<compile_context>
chip_gen: v5e
topology: v5e:2x2
jax: 0.10.0
libtpu: 0.0.40
codegen_flags: <defaults>
</compile_context>

<pallas_src>
import jax
import jax.numpy as jnp
from jax.experimental import pallas as pl
from jax.experimental.pallas import tpu as pltpu

LANE = 128                   # lane width; channels zero-padded to this in VMEM
SUB = 8                      # sublane rows of the per-step loss-partial block
CHANNELS = (3, 8, 16, 32)    # synthetic frozen backbone (3 stages)


# ---------------------------------------------------------------------------
# In-kernel helpers (pure value ops on VMEM-resident data).
# ---------------------------------------------------------------------------
def _pad_hw(x):
    """Zero-pad spatial dims (axes 0,1) of a (H, W, 1, LANE) value by 1.

    Both concats are on OUTER dims (minor dims stay (1, LANE))."""
    h, w = x.shape[0], x.shape[1]
    zr = jnp.zeros((1, w, 1, LANE), x.dtype)
    x = jnp.concatenate([zr, x, zr], axis=0)
    zc = jnp.zeros((h + 2, 1, 1, LANE), x.dtype)
    return jnp.concatenate([zc, x, zc], axis=1)


def _conv3x3s2_relu(xp, w, b, oh, ow):
    """3x3 / stride-2 / pad-1 conv + bias + ReLU.

    xp: padded activation value (2*oh+2, 2*ow+2, 1, LANE), channels in the
    first true-C lanes (rest exactly 0).  Taps are extracted with outer-dim
    slices / reshapes only; the 9 lane-dense taps are concatenated along the
    lane axis (aligned, 128 each) and fed to ONE MXU dot.  Returns (oh*ow, LANE)."""
    wp_full = xp.shape[1]
    taps = []
    for kh in range(3):
        r = xp[kh:kh + 2 * oh]                            # (2*oh, Wp, 1, LANE)
        r = r.reshape(oh, 2, wp_full, 1, LANE)[:, 0]      # rows kh, kh+2, ...
        for kw in range(3):
            c = r[:, kw:kw + 2 * ow]                      # (oh, 2*ow, 1, LANE)
            c = c.reshape(oh, ow, 2, 1, LANE)[:, :, 0]    # cols kw, kw+2, ...
            taps.append(c)                                # (oh, ow, 1, LANE)
    patches = jnp.concatenate(taps, axis=-1)              # (oh, ow, 1, 9*LANE)
    patches = patches.reshape(oh * ow, 9 * LANE)          # (M, 9*LANE)
    f = jnp.dot(patches, w, preferred_element_type=jnp.float32) + b
    return jnp.maximum(f, 0.0)                            # (M, LANE) f32


def _build_kernel(n, h, w, c_in, stages):
    """stages: tuple of (oh, ow, oc_true) per backbone stage."""
    n_stages = len(stages)

    def kernel(*refs):
        xa_ref, xd_ref = refs[0], refs[1]
        wb_refs = refs[2:2 + 2 * n_stages]
        loss_ref = refs[2 + 2 * n_stages]
        pa_ref, pd_ref = refs[3 + 2 * n_stages], refs[4 + 2 * n_stages]

        # Stage-1 input: zero the padded scratch (spatial halo + channel-pad
        # lanes), then drop the true image into lanes [0, c_in).
        pa_ref[...] = jnp.zeros_like(pa_ref)
        pd_ref[...] = jnp.zeros_like(pd_ref)
        pa_ref[1:h + 1, 1:w + 1, :, 0:c_in] = xa_ref[...]
        pd_ref[1:h + 1, 1:w + 1, :, 0:c_in] = xd_ref[...]

        xa = pa_ref[...]
        xd = pd_ref[...]
        acc = jnp.zeros((1, LANE), jnp.float32)
        for s, (oh, ow, oc) in enumerate(stages):
            ws = wb_refs[2 * s][...]
            bs = wb_refs[2 * s + 1][...]
            fa = _conv3x3s2_relu(xa, ws, bs, oh, ow)      # (M, LANE) f32
            fd = _conv3x3s2_relu(xd, ws, bs, oh, ow)
            # F.l1_loss(mean): padded lanes are exactly 0 for both inputs, so
            # summing all 128 lanes and dividing by this stage's TRUE element
            # count over the whole batch gives the exact mean.
            denom = float(n * oh * ow * oc)
            acc = acc + jnp.sum(jnp.abs(fa - fd), axis=0, keepdims=True) / denom
            if s + 1 < n_stages:
                xa = _pad_hw(fa.reshape(oh, ow, 1, LANE))
                xd = _pad_hw(fd.reshape(oh, ow, 1, LANE))
        # Lane-dense (8, 128) partial block; wrapper divides by SUB.
        loss_ref[...] = jnp.broadcast_to(acc, (SUB, LANE))

    return kernel


# ---------------------------------------------------------------------------
# Synthetic frozen backbone parameters (deterministic in-script init).
# ---------------------------------------------------------------------------
def init_backbone_params(key, channels=CHANNELS):
    # TODO(synk): the real module loads pretrained timm weights from disk;
    # a deterministic synthetic frozen backbone is used instead.
    params = []
    for idx, (cin, cout) in enumerate(zip(channels[:-1], channels[1:])):
        kw_, kb_ = jax.random.split(jax.random.fold_in(key, idx))
        fan_in = 9 * cin
        scale = 1.0 / float(fan_in) ** 0.5
        w = jax.random.uniform(kw_, (3, 3, cin, cout), jnp.float32, -scale, scale)
        b = jax.random.uniform(kb_, (cout,), jnp.float32, -scale, scale)
        params.append((w, b))
    return params


def pack_backbone_params(params):
    """(3,3,cin,cout) weights -> (9*LANE, LANE) blocks (tap-major rows).

    Rows/cols beyond the true channel counts are zero, so padded lanes stay
    exactly zero through every stage (no loss / no next-stage contribution)."""
    packed = []
    for w, b in params:
        cin, cout = w.shape[2], w.shape[3]
        wp = jnp.zeros((9 * LANE, LANE), jnp.float32)
        for kh in range(3):
            for kw in range(3):
                t = kh * 3 + kw
                wp = wp.at[t * LANE:t * LANE + cin, :cout].set(w[kh, kw])
        bp = jnp.zeros((1, LANE), jnp.float32).at[0, :cout].set(b)
        packed.append((wp, bp, cout))
    return packed


# ---------------------------------------------------------------------------
# PerceptualLoss.forward equivalent.
# ---------------------------------------------------------------------------
def perceptual_loss(images_nchw, decodings_nchw, packed_params):
    xa = jnp.transpose(images_nchw, (0, 2, 3, 1)).astype(jnp.float32)
    xd = jnp.transpose(decodings_nchw, (0, 2, 3, 1)).astype(jnp.float32)
    n, h, w, c = xa.shape
    assert h % 2 == 0 and w % 2 == 0, "even spatial dims expected"

    stages = []
    sh, sw = h, w
    for (_, _, oc) in packed_params:
        sh, sw = sh // 2, sw // 2
        stages.append((sh, sw, oc))

    # Free metadata reshape so each input block arrives with a (1, c) minor
    # tile that matches the padded-activation scratch layout (no in-kernel
    # relayout of the raw image).
    xa = xa.reshape(n, h, w, 1, c)
    xd = xd.reshape(n, h, w, 1, c)

    in_specs = [
        pl.BlockSpec((None, h, w, 1, c), lambda i: (i, 0, 0, 0, 0)),
        pl.BlockSpec((None, h, w, 1, c), lambda i: (i, 0, 0, 0, 0)),
    ]
    flat_wb = []
    for (wp, bp, _) in packed_params:
        flat_wb += [wp, bp]
        in_specs += [pl.BlockSpec((9 * LANE, LANE), lambda i: (0, 0)),
                     pl.BlockSpec((1, LANE), lambda i: (0, 0))]

    kernel = _build_kernel(n, h, w, c, tuple(stages))
    partial = pl.pallas_call(
        kernel,
        grid=(n,),
        out_shape=jax.ShapeDtypeStruct((n * SUB, LANE), jnp.float32),
        in_specs=in_specs,
        out_specs=pl.BlockSpec((SUB, LANE), lambda i: (i, 0)),
        scratch_shapes=[pltpu.VMEM((h + 2, w + 2, 1, LANE), jnp.float32),
                        pltpu.VMEM((h + 2, w + 2, 1, LANE), jnp.float32)],
        compiler_params=pltpu.CompilerParams(
            dimension_semantics=("parallel",),        # shards batch over TCs (v7x)
            vmem_limit_bytes=48 * 1024 * 1024,        # explicit; fits 64 MiB/TC v7x
        ),
    )(xa, xd, *flat_wb)
    # Each step's contribution is broadcast over SUB sublanes; padded lanes are 0.
    return jnp.sum(partial) / float(SUB)


# ---------------------------------------------------------------------------
# Pure-JAX/XLA reference (for the correctness check requested by the review).
# ---------------------------------------------------------------------------
def perceptual_loss_reference(images_nchw, decodings_nchw, params):
    xa = jnp.transpose(images_nchw, (0, 2, 3, 1)).astype(jnp.float32)
    xd = jnp.transpose(decodings_nchw, (0, 2, 3, 1)).astype(jnp.float32)
    total = jnp.zeros((), jnp.float32)
    for w, b in params:
        dn = jax.lax.conv_dimension_numbers(xa.shape, w.shape,
                                            ("NHWC", "HWIO", "NHWC"))

        def conv(x, w=w, b=b, dn=dn):
            y = jax.lax.conv_general_dilated(
                x, w, window_strides=(2, 2), padding=((1, 1), (1, 1)),
                dimension_numbers=dn, precision=jax.lax.Precision.HIGHEST)
            return jnp.maximum(y + b.reshape(1, 1, 1, -1), 0.0)

        xa, xd = conv(xa), conv(xd)
        total = total + jnp.mean(jnp.abs(xa - xd))
    return total


if __name__ == "__main__":
    key = jax.random.PRNGKey(0)
    k_img, k_dec, k_par = jax.random.split(key, 3)

    # Small RGB images, PyTorch NCHW convention.
    images = jax.random.normal(k_img, (2, 3, 16, 16), jnp.float32)
    decodings = jax.random.normal(k_dec, (2, 3, 16, 16), jnp.float32)

    params = init_backbone_params(k_par)
    packed = pack_backbone_params(params)

    loss_fn = jax.jit(lambda a, b: perceptual_loss(a, b, packed))
    loss = loss_fn(images, decodings)
    jax.block_until_ready(loss)

    ref = perceptual_loss_reference(images, decodings, params)
    assert loss.shape == () and bool(jnp.isfinite(loss))
    assert bool(jnp.allclose(loss, ref, rtol=1e-3, atol=1e-4)), (float(loss), float(ref))
    print("KERNEL_OK")
</pallas_src>

<mosaic_0001>
module attributes {stable_mosaic.version = 11 : i64} {
  func.func @kernel(%arg0: i32, %arg1: memref<1x16x16x1x3xf32, #tpu.memory_space<vmem>>, %arg2: memref<1x16x16x1x3xf32, #tpu.memory_space<vmem>>, %arg3: memref<1152x128xf32, #tpu.memory_space<vmem>>, %arg4: memref<1x128xf32, #tpu.memory_space<vmem>>, %arg5: memref<1152x128xf32, #tpu.memory_space<vmem>>, %arg6: memref<1x128xf32, #tpu.memory_space<vmem>>, %arg7: memref<1152x128xf32, #tpu.memory_space<vmem>>, %arg8: memref<1x128xf32, #tpu.memory_space<vmem>>, %arg9: memref<8x128xf32, #tpu.memory_space<vmem>>, %arg10: memref<18x18x1x128xf32, #tpu.memory_space<vmem>>, %arg11: memref<18x18x1x128xf32, #tpu.memory_space<vmem>>) attributes {dimension_semantics = [#tpu.dimension_semantics<parallel>], iteration_bounds = array<i64: 2>, scalar_prefetch = 0 : i64, scratch_operands = 2 : i64, tpu.core_type = #tpu.core_type<tc>, window_params = [{transform_indices = @transform_0, window_bounds = array<i64: 1, 16, 16, 1, 3>}, {transform_indices = @transform_1, window_bounds = array<i64: 1, 16, 16, 1, 3>}, {pipeline_mode = #tpu.pipeline_mode<synchronous>, transform_indices = @transform_2, window_bounds = array<i64: 1152, 128>}, {pipeline_mode = #tpu.pipeline_mode<synchronous>, transform_indices = @transform_3, window_bounds = array<i64: 1, 128>}, {pipeline_mode = #tpu.pipeline_mode<synchronous>, transform_indices = @transform_4, window_bounds = array<i64: 1152, 128>}, {pipeline_mode = #tpu.pipeline_mode<synchronous>, transform_indices = @transform_5, window_bounds = array<i64: 1, 128>}, {pipeline_mode = #tpu.pipeline_mode<synchronous>, transform_indices = @transform_6, window_bounds = array<i64: 1152, 128>}, {pipeline_mode = #tpu.pipeline_mode<synchronous>, transform_indices = @transform_7, window_bounds = array<i64: 1, 128>}, {transform_indices = @transform_8, window_bounds = array<i64: 8, 128>}]} {
    %cst = arith.constant 0.000000e+00 : f32
    %0 = vector.broadcast %cst : f32 to vector<18x18x1x128xf32>
    %c0 = arith.constant 0 : index
    %c0_0 = arith.constant 0 : index
    %c0_1 = arith.constant 0 : index
    %c0_2 = arith.constant 0 : index
    %1 = vector.load %arg10[%c0, %c0_0, %c0_1, %c0_2] : memref<18x18x1x128xf32, #tpu.memory_space<vmem>>, vector<18x18x1x128xf32>
    tpu.vector_store %arg10[%c0, %c0_0, %c0_1, %c0_2], %0 {strides = array<i32>} : memref<18x18x1x128xf32, #tpu.memory_space<vmem>>, vector<18x18x1x128xf32>,
    %cst_3 = arith.constant 0.000000e+00 : f32
    %2 = vector.broadcast %cst_3 : f32 to vector<18x18x1x128xf32>
    %c0_4 = arith.constant 0 : index
    %c0_5 = arith.constant 0 : index
    %c0_6 = arith.constant 0 : index
    %c0_7 = arith.constant 0 : index
    %3 = vector.load %arg11[%c0_4, %c0_5, %c0_6, %c0_7] : memref<18x18x1x128xf32, #tpu.memory_space<vmem>>, vector<18x18x1x128xf32>
    tpu.vector_store %arg11[%c0_4, %c0_5, %c0_6, %c0_7], %2 {strides = array<i32>} : memref<18x18x1x128xf32, #tpu.memory_space<vmem>>, vector<18x18x1x128xf32>,
    %c0_8 = arith.constant 0 : index
    %c0_9 = arith.constant 0 : index
    %c0_10 = arith.constant 0 : index
    %c0_11 = arith.constant 0 : index
    %c0_12 = arith.constant 0 : index
    %4 = vector.load %arg1[%c0_8, %c0_9, %c0_10, %c0_11, %c0_12] : memref<1x16x16x1x3xf32, #tpu.memory_space<vmem>>, vector<1x16x16x1x3xf32>
    %5 = vector.shape_cast %4 : vector<1x16x16x1x3xf32> to vector<16x16x1x3xf32>
    %c1 = arith.constant 1 : index
    %c1_13 = arith.constant 1 : index
    %c0_14 = arith.constant 0 : index
    %c0_15 = arith.constant 0 : index
    %6 = vector.load %arg10[%c1, %c1_13, %c0_14, %c0_15] : memref<18x18x1x128xf32, #tpu.memory_space<vmem>>, vector<16x16x1x3xf32>
    tpu.vector_store %arg10[%c1, %c1_13, %c0_14, %c0_15], %5 {strides = array<i32>} : memref<18x18x1x128xf32, #tpu.memory_space<vmem>>, vector<16x16x1x3xf32>,
    %c0_16 = arith.constant 0 : index
    %c0_17 = arith.constant 0 : index
    %c0_18 = arith.constant 0 : index
    %c0_19 = arith.constant 0 : index
    %c0_20 = arith.constant 0 : index
    %7 = vector.load %arg2[%c0_16, %c0_17, %c0_18, %c0_19, %c0_20] : memref<1x16x16x1x3xf32, #tpu.memory_space<vmem>>, vector<1x16x16x1x3xf32>
    %8 = vector.shape_cast %7 : vector<1x16x16x1x3xf32> to vector<16x16x1x3xf32>
    %c1_21 = arith.constant 1 : index
    %c1_22 = arith.constant 1 : index
    %c0_23 = arith.constant 0 : index
    %c0_24 = arith.constant 0 : index
    %9 = vector.load %arg11[%c1_21, %c1_22, %c0_23, %c0_24] : memref<18x18x1x128xf32, #tpu.memory_space<vmem>>, vector<16x16x1x3xf32>
    tpu.vector_store %arg11[%c1_21, %c1_22, %c0_23, %c0_24], %8 {strides = array<i32>} : memref<18x18x1x128xf32, #tpu.memory_space<vmem>>, vector<16x16x1x3xf32>,
    %c0_25 = arith.constant 0 : index
    %c0_26 = arith.constant 0 : index
    %c0_27 = arith.constant 0 : index
    %c0_28 = arith.constant 0 : index
    %10 = vector.load %arg10[%c0_25, %c0_26, %c0_27, %c0_28] : memref<18x18x1x128xf32, #tpu.memory_space<vmem>>, vector<18x18x1x128xf32>
    %c0_29 = arith.constant 0 : index
    %c0_30 = arith.constant 0 : index
    %c0_31 = arith.constant 0 : index
    %c0_32 = arith.constant 0 : index
    %11 = vector.load %arg11[%c0_29, %c0_30, %c0_31, %c0_32] : memref<18x18x1x128xf32, #tpu.memory_space<vmem>>, vector<18x18x1x128xf32>
    %cst_33 = arith.constant 0.000000e+00 : f32
    %12 = vector.broadcast %cst_33 : f32 to vector<1x128xf32>
    %c0_34 = arith.constant 0 : index
    %c0_35 = arith.constant 0 : index
    %13 = vector.load %arg3[%c0_34, %c0_35] : memref<1152x128xf32, #tpu.memory_space<vmem>>, vector<1152x128xf32>
    %c0_36 = arith.constant 0 : index
    %c0_37 = arith.constant 0 : index
    %14 = vector.load %arg4[%c0_36, %c0_37] : memref<1x128xf32, #tpu.memory_space<vmem>>, vector<1x128xf32>
    %15 = vector.extract_strided_slice %10 {offsets = [0, 0, 0, 0], sizes = [16, 18, 1, 128], strides = [1, 1, 1, 1]} : vector<18x18x1x128xf32> to vector<16x18x1x128xf32>
    %16 = vector.shape_cast %15 : vector<16x18x1x128xf32> to vector<8x2x18x1x128xf32>
    %17 = vector.extract_strided_slice %16 {offsets = [0, 0, 0, 0, 0], sizes = [8, 1, 18, 1, 128], strides = [1, 1, 1, 1, 1]} : vector<8x2x18x1x128xf32> to vector<8x1x18x1x128xf32>
    %18 = vector.shape_cast %17 : vector<8x1x18x1x128xf32> to vector<8x18x1x128xf32>
    %19 = vector.extract_strided_slice %18 {offsets = [0, 0, 0, 0], sizes = [8, 16, 1, 128], strides = [1, 1, 1, 1]} : vector<8x18x1x128xf32> to vector<8x16x1x128xf32>
    %20 = vector.shape_cast %19 : vector<8x16x1x128xf32> to vector<8x8x2x1x128xf32>
    %21 = vector.extract_strided_slice %20 {offsets = [0, 0, 0, 0, 0], sizes = [8, 8, 1, 1, 128], strides = [1, 1, 1, 1, 1]} : vector<8x8x2x1x128xf32> to vector<8x8x1x1x128xf32>
    %22 = vector.shape_cast %21 : vector<8x8x1x1x128xf32> to vector<8x8x1x128xf32>
    %23 = vector.extract_strided_slice %18 {offsets = [0, 1, 0, 0], sizes = [8, 16, 1, 128], strides = [1, 1, 1, 1]} : vector<8x18x1x128xf32> to vector<8x16x1x128xf32>
    %24 = vector.shape_cast %23 : vector<8x16x1x128xf32> to vector<8x8x2x1x128xf32>
    %25 = vector.extract_strided_slice %24 {offsets = [0, 0, 0, 0, 0], sizes = [8, 8, 1, 1, 128], strides = [1, 1, 1, 1, 1]} : vector<8x8x2x1x128xf32> to vector<8x8x1x1x128xf32>
    %26 = vector.shape_cast %25 : vector<8x8x1x1x128xf32> to vector<8x8x1x128xf32>
    %27 = vector.extract_strided_slice %18 {offsets = [0, 2, 0, 0], sizes = [8, 16, 1, 128], strides = [1, 1, 1, 1]} : vector<8x18x1x128xf32> to vector<8x16x1x128xf32>
    %28 = vector.shape_cast %27 : vector<8x16x1x128xf32> to vector<8x8x2x1x128xf32>
    %29 = vector.extract_strided_slice %28 {offsets = [0, 0, 0, 0, 0], sizes = [8, 8, 1, 1, 128], strides = [1, 1, 1, 1, 1]} : vector<8x8x2x1x128xf32> to vector<8x8x1x1x128xf32>
    %30 = vector.shape_cast %29 : vector<8x8x1x1x128xf32> to vector<8x8x1x128xf32>
    %31 = vector.extract_strided_slice %10 {offsets = [1, 0, 0, 0], sizes = [16, 18, 1, 128], strides = [1, 1, 1, 1]} : vector<18x18x1x128xf32> to vector<16x18x1x128xf32>
    %32 = vector.shape_cast %31 : vector<16x18x1x128xf32> to vector<8x2x18x1x128xf32>
    %33 = vector.extract_strided_slice %32 {offsets = [0, 0, 0, 0, 0], sizes = [8, 1, 18, 1, 128], strides = [1, 1, 1, 1, 1]} : vector<8x2x18x1x128xf32> to vector<8x1x18x1x128xf32>
    %34 = vector.shape_cast %33 : vector<8x1x18x1x128xf32> to vector<8x18x1x128xf32>
    %35 = vector.extract_strided_slice %34 {offsets = [0, 0, 0, 0], sizes = [8, 16, 1, 128], strides = [1, 1, 1, 1]} : vector<8x18x1x128xf32> to vector<8x16x1x128xf32>
    %36 = vector.shape_cast %35 : vector<8x16x1x128xf32> to vector<8x8x2x1x128xf32>
    %37 = vector.extract_strided_slice %36 {offsets = [0, 0, 0, 0, 0], sizes = [8, 8, 1, 1, 128], strides = [1, 1, 1, 1, 1]} : vector<8x8x2x1x128xf32> to vector<8x8x1x1x128xf32>
    %38 = vector.shape_cast %37 : vector<8x8x1x1x128xf32> to vector<8x8x1x128xf32>
    %39 = vector.extract_strided_slice %34 {offsets = [0, 1, 0, 0], sizes = [8, 16, 1, 128], strides = [1, 1, 1, 1]} : vector<8x18x1x128xf32> to vector<8x16x1x128xf32>
    %40 = vector.shape_cast %39 : vector<8x16x1x128xf32> to vector<8x8x2x1x128xf32>
    %41 = vector.extract_strided_slice %40 {offsets = [0, 0, 0, 0, 0], sizes = [8, 8, 1, 1, 128], strides = [1, 1, 1, 1, 1]} : vector<8x8x2x1x128xf32> to vector<8x8x1x1x128xf32>
    %42 = vector.shape_cast %41 : vector<8x8x1x1x128xf32> to vector<8x8x1x128xf32>
    %43 = vector.extract_strided_slice %34 {offsets = [0, 2, 0, 0], sizes = [8, 16, 1, 128], strides = [1, 1, 1, 1]} : vector<8x18x1x128xf32> to vector<8x16x1x128xf32>
    %44 = vector.shape_cast %43 : vector<8x16x1x128xf32> to vector<8x8x2x1x128xf32>
    %45 = vector.extract_strided_slice %44 {offsets = [0, 0, 0, 0, 0], sizes = [8, 8, 1, 1, 128], strides = [1, 1, 1, 1, 1]} : vector<8x8x2x1x128xf32> to vector<8x8x1x1x128xf32>
    %46 = vector.shape_cast %45 : vector<8x8x1x1x128xf32> to vector<8x8x1x128xf32>
    %47 = vector.extract_strided_slice %10 {offsets = [2, 0, 0, 0], sizes = [16, 18, 1, 128], strides = [1, 1, 1, 1]} : vector<18x18x1x128xf32> to vector<16x18x1x128xf32>
    %48 = vector.shape_cast %47 : vector<16x18x1x128xf32> to vector<8x2x18x1x128xf32>
    %49 = vector.extract_strided_slice %48 {offsets = [0, 0, 0, 0, 0], sizes = [8, 1, 18, 1, 128], strides = [1, 1, 1, 1, 1]} : vector<8x2x18x1x128xf32> to vector<8x1x18x1x128xf32>
    %50 = vector.shape_cast %49 : vector<8x1x18x1x128xf32> to vector<8x18x1x128xf32>
    %51 = vector.extract_strided_slice %50 {offsets = [0, 0, 0, 0], sizes = [8, 16, 1, 128], strides = [1, 1, 1, 1]} : vector<8x18x1x128xf32> to vector<8x16x1x128xf32>
    %52 = vector.shape_cast %51 : vector<8x16x1x128xf32> to vector<8x8x2x1x128xf32>
    %53 = vector.extract_strided_slice %52 {offsets = [0, 0, 0, 0, 0], sizes = [8, 8, 1, 1, 128], strides = [1, 1, 1, 1, 1]} : vector<8x8x2x1x128xf32> to vector<8x8x1x1x128xf32>
    %54 = vector.shape_cast %53 : vector<8x8x1x1x128xf32> to vector<8x8x1x128xf32>
    %55 = vector.extract_strided_slice %50 {offsets = [0, 1, 0, 0], sizes = [8, 16, 1, 128], strides = [1, 1, 1, 1]} : vector<8x18x1x128xf32> to vector<8x16x1x128xf32>
    %56 = vector.shape_cast %55 : vector<8x16x1x128xf32> to vector<8x8x2x1x128xf32>
    %57 = vector.extract_strided_slice %56 {offsets = [0, 0, 0, 0, 0], sizes = [8, 8, 1, 1, 128], strides = [1, 1, 1, 1, 1]} : vector<8x8x2x1x128xf32> to vector<8x8x1x1x128xf32>
    %58 = vector.shape_cast %57 : vector<8x8x1x1x128xf32> to vector<8x8x1x128xf32>
    %59 = vector.extract_strided_slice %50 {offsets = [0, 2, 0, 0], sizes = [8, 16, 1, 128], strides = [1, 1, 1, 1]} : vector<8x18x1x128xf32> to vector<8x16x1x128xf32>
    %60 = vector.shape_cast %59 : vector<8x16x1x128xf32> to vector<8x8x2x1x128xf32>
    %61 = vector.extract_strided_slice %60 {offsets = [0, 0, 0, 0, 0], sizes = [8, 8, 1, 1, 128], strides = [1, 1, 1, 1, 1]} : vector<8x8x2x1x128xf32> to vector<8x8x1x1x128xf32>
    %62 = vector.shape_cast %61 : vector<8x8x1x1x128xf32> to vector<8x8x1x128xf32>
    %63 = tpu.concatenate %22, %26, %30, %38, %42, %46, %54, %58, %62 in 3 : vector<8x8x1x128xf32>, vector<8x8x1x128xf32>, vector<8x8x1x128xf32>, vector<8x8x1x128xf32>, vector<8x8x1x128xf32>, vector<8x8x1x128xf32>, vector<8x8x1x128xf32>, vector<8x8x1x128xf32>, vector<8x8x1x128xf32> -> vector<8x8x1x1152xf32>
    %64 = vector.shape_cast %63 : vector<8x8x1x1152xf32> to vector<64x1152xf32>
    %cst_38 = arith.constant dense<0.000000e+00> : vector<64x128xf32>
    %65 = tpu.matmul %64, %13, %cst_38 {dimension_numbers = #tpu.dot_dimension_numbers<[1], [0], [0], [1], [0, 0, 1, 1], [], []>} : vector<64x1152xf32>, vector<1152x128xf32>, vector<64x128xf32> -> vector<64x128xf32>
    %66 = vector.broadcast %14 : vector<1x128xf32> to vector<64x128xf32>
    %67 = arith.addf %65, %66 : vector<64x128xf32>
    %cst_39 = arith.constant 0.000000e+00 : f32
    %68 = vector.broadcast %cst_39 : f32 to vector<64x128xf32>
    %69 = arith.maximumf %67, %68 : vector<64x128xf32>
    %70 = vector.extract_strided_slice %11 {offsets = [0, 0, 0, 0], sizes = [16, 18, 1, 128], strides = [1, 1, 1, 1]} : vector<18x18x1x128xf32> to vector<16x18x1x128xf32>
    %71 = vector.shape_cast %70 : vector<16x18x1x128xf32> to vector<8x2x18x1x128xf32>
    %72 = vector.extract_strided_slice %71 {offsets = [0, 0, 0, 0, 0], sizes = [8, 1, 18, 1, 128], strides = [1, 1, 1, 1, 1]} : vector<8x2x18x1x128xf32> to vector<8x1x18x1x128xf32>
    %73 = vector.shape_cast %72 : vector<8x1x18x1x128xf32> to vector<8x18x1x128xf32>
    %74 = vector.extract_strided_slice %73 {offsets = [0, 0, 0, 0], sizes = [8, 16, 1, 128], strides = [1, 1, 1, 1]} : vector<8x18x1x128xf32> to vector<8x16x1x128xf32>
    %75 = vector.shape_cast %74 : vector<8x16x1x128xf32> to vector<8x8x2x1x128xf32>
    %76 = vector.extract_strided_slice %75 {offsets = [0, 0, 0, 0, 0], sizes = [8, 8, 1, 1, 128], strides = [1, 1, 1, 1, 1]} : vector<8x8x2x1x128xf32> to vector<8x8x1x1x128xf32>
    %77 = vector.shape_cast %76 : vector<8x8x1x1x128xf32> to vector<8x8x1x128xf32>
    %78 = vector.extract_strided_slice %73 {offsets = [0, 1, 0, 0], sizes = [8, 16, 1, 128], strides = [1, 1, 1, 1]} : vector<8x18x1x128xf32> to vector<8x16x1x128xf32>
    %79 = vector.shape_cast %78 : vector<8x16x1x128xf32> to vector<8x8x2x1x128xf32>
    %80 = vector.extract_strided_slice %79 {offsets = [0, 0, 0, 0, 0], sizes = [8, 8, 1, 1, 128], strides = [1, 1, 1, 1, 1]} : vector<8x8x2x1x128xf32> to vector<8x8x1x1x128xf32>
    %81 = vector.shape_cast %80 : vector<8x8x1x1x128xf32> to vector<8x8x1x128xf32>
    %82 = vector.extract_strided_slice %73 {offsets = [0, 2, 0, 0], sizes = [8, 16, 1, 128], strides = [1, 1, 1, 1]} : vector<8x18x1x128xf32> to vector<8x16x1x128xf32>
    %83 = vector.shape_cast %82 : vector<8x16x1x128xf32> to vector<8x8x2x1x128xf32>
    %84 = vector.extract_strided_slice %83 {offsets = [0, 0, 0, 0, 0], sizes = [8, 8, 1, 1, 128], strides = [1, 1, 1, 1, 1]} : vector<8x8x2x1x128xf32> to vector<8x8x1x1x128xf32>
    %85 = vector.shape_cast %84 : vector<8x8x1x1x128xf32> to vector<8x8x1x128xf32>
    %86 = vector.extract_strided_slice %11 {offsets = [1, 0, 0, 0], sizes = [16, 18, 1, 128], strides = [1, 1, 1, 1]} : vector<18x18x1x128xf32> to vector<16x18x1x128xf32>
    %87 = vector.shape_cast %86 : vector<16x18x1x128xf32> to vector<8x2x18x1x128xf32>
    %88 = vector.extract_strided_slice %87 {offsets = [0, 0, 0, 0, 0], sizes = [8, 1, 18, 1, 128], strides = [1, 1, 1, 1, 1]} : vector<8x2x18x1x128xf32> to vector<8x1x18x1x128xf32>
    %89 = vector.shape_cast %88 : vector<8x1x18x1x128xf32> to vector<8x18x1x128xf32>
    %90 = vector.extract_strided_slice %89 {offsets = [0, 0, 0, 0], sizes = [8, 16, 1, 128], strides = [1, 1, 1, 1]} : vector<8x18x1x128xf32> to vector<8x16x1x128xf32>
    %91 = vector.shape_cast %90 : vector<8x16x1x128xf32> to vector<8x8x2x1x128xf32>
    %92 = vector.extract_strided_slice %91 {offsets = [0, 0, 0, 0, 0], sizes = [8, 8, 1, 1, 128], strides = [1, 1, 1, 1, 1]} : vector<8x8x2x1x128xf32> to vector<8x8x1x1x128xf32>
    %93 = vector.shape_cast %92 : vector<8x8x1x1x128xf32> to vector<8x8x1x128xf32>
    %94 = vector.extract_strided_slice %89 {offsets = [0, 1, 0, 0], sizes = [8, 16, 1, 128], strides = [1, 1, 1, 1]} : vector<8x18x1x128xf32> to vector<8x16x1x128xf32>
    %95 = vector.shape_cast %94 : vector<8x16x1x128xf32> to vector<8x8x2x1x128xf32>
    %96 = vector.extract_strided_slice %95 {offsets = [0, 0, 0, 0, 0], sizes = [8, 8, 1, 1, 128], strides = [1, 1, 1, 1, 1]} : vector<8x8x2x1x128xf32> to vector<8x8x1x1x128xf32>
    %97 = vector.shape_cast %96 : vector<8x8x1x1x128xf32> to vector<8x8x1x128xf32>
    %98 = vector.extract_strided_slice %89 {offsets = [0, 2, 0, 0], sizes = [8, 16, 1, 128], strides = [1, 1, 1, 1]} : vector<8x18x1x128xf32> to vector<8x16x1x128xf32>
    %99 = vector.shape_cast %98 : vector<8x16x1x128xf32> to vector<8x8x2x1x128xf32>
    %100 = vector.extract_strided_slice %99 {offsets = [0, 0, 0, 0, 0], sizes = [8, 8, 1, 1, 128], strides = [1, 1, 1, 1, 1]} : vector<8x8x2x1x128xf32> to vector<8x8x1x1x128xf32>
    %101 = vector.shape_cast %100 : vector<8x8x1x1x128xf32> to vector<8x8x1x128xf32>
    %102 = vector.extract_strided_slice %11 {offsets = [2, 0, 0, 0], sizes = [16, 18, 1, 128], strides = [1, 1, 1, 1]} : vector<18x18x1x128xf32> to vector<16x18x1x128xf32>
    %103 = vector.shape_cast %102 : vector<16x18x1x128xf32> to vector<8x2x18x1x128xf32>
    %104 = vector.extract_strided_slice %103 {offsets = [0, 0, 0, 0, 0], sizes = [8, 1, 18, 1, 128], strides = [1, 1, 1, 1, 1]} : vector<8x2x18x1x128xf32> to vector<8x1x18x1x128xf32>
    %105 = vector.shape_cast %104 : vector<8x1x18x1x128xf32> to vector<8x18x1x128xf32>
    %106 = vector.extract_strided_slice %105 {offsets = [0, 0, 0, 0], sizes = [8, 16, 1, 128], strides = [1, 1, 1, 1]} : vector<8x18x1x128xf32> to vector<8x16x1x128xf32>
    %107 = vector.shape_cast %106 : vector<8x16x1x128xf32> to vector<8x8x2x1x128xf32>
    %108 = vector.extract_strided_slice %107 {offsets = [0, 0, 0, 0, 0], sizes = [8, 8, 1, 1, 128], strides = [1, 1, 1, 1, 1]} : vector<8x8x2x1x128xf32> to vector<8x8x1x1x128xf32>
    %109 = vector.shape_cast %108 : vector<8x8x1x1x128xf32> to vector<8x8x1x128xf32>
    %110 = vector.extract_strided_slice %105 {offsets = [0, 1, 0, 0], sizes = [8, 16, 1, 128], strides = [1, 1, 1, 1]} : vector<8x18x1x128xf32> to vector<8x16x1x128xf32>
    %111 = vector.shape_cast %110 : vector<8x16x1x128xf32> to vector<8x8x2x1x128xf32>
    %112 = vector.extract_strided_slice %111 {offsets = [0, 0, 0, 0, 0], sizes = [8, 8, 1, 1, 128], strides = [1, 1, 1, 1, 1]} : vector<8x8x2x1x128xf32> to vector<8x8x1x1x128xf32>
    %113 = vector.shape_cast %112 : vector<8x8x1x1x128xf32> to vector<8x8x1x128xf32>
    %114 = vector.extract_strided_slice %105 {offsets = [0, 2, 0, 0], sizes = [8, 16, 1, 128], strides = [1, 1, 1, 1]} : vector<8x18x1x128xf32> to vector<8x16x1x128xf32>
    %115 = vector.shape_cast %114 : vector<8x16x1x128xf32> to vector<8x8x2x1x128xf32>
    %116 = vector.extract_strided_slice %115 {offsets = [0, 0, 0, 0, 0], sizes = [8, 8, 1, 1, 128], strides = [1, 1, 1, 1, 1]} : vector<8x8x2x1x128xf32> to vector<8x8x1x1x128xf32>
    %117 = vector.shape_cast %116 : vector<8x8x1x1x128xf32> to vector<8x8x1x128xf32>
    %118 = tpu.concatenate %77, %81, %85, %93, %97, %101, %109, %113, %117 in 3 : vector<8x8x1x128xf32>, vector<8x8x1x128xf32>, vector<8x8x1x128xf32>, vector<8x8x1x128xf32>, vector<8x8x1x128xf32>, vector<8x8x1x128xf32>, vector<8x8x1x128xf32>, vector<8x8x1x128xf32>, vector<8x8x1x128xf32> -> vector<8x8x1x1152xf32>
    %119 = vector.shape_cast %118 : vector<8x8x1x1152xf32> to vector<64x1152xf32>
    %cst_40 = arith.constant dense<0.000000e+00> : vector<64x128xf32>
    %120 = tpu.matmul %119, %13, %cst_40 {dimension_numbers = #tpu.dot_dimension_numbers<[1], [0], [0], [1], [0, 0, 1, 1], [], []>} : vector<64x1152xf32>, vector<1152x128xf32>, vector<64x128xf32> -> vector<64x128xf32>
    %121 = vector.broadcast %14 : vector<1x128xf32> to vector<64x128xf32>
    %122 = arith.addf %120, %121 : vector<64x128xf32>
    %cst_41 = arith.constant 0.000000e+00 : f32
    %123 = vector.broadcast %cst_41 : f32 to vector<64x128xf32>
    %124 = arith.maximumf %122, %123 : vector<64x128xf32>
    %125 = arith.subf %69, %124 : vector<64x128xf32>
    %126 = math.absf %125 : vector<64x128xf32>
    %cst_42 = arith.constant dense<0.000000e+00> : vector<128xf32>
    %127 = vector.multi_reduction <add>, %126, %cst_42 [0] : vector<64x128xf32> to vector<128xf32>
    %128 = vector.shape_cast %127 : vector<128xf32> to vector<1x128xf32>
    %cst_43 = arith.constant 1.024000e+03 : f32
    %129 = vector.broadcast %cst_43 : f32 to vector<1x128xf32>
    %130 = arith.divf %128, %129 : vector<1x128xf32>
    %131 = arith.addf %12, %130 : vector<1x128xf32>
    %132 = vector.shape_cast %69 : vector<64x128xf32> to vector<8x8x1x128xf32>
    %cst_44 = arith.constant 0.000000e+00 : f32
    %133 = vector.broadcast %cst_44 : f32 to vector<1x8x1x128xf32>
    %134 = tpu.concatenate %133, %132, %133 in 0 : vector<1x8x1x128xf32>, vector<8x8x1x128xf32>, vector<1x8x1x128xf32> -> vector<10x8x1x128xf32>
    %cst_45 = arith.constant 0.000000e+00 : f32
    %135 = vector.broadcast %cst_45 : f32 to vector<10x1x1x128xf32>
    %136 = tpu.concatenate %135, %134, %135 in 1 : vector<10x1x1x128xf32>, vector<10x8x1x128xf32>, vector<10x1x1x128xf32> -> vector<10x10x1x128xf32>
    %137 = vector.shape_cast %124 : vector<64x128xf32> to vector<8x8x1x128xf32>
    %cst_46 = arith.constant 0.000000e+00 : f32
    %138 = vector.broadcast %cst_46 : f32 to vector<1x8x1x128xf32>
    %139 = tpu.concatenate %138, %137, %138 in 0 : vector<1x8x1x128xf32>, vector<8x8x1x128xf32>, vector<1x8x1x128xf32> -> vector<10x8x1x128xf32>
    %cst_47 = arith.constant 0.000000e+00 : f32
    %140 = vector.broadcast %cst_47 : f32 to vector<10x1x1x128xf32>
    %141 = tpu.concatenate %140, %139, %140 in 1 : vector<10x1x1x128xf32>, vector<10x8x1x128xf32>, vector<10x1x1x128xf32> -> vector<10x10x1x128xf32>
    %c0_48 = arith.constant 0 : index
    %c0_49 = arith.constant 0 : index
    %142 = vector.load %arg5[%c0_48, %c0_49] : memref<1152x128xf32, #tpu.memory_space<vmem>>, vector<1152x128xf32>
    %c0_50 = arith.constant 0 : index
    %c0_51 = arith.constant 0 : index
    %143 = vector.load %arg6[%c0_50, %c0_51] : memref<1x128xf32, #tpu.memory_space<vmem>>, vector<1x128xf32>
    %144 = vector.extract_strided_slice %136 {offsets = [0, 0, 0, 0], sizes = [8, 10, 1, 128], strides = [1, 1, 1, 1]} : vector<10x10x1x128xf32> to vector<8x10x1x128xf32>
    %145 = vector.shape_cast %144 : vector<8x10x1x128xf32> to vector<4x2x10x1x128xf32>
    %146 = vector.extract_strided_slice %145 {offsets = [0, 0, 0, 0, 0], sizes = [4, 1, 10, 1, 128], strides = [1, 1, 1, 1, 1]} : vector<4x2x10x1x128xf32> to vector<4x1x10x1x128xf32>
    %147 = vector.shape_cast %146 : vector<4x1x10x1x128xf32> to vector<4x10x1x128xf32>
    %148 = vector.extract_strided_slice %147 {offsets = [0, 0, 0, 0], sizes = [4, 8, 1, 128], strides = [1, 1, 1, 1]} : vector<4x10x1x128xf32> to vector<4x8x1x128xf32>
    %149 = vector.shape_cast %148 : vector<4x8x1x128xf32> to vector<4x4x2x1x128xf32>
    %150 = vector.extract_strided_slice %149 {offsets = [0, 0, 0, 0, 0], sizes = [4, 4, 1, 1, 128], strides = [1, 1, 1, 1, 1]} : vector<4x4x2x1x128xf32> to vector<4x4x1x1x128xf32>
    %151 = vector.shape_cast %150 : vector<4x4x1x1x128xf32> to vector<4x4x1x128xf32>
    %152 = vector.extract_strided_slice %147 {offsets = [0, 1, 0, 0], sizes = [4, 8, 1, 128], strides = [1, 1, 1, 1]} : vector<4x10x1x128xf32> to vector<4x8x1x128xf32>
    %153 = vector.shape_cast %152 : vector<4x8x1x128xf32> to vector<4x4x2x1x128xf32>
    %154 = vector.extract_strided_slice %153 {offsets = [0, 0, 0, 0, 0], sizes = [4, 4, 1, 1, 128], strides = [1, 1, 1, 1, 1]} : vector<4x4x2x1x128xf32> to vector<4x4x1x1x128xf32>
    %155 = vector.shape_cast %154 : vector<4x4x1x1x128xf32> to vector<4x4x1x128xf32>
    %156 = vector.extract_strided_slice %147 {offsets = [0, 2, 0, 0], sizes = [4, 8, 1, 128], strides = [1, 1, 1, 1]} : vector<4x10x1x128xf32> to vector<4x8x1x128xf32>
    %157 = vector.shape_cast %156 : vector<4x8x1x128xf32> to vector<4x4x2x1x128xf32>
    %158 = vector.extract_strided_slice %157 {offsets = [0, 0, 0, 0, 0], sizes = [4, 4, 1, 1, 128], strides = [1, 1, 1, 1, 1]} : vector<4x4x2x1x128xf32> to vector<4x4x1x1x128xf32>
    %159 = vector.shape_cast %158 : vector<4x4x1x1x128xf32> to vector<4x4x1x128xf32>
    %160 = vector.extract_strided_slice %136 {offsets = [1, 0, 0, 0], sizes = [8, 10, 1, 128], strides = [1, 1, 1, 1]} : vector<10x10x1x128xf32> to vector<8x10x1x128xf32>
    %161 = vector.shape_cast %160 : vector<8x10x1x128xf32> to vector<4x2x10x1x128xf32>
    %162 = vector.extract_strided_slice %161 {offsets = [0, 0, 0, 0, 0], sizes = [4, 1, 10, 1, 128], strides = [1, 1, 1, 1, 1]} : vector<4x2x10x1x128xf32> to vector<4x1x10x1x128xf32>
    %163 = vector.shape_cast %162 : vector<4x1x10x1x128xf32> to vector<4x10x1x128xf32>
    %164 = vector.extract_strided_slice %163 {offsets = [0, 0, 0, 0], sizes = [4, 8, 1, 128], strides = [1, 1, 1, 1]} : vector<4x10x1x128xf32> to vector<4x8x1x128xf32>
    %165 = vector.shape_cast %164 : vector<4x8x1x128xf32> to vector<4x4x2x1x128xf32>
    %166 = vector.extract_strided_slice %165 {offsets = [0, 0, 0, 0, 0], sizes = [4, 4, 1, 1, 128], strides = [1, 1, 1, 1, 1]} : vector<4x4x2x1x128xf32> to vector<4x4x1x1x128xf32>
    %167 = vector.shape_cast %166 : vector<4x4x1x1x128xf32> to vector<4x4x1x128xf32>
    %168 = vector.extract_strided_slice %163 {offsets = [0, 1, 0, 0], sizes = [4, 8, 1, 128], strides = [1, 1, 1, 1]} : vector<4x10x1x128xf32> to vector<4x8x1x128xf32>
    %169 = vector.shape_cast %168 : vector<4x8x1x128xf32> to vector<4x4x2x1x128xf32>
    %170 = vector.extract_strided_slice %169 {offsets = [0, 0, 0, 0, 0], sizes = [4, 4, 1, 1, 128], strides = [1, 1, 1, 1, 1]} : vector<4x4x2x1x128xf32> to vector<4x4x1x1x128xf32>
    %171 = vector.shape_cast %170 : vector<4x4x1x1x128xf32> to vector<4x4x1x128xf32>
    %172 = vector.extract_strided_slice %163 {offsets = [0, 2, 0, 0], sizes = [4, 8, 1, 128], strides = [1, 1, 1, 1]} : vector<4x10x1x128xf32> to vector<4x8x1x128xf32>
    %173 = vector.shape_cast %172 : vector<4x8x1x128xf32> to vector<4x4x2x1x128xf32>
    %174 = vector.extract_strided_slice %173 {offsets = [0, 0, 0, 0, 0], sizes = [4, 4, 1, 1, 128], strides = [1, 1, 1, 1, 1]} : vector<4x4x2x1x128xf32> to vector<4x4x1x1x128xf32>
    %175 = vector.shape_cast %174 : vector<4x4x1x1x128xf32> to vector<4x4x1x128xf32>
    %176 = vector.extract_strided_slice %136 {offsets = [2, 0, 0, 0], sizes = [8, 10, 1, 128], strides = [1, 1, 1, 1]} : vector<10x10x1x128xf32> to vector<8x10x1x128xf32>
    %177 = vector.shape_cast %176 : vector<8x10x1x128xf32> to vector<4x2x10x1x128xf32>
    %178 = vector.extract_strided_slice %177 {offsets = [0, 0, 0, 0, 0], sizes = [4, 1, 10, 1, 128], strides = [1, 1, 1, 1, 1]} : vector<4x2x10x1x128xf32> to vector<4x1x10x1x128xf32>
    %179 = vector.shape_cast %178 : vector<4x1x10x1x128xf32> to vector<4x10x1x128xf32>
    %180 = vector.extract_strided_slice %179 {offsets = [0, 0, 0, 0], sizes = [4, 8, 1, 128], strides = [1, 1, 1, 1]} : vector<4x10x1x128xf32> to vector<4x8x1x128xf32>
    %181 = vector.shape_cast %180 : vector<4x8x1x128xf32> to vector<4x4x2x1x128xf32>
    %182 = vector.extract_strided_slice %181 {offsets = [0, 0, 0, 0, 0], sizes = [4, 4, 1, 1, 128], strides = [1, 1, 1, 1, 1]} : vector<4x4x2x1x128xf32> to vector<4x4x1x1x128xf32>
    %183 = vector.shape_cast %182 : vector<4x4x1x1x128xf32> to vector<4x4x1x128xf32>
    %184 = vector.extract_strided_slice %179 {offsets = [0, 1, 0, 0], sizes = [4, 8, 1, 128], strides = [1, 1, 1, 1]} : vector<4x10x1x128xf32> to vector<4x8x1x128xf32>
    %185 = vector.shape_cast %184 : vector<4x8x1x128xf32> to vector<4x4x2x1x128xf32>
    %186 = vector.extract_strided_slice %185 {offsets = [0, 0, 0, 0, 0], sizes = [4, 4, 1, 1, 128], strides = [1, 1, 1, 1, 1]} : vector<4x4x2x1x128xf32> to vector<4x4x1x1x128xf32>
    %187 = vector.shape_cast %186 : vector<4x4x1x1x128xf32> to vector<4x4x1x128xf32>
    %188 = vector.extract_strided_slice %179 {offsets = [0, 2, 0, 0], sizes = [4, 8, 1, 128], strides = [1, 1, 1, 1]} : vector<4x10x1x128xf32> to vector<4x8x1x128xf32>
    %189 = vector.shape_cast %188 : vector<4x8x1x128xf32> to vector<4x4x2x1x128xf32>
    %190 = vector.extract_strided_slice %189 {offsets = [0, 0, 0, 0, 0], sizes = [4, 4, 1, 1, 128], strides = [1, 1, 1, 1, 1]} : vector<4x4x2x1x128xf32> to vector<4x4x1x1x128xf32>
    %191 = vector.shape_cast %190 : vector<4x4x1x1x128xf32> to vector<4x4x1x128xf32>
    %192 = tpu.concatenate %151, %155, %159, %167, %171, %175, %183, %187, %191 in 3 : vector<4x4x1x128xf32>, vector<4x4x1x128xf32>, vector<4x4x1x128xf32>, vector<4x4x1x128xf32>, vector<4x4x1x128xf32>, vector<4x4x1x128xf32>, vector<4x4x1x128xf32>, vector<4x4x1x128xf32>, vector<4x4x1x128xf32> -> vector<4x4x1x1152xf32>
    %193 = vector.shape_cast %192 : vector<4x4x1x1152xf32> to vector<16x1152xf32>
    %cst_52 = arith.constant dense<0.000000e+00> : vector<16x128xf32>
    %194 = tpu.matmul %193, %142, %cst_52 {dimension_numbers = #tpu.dot_dimension_numbers<[1], [0], [0], [1], [0, 0, 1, 1], [], []>} : vector<16x1152xf32>, vector<1152x128xf32>, vector<16x128xf32> -> vector<16x128xf32>
    %195 = vector.broadcast %143 : vector<1x128xf32> to vector<16x128xf32>
    %196 = arith.addf %194, %195 : vector<16x128xf32>
    %cst_53 = arith.constant 0.000000e+00 : f32
    %197 = vector.broadcast %cst_53 : f32 to vector<16x128xf32>
    %198 = arith.maximumf %196, %197 : vector<16x128xf32>
    %199 = vector.extract_strided_slice %141 {offsets = [0, 0, 0, 0], sizes = [8, 10, 1, 128], strides = [1, 1, 1, 1]} : vector<10x10x1x128xf32> to vector<8x10x1x128xf32>
    %200 = vector.shape_cast %199 : vector<8x10x1x128xf32> to vector<4x2x10x1x128xf32>
    %201 = vector.extract_strided_slice %200 {offsets = [0, 0, 0, 0, 0], sizes = [4, 1, 10, 1, 128], strides = [1, 1, 1, 1, 1]} : vector<4x2x10x1x128xf32> to vector<4x1x10x1x128xf32>
    %202 = vector.shape_cast %201 : vector<4x1x10x1x128xf32> to vector<4x10x1x128xf32>
    %203 = vector.extract_strided_slice %202 {offsets = [0, 0, 0, 0], sizes = [4, 8, 1, 128], strides = [1, 1, 1, 1]} : vector<4x10x1x128xf32> to vector<4x8x1x128xf32>
    %204 = vector.shape_cast %203 : vector<4x8x1x128xf32> to vector<4x4x2x1x128xf32>
    %205 = vector.extract_strided_slice %204 {offsets = [0, 0, 0, 0, 0], sizes = [4, 4, 1, 1, 128], strides = [1, 1, 1, 1, 1]} : vector<4x4x2x1x128xf32> to vector<4x4x1x1x128xf32>
    %206 = vector.shape_cast %205 : vector<4x4x1x1x128xf32> to vector<4x4x1x128xf32>
    %207 = vector.extract_strided_slice %202 {offsets = [0, 1, 0, 0], sizes = [4, 8, 1, 128], strides = [1, 1, 1, 1]} : vector<4x10x1x128xf32> to vector<4x8x1x128xf32>
    %208 = vector.shape_cast %207 : vector<4x8x1x128xf32> to vector<4x4x2x1x128xf32>
    %209 = vector.extract_strided_slice %208 {offsets = [0, 0, 0, 0, 0], sizes = [4, 4, 1, 1, 128], strides = [1, 1, 1, 1, 1]} : vector<4x4x2x1x128xf32> to vector<4x4x1x1x128xf32>
    %210 = vector.shape_cast %209 : vector<4x4x1x1x128xf32> to vector<4x4x1x128xf32>
    %211 = vector.extract_strided_slice %202 {offsets = [0, 2, 0, 0], sizes = [4, 8, 1, 128], strides = [1, 1, 1, 1]} : vector<4x10x1x128xf32> to vector<4x8x1x128xf32>
    %212 = vector.shape_cast %211 : vector<4x8x1x128xf32> to vector<4x4x2x1x128xf32>
    %213 = vector.extract_strided_slice %212 {offsets = [0, 0, 0, 0, 0], sizes = [4, 4, 1, 1, 128], strides = [1, 1, 1, 1, 1]} : vector<4x4x2x1x128xf32> to vector<4x4x1x1x128xf32>
    %214 = vector.shape_cast %213 : vector<4x4x1x1x128xf32> to vector<4x4x1x128xf32>
    %215 = vector.extract_strided_slice %141 {offsets = [1, 0, 0, 0], sizes = [8, 10, 1, 128], strides = [1, 1, 1, 1]} : vector<10x10x1x128xf32> to vector<8x10x1x128xf32>
    %216 = vector.shape_cast %215 : vector<8x10x1x128xf32> to vector<4x2x10x1x128xf32>
    %217 = vector.extract_strided_slice %216 {offsets = [0, 0, 0, 0, 0], sizes = [4, 1, 10, 1, 128], strides = [1, 1, 1, 1, 1]} : vector<4x2x10x1x128xf32> to vector<4x1x10x1x128xf32>
    %218 = vector.shape_cast %217 : vector<4x1x10x1x128xf32> to vector<4x10x1x128xf32>
    %219 = vector.extract_strided_slice %218 {offsets = [0, 0, 0, 0], sizes = [4, 8, 1, 128], strides = [1, 1, 1, 1]} : vector<4x10x1x128xf32> to vector<4x8x1x128xf32>
    %220 = vector.shape_cast %219 : vector<4x8x1x128xf32> to vector<4x4x2x1x128xf32>
    %221 = vector.extract_strided_slice %220 {offsets = [0, 0, 0, 0, 0], sizes = [4, 4, 1, 1, 128], strides = [1, 1, 1, 1, 1]} : vector<4x4x2x1x128xf32> to vector<4x4x1x1x128xf32>
    %222 = vector.shape_cast %221 : vector<4x4x1x1x128xf32> to vector<4x4x1x128xf32>
    %223 = vector.extract_strided_slice %218 {offsets = [0, 1, 0, 0], sizes = [4, 8, 1, 128], strides = [1, 1, 1, 1]} : vector<4x10x1x128xf32> to vector<4x8x1x128xf32>
    %224 = vector.shape_cast %223 : vector<4x8x1x128xf32> to vector<4x4x2x1x128xf32>
    %225 = vector.extract_strided_slice %224 {offsets = [0, 0, 0, 0, 0], sizes = [4, 4, 1, 1, 128], strides = [1, 1, 1, 1, 1]} : vector<4x4x2x1x128xf32> to vector<4x4x1x1x128xf32>
    %226 = vector.shape_cast %225 : vector<4x4x1x1x128xf32> to vector<4x4x1x128xf32>
    %227 = vector.extract_strided_slice %218 {offsets = [0, 2, 0, 0], sizes = [4, 8, 1, 128], strides = [1, 1, 1, 1]} : vector<4x10x1x128xf32> to vector<4x8x1x128xf32>
    %228 = vector.shape_cast %227 : vector<4x8x1x128xf32> to vector<4x4x2x1x128xf32>
    %229 = vector.extract_strided_slice %228 {offsets = [0, 0, 0, 0, 0], sizes = [4, 4, 1, 1, 128], strides = [1, 1, 1, 1, 1]} : vector<4x4x2x1x128xf32> to vector<4x4x1x1x128xf32>
    %230 = vector.shape_cast %229 : vector<4x4x1x1x128xf32> to vector<4x4x1x128xf32>
    %231 = vector.extract_strided_slice %141 {offsets = [2, 0, 0, 0], sizes = [8, 10, 1, 128], strides = [1, 1, 1, 1]} : vector<10x10x1x128xf32> to vector<8x10x1x128xf32>
    %232 = vector.shape_cast %231 : vector<8x10x1x128xf32> to vector<4x2x10x1x128xf32>
    %233 = vector.extract_strided_slice %232 {offsets = [0, 0, 0, 0, 0], sizes = [4, 1, 10, 1, 128], strides = [1, 1, 1, 1, 1]} : vector<4x2x10x1x128xf32> to vector<4x1x10x1x128xf32>
    %234 = vector.shape_cast %233 : vector<4x1x10x1x128xf32> to vector<4x10x1x128xf32>
    %235 = vector.extract_strided_slice %234 {offsets = [0, 0, 0, 0], sizes = [4, 8, 1, 128], strides = [1, 1, 1, 1]} : vector<4x10x1x128xf32> to vector<4x8x1x128xf32>
    %236 = vector.shape_cast %235 : vector<4x8x1x128xf32> to vector<4x4x2x1x128xf32>
    %237 = vector.extract_strided_slice %236 {offsets = [0, 0, 0, 0, 0], sizes = [4, 4, 1, 1, 128], strides = [1, 1, 1, 1, 1]} : vector<4x4x2x1x128xf32> to vector<4x4x1x1x128xf32>
    %238 = vector.shape_cast %237 : vector<4x4x1x1x128xf32> to vector<4x4x1x128xf32>
    %239 = vector.extract_strided_slice %234 {offsets = [0, 1, 0, 0], sizes = [4, 8, 1, 128], strides = [1, 1, 1, 1]} : vector<4x10x1x128xf32> to vector<4x8x1x128xf32>
    %240 = vector.shape_cast %239 : vector<4x8x1x128xf32> to vector<4x4x2x1x128xf32>
    %241 = vector.extract_strided_slice %240 {offsets = [0, 0, 0, 0, 0], sizes = [4, 4, 1, 1, 128], strides = [1, 1, 1, 1, 1]} : vector<4x4x2x1x128xf32> to vector<4x4x1x1x128xf32>
    %242 = vector.shape_cast %241 : vector<4x4x1x1x128xf32> to vector<4x4x1x128xf32>
    %243 = vector.extract_strided_slice %234 {offsets = [0, 2, 0, 0], sizes = [4, 8, 1, 128], strides = [1, 1, 1, 1]} : vector<4x10x1x128xf32> to vector<4x8x1x128xf32>
    %244 = vector.shape_cast %243 : vector<4x8x1x128xf32> to vector<4x4x2x1x128xf32>
    %245 = vector.extract_strided_slice %244 {offsets = [0, 0, 0, 0, 0], sizes = [4, 4, 1, 1, 128], strides = [1, 1, 1, 1, 1]} : vector<4x4x2x1x128xf32> to vector<4x4x1x1x128xf32>
    %246 = vector.shape_cast %245 : vector<4x4x1x1x128xf32> to vector<4x4x1x128xf32>
    %247 = tpu.concatenate %206, %210, %214, %222, %226, %230, %238, %242, %246 in 3 : vector<4x4x1x128xf32>, vector<4x4x1x128xf32>, vector<4x4x1x128xf32>, vector<4x4x1x128xf32>, vector<4x4x1x128xf32>, vector<4x4x1x128xf32>, vector<4x4x1x128xf32>, vector<4x4x1x128xf32>, vector<4x4x1x128xf32> -> vector<4x4x1x1152xf32>
    %248 = vector.shape_cast %247 : vector<4x4x1x1152xf32> to vector<16x1152xf32>
    %cst_54 = arith.constant dense<0.000000e+00> : vector<16x128xf32>
    %249 = tpu.matmul %248, %142, %cst_54 {dimension_numbers = #tpu.dot_dimension_numbers<[1], [0], [0], [1], [0, 0, 1, 1], [], []>} : vector<16x1152xf32>, vector<1152x128xf32>, vector<16x128xf32> -> vector<16x128xf32>
    %250 = vector.broadcast %143 : vector<1x128xf32> to vector<16x128xf32>
    %251 = arith.addf %249, %250 : vector<16x128xf32>
    %cst_55 = arith.constant 0.000000e+00 : f32
    %252 = vector.broadcast %cst_55 : f32 to vector<16x128xf32>
    %253 = arith.maximumf %251, %252 : vector<16x128xf32>
    %254 = arith.subf %198, %253 : vector<16x128xf32>
    %255 = math.absf %254 : vector<16x128xf32>
    %cst_56 = arith.constant dense<0.000000e+00> : vector<128xf32>
    %256 = vector.multi_reduction <add>, %255, %cst_56 [0] : vector<16x128xf32> to vector<128xf32>
    %257 = vector.shape_cast %256 : vector<128xf32> to vector<1x128xf32>
    %cst_57 = arith.constant 5.120000e+02 : f32
    %258 = vector.broadcast %cst_57 : f32 to vector<1x128xf32>
    %259 = arith.divf %257, %258 : vector<1x128xf32>
    %260 = arith.addf %131, %259 : vector<1x128xf32>
    %261 = vector.shape_cast %198 : vector<16x128xf32> to vector<4x4x1x128xf32>
    %cst_58 = arith.constant 0.000000e+00 : f32
    %262 = vector.broadcast %cst_58 : f32 to vector<1x4x1x128xf32>
    %263 = tpu.concatenate %262, %261, %262 in 0 : vector<1x4x1x128xf32>, vector<4x4x1x128xf32>, vector<1x4x1x128xf32> -> vector<6x4x1x128xf32>
    %cst_59 = arith.constant 0.000000e+00 : f32
    %264 = vector.broadcast %cst_59 : f32 to vector<6x1x1x128xf32>
    %265 = tpu.concatenate %264, %263, %264 in 1 : vector<6x1x1x128xf32>, vector<6x4x1x128xf32>, vector<6x1x1x128xf32> -> vector<6x6x1x128xf32>
    %266 = vector.shape_cast %253 : vector<16x128xf32> to vector<4x4x1x128xf32>
    %cst_60 = arith.constant 0.000000e+00 : f32
    %267 = vector.broadcast %cst_60 : f32 to vector<1x4x1x128xf32>
    %268 = tpu.concatenate %267, %266, %267 in 0 : vector<1x4x1x128xf32>, vector<4x4x1x128xf32>, vector<1x4x1x128xf32> -> vector<6x4x1x128xf32>
    %cst_61 = arith.constant 0.000000e+00 : f32
    %269 = vector.broadcast %cst_61 : f32 to vector<6x1x1x128xf32>
    %270 = tpu.concatenate %269, %268, %269 in 1 : vector<6x1x1x128xf32>, vector<6x4x1x128xf32>, vector<6x1x1x128xf32> -> vector<6x6x1x128xf32>
    %c0_62 = arith.constant 0 : index
    %c0_63 = arith.constant 0 : index
    %271 = vector.load %arg7[%c0_62, %c0_63] : memref<1152x128xf32, #tpu.memory_space<vmem>>, vector<1152x128xf32>
    %c0_64 = arith.constant 0 : index
    %c0_65 = arith.constant 0 : index
    %272 = vector.load %arg8[%c0_64, %c0_65] : memref<1x128xf32, #tpu.memory_space<vmem>>, vector<1x128xf32>
    %273 = vector.extract_strided_slice %265 {offsets = [0, 0, 0, 0], sizes = [4, 6, 1, 128], strides = [1, 1, 1, 1]} : vector<6x6x1x128xf32> to vector<4x6x1x128xf32>
    %274 = vector.shape_cast %273 : vector<4x6x1x128xf32> to vector<2x2x6x1x128xf32>
    %275 = vector.extract_strided_slice %274 {offsets = [0, 0, 0, 0, 0], sizes = [2, 1, 6, 1, 128], strides = [1, 1, 1, 1, 1]} : vector<2x2x6x1x128xf32> to vector<2x1x6x1x128xf32>
    %276 = vector.shape_cast %275 : vector<2x1x6x1x128xf32> to vector<2x6x1x128xf32>
    %277 = vector.extract_strided_slice %276 {offsets = [0, 0, 0, 0], sizes = [2, 4, 1, 128], strides = [1, 1, 1, 1]} : vector<2x6x1x128xf32> to vector<2x4x1x128xf32>
    %278 = vector.shape_cast %277 : vector<2x4x1x128xf32> to vector<2x2x2x1x128xf32>
    %279 = vector.extract_strided_slice %278 {offsets = [0, 0, 0, 0, 0], sizes = [2, 2, 1, 1, 128], strides = [1, 1, 1, 1, 1]} : vector<2x2x2x1x128xf32> to vector<2x2x1x1x128xf32>
    %280 = vector.shape_cast %279 : vector<2x2x1x1x128xf32> to vector<2x2x1x128xf32>
    %281 = vector.extract_strided_slice %276 {offsets = [0, 1, 0, 0], sizes = [2, 4, 1, 128], strides = [1, 1, 1, 1]} : vector<2x6x1x128xf32> to vector<2x4x1x128xf32>
    %282 = vector.shape_cast %281 : vector<2x4x1x128xf32> to vector<2x2x2x1x128xf32>
    %283 = vector.extract_strided_slice %282 {offsets = [0, 0, 0, 0, 0], sizes = [2, 2, 1, 1, 128], strides = [1, 1, 1, 1, 1]} : vector<2x2x2x1x128xf32> to vector<2x2x1x1x128xf32>
    %284 = vector.shape_cast %283 : vector<2x2x1x1x128xf32> to vector<2x2x1x128xf32>
    %285 = vector.extract_strided_slice %276 {offsets = [0, 2, 0, 0], sizes = [2, 4, 1, 128], strides = [1, 1, 1, 1]} : vector<2x6x1x128xf32> to vector<2x4x1x128xf32>
    %286 = vector.shape_cast %285 : vector<2x4x1x128xf32> to vector<2x2x2x1x128xf32>
    %287 = vector.extract_strided_slice %286 {offsets = [0, 0, 0, 0, 0], sizes = [2, 2, 1, 1, 128], strides = [1, 1, 1, 1, 1]} : vector<2x2x2x1x128xf32> to vector<2x2x1x1x128xf32>
    %288 = vector.shape_cast %287 : vector<2x2x1x1x128xf32> to vector<2x2x1x128xf32>
    %289 = vector.extract_strided_slice %265 {offsets = [1, 0, 0, 0], sizes = [4, 6, 1, 128], strides = [1, 1, 1, 1]} : vector<6x6x1x128xf32> to vector<4x6x1x128xf32>
    %290 = vector.shape_cast %289 : vector<4x6x1x128xf32> to vector<2x2x6x1x128xf32>
    %291 = vector.extract_strided_slice %290 {offsets = [0, 0, 0, 0, 0], sizes = [2, 1, 6, 1, 128], strides = [1, 1, 1, 1, 1]} : vector<2x2x6x1x128xf32> to vector<2x1x6x1x128xf32>
    %292 = vector.shape_cast %291 : vector<2x1x6x1x128xf32> to vector<2x6x1x128xf32>
    %293 = vector.extract_strided_slice %292 {offsets = [0, 0, 0, 0], sizes = [2, 4, 1, 128], strides = [1, 1, 1, 1]} : vector<2x6x1x128xf32> to vector<2x4x1x128xf32>
    %294 = vector.shape_cast %293 : vector<2x4x1x128xf32> to vector<2x2x2x1x128xf32>
    %295 = vector.extract_strided_slice %294 {offsets = [0, 0, 0, 0, 0], sizes = [2, 2, 1, 1, 128], strides = [1, 1, 1, 1, 1]} : vector<2x2x2x1x128xf32> to vector<2x2x1x1x128xf32>
    %296 = vector.shape_cast %295 : vector<2x2x1x1x128xf32> to vector<2x2x1x128xf32>
    %297 = vector.extract_strided_slice %292 {offsets = [0, 1, 0, 0], sizes = [2, 4, 1, 128], strides = [1, 1, 1, 1]} : vector<2x6x1x128xf32> to vector<2x4x1x128xf32>
    %298 = vector.shape_cast %297 : vector<2x4x1x128xf32> to vector<2x2x2x1x128xf32>
    %299 = vector.extract_strided_slice %298 {offsets = [0, 0, 0, 0, 0], sizes = [2, 2, 1, 1, 128], strides = [1, 1, 1, 1, 1]} : vector<2x2x2x1x128xf32> to vector<2x2x1x1x128xf32>
    %300 = vector.shape_cast %299 : vector<2x2x1x1x128xf32> to vector<2x2x1x128xf32>
    %301 = vector.extract_strided_slice %292 {offsets = [0, 2, 0, 0], sizes = [2, 4, 1, 128], strides = [1, 1, 1, 1]} : vector<2x6x1x128xf32> to vector<2x4x1x128xf32>
    %302 = vector.shape_cast %301 : vector<2x4x1x128xf32> to vector<2x2x2x1x128xf32>
    %303 = vector.extract_strided_slice %302 {offsets = [0, 0, 0, 0, 0], sizes = [2, 2, 1, 1, 128], strides = [1, 1, 1, 1, 1]} : vector<2x2x2x1x128xf32> to vector<2x2x1x1x128xf32>
    %304 = vector.shape_cast %303 : vector<2x2x1x1x128xf32> to vector<2x2x1x128xf32>
    %305 = vector.extract_strided_slice %265 {offsets = [2, 0, 0, 0], sizes = [4, 6, 1, 128], strides = [1, 1, 1, 1]} : vector<6x6x1x128xf32> to vector<4x6x1x128xf32>
    %306 = vector.shape_cast %305 : vector<4x6x1x128xf32> to vector<2x2x6x1x128xf32>
    %307 = vector.extract_strided_slice %306 {offsets = [0, 0, 0, 0, 0], sizes = [2, 1, 6, 1, 128], strides = [1, 1, 1, 1, 1]} : vector<2x2x6x1x128xf32> to vector<2x1x6x1x128xf32>
    %308 = vector.shape_cast %307 : vector<2x1x6x1x128xf32> to vector<2x6x1x128xf32>
    %309 = vector.extract_strided_slice %308 {offsets = [0, 0, 0, 0], sizes = [2, 4, 1, 128], strides = [1, 1, 1, 1]} : vector<2x6x1x128xf32> to vector<2x4x1x128xf32>
    %310 = vector.shape_cast %309 : vector<2x4x1x128xf32> to vector<2x2x2x1x128xf32>
    %311 = vector.extract_strided_slice %310 {offsets = [0, 0, 0, 0, 0], sizes = [2, 2, 1, 1, 128], strides = [1, 1, 1, 1, 1]} : vector<2x2x2x1x128xf32> to vector<2x2x1x1x128xf32>
    %312 = vector.shape_cast %311 : vector<2x2x1x1x128xf32> to vector<2x2x1x128xf32>
    %313 = vector.extract_strided_slice %308 {offsets = [0, 1, 0, 0], sizes = [2, 4, 1, 128], strides = [1, 1, 1, 1]} : vector<2x6x1x128xf32> to vector<2x4x1x128xf32>
    %314 = vector.shape_cast %313 : vector<2x4x1x128xf32> to vector<2x2x2x1x128xf32>
    %315 = vector.extract_strided_slice %314 {offsets = [0, 0, 0, 0, 0], sizes = [2, 2, 1, 1, 128], strides = [1, 1, 1, 1, 1]} : vector<2x2x2x1x128xf32> to vector<2x2x1x1x128xf32>
    %316 = vector.shape_cast %315 : vector<2x2x1x1x128xf32> to vector<2x2x1x128xf32>
    %317 = vector.extract_strided_slice %308 {offsets = [0, 2, 0, 0], sizes = [2, 4, 1, 128], strides = [1, 1, 1, 1]} : vector<2x6x1x128xf32> to vector<2x4x1x128xf32>
    %318 = vector.shape_cast %317 : vector<2x4x1x128xf32> to vector<2x2x2x1x128xf32>
    %319 = vector.extract_strided_slice %318 {offsets = [0, 0, 0, 0, 0], sizes = [2, 2, 1, 1, 128], strides = [1, 1, 1, 1, 1]} : vector<2x2x2x1x128xf32> to vector<2x2x1x1x128xf32>
    %320 = vector.shape_cast %319 : vector<2x2x1x1x128xf32> to vector<2x2x1x128xf32>
    %321 = tpu.concatenate %280, %284, %288, %296, %300, %304, %312, %316, %320 in 3 : vector<2x2x1x128xf32>, vector<2x2x1x128xf32>, vector<2x2x1x128xf32>, vector<2x2x1x128xf32>, vector<2x2x1x128xf32>, vector<2x2x1x128xf32>, vector<2x2x1x128xf32>, vector<2x2x1x128xf32>, vector<2x2x1x128xf32> -> vector<2x2x1x1152xf32>
    %322 = vector.shape_cast %321 : vector<2x2x1x1152xf32> to vector<4x1152xf32>
    %cst_66 = arith.constant dense<0.000000e+00> : vector<4x128xf32>
    %323 = tpu.matmul %322, %271, %cst_66 {dimension_numbers = #tpu.dot_dimension_numbers<[1], [0], [0], [1], [0, 0, 1, 1], [], []>} : vector<4x1152xf32>, vector<1152x128xf32>, vector<4x128xf32> -> vector<4x128xf32>
    %324 = vector.broadcast %272 : vector<1x128xf32> to vector<4x128xf32>
    %325 = arith.addf %323, %324 : vector<4x128xf32>
    %cst_67 = arith.constant 0.000000e+00 : f32
    %326 = vector.broadcast %cst_67 : f32 to vector<4x128xf32>
    %327 = arith.maximumf %325, %326 : vector<4x128xf32>
    %328 = vector.extract_strided_slice %270 {offsets = [0, 0, 0, 0], sizes = [4, 6, 1, 128], strides = [1, 1, 1, 1]} : vector<6x6x1x128xf32> to vector<4x6x1x128xf32>
    %329 = vector.shape_cast %328 : vector<4x6x1x128xf32> to vector<2x2x6x1x128xf32>
    %330 = vector.extract_strided_slice %329 {offsets = [0, 0, 0, 0, 0], sizes = [2, 1, 6, 1, 128], strides = [1, 1, 1, 1, 1]} : vector<2x2x6x1x128xf32> to vector<2x1x6x1x128xf32>
    %331 = vector.shape_cast %330 : vector<2x1x6x1x128xf32> to vector<2x6x1x128xf32>
    %332 = vector.extract_strided_slice %331 {offsets = [0, 0, 0, 0], sizes = [2, 4, 1, 128], strides = [1, 1, 1, 1]} : vector<2x6x1x128xf32> to vector<2x4x1x128xf32>
    %333 = vector.shape_cast %332 : vector<2x4x1x128xf32> to vector<2x2x2x1x128xf32>
    %334 = vector.extract_strided_slice %333 {offsets = [0, 0, 0, 0, 0], sizes = [2, 2, 1, 1, 128], strides = [1, 1, 1, 1, 1]} : vector<2x2x2x1x128xf32> to vector<2x2x1x1x128xf32>
    %335 = vector.shape_cast %334 : vector<2x2x1x1x128xf32> to vector<2x2x1x128xf32>
    %336 = vector.extract_strided_slice %331 {offsets = [0, 1, 0, 0], sizes = [2, 4, 1, 128], strides = [1, 1, 1, 1]} : vector<2x6x1x128xf32> to vector<2x4x1x128xf32>
    %337 = vector.shape_cast %336 : vector<2x4x1x128xf32> to vector<2x2x2x1x128xf32>
    %338 = vector.extract_strided_slice %337 {offsets = [0, 0, 0, 0, 0], sizes = [2, 2, 1, 1, 128], strides = [1, 1, 1, 1, 1]} : vector<2x2x2x1x128xf32> to vector<2x2x1x1x128xf32>
    %339 = vector.shape_cast %338 : vector<2x2x1x1x128xf32> to vector<2x2x1x128xf32>
    %340 = vector.extract_strided_slice %331 {offsets = [0, 2, 0, 0], sizes = [2, 4, 1, 128], strides = [1, 1, 1, 1]} : vector<2x6x1x128xf32> to vector<2x4x1x128xf32>
    %341 = vector.shape_cast %340 : vector<2x4x1x128xf32> to vector<2x2x2x1x128xf32>
    %342 = vector.extract_strided_slice %341 {offsets = [0, 0, 0, 0, 0], sizes = [2, 2, 1, 1, 128], strides = [1, 1, 1, 1, 1]} : vector<2x2x2x1x128xf32> to vector<2x2x1x1x128xf32>
    %343 = vector.shape_cast %342 : vector<2x2x1x1x128xf32> to vector<2x2x1x128xf32>
    %344 = vector.extract_strided_slice %270 {offsets = [1, 0, 0, 0], sizes = [4, 6, 1, 128], strides = [1, 1, 1, 1]} : vector<6x6x1x128xf32> to vector<4x6x1x128xf32>
    %345 = vector.shape_cast %344 : vector<4x6x1x128xf32> to vector<2x2x6x1x128xf32>
    %346 = vector.extract_strided_slice %345 {offsets = [0, 0, 0, 0, 0], sizes = [2, 1, 6, 1, 128], strides = [1, 1, 1, 1, 1]} : vector<2x2x6x1x128xf32> to vector<2x1x6x1x128xf32>
    %347 = vector.shape_cast %346 : vector<2x1x6x1x128xf32> to vector<2x6x1x128xf32>
    %348 = vector.extract_strided_slice %347 {offsets = [0, 0, 0, 0], sizes = [2, 4, 1, 128], strides = [1, 1, 1, 1]} : vector<2x6x1x128xf32> to vector<2x4x1x128xf32>
    %349 = vector.shape_cast %348 : vector<2x4x1x128xf32> to vector<2x2x2x1x128xf32>
    %350 = vector.extract_strided_slice %349 {offsets = [0, 0, 0, 0, 0], sizes = [2, 2, 1, 1, 128], strides = [1, 1, 1, 1, 1]} : vector<2x2x2x1x128xf32> to vector<2x2x1x1x128xf32>
    %351 = vector.shape_cast %350 : vector<2x2x1x1x128xf32> to vector<2x2x1x128xf32>
    %352 = vector.extract_strided_slice %347 {offsets = [0, 1, 0, 0], sizes = [2, 4, 1, 128], strides = [1, 1, 1, 1]} : vector<2x6x1x128xf32> to vector<2x4x1x128xf32>
    %353 = vector.shape_cast %352 : vector<2x4x1x128xf32> to vector<2x2x2x1x128xf32>
    %354 = vector.extract_strided_slice %353 {offsets = [0, 0, 0, 0, 0], sizes = [2, 2, 1, 1, 128], strides = [1, 1, 1, 1, 1]} : vector<2x2x2x1x128xf32> to vector<2x2x1x1x128xf32>
    %355 = vector.shape_cast %354 : vector<2x2x1x1x128xf32> to vector<2x2x1x128xf32>
    %356 = vector.extract_strided_slice %347 {offsets = [0, 2, 0, 0], sizes = [2, 4, 1, 128], strides = [1, 1, 1, 1]} : vector<2x6x1x128xf32> to vector<2x4x1x128xf32>
    %357 = vector.shape_cast %356 : vector<2x4x1x128xf32> to vector<2x2x2x1x128xf32>
    %358 = vector.extract_strided_slice %357 {offsets = [0, 0, 0, 0, 0], sizes = [2, 2, 1, 1, 128], strides = [1, 1, 1, 1, 1]} : vector<2x2x2x1x128xf32> to vector<2x2x1x1x128xf32>
    %359 = vector.shape_cast %358 : vector<2x2x1x1x128xf32> to vector<2x2x1x128xf32>
    %360 = vector.extract_strided_slice %270 {offsets = [2, 0, 0, 0], sizes = [4, 6, 1, 128], strides = [1, 1, 1, 1]} : vector<6x6x1x128xf32> to vector<4x6x1x128xf32>
    %361 = vector.shape_cast %360 : vector<4x6x1x128xf32> to vector<2x2x6x1x128xf32>
    %362 = vector.extract_strided_slice %361 {offsets = [0, 0, 0, 0, 0], sizes = [2, 1, 6, 1, 128], strides = [1, 1, 1, 1, 1]} : vector<2x2x6x1x128xf32> to vector<2x1x6x1x128xf32>
    %363 = vector.shape_cast %362 : vector<2x1x6x1x128xf32> to vector<2x6x1x128xf32>
    %364 = vector.extract_strided_slice %363 {offsets = [0, 0, 0, 0], sizes = [2, 4, 1, 128], strides = [1, 1, 1, 1]} : vector<2x6x1x128xf32> to vector<2x4x1x128xf32>
    %365 = vector.shape_cast %364 : vector<2x4x1x128xf32> to vector<2x2x2x1x128xf32>
    %366 = vector.extract_strided_slice %365 {offsets = [0, 0, 0, 0, 0], sizes = [2, 2, 1, 1, 128], strides = [1, 1, 1, 1, 1]} : vector<2x2x2x1x128xf32> to vector<2x2x1x1x128xf32>
    %367 = vector.shape_cast %366 : vector<2x2x1x1x128xf32> to vector<2x2x1x128xf32>
    %368 = vector.extract_strided_slice %363 {offsets = [0, 1, 0, 0], sizes = [2, 4, 1, 128], strides = [1, 1, 1, 1]} : vector<2x6x1x128xf32> to vector<2x4x1x128xf32>
    %369 = vector.shape_cast %368 : vector<2x4x1x128xf32> to vector<2x2x2x1x128xf32>
    %370 = vector.extract_strided_slice %369 {offsets = [0, 0, 0, 0, 0], sizes = [2, 2, 1, 1, 128], strides = [1, 1, 1, 1, 1]} : vector<2x2x2x1x128xf32> to vector<2x2x1x1x128xf32>
    %371 = vector.shape_cast %370 : vector<2x2x1x1x128xf32> to vector<2x2x1x128xf32>
    %372 = vector.extract_strided_slice %363 {offsets = [0, 2, 0, 0], sizes = [2, 4, 1, 128], strides = [1, 1, 1, 1]} : vector<2x6x1x128xf32> to vector<2x4x1x128xf32>
    %373 = vector.shape_cast %372 : vector<2x4x1x128xf32> to vector<2x2x2x1x128xf32>
    %374 = vector.extract_strided_slice %373 {offsets = [0, 0, 0, 0, 0], sizes = [2, 2, 1, 1, 128], strides = [1, 1, 1, 1, 1]} : vector<2x2x2x1x128xf32> to vector<2x2x1x1x128xf32>
    %375 = vector.shape_cast %374 : vector<2x2x1x1x128xf32> to vector<2x2x1x128xf32>
    %376 = tpu.concatenate %335, %339, %343, %351, %355, %359, %367, %371, %375 in 3 : vector<2x2x1x128xf32>, vector<2x2x1x128xf32>, vector<2x2x1x128xf32>, vector<2x2x1x128xf32>, vector<2x2x1x128xf32>, vector<2x2x1x128xf32>, vector<2x2x1x128xf32>, vector<2x2x1x128xf32>, vector<2x2x1x128xf32> -> vector<2x2x1x1152xf32>
    %377 = vector.shape_cast %376 : vector<2x2x1x1152xf32> to vector<4x1152xf32>
    %cst_68 = arith.constant dense<0.000000e+00> : vector<4x128xf32>
    %378 = tpu.matmul %377, %271, %cst_68 {dimension_numbers = #tpu.dot_dimension_numbers<[1], [0], [0], [1], [0, 0, 1, 1], [], []>} : vector<4x1152xf32>, vector<1152x128xf32>, vector<4x128xf32> -> vector<4x128xf32>
    %379 = vector.broadcast %272 : vector<1x128xf32> to vector<4x128xf32>
    %380 = arith.addf %378, %379 : vector<4x128xf32>
    %cst_69 = arith.constant 0.000000e+00 : f32
    %381 = vector.broadcast %cst_69 : f32 to vector<4x128xf32>
    %382 = arith.maximumf %380, %381 : vector<4x128xf32>
    %383 = arith.subf %327, %382 : vector<4x128xf32>
    %384 = math.absf %383 : vector<4x128xf32>
    %cst_70 = arith.constant dense<0.000000e+00> : vector<128xf32>
    %385 = vector.multi_reduction <add>, %384, %cst_70 [0] : vector<4x128xf32> to vector<128xf32>
    %386 = vector.shape_cast %385 : vector<128xf32> to vector<1x128xf32>
    %cst_71 = arith.constant 2.560000e+02 : f32
    %387 = vector.broadcast %cst_71 : f32 to vector<1x128xf32>
    %388 = arith.divf %386, %387 : vector<1x128xf32>
    %389 = arith.addf %260, %388 : vector<1x128xf32>
    %390 = vector.shape_cast %389 : vector<1x128xf32> to vector<1x128xf32>
    %391 = vector.broadcast %390 : vector<1x128xf32> to vector<8x128xf32>
    %c0_72 = arith.constant 0 : index
    %c0_73 = arith.constant 0 : index
    %392 = vector.load %arg9[%c0_72, %c0_73] : memref<8x128xf32, #tpu.memory_space<vmem>>, vector<8x128xf32>
    tpu.vector_store %arg9[%c0_72, %c0_73], %391 {strides = array<i32>} : memref<8x128xf32, #tpu.memory_space<vmem>>, vector<8x128xf32>,
    return
  }
  func.func @transform_0(%arg0: i32) -> (i32, i32, i32, i32, i32) {
    %c0_i32 = arith.constant 0 : i32
    %c0_i32_0 = arith.constant 0 : i32
    %c0_i32_1 = arith.constant 0 : i32
    %c0_i32_2 = arith.constant 0 : i32
    %c0_i32_3 = arith.constant 0 : i32
    return %arg0, %c0_i32, %c0_i32_0, %c0_i32_1, %c0_i32_2 : i32, i32, i32, i32, i32
  }
  func.func @transform_1(%arg0: i32) -> (i32, i32, i32, i32, i32) {
    %c0_i32 = arith.constant 0 : i32
    %c0_i32_0 = arith.constant 0 : i32
    %c0_i32_1 = arith.constant 0 : i32
    %c0_i32_2 = arith.constant 0 : i32
    %c0_i32_3 = arith.constant 0 : i32
    return %arg0, %c0_i32, %c0_i32_0, %c0_i32_1, %c0_i32_2 : i32, i32, i32, i32, i32
  }
  func.func @transform_2(%arg0: i32) -> (i32, i32) {
    %c0_i32 = arith.constant 0 : i32
    %c0_i32_0 = arith.constant 0 : i32
    %c0_i32_1 = arith.constant 0 : i32
    return %c0_i32, %c0_i32_0 : i32, i32
  }
  func.func @transform_3(%arg0: i32) -> (i32, i32) {
    %c0_i32 = arith.constant 0 : i32
    %c0_i32_0 = arith.constant 0 : i32
    %c0_i32_1 = arith.constant 0 : i32
    return %c0_i32, %c0_i32_0 : i32, i32
  }
  func.func @transform_4(%arg0: i32) -> (i32, i32) {
    %c0_i32 = arith.constant 0 : i32
    %c0_i32_0 = arith.constant 0 : i32
    %c0_i32_1 = arith.constant 0 : i32
    return %c0_i32, %c0_i32_0 : i32, i32
  }
  func.func @transform_5(%arg0: i32) -> (i32, i32) {
    %c0_i32 = arith.constant 0 : i32
    %c0_i32_0 = arith.constant 0 : i32
    %c0_i32_1 = arith.constant 0 : i32
    return %c0_i32, %c0_i32_0 : i32, i32
  }
  func.func @transform_6(%arg0: i32) -> (i32, i32) {
    %c0_i32 = arith.constant 0 : i32
    %c0_i32_0 = arith.constant 0 : i32
    %c0_i32_1 = arith.constant 0 : i32
    return %c0_i32, %c0_i32_0 : i32, i32
  }
  func.func @transform_7(%arg0: i32) -> (i32, i32) {
    %c0_i32 = arith.constant 0 : i32
    %c0_i32_0 = arith.constant 0 : i32
    %c0_i32_1 = arith.constant 0 : i32
    return %c0_i32, %c0_i32_0 : i32, i32
  }
  func.func @transform_8(%arg0: i32) -> (i32, i32) {
    %c0_i32 = arith.constant 0 : i32
    %c0_i32_0 = arith.constant 0 : i32
    return %arg0, %c0_i32 : i32, i32
  }
}

</mosaic_0001>

<llo_original>
// kernel: _lambda_.1
$region0: #{_lambda_.1}
  #allocation0 [shape = 'u32[]', space=smem, size = 0x4, offset = 0x4, fixed_abs, tag = 'smem constant byte address 0x4 - core index']
  #allocation1 [shape = 'u32[72,128]{1,0:T(1,128)}', space=vmem, size = 0x9000, scoped, tag = 'internal scratch']
  #allocation2 [shape = 'f32[18,18,1,128]{3,2,1,0:T(1,128)}', space=vmem, size = 0x28800, scoped, tag = 'scratch operand']
  #allocation3 [shape = 'f32[18,18,1,128]{3,2,1,0:T(1,128)}', space=vmem, size = 0x28800, scoped, tag = 'scratch operand']
  %s0 = inlined_call_operand.vmem [shape: f32[2,16,16,1,3], index: 0, kind: input, shape index: {}]
  %s1 = inlined_call_operand.vmem [shape: f32[2,16,16,1,3], index: 1, kind: input, shape index: {}]
  %s2 = inlined_call_operand.hbm [shape: f32[1152,128], index: 2, kind: input, shape index: {}]
  %s3 = inlined_call_operand.vmem [shape: f32[1,128], index: 3, kind: input, shape index: {}]
  %s4 = inlined_call_operand.hbm [shape: f32[1152,128], index: 4, kind: input, shape index: {}]
  %s5 = inlined_call_operand.vmem [shape: f32[1,128], index: 5, kind: input, shape index: {}]
  %s6 = inlined_call_operand.hbm [shape: f32[1152,128], index: 6, kind: input, shape index: {}]
  %s7 = inlined_call_operand.vmem [shape: f32[1,128], index: 7, kind: input, shape index: {}]
  %s8 = inlined_call_operand.vmem [shape: f32[16,128], index: 8, kind: output, shape index: {}]
  %s9 = sld [smem:[#allocation0]]
  $region77: #{_lambda_.1} parent=0
    _
  %s11 = ssub.s32 1, %s9
  %s12 = scalar_select 0, %s11, %s9
  $region1: #{_lambda_.1} parent=0
    #allocation4 [shape = 'u8[589824]{0}', space=vmem, size = 0x90000, scoped, tag = 'input window, operand 2, single buffered']
    #allocation5 [shape = 's32[2]{0}', space=sflag, size = 0x8, scoped, tag = 'scoped memory for _lambda_.1']
    #allocation6 [shape = 'u8[589824]{0}', space=vmem, size = 0x90000, scoped, tag = 'input window, operand 4, single buffered']
    #allocation7 [shape = 's32[1]{0}', space=sflag, size = 0x4, scoped, tag = 'scoped memory for _lambda_.1']
    #allocation8 [shape = 'u8[589824]{0}', space=vmem, size = 0x90000, scoped, tag = 'input window, operand 6, single buffered']
    %13 = vsyncpa [#allocation5], 0
    %14 = vsyncpa [#allocation7], 0
    loop: start=0, step=1, limit=4
    $region2: #{_lambda_.1} parent=1 // loop_pre_header
      _
    $region3: #{_lambda_.1} parent=1 // loop_header
      %s16 = sphi 0, %s20
      %p17 = scmp.ge.s32.totalorder %s16, 4
      %s26 = sphi 0, %s28
      %s29 = sphi 0, %s26
      %s30 = sphi 0, %s29
      %s46 = sphi 0, %s30
      %s52 = sphi 0, %s54
      %s55 = sphi 0, %s52
      %s56 = sphi 0, %s55
      %s72 = sphi 0, %s56
      %s76 = sphi 0, %s76
      %s78 = sphi 0, %s76
      %s79 = sphi 0, %s78
      %s93 = sphi 0, %s79
      %s97 = sphi 0, %s97
      %s99 = sphi 0, %s97
      %s100 = sphi 0, %s99
      %s114 = sphi 0, %s100
      %s118 = sphi 0, %s118
      %s120 = sphi 0, %s118
      %s121 = sphi 0, %s120
      %s135 = sphi 0, %s121
      %s139 = sphi 0, %s139
      %s141 = sphi 0, %s139
      %s142 = sphi 0, %s141
      %s156 = sphi 0, %s142
      %s160 = sphi 0, %s160
      %s162 = sphi 0, %s160
      %s163 = sphi 0, %s162
      %s177 = sphi 0, %s163
      %s181 = sphi 0, %s181
      %s183 = sphi 0, %s181
      %s184 = sphi 0, %s183
      %s198 = sphi 0, %s184
      %s204 = sphi 0, %s206
      %s207 = sphi 0, %s204
      %s208 = sphi 0, %s207
      %s224 = sphi 0, %s208
    $region4: #{_lambda_.1} parent=1 // loop_header_branch
      %19 = sbr.rel (%p17) target = $region8
    $region5: #{_lambda_.1} parent=1 // loop_body
      %s21 = ssub.s32 %s16, 1
      %s22 = ssub.s32 %s16, 2
      %s23 = sadd.s32 %s16, 1
      %s24 = ssub.s32 %s16, %s23
      %p25 = scmp.eq.s32.totalorder %s24, 0
      %s27 = sadd.s32 %s26, 1
      %s28 = scalar_select %p25, %s26, %s27
      %p31 = pneg %p25
      %p32 = scmp.eq.s32.totalorder %s16, 1
      %p33 = por %p31, %p32
      %p34 = scmp.ne.s32.totalorder %s26, %s29
      %p35 = scmp.eq.s32.totalorder %s16, 0
      %p36 = por %p34, %p35
      %p37 = scmp.ne.s32.totalorder %s26, %s29
      %p38 = scmp.eq.s32.totalorder %s21, 1
      %p39 = por %p37, %p38
      %p40 = scmp.ne.s32.totalorder %s29, %s30
      %p41 = scmp.eq.s32.totalorder %s21, 0
      %p42 = por %p40, %p41
      %p43 = scmp.ne.s32.totalorder %s29, %s30
      %p44 = scmp.eq.s32.totalorder %s22, 1
      %p45 = por %p43, %p44
      %p47 = scmp.ne.s32.totalorder %s30, %s46
      %p48 = scmp.eq.s32.totalorder %s22, 0
      %p49 = por %p47, %p48
      %s50 = ssub.s32 %s16, %s23
      %p51 = scmp.eq.s32.totalorder %s50, 0
      %s53 = sadd.s32 %s52, 1
      %s54 = scalar_select %p51, %s52, %s53
      %p57 = pneg %p51
      %p58 = scmp.eq.s32.totalorder %s16, 1
      %p59 = por %p57, %p58
      %p60 = scmp.ne.s32.totalorder %s52, %s55
      %p61 = scmp.eq.s32.totalorder %s16, 0
      %p62 = por %p60, %p61
      %p63 = scmp.ne.s32.totalorder %s52, %s55
      %p64 = scmp.eq.s32.totalorder %s21, 1
      %p65 = por %p63, %p64
      %p66 = scmp.ne.s32.totalorder %s55, %s56
      %p67 = scmp.eq.s32.totalorder %s21, 0
      %p68 = por %p66, %p67
      %p69 = scmp.ne.s32.totalorder %s55, %s56
      %p70 = scmp.eq.s32.totalorder %s22, 1
      %p71 = por %p69, %p70
      %p73 = scmp.ne.s32.totalorder %s56, %s72
      %p74 = scmp.eq.s32.totalorder %s22, 0
      %p75 = por %p73, %p74
      %s77 = sadd.s32 %s76, 1
      %p80 = scmp.eq.s32.totalorder %s16, 1
      %p81 = scmp.ne.s32.totalorder %s76, %s78
      %p82 = scmp.eq.s32.totalorder %s16, 0
      %p83 = por %p81, %p82
      %p84 = scmp.ne.s32.totalorder %s76, %s78
      %p85 = scmp.eq.s32.totalorder %s21, 1
      %p86 = por %p84, %p85
      %p87 = scmp.ne.s32.totalorder %s78, %s79
      %p88 = scmp.eq.s32.totalorder %s21, 0
      %p89 = por %p87, %p88
      %p90 = scmp.ne.s32.totalorder %s78, %s79
      %p91 = scmp.eq.s32.totalorder %s22, 1
      %p92 = por %p90, %p91
      %p94 = scmp.ne.s32.totalorder %s79, %s93
      %p95 = scmp.eq.s32.totalorder %s22, 0
      %p96 = por %p94, %p95
      %s98 = sadd.s32 %s97, 1
      %p101 = scmp.eq.s32.totalorder %s16, 1
      %p102 = scmp.ne.s32.totalorder %s97, %s99
      %p103 = scmp.eq.s32.totalorder %s16, 0
      %p104 = por %p102, %p103
      %p105 = scmp.ne.s32.totalorder %s97, %s99
      %p106 = scmp.eq.s32.totalorder %s21, 1
      %p107 = por %p105, %p106
      %p108 = scmp.ne.s32.totalorder %s99, %s100
      %p109 = scmp.eq.s32.totalorder %s21, 0
      %p110 = por %p108, %p109
      %p111 = scmp.ne.s32.totalorder %s99, %s100
      %p112 = scmp.eq.s32.totalorder %s22, 1
      %p113 = por %p111, %p112
      %p115 = scmp.ne.s32.totalorder %s100, %s114
      %p116 = scmp.eq.s32.totalorder %s22, 0
      %p117 = por %p115, %p116
      %s119 = sadd.s32 %s118, 1
      %p122 = scmp.eq.s32.totalorder %s16, 1
      %p123 = scmp.ne.s32.totalorder %s118, %s120
      %p124 = scmp.eq.s32.totalorder %s16, 0
      %p125 = por %p123, %p124
      %p126 = scmp.ne.s32.totalorder %s118, %s120
      %p127 = scmp.eq.s32.totalorder %s21, 1
      %p128 = por %p126, %p127
      %p129 = scmp.ne.s32.totalorder %s120, %s121
      %p130 = scmp.eq.s32.totalorder %s21, 0
      %p131 = por %p129, %p130
      %p132 = scmp.ne.s32.totalorder %s120, %s121
      %p133 = scmp.eq.s32.totalorder %s22, 1
      %p134 = por %p132, %p133
      %p136 = scmp.ne.s32.totalorder %s121, %s135
      %p137 = scmp.eq.s32.totalorder %s22, 0
      %p138 = por %p136, %p137
      %s140 = sadd.s32 %s139, 1
      %p143 = scmp.eq.s32.totalorder %s16, 1
      %p144 = scmp.ne.s32.totalorder %s139, %s141
      %p145 = scmp.eq.s32.totalorder %s16, 0
      %p146 = por %p144, %p145
      %p147 = scmp.ne.s32.totalorder %s139, %s141
      %p148 = scmp.eq.s32.totalorder %s21, 1
      %p149 = por %p147, %p148
      %p150 = scmp.ne.s32.totalorder %s141, %s142
      %p151 = scmp.eq.s32.totalorder %s21, 0
      %p152 = por %p150, %p151
      %p153 = scmp.ne.s32.totalorder %s141, %s142
      %p154 = scmp.eq.s32.totalorder %s22, 1
      %p155 = por %p153, %p154
      %p157 = scmp.ne.s32.totalorder %s142, %s156
      %p158 = scmp.eq.s32.totalorder %s22, 0
      %p159 = por %p157, %p158
      %s161 = sadd.s32 %s160, 1
      %p164 = scmp.eq.s32.totalorder %s16, 1
      %p165 = scmp.ne.s32.totalorder %s160, %s162
      %p166 = scmp.eq.s32.totalorder %s16, 0
      %p167 = por %p165, %p166
      %p168 = scmp.ne.s32.totalorder %s160, %s162
      %p169 = scmp.eq.s32.totalorder %s21, 1
      %p170 = por %p168, %p169
      %p171 = scmp.ne.s32.totalorder %s162, %s163
      %p172 = scmp.eq.s32.totalorder %s21, 0
      %p173 = por %p171, %p172
      %p174 = scmp.ne.s32.totalorder %s162, %s163
      %p175 = scmp.eq.s32.totalorder %s22, 1
      %p176 = por %p174, %p175
      %p178 = scmp.ne.s32.totalorder %s163, %s177
      %p179 = scmp.eq.s32.totalorder %s22, 0
      %p180 = por %p178, %p179
      %s182 = sadd.s32 %s181, 1
      %p185 = scmp.eq.s32.totalorder %s16, 1
      %p186 = scmp.ne.s32.totalorder %s181, %s183
      %p187 = scmp.eq.s32.totalorder %s16, 0
      %p188 = por %p186, %p187
      %p189 = scmp.ne.s32.totalorder %s181, %s183
      %p190 = scmp.eq.s32.totalorder %s21, 1
      %p191 = por %p189, %p190
      %p192 = scmp.ne.s32.totalorder %s183, %s184
      %p193 = scmp.eq.s32.totalorder %s21, 0
      %p194 = por %p192, %p193
      %p195 = scmp.ne.s32.totalorder %s183, %s184
      %p196 = scmp.eq.s32.totalorder %s22, 1
      %p197 = por %p195, %p196
      %p199 = scmp.ne.s32.totalorder %s184, %s198
      %p200 = scmp.eq.s32.totalorder %s22, 0
      %p201 = por %p199, %p200
      %s202 = ssub.s32 %s16, %s23
      %p203 = scmp.eq.s32.totalorder %s202, 0
      %s205 = sadd.s32 %s204, 1
      %s206 = scalar_select %p203, %s204, %s205
      %p209 = pneg %p203
      %p210 = scmp.eq.s32.totalorder %s16, 1
      %p211 = por %p209, %p210
      %p212 = scmp.ne.s32.totalorder %s204, %s207
      %p213 = scmp.eq.s32.totalorder %s16, 0
      %p214 = por %p212, %p213
      %p215 = scmp.ne.s32.totalorder %s204, %s207
      %p216 = scmp.eq.s32.totalorder %s21, 1
      %p217 = por %p215, %p216
      %p218 = scmp.ne.s32.totalorder %s207, %s208
      %p219 = scmp.eq.s32.totalorder %s21, 0
      %p220 = por %p218, %p219
      %p221 = scmp.ne.s32.totalorder %s207, %s208
      %p222 = scmp.eq.s32.totalorder %s22, 1
      %p223 = por %p221, %p222
      %p225 = scmp.ne.s32.totalorder %s208, %s224
      %p226 = scmp.eq.s32.totalorder %s22, 0
      %p227 = por %p225, %p226
      %p228 = scmp.le.s32.totalorder 1, %s16
      %p229 = scmp.lt.s32.totalorder %s16, 3
      %p230 = pnand %p228, %p229
      %p231 = pneg %p230
      // Predicated region
      $region9: #{_lambda_.1} parent=5 // pred_check
        _
      $region10: #{_lambda_.1} parent=5 // pred_check_branch
        %233 = sbr.rel (%p230) target = $region12
      $region11: #{_lambda_.1} parent=5 // pred_region
        %s234 = ssub.s32 %s16, 1
        // Predicated region
        $region13: #{_lambda_.1} parent=11 // pred_check
          %p235 = pneg %p89
        $region14: #{_lambda_.1} parent=11 // pred_check_branch
          %237 = sbr.rel (%p235) target = $region16
        $region15: #{_lambda_.1} parent=11 // pred_region
          %239 = vsyncadd [#allocation5], 0
          %s240 = sshll.u32 %s2, 4
          %s241 = int_to_ptr.hbm [resolvable:$true] %s240
          %s242 = sshll.u32 [#allocation4], 4
          %s243 = int_to_ptr.vmem [resolvable:$true] %s242
          %248 = dma.hbm_to_vmem [thread:$0]  %s241, 18432, %s243, [#allocation5], 128, 128, 8
        $region16: #{_lambda_.1} parent=11 // pred_fallthru
          _
        // Predicated region
        $region17: #{_lambda_.1} parent=11 // pred_check
          %p249 = pneg %p110
        $region18: #{_lambda_.1} parent=11 // pred_check_branch
          %251 = sbr.rel (%p249) target = $region20
        $region19: #{_lambda_.1} parent=11 // pred_region
          _
        $region20: #{_lambda_.1} parent=11 // pred_fallthru
          _
        // Predicated region
        $region21: #{_lambda_.1} parent=11 // pred_check
          %p252 = pneg %p131
        $region22: #{_lambda_.1} parent=11 // pred_check_branch
          %254 = sbr.rel (%p252) target = $region24
        $region23: #{_lambda_.1} parent=11 // pred_region
          %256 = vsyncadd [#allocation7], 0
          %s257 = sshll.u32 %s4, 4
          %s258 = int_to_ptr.hbm [resolvable:$true] %s257
          %s259 = sshll.u32 [#allocation6], 4
          %s260 = int_to_ptr.vmem [resolvable:$true] %s259
          %265 = dma.hbm_to_vmem [thread:$0]  %s258, 18432, %s260, [#allocation7], 128, 128, 8
        $region24: #{_lambda_.1} parent=11 // pred_fallthru
          _
        // Predicated region
        $region25: #{_lambda_.1} parent=11 // pred_check
          %p266 = pneg %p152
        $region26: #{_lambda_.1} parent=11 // pred_check_branch
          %268 = sbr.rel (%p266) target = $region28
        $region27: #{_lambda_.1} parent=11 // pred_region
          _
        $region28: #{_lambda_.1} parent=11 // pred_fallthru
          _
        // Predicated region
        $region29: #{_lambda_.1} parent=11 // pred_check
          %p269 = pneg %p173
        $region30: #{_lambda_.1} parent=11 // pred_check_branch
          %271 = sbr.rel (%p269) target = $region32
        $region31: #{_lambda_.1} parent=11 // pred_region
          %273 = vsyncadd [#allocation7], 0
          %s274 = sshll.u32 %s6, 4
          %s275 = int_to_ptr.hbm [resolvable:$true] %s274
          %s276 = sshll.u32 [#allocation8], 4
          %s277 = int_to_ptr.vmem [resolvable:$true] %s276
          %282 = dma.hbm_to_vmem [thread:$0]  %s275, 18432, %s277, [#allocation7], 128, 128, 8
        $region32: #{_lambda_.1} parent=11 // pred_fallthru
          _
        // Predicated region
        $region33: #{_lambda_.1} parent=11 // pred_check
          %p283 = pneg %p194
        $region34: #{_lambda_.1} parent=11 // pred_check_branch
          %285 = sbr.rel (%p283) target = $region36
        $region35: #{_lambda_.1} parent=11 // pred_region
          _
        $region36: #{_lambda_.1} parent=11 // pred_fallthru
          _
      $region12: #{_lambda_.1} parent=5 // pred_fallthru
        _
      %p286 = scmp.lt.s32.totalorder %s16, 2
      // Predicated region
      $region37: #{_lambda_.1} parent=5 // pred_check
        %p287 = pneg %p286
      $region38: #{_lambda_.1} parent=5 // pred_check_branch
        %289 = sbr.rel (%p287) target = $region40
      $region39: #{_lambda_.1} parent=5 // pred_region
        // Predicated region
        $region41: #{_lambda_.1} parent=39 // pred_check
          %p290 = pneg %p36
        $region42: #{_lambda_.1} parent=39 // pred_check_branch
          %292 = sbr.rel (%p290) target = $region44
        $region43: #{_lambda_.1} parent=39 // pred_region
          %p293 = scmp.lt.s32.totalorder %s16, 1
          %s294 = scalar_select %p293, %s16, 1
          %s295 = smul.addr %s294, 256
          %s296 = scalar_lea.vmem %s0, %s295
        $region44: #{_lambda_.1} parent=39 // pred_fallthru
          _
        // Predicated region
        $region45: #{_lambda_.1} parent=39 // pred_check
          %p297 = pneg %p62
        $region46: #{_lambda_.1} parent=39 // pred_check_branch
          %299 = sbr.rel (%p297) target = $region48
        $region47: #{_lambda_.1} parent=39 // pred_region
          %p300 = scmp.lt.s32.totalorder %s16, 1
          %s301 = scalar_select %p300, %s16, 1
          %s302 = smul.addr %s301, 256
          %s303 = scalar_lea.vmem %s1, %s302
        $region48: #{_lambda_.1} parent=39 // pred_fallthru
          _
      $region40: #{_lambda_.1} parent=5 // pred_fallthru
        _
      %p304 = scmp.le.s32.totalorder 1, %s16
      %p305 = scmp.lt.s32.totalorder %s16, 3
      %p306 = pnand %p304, %p305
      %p307 = pneg %p306
      // Predicated region
      $region49: #{_lambda_.1} parent=5 // pred_check
        _
      $region50: #{_lambda_.1} parent=5 // pred_check_branch
        %309 = sbr.rel (%p306) target = $region52
      $region51: #{_lambda_.1} parent=5 // pred_region
        %s310 = ssub.s32 %s16, 1
        // Predicated region
        $region53: #{_lambda_.1} parent=51 // pred_check
          %p311 = pneg %p89
        $region54: #{_lambda_.1} parent=51 // pred_check_branch
          %313 = sbr.rel (%p311) target = $region56
        $region55: #{_lambda_.1} parent=51 // pred_region
          %315 = dma.done [#allocation5], 18432
        $region56: #{_lambda_.1} parent=51 // pred_fallthru
          _
        // Predicated region
        $region57: #{_lambda_.1} parent=51 // pred_check
          %p316 = pneg %p131
        $region58: #{_lambda_.1} parent=51 // pred_check_branch
          %318 = sbr.rel (%p316) target = $region60
        $region59: #{_lambda_.1} parent=51 // pred_region
          %320 = dma.done [#allocation7], 18432
        $region60: #{_lambda_.1} parent=51 // pred_fallthru
          _
        // Predicated region
        $region61: #{_lambda_.1} parent=51 // pred_check
          %p321 = pneg %p173
        $region62: #{_lambda_.1} parent=51 // pred_check_branch
          %323 = sbr.rel (%p321) target = $region64
        $region63: #{_lambda_.1} parent=51 // pred_region
          %325 = dma.done [#allocation7], 18432
        $region64: #{_lambda_.1} parent=51 // pred_fallthru
          _
        %p326 = scmp.lt.s32.totalorder %s21, 1
        %s327 = scalar_select %p326, %s21, 1
        %s328 = smul.addr %s327, 256
        %s329 = scalar_lea.vmem %s0, %s328
        %p330 = pneg %p42
        %p331 = pneg %p39
        %p332 = scmp.lt.s32.totalorder %s21, 1
        %s333 = scalar_select %p332, %s21, 1
        %s334 = smul.addr %s333, 256
        %s335 = scalar_lea.vmem %s1, %s334
        %p336 = pneg %p68
        %p337 = pneg %p65
        %p338 = pneg %p89
        %p339 = pneg %p86
        %p340 = pneg %p110
        %p341 = pneg %p107
        %p342 = pneg %p131
        %p343 = pneg %p128
        %p344 = pneg %p152
        %p345 = pneg %p149
        %p346 = pneg %p173
        %p347 = pneg %p170
        %p348 = pneg %p194
        %p349 = pneg %p191
        %p350 = pneg %p220
        %p351 = pneg %p217
        %p352 = scmp.lt.s32.totalorder %s21, 1
        %s353 = scalar_select %p352, %s21, 1
        %s354 = smul.addr %s353, 8
        %s355 = scalar_lea.vmem %s8, %s354
        %p356 = scmp.lt.s32.totalorder %s21, 1
        %s357 = scalar_select %p356, %s21, 1
        %s358 = smul.addr %s357, 256
        %s359 = scalar_lea.vmem %s0, %s358
        %p360 = scmp.lt.s32.totalorder %s21, 1
        %s361 = scalar_select %p360, %s21, 1
        %s362 = smul.addr %s361, 256
        %s363 = scalar_lea.vmem %s1, %s362
        %p364 = scmp.lt.s32.totalorder %s21, 1
        %s365 = scalar_select %p364, %s21, 1
        %s366 = smul.addr %s365, 8
        %s367 = scalar_lea.vmem %s8, %s366
        %368 = vst [vmem:[#allocation2] sm:$0x1] 0.0
        %369 = vst [vmem:[#allocation2 + $0x1] sm:$0x1] 0.0
        %370 = vst [vmem:[#allocation2 + $0x2] sm:$0x1] 0.0
        %371 = vst [vmem:[#allocation2 + $0x3] sm:$0x1] 0.0
        %372 = vst [vmem:[#allocation2 + $0x4] sm:$0x1] 0.0
        %373 = vst [vmem:[#allocation2 + $0x5] sm:$0x1] 0.0
        %374 = vst [vmem:[#allocation2 + $0x6] sm:$0x1] 0.0
        %375 = vst [vmem:[#allocation2 + $0x7] sm:$0x1] 0.0
        %376 = vst [vmem:[#allocation2 + $0x8] sm:$0x1] 0.0
        %377 = vst [vmem:[#allocation2 + $0x9] sm:$0x1] 0.0
        %378 = vst [vmem:[#allocation2 + $0xa] sm:$0x1] 0.0
        %379 = vst [vmem:[#allocation2 + $0xb] sm:$0x1] 0.0
        %380 = vst [vmem:[#allocation2 + $0xc] sm:$0x1] 0.0
        %381 = vst [vmem:[#allocation2 + $0xd] sm:$0x1] 0.0
        %382 = vst [vmem:[#allocation2 + $0xe] sm:$0x1] 0.0
        %383 = vst [vmem:[#allocation2 + $0xf] sm:$0x1] 0.0
        %384 = vst [vmem:[#allocation2 + $0x10] sm:$0x1] 0.0
        %385 = vst [vmem:[#allocation2 + $0x11] sm:$0x1] 0.0
        %386 = vst [vmem:[#allocation2 + $0x12] sm:$0x1] 0.0
        %387 = vst [vmem:[#allocation2 + $0x13] sm:$0x1] 0.0
        %388 = vst [vmem:[#allocation2 + $0x14] sm:$0x1] 0.0
        %389 = vst [vmem:[#allocation2 + $0x15] sm:$0x1] 0.0
        %390 = vst [vmem:[#allocation2 + $0x16] sm:$0x1] 0.0
        %391 = vst [vmem:[#allocation2 + $0x17] sm:$0x1] 0.0
        %392 = vst [vmem:[#allocation2 + $0x18] sm:$0x1] 0.0
        %393 = vst [vmem:[#allocation2 + $0x19] sm:$0x1] 0.0
        %394 = vst [vmem:[#allocation2 + $0x1a] sm:$0x1] 0.0
        %395 = vst [vmem:[#allocation2 + $0x1b] sm:$0x1] 0.0
        %396 = vst [vmem:[#allocation2 + $0x1c] sm:$0x1] 0.0
        %397 = vst [vmem:[#allocation2 + $0x1d] sm:$0x1] 0.0
        %398 = vst [vmem:[#allocation2 + $0x1e] sm:$0x1] 0.0
        %399 = vst [vmem:[#allocation2 + $0x1f] sm:$0x1] 0.0
        %400 = vst [vmem:[#allocation2 + $0x20] sm:$0x1] 0.0
        %401 = vst [vmem:[#allocation2 + $0x21] sm:$0x1] 0.0
        %402 = vst [vmem:[#allocation2 + $0x22] sm:$0x1] 0.0
        %403 = vst [vmem:[#allocation2 + $0x23] sm:$0x1] 0.0
        %404 = vst [vmem:[#allocation2 + $0x24] sm:$0x1] 0.0
        %405 = vst [vmem:[#allocation2 + $0x25] sm:$0x1] 0.0
        %406 = vst [vmem:[#allocation2 + $0x26] sm:$0x1] 0.0
        %407 = vst [vmem:[#allocation2 + $0x27] sm:$0x1] 0.0
        %408 = vst [vmem:[#allocation2 + $0x28] sm:$0x1] 0.0
        %409 = vst [vmem:[#allocation2 + $0x29] sm:$0x1] 0.0
        %410 = vst [vmem:[#allocation2 + $0x2a] sm:$0x1] 0.0
        %411 = vst [vmem:[#allocation2 + $0x2b] sm:$0x1] 0.0
        %412 = vst [vmem:[#allocation2 + $0x2c] sm:$0x1] 0.0
        %413 = vst [vmem:[#allocation2 + $0x2d] sm:$0x1] 0.0
        %414 = vst [vmem:[#allocation2 + $0x2e] sm:$0x1] 0.0
        %415 = vst [vmem:[#allocation2 + $0x2f] sm:$0x1] 0.0
        %416 = vst [vmem:[#allocation2 + $0x30] sm:$0x1] 0.0
        %417 = vst [vmem:[#allocation2 + $0x31] sm:$0x1] 0.0
        %418 = vst [vmem:[#allocation2 + $0x32] sm:$0x1] 0.0
        %419 = vst [vmem:[#allocation2 + $0x33] sm:$0x1] 0.0
        %420 = vst [vmem:[#allocation2 + $0x34] sm:$0x1] 0.0
        %421 = vst [vmem:[#allocation2 + $0x35] sm:$0x1] 0.0
        %422 = vst [vmem:[#allocation2 + $0x36] sm:$0x1] 0.0
        %423 = vst [vmem:[#allocation2 + $0x37] sm:$0x1] 0.0
        %424 = vst [vmem:[#allocation2 + $0x38] sm:$0x1] 0.0
        %425 = vst [vmem:[#allocation2 + $0x39] sm:$0x1] 0.0
        %426 = vst [vmem:[#allocation2 + $0x3a] sm:$0x1] 0.0
        %427 = vst [vmem:[#allocation2 + $0x3b] sm:$0x1] 0.0
        %428 = vst [vmem:[#allocation2 + $0x3c] sm:$0x1] 0.0
        %429 = vst [vmem:[#allocation2 + $0x3d] sm:$0x1] 0.0
        %430 = vst [vmem:[#allocation2 + $0x3e] sm:$0x1] 0.0
        %431 = vst [vmem:[#allocation2 + $0x3f] sm:$0x1] 0.0
        %432 = vst [vmem:[#allocation2 + $0x40] sm:$0x1] 0.0
        %433 = vst [vmem:[#allocation2 + $0x41] sm:$0x1] 0.0
        %434 = vst [vmem:[#allocation2 + $0x42] sm:$0x1] 0.0
        %435 = vst [vmem:[#allocation2 + $0x43] sm:$0x1] 0.0
        %436 = vst [vmem:[#allocation2 + $0x44] sm:$0x1] 0.0
        %437 = vst [vmem:[#allocation2 + $0x45] sm:$0x1] 0.0
        %438 = vst [vmem:[#allocation2 + $0x46] sm:$0x1] 0.0
        %439 = vst [vmem:[#allocation2 + $0x47] sm:$0x1] 0.0
        %440 = vst [vmem:[#allocation2 + $0x48] sm:$0x1] 0.0
        %441 = vst [vmem:[#allocation2 + $0x49] sm:$0x1] 0.0
        %442 = vst [vmem:[#allocation2 + $0x4a] sm:$0x1] 0.0
        %443 = vst [vmem:[#allocation2 + $0x4b] sm:$0x1] 0.0
        %444 = vst [vmem:[#allocation2 + $0x4c] sm:$0x1] 0.0
        %445 = vst [vmem:[#allocation2 + $0x4d] sm:$0x1] 0.0
        %446 = vst [vmem:[#allocation2 + $0x4e] sm:$0x1] 0.0
        %447 = vst [vmem:[#allocation2 + $0x4f] sm:$0x1] 0.0
        %448 = vst [vmem:[#allocation2 + $0x50] sm:$0x1] 0.0
        %449 = vst [vmem:[#allocation2 + $0x51] sm:$0x1] 0.0
        %450 = vst [vmem:[#allocation2 + $0x52] sm:$0x1] 0.0
        %451 = vst [vmem:[#allocation2 + $0x53] sm:$0x1] 0.0
        %452 = vst [vmem:[#allocation2 + $0x54] sm:$0x1] 0.0
        %453 = vst [vmem:[#allocation2 + $0x55] sm:$0x1] 0.0
        %454 = vst [vmem:[#allocation2 + $0x56] sm:$0x1] 0.0
        %455 = vst [vmem:[#allocation2 + $0x57] sm:$0x1] 0.0
        %456 = vst [vmem:[#allocation2 + $0x58] sm:$0x1] 0.0
        %457 = vst [vmem:[#allocation2 + $0x59] sm:$0x1] 0.0
        %458 = vst [vmem:[#allocation2 + $0x5a] sm:$0x1] 0.0
        %459 = vst [vmem:[#allocation2 + $0x5b] sm:$0x1] 0.0
        %460 = vst [vmem:[#allocation2 + $0x5c] sm:$0x1] 0.0
        %461 = vst [vmem:[#allocation2 + $0x5d] sm:$0x1] 0.0
        %462 = vst [vmem:[#allocation2 + $0x5e] sm:$0x1] 0.0
        %463 = vst [vmem:[#allocation2 + $0x5f] sm:$0x1] 0.0
        %464 = vst [vmem:[#allocation2 + $0x60] sm:$0x1] 0.0
        %465 = vst [vmem:[#allocation2 + $0x61] sm:$0x1] 0.0
        %466 = vst [vmem:[#allocation2 + $0x62] sm:$0x1] 0.0
        %467 = vst [vmem:[#allocation2 + $0x63] sm:$0x1] 0.0
        %468 = vst [vmem:[#allocation2 + $0x64] sm:$0x1] 0.0
        %469 = vst [vmem:[#allocation2 + $0x65] sm:$0x1] 0.0
        %470 = vst [vmem:[#allocation2 + $0x66] sm:$0x1] 0.0
        %471 = vst [vmem:[#allocation2 + $0x67] sm:$0x1] 0.0
        %472 = vst [vmem:[#allocation2 + $0x68] sm:$0x1] 0.0
        %473 = vst [vmem:[#allocation2 + $0x69] sm:$0x1] 0.0
        %474 = vst [vmem:[#allocation2 + $0x6a] sm:$0x1] 0.0
        %475 = vst [vmem:[#allocation2 + $0x6b] sm:$0x1] 0.0
        %476 = vst [vmem:[#allocation2 + $0x6c] sm:$0x1] 0.0
        %477 = vst [vmem:[#allocation2 + $0x6d] sm:$0x1] 0.0
        %478 = vst [vmem:[#allocation2 + $0x6e] sm:$0x1] 0.0
        %479 = vst [vmem:[#allocation2 + $0x6f] sm:$0x1] 0.0
        %480 = vst [vmem:[#allocation2 + $0x70] sm:$0x1] 0.0
        %481 = vst [vmem:[#allocation2 + $0x71] sm:$0x1] 0.0
        %482 = vst [vmem:[#allocation2 + $0x72] sm:$0x1] 0.0
        %483 = vst [vmem:[#allocation2 + $0x73] sm:$0x1] 0.0
        %484 = vst [vmem:[#allocation2 + $0x74] sm:$0x1] 0.0
        %485 = vst [vmem:[#allocation2 + $0x75] sm:$0x1] 0.0
        %486 = vst [vmem:[#allocation2 + $0x76] sm:$0x1] 0.0
        %487 = vst [vmem:[#allocation2 + $0x77] sm:$0x1] 0.0
        %488 = vst [vmem:[#allocation2 + $0x78] sm:$0x1] 0.0
        %489 = vst [vmem:[#allocation2 + $0x79] sm:$0x1] 0.0
        %490 = vst [vmem:[#allocation2 + $0x7a] sm:$0x1] 0.0
        %491 = vst [vmem:[#allocation2 + $0x7b] sm:$0x1] 0.0
        %492 = vst [vmem:[#allocation2 + $0x7c] sm:$0x1] 0.0
        %493 = vst [vmem:[#allocation2 + $0x7d] sm:$0x1] 0.0
        %494 = vst [vmem:[#allocation2 + $0x7e] sm:$0x1] 0.0
        %495 = vst [vmem:[#allocation2 + $0x7f] sm:$0x1] 0.0
        %496 = vst [vmem:[#allocation2 + $0x80] sm:$0x1] 0.0
        %497 = vst [vmem:[#allocation2 + $0x81] sm:$0x1] 0.0
        %498 = vst [vmem:[#allocation2 + $0x82] sm:$0x1] 0.0
        %499 = vst [vmem:[#allocation2 + $0x83] sm:$0x1] 0.0
        %500 = vst [vmem:[#allocation2 + $0x84] sm:$0x1] 0.0
        %501 = vst [vmem:[#allocation2 + $0x85] sm:$0x1] 0.0
        %502 = vst [vmem:[#allocation2 + $0x86] sm:$0x1] 0.0
        %503 = vst [vmem:[#allocation2 + $0x87] sm:$0x1] 0.0
        %504 = vst [vmem:[#allocation2 + $0x88] sm:$0x1] 0.0
        %505 = vst [vmem:[#allocation2 + $0x89] sm:$0x1] 0.0
        %506 = vst [vmem:[#allocation2 + $0x8a] sm:$0x1] 0.0
        %507 = vst [vmem:[#allocation2 + $0x8b] sm:$0x1] 0.0
        %508 = vst [vmem:[#allocation2 + $0x8c] sm:$0x1] 0.0
        %509 = vst [vmem:[#allocation2 + $0x8d] sm:$0x1] 0.0
        %510 = vst [vmem:[#allocation2 + $0x8e] sm:$0x1] 0.0
        %511 = vst [vmem:[#allocation2 + $0x8f] sm:$0x1] 0.0
        %512 = vst [vmem:[#allocation2 + $0x90] sm:$0x1] 0.0
        %513 = vst [vmem:[#allocation2 + $0x91] sm:$0x1] 0.0
        %514 = vst [vmem:[#allocation2 + $0x92] sm:$0x1] 0.0
        %515 = vst [vmem:[#allocation2 + $0x93] sm:$0x1] 0.0
        %516 = vst [vmem:[#allocation2 + $0x94] sm:$0x1] 0.0
        %517 = vst [vmem:[#allocation2 + $0x95] sm:$0x1] 0.0
        %518 = vst [vmem:[#allocation2 + $0x96] sm:$0x1] 0.0
        %519 = vst [vmem:[#allocation2 + $0x97] sm:$0x1] 0.0
        %520 = vst [vmem:[#allocation2 + $0x98] sm:$0x1] 0.0
        %521 = vst [vmem:[#allocation2 + $0x99] sm:$0x1] 0.0
        %522 = vst [vmem:[#allocation2 + $0x9a] sm:$0x1] 0.0
        %523 = vst [vmem:[#allocation2 + $0x9b] sm:$0x1] 0.0
        %524 = vst [vmem:[#allocation2 + $0x9c] sm:$0x1] 0.0
        %525 = vst [vmem:[#allocation2 + $0x9d] sm:$0x1] 0.0
        %526 = vst [vmem:[#allocation2 + $0x9e] sm:$0x1] 0.0
        %527 = vst [vmem:[#allocation2 + $0x9f] sm:$0x1] 0.0
        %528 = vst [vmem:[#allocation2 + $0xa0] sm:$0x1] 0.0
        %529 = vst [vmem:[#allocation2 + $0xa1] sm:$0x1] 0.0
        %530 = vst [vmem:[#allocation2 + $0xa2] sm:$0x1] 0.0
        %531 = vst [vmem:[#allocation2 + $0xa3] sm:$0x1] 0.0
        %532 = vst [vmem:[#allocation2 + $0xa4] sm:$0x1] 0.0
        %533 = vst [vmem:[#allocation2 + $0xa5] sm:$0x1] 0.0
        %534 = vst [vmem:[#allocation2 + $0xa6] sm:$0x1] 0.0
        %535 = vst [vmem:[#allocation2 + $0xa7] sm:$0x1] 0.0
        %536 = vst [vmem:[#allocation2 + $0xa8] sm:$0x1] 0.0
        %537 = vst [vmem:[#allocation2 + $0xa9] sm:$0x1] 0.0
        %538 = vst [vmem:[#allocation2 + $0xaa] sm:$0x1] 0.0
        %539 = vst [vmem:[#allocation2 + $0xab] sm:$0x1] 0.0
        %540 = vst [vmem:[#allocation2 + $0xac] sm:$0x1] 0.0
        %541 = vst [vmem:[#allocation2 + $0xad] sm:$0x1] 0.0
        %542 = vst [vmem:[#allocation2 + $0xae] sm:$0x1] 0.0
        %543 = vst [vmem:[#allocation2 + $0xaf] sm:$0x1] 0.0
        %544 = vst [vmem:[#allocation2 + $0xb0] sm:$0x1] 0.0
        %545 = vst [vmem:[#allocation2 + $0xb1] sm:$0x1] 0.0
        %546 = vst [vmem:[#allocation2 + $0xb2] sm:$0x1] 0.0
        %547 = vst [vmem:[#allocation2 + $0xb3] sm:$0x1] 0.0
        %548 = vst [vmem:[#allocation2 + $0xb4] sm:$0x1] 0.0
        %549 = vst [vmem:[#allocation2 + $0xb5] sm:$0x1] 0.0
        %550 = vst [vmem:[#allocation2 + $0xb6] sm:$0x1] 0.0
        %551 = vst [vmem:[#allocation2 + $0xb7] sm:$0x1] 0.0
        %552 = vst [vmem:[#allocation2 + $0xb8] sm:$0x1] 0.0
        %553 = vst [vmem:[#allocation2 + $0xb9] sm:$0x1] 0.0
        %554 = vst [vmem:[#allocation2 + $0xba] sm:$0x1] 0.0
        %555 = vst [vmem:[#allocation2 + $0xbb] sm:$0x1] 0.0
        %556 = vst [vmem:[#allocation2 + $0xbc] sm:$0x1] 0.0
        %557 = vst [vmem:[#allocation2 + $0xbd] sm:$0x1] 0.0
        %558 = vst [vmem:[#allocation2 + $0xbe] sm:$0x1] 0.0
        %559 = vst [vmem:[#allocation2 + $0xbf] sm:$0x1] 0.0
        %560 = vst [vmem:[#allocation2 + $0xc0] sm:$0x1] 0.0
        %561 = vst [vmem:[#allocation2 + $0xc1] sm:$0x1] 0.0
        %562 = vst [vmem:[#allocation2 + $0xc2] sm:$0x1] 0.0
        %563 = vst [vmem:[#allocation2 + $0xc3] sm:$0x1] 0.0
        %564 = vst [vmem:[#allocation2 + $0xc4] sm:$0x1] 0.0
        %565 = vst [vmem:[#allocation2 + $0xc5] sm:$0x1] 0.0
        %566 = vst [vmem:[#allocation2 + $0xc6] sm:$0x1] 0.0
        %567 = vst [vmem:[#allocation2 + $0xc7] sm:$0x1] 0.0
        %568 = vst [vmem:[#allocation2 + $0xc8] sm:$0x1] 0.0
        %569 = vst [vmem:[#allocation2 + $0xc9] sm:$0x1] 0.0
        %570 = vst [vmem:[#allocation2 + $0xca] sm:$0x1] 0.0
        %571 = vst [vmem:[#allocation2 + $0xcb] sm:$0x1] 0.0
        %572 = vst [vmem:[#allocation2 + $0xcc] sm:$0x1] 0.0
        %573 = vst [vmem:[#allocation2 + $0xcd] sm:$0x1] 0.0
        %574 = vst [vmem:[#allocation2 + $0xce] sm:$0x1] 0.0
        %575 = vst [vmem:[#allocation2 + $0xcf] sm:$0x1] 0.0
        %576 = vst [vmem:[#allocation2 + $0xd0] sm:$0x1] 0.0
        %577 = vst [vmem:[#allocation2 + $0xd1] sm:$0x1] 0.0
        %578 = vst [vmem:[#allocation2 + $0xd2] sm:$0x1] 0.0
        %579 = vst [vmem:[#allocation2 + $0xd3] sm:$0x1] 0.0
        %580 = vst [vmem:[#allocation2 + $0xd4] sm:$0x1] 0.0
        %581 = vst [vmem:[#allocation2 + $0xd5] sm:$0x1] 0.0
        %582 = vst [vmem:[#allocation2 + $0xd6] sm:$0x1] 0.0
        %583 = vst [vmem:[#allocation2 + $0xd7] sm:$0x1] 0.0
        %584 = vst [vmem:[#allocation2 + $0xd8] sm:$0x1] 0.0
        %585 = vst [vmem:[#allocation2 + $0xd9] sm:$0x1] 0.0
        %586 = vst [vmem:[#allocation2 + $0xda] sm:$0x1] 0.0
        %587 = vst [vmem:[#allocation2 + $0xdb] sm:$0x1] 0.0
        %588 = vst [vmem:[#allocation2 + $0xdc] sm:$0x1] 0.0
        %589 = vst [vmem:[#allocation2 + $0xdd] sm:$0x1] 0.0
        %590 = vst [vmem:[#allocation2 + $0xde] sm:$0x1] 0.0
        %591 = vst [vmem:[#allocation2 + $0xdf] sm:$0x1] 0.0
        %592 = vst [vmem:[#allocation2 + $0xe0] sm:$0x1] 0.0
        %593 = vst [vmem:[#allocation2 + $0xe1] sm:$0x1] 0.0
        %594 = vst [vmem:[#allocation2 + $0xe2] sm:$0x1] 0.0
        %595 = vst [vmem:[#allocation2 + $0xe3] sm:$0x1] 0.0
        %596 = vst [vmem:[#allocation2 + $0xe4] sm:$0x1] 0.0
        %597 = vst [vmem:[#allocation2 + $0xe5] sm:$0x1] 0.0
        %598 = vst [vmem:[#allocation2 + $0xe6] sm:$0x1] 0.0
        %599 = vst [vmem:[#allocation2 + $0xe7] sm:$0x1] 0.0
        %600 = vst [vmem:[#allocation2 + $0xe8] sm:$0x1] 0.0
        %601 = vst [vmem:[#allocation2 + $0xe9] sm:$0x1] 0.0
        %602 = vst [vmem:[#allocation2 + $0xea] sm:$0x1] 0.0
        %603 = vst [vmem:[#allocation2 + $0xeb] sm:$0x1] 0.0
        %604 = vst [vmem:[#allocation2 + $0xec] sm:$0x1] 0.0
        %605 = vst [vmem:[#allocation2 + $0xed] sm:$0x1] 0.0
        %606 = vst [vmem:[#allocation2 + $0xee] sm:$0x1] 0.0
        %607 = vst [vmem:[#allocation2 + $0xef] sm:$0x1] 0.0
        %608 = vst [vmem:[#allocation2 + $0xf0] sm:$0x1] 0.0
        %609 = vst [vmem:[#allocation2 + $0xf1] sm:$0x1] 0.0
        %610 = vst [vmem:[#allocation2 + $0xf2] sm:$0x1] 0.0
        %611 = vst [vmem:[#allocation2 + $0xf3] sm:$0x1] 0.0
        %612 = vst [vmem:[#allocation2 + $0xf4] sm:$0x1] 0.0
        %613 = vst [vmem:[#allocation2 + $0xf5] sm:$0x1] 0.0
        %614 = vst [vmem:[#allocation2 + $0xf6] sm:$0x1] 0.0
        %615 = vst [vmem:[#allocation2 + $0xf7] sm:$0x1] 0.0
        %616 = vst [vmem:[#allocation2 + $0xf8] sm:$0x1] 0.0
        %617 = vst [vmem:[#allocation2 + $0xf9] sm:$0x1] 0.0
        %618 = vst [vmem:[#allocation2 + $0xfa] sm:$0x1] 0.0
        %619 = vst [vmem:[#allocation2 + $0xfb] sm:$0x1] 0.0
        %620 = vst [vmem:[#allocation2 + $0xfc] sm:$0x1] 0.0
        %621 = vst [vmem:[#allocation2 + $0xfd] sm:$0x1] 0.0
        %622 = vst [vmem:[#allocation2 + $0xfe] sm:$0x1] 0.0
        %623 = vst [vmem:[#allocation2 + $0xff] sm:$0x1] 0.0
        %624 = vst [vmem:[#allocation2 + $0x100] sm:$0x1] 0.0
        %625 = vst [vmem:[#allocation2 + $0x101] sm:$0x1] 0.0
        %626 = vst [vmem:[#allocation2 + $0x102] sm:$0x1] 0.0
        %627 = vst [vmem:[#allocation2 + $0x103] sm:$0x1] 0.0
        %628 = vst [vmem:[#allocation2 + $0x104] sm:$0x1] 0.0
        %629 = vst [vmem:[#allocation2 + $0x105] sm:$0x1] 0.0
        %630 = vst [vmem:[#allocation2 + $0x106] sm:$0x1] 0.0
        %631 = vst [vmem:[#allocation2 + $0x107] sm:$0x1] 0.0
        %632 = vst [vmem:[#allocation2 + $0x108] sm:$0x1] 0.0
        %633 = vst [vmem:[#allocation2 + $0x109] sm:$0x1] 0.0
        %634 = vst [vmem:[#allocation2 + $0x10a] sm:$0x1] 0.0
        %635 = vst [vmem:[#allocation2 + $0x10b] sm:$0x1] 0.0
        %636 = vst [vmem:[#allocation2 + $0x10c] sm:$0x1] 0.0
        %637 = vst [vmem:[#allocation2 + $0x10d] sm:$0x1] 0.0
        %638 = vst [vmem:[#allocation2 + $0x10e] sm:$0x1] 0.0
        %639 = vst [vmem:[#allocation2 + $0x10f] sm:$0x1] 0.0
        %640 = vst [vmem:[#allocation2 + $0x110] sm:$0x1] 0.0
        %641 = vst [vmem:[#allocation2 + $0x111] sm:$0x1] 0.0
        %642 = vst [vmem:[#allocation2 + $0x112] sm:$0x1] 0.0
        %643 = vst [vmem:[#allocation2 + $0x113] sm:$0x1] 0.0
        %644 = vst [vmem:[#allocation2 + $0x114] sm:$0x1] 0.0
        %645 = vst [vmem:[#allocation2 + $0x115] sm:$0x1] 0.0
        %646 = vst [vmem:[#allocation2 + $0x116] sm:$0x1] 0.0
        %647 = vst [vmem:[#allocation2 + $0x117] sm:$0x1] 0.0
        %648 = vst [vmem:[#allocation2 + $0x118] sm:$0x1] 0.0
        %649 = vst [vmem:[#allocation2 + $0x119] sm:$0x1] 0.0
        %650 = vst [vmem:[#allocation2 + $0x11a] sm:$0x1] 0.0
        %651 = vst [vmem:[#allocation2 + $0x11b] sm:$0x1] 0.0
        %652 = vst [vmem:[#allocation2 + $0x11c] sm:$0x1] 0.0
        %653 = vst [vmem:[#allocation2 + $0x11d] sm:$0x1] 0.0
        %654 = vst [vmem:[#allocation2 + $0x11e] sm:$0x1] 0.0
        %655 = vst [vmem:[#allocation2 + $0x11f] sm:$0x1] 0.0
        %656 = vst [vmem:[#allocation2 + $0x120] sm:$0x1] 0.0
        %657 = vst [vmem:[#allocation2 + $0x121] sm:$0x1] 0.0
        %658 = vst [vmem:[#allocation2 + $0x122] sm:$0x1] 0.0
        %659 = vst [vmem:[#allocation2 + $0x123] sm:$0x1] 0.0
        %660 = vst [vmem:[#allocation2 + $0x124] sm:$0x1] 0.0
        %661 = vst [vmem:[#allocation2 + $0x125] sm:$0x1] 0.0
        %662 = vst [vmem:[#allocation2 + $0x126] sm:$0x1] 0.0
        %663 = vst [vmem:[#allocation2 + $0x127] sm:$0x1] 0.0
        %664 = vst [vmem:[#allocation2 + $0x128] sm:$0x1] 0.0
        %665 = vst [vmem:[#allocation2 + $0x129] sm:$0x1] 0.0
        %666 = vst [vmem:[#allocation2 + $0x12a] sm:$0x1] 0.0
        %667 = vst [vmem:[#allocation2 + $0x12b] sm:$0x1] 0.0
        %668 = vst [vmem:[#allocation2 + $0x12c] sm:$0x1] 0.0
        %669 = vst [vmem:[#allocation2 + $0x12d] sm:$0x1] 0.0
        %670 = vst [vmem:[#allocation2 + $0x12e] sm:$0x1] 0.0
        %671 = vst [vmem:[#allocation2 + $0x12f] sm:$0x1] 0.0
        %672 = vst [vmem:[#allocation2 + $0x130] sm:$0x1] 0.0
        %673 = vst [vmem:[#allocation2 + $0x131] sm:$0x1] 0.0
        %674 = vst [vmem:[#allocation2 + $0x132] sm:$0x1] 0.0
        %675 = vst [vmem:[#allocation2 + $0x133] sm:$0x1] 0.0
        %676 = vst [vmem:[#allocation2 + $0x134] sm:$0x1] 0.0
        %677 = vst [vmem:[#allocation2 + $0x135] sm:$0x1] 0.0
        %678 = vst [vmem:[#allocation2 + $0x136] sm:$0x1] 0.0
        %679 = vst [vmem:[#allocation2 + $0x137] sm:$0x1] 0.0
        %680 = vst [vmem:[#allocation2 + $0x138] sm:$0x1] 0.0
        %681 = vst [vmem:[#allocation2 + $0x139] sm:$0x1] 0.0
        %682 = vst [vmem:[#allocation2 + $0x13a] sm:$0x1] 0.0
        %683 = vst [vmem:[#allocation2 + $0x13b] sm:$0x1] 0.0
        %684 = vst [vmem:[#allocation2 + $0x13c] sm:$0x1] 0.0
        %685 = vst [vmem:[#allocation2 + $0x13d] sm:$0x1] 0.0
        %686 = vst [vmem:[#allocation2 + $0x13e] sm:$0x1] 0.0
        %687 = vst [vmem:[#allocation2 + $0x13f] sm:$0x1] 0.0
        %688 = vst [vmem:[#allocation2 + $0x140] sm:$0x1] 0.0
        %689 = vst [vmem:[#allocation2 + $0x141] sm:$0x1] 0.0
        %690 = vst [vmem:[#allocation2 + $0x142] sm:$0x1] 0.0
        %691 = vst [vmem:[#allocation2 + $0x143] sm:$0x1] 0.0
        %692 = vst [vmem:[#allocation3] sm:$0x1] 0.0
        %693 = vst [vmem:[#allocation3 + $0x1] sm:$0x1] 0.0
        %694 = vst [vmem:[#allocation3 + $0x2] sm:$0x1] 0.0
        %695 = vst [vmem:[#allocation3 + $0x3] sm:$0x1] 0.0
        %696 = vst [vmem:[#allocation3 + $0x4] sm:$0x1] 0.0
        %697 = vst [vmem:[#allocation3 + $0x5] sm:$0x1] 0.0
        %698 = vst [vmem:[#allocation3 + $0x6] sm:$0x1] 0.0
        %699 = vst [vmem:[#allocation3 + $0x7] sm:$0x1] 0.0
        %700 = vst [vmem:[#allocation3 + $0x8] sm:$0x1] 0.0
        %701 = vst [vmem:[#allocation3 + $0x9] sm:$0x1] 0.0
        %702 = vst [vmem:[#allocation3 + $0xa] sm:$0x1] 0.0
        %703 = vst [vmem:[#allocation3 + $0xb] sm:$0x1] 0.0
        %704 = vst [vmem:[#allocation3 + $0xc] sm:$0x1] 0.0
        %705 = vst [vmem:[#allocation3 + $0xd] sm:$0x1] 0.0
        %706 = vst [vmem:[#allocation3 + $0xe] sm:$0x1] 0.0
        %707 = vst [vmem:[#allocation3 + $0xf] sm:$0x1] 0.0
        %708 = vst [vmem:[#allocation3 + $0x10] sm:$0x1] 0.0
        %709 = vst [vmem:[#allocation3 + $0x11] sm:$0x1] 0.0
        %710 = vst [vmem:[#allocation3 + $0x12] sm:$0x1] 0.0
        %711 = vst [vmem:[#allocation3 + $0x13] sm:$0x1] 0.0
        %712 = vst [vmem:[#allocation3 + $0x14] sm:$0x1] 0.0
        %713 = vst [vmem:[#allocation3 + $0x15] sm:$0x1] 0.0
        %714 = vst [vmem:[#allocation3 + $0x16] sm:$0x1] 0.0
        %715 = vst [vmem:[#allocation3 + $0x17] sm:$0x1] 0.0
        %716 = vst [vmem:[#allocation3 + $0x18] sm:$0x1] 0.0
        %717 = vst [vmem:[#allocation3 + $0x19] sm:$0x1] 0.0
        %718 = vst [vmem:[#allocation3 + $0x1a] sm:$0x1] 0.0
        %719 = vst [vmem:[#allocation3 + $0x1b] sm:$0x1] 0.0
        %720 = vst [vmem:[#allocation3 + $0x1c] sm:$0x1] 0.0
        %721 = vst [vmem:[#allocation3 + $0x1d] sm:$0x1] 0.0
        %722 = vst [vmem:[#allocation3 + $0x1e] sm:$0x1] 0.0
        %723 = vst [vmem:[#allocation3 + $0x1f] sm:$0x1] 0.0
        %724 = vst [vmem:[#allocation3 + $0x20] sm:$0x1] 0.0
        %725 = vst [vmem:[#allocation3 + $0x21] sm:$0x1] 0.0
        %726 = vst [vmem:[#allocation3 + $0x22] sm:$0x1] 0.0
        %727 = vst [vmem:[#allocation3 + $0x23] sm:$0x1] 0.0
        %728 = vst [vmem:[#allocation3 + $0x24] sm:$0x1] 0.0
        %729 = vst [vmem:[#allocation3 + $0x25] sm:$0x1] 0.0
        %730 = vst [vmem:[#allocation3 + $0x26] sm:$0x1] 0.0
        %731 = vst [vmem:[#allocation3 + $0x27] sm:$0x1] 0.0
        %732 = vst [vmem:[#allocation3 + $0x28] sm:$0x1] 0.0
        %733 = vst [vmem:[#allocation3 + $0x29] sm:$0x1] 0.0
        %734 = vst [vmem:[#allocation3 + $0x2a] sm:$0x1] 0.0
        %735 = vst [vmem:[#allocation3 + $0x2b] sm:$0x1] 0.0
        %736 = vst [vmem:[#allocation3 + $0x2c] sm:$0x1] 0.0
        %737 = vst [vmem:[#allocation3 + $0x2d] sm:$0x1] 0.0
        %738 = vst [vmem:[#allocation3 + $0x2e] sm:$0x1] 0.0
        %739 = vst [vmem:[#allocation3 + $0x2f] sm:$0x1] 0.0
        %740 = vst [vmem:[#allocation3 + $0x30] sm:$0x1] 0.0
        %741 = vst [vmem:[#allocation3 + $0x31] sm:$0x1] 0.0
        %742 = vst [vmem:[#allocation3 + $0x32] sm:$0x1] 0.0
        %743 = vst [vmem:[#allocation3 + $0x33] sm:$0x1] 0.0
        %744 = vst [vmem:[#allocation3 + $0x34] sm:$0x1] 0.0
        %745 = vst [vmem:[#allocation3 + $0x35] sm:$0x1] 0.0
        %746 = vst [vmem:[#allocation3 + $0x36] sm:$0x1] 0.0
        %747 = vst [vmem:[#allocation3 + $0x37] sm:$0x1] 0.0
        %748 = vst [vmem:[#allocation3 + $0x38] sm:$0x1] 0.0
        %749 = vst [vmem:[#allocation3 + $0x39] sm:$0x1] 0.0
        %750 = vst [vmem:[#allocation3 + $0x3a] sm:$0x1] 0.0
        %751 = vst [vmem:[#allocation3 + $0x3b] sm:$0x1] 0.0
        %752 = vst [vmem:[#allocation3 + $0x3c] sm:$0x1] 0.0
        %753 = vst [vmem:[#allocation3 + $0x3d] sm:$0x1] 0.0
        %754 = vst [vmem:[#allocation3 + $0x3e] sm:$0x1] 0.0
        %755 = vst [vmem:[#allocation3 + $0x3f] sm:$0x1] 0.0
        %756 = vst [vmem:[#allocation3 + $0x40] sm:$0x1] 0.0
        %757 = vst [vmem:[#allocation3 + $0x41] sm:$0x1] 0.0
        %758 = vst [vmem:[#allocation3 + $0x42] sm:$0x1] 0.0
        %759 = vst [vmem:[#allocation3 + $0x43] sm:$0x1] 0.0
        %760 = vst [vmem:[#allocation3 + $0x44] sm:$0x1] 0.0
        %761 = vst [vmem:[#allocation3 + $0x45] sm:$0x1] 0.0
        %762 = vst [vmem:[#allocation3 + $0x46] sm:$0x1] 0.0
        %763 = vst [vmem:[#allocation3 + $0x47] sm:$0x1] 0.0
        %764 = vst [vmem:[#allocation3 + $0x48] sm:$0x1] 0.0
        %765 = vst [vmem:[#allocation3 + $0x49] sm:$0x1] 0.0
        %766 = vst [vmem:[#allocation3 + $0x4a] sm:$0x1] 0.0
        %767 = vst [vmem:[#allocation3 + $0x4b] sm:$0x1] 0.0
        %768 = vst [vmem:[#allocation3 + $0x4c] sm:$0x1] 0.0
        %769 = vst [vmem:[#allocation3 + $0x4d] sm:$0x1] 0.0
        %770 = vst [vmem:[#allocation3 + $0x4e] sm:$0x1] 0.0
        %771 = vst [vmem:[#allocation3 + $0x4f] sm:$0x1] 0.0
        %772 = vst [vmem:[#allocation3 + $0x50] sm:$0x1] 0.0
        %773 = vst [vmem:[#allocation3 + $0x51] sm:$0x1] 0.0
        %774 = vst [vmem:[#allocation3 + $0x52] sm:$0x1] 0.0
        %775 = vst [vmem:[#allocation3 + $0x53] sm:$0x1] 0.0
        %776 = vst [vmem:[#allocation3 + $0x54] sm:$0x1] 0.0
        %777 = vst [vmem:[#allocation3 + $0x55] sm:$0x1] 0.0
        %778 = vst [vmem:[#allocation3 + $0x56] sm:$0x1] 0.0
        %779 = vst [vmem:[#allocation3 + $0x57] sm:$0x1] 0.0
        %780 = vst [vmem:[#allocation3 + $0x58] sm:$0x1] 0.0
        %781 = vst [vmem:[#allocation3 + $0x59] sm:$0x1] 0.0
        %782 = vst [vmem:[#allocation3 + $0x5a] sm:$0x1] 0.0
        %783 = vst [vmem:[#allocation3 + $0x5b] sm:$0x1] 0.0
        %784 = vst [vmem:[#allocation3 + $0x5c] sm:$0x1] 0.0
        %785 = vst [vmem:[#allocation3 + $0x5d] sm:$0x1] 0.0
        %786 = vst [vmem:[#allocation3 + $0x5e] sm:$0x1] 0.0
        %787 = vst [vmem:[#allocation3 + $0x5f] sm:$0x1] 0.0
        %788 = vst [vmem:[#allocation3 + $0x60] sm:$0x1] 0.0
        %789 = vst [vmem:[#allocation3 + $0x61] sm:$0x1] 0.0
        %790 = vst [vmem:[#allocation3 + $0x62] sm:$0x1] 0.0
        %791 = vst [vmem:[#allocation3 + $0x63] sm:$0x1] 0.0
        %792 = vst [vmem:[#allocation3 + $0x64] sm:$0x1] 0.0
        %793 = vst [vmem:[#allocation3 + $0x65] sm:$0x1] 0.0
        %794 = vst [vmem:[#allocation3 + $0x66] sm:$0x1] 0.0
        %795 = vst [vmem:[#allocation3 + $0x67] sm:$0x1] 0.0
        %796 = vst [vmem:[#allocation3 + $0x68] sm:$0x1] 0.0
        %797 = vst [vmem:[#allocation3 + $0x69] sm:$0x1] 0.0
        %798 = vst [vmem:[#allocation3 + $0x6a] sm:$0x1] 0.0
        %799 = vst [vmem:[#allocation3 + $0x6b] sm:$0x1] 0.0
        %800 = vst [vmem:[#allocation3 + $0x6c] sm:$0x1] 0.0
        %801 = vst [vmem:[#allocation3 + $0x6d] sm:$0x1] 0.0
        %802 = vst [vmem:[#allocation3 + $0x6e] sm:$0x1] 0.0
        %803 = vst [vmem:[#allocation3 + $0x6f] sm:$0x1] 0.0
        %804 = vst [vmem:[#allocation3 + $0x70] sm:$0x1] 0.0
        %805 = vst [vmem:[#allocation3 + $0x71] sm:$0x1] 0.0
        %806 = vst [vmem:[#allocation3 + $0x72] sm:$0x1] 0.0
        %807 = vst [vmem:[#allocation3 + $0x73] sm:$0x1] 0.0
        %808 = vst [vmem:[#allocation3 + $0x74] sm:$0x1] 0.0
        %809 = vst [vmem:[#allocation3 + $0x75] sm:$0x1] 0.0
        %810 = vst [vmem:[#allocation3 + $0x76] sm:$0x1] 0.0
        %811 = vst [vmem:[#allocation3 + $0x77] sm:$0x1] 0.0
        %812 = vst [vmem:[#allocation3 + $0x78] sm:$0x1] 0.0
        %813 = vst [vmem:[#allocation3 + $0x79] sm:$0x1] 0.0
        %814 = vst [vmem:[#allocation3 + $0x7a] sm:$0x1] 0.0
        %815 = vst [vmem:[#allocation3 + $0x7b] sm:$0x1] 0.0
        %816 = vst [vmem:[#allocation3 + $0x7c] sm:$0x1] 0.0
        %817 = vst [vmem:[#allocation3 + $0x7d] sm:$0x1] 0.0
        %818 = vst [vmem:[#allocation3 + $0x7e] sm:$0x1] 0.0
        %819 = vst [vmem:[#allocation3 + $0x7f] sm:$0x1] 0.0
        %820 = vst [vmem:[#allocation3 + $0x80] sm:$0x1] 0.0
        %821 = vst [vmem:[#allocation3 + $0x81] sm:$0x1] 0.0
        %822 = vst [vmem:[#allocation3 + $0x82] sm:$0x1] 0.0
        %823 = vst [vmem:[#allocation3 + $0x83] sm:$0x1] 0.0
        %824 = vst [vmem:[#allocation3 + $0x84] sm:$0x1] 0.0
        %825 = vst [vmem:[#allocation3 + $0x85] sm:$0x1] 0.0
        %826 = vst [vmem:[#allocation3 + $0x86] sm:$0x1] 0.0
        %827 = vst [vmem:[#allocation3 + $0x87] sm:$0x1] 0.0
        %828 = vst [vmem:[#allocation3 + $0x88] sm:$0x1] 0.0
        %829 = vst [vmem:[#allocation3 + $0x89] sm:$0x1] 0.0
        %830 = vst [vmem:[#allocation3 + $0x8a] sm:$0x1] 0.0
        %831 = vst [vmem:[#allocation3 + $0x8b] sm:$0x1] 0.0
        %832 = vst [vmem:[#allocation3 + $0x8c] sm:$0x1] 0.0
        %833 = vst [vmem:[#allocation3 + $0x8d] sm:$0x1] 0.0
        %834 = vst [vmem:[#allocation3 + $0x8e] sm:$0x1] 0.0
        %835 = vst [vmem:[#allocation3 + $0x8f] sm:$0x1] 0.0
        %836 = vst [vmem:[#allocation3 + $0x90] sm:$0x1] 0.0
        %837 = vst [vmem:[#allocation3 + $0x91] sm:$0x1] 0.0
        %838 = vst [vmem:[#allocation3 + $0x92] sm:$0x1] 0.0
        %839 = vst [vmem:[#allocation3 + $0x93] sm:$0x1] 0.0
        %840 = vst [vmem:[#allocation3 + $0x94] sm:$0x1] 0.0
        %841 = vst [vmem:[#allocation3 + $0x95] sm:$0x1] 0.0
        %842 = vst [vmem:[#allocation3 + $0x96] sm:$0x1] 0.0
        %843 = vst [vmem:[#allocation3 + $0x97] sm:$0x1] 0.0
        %844 = vst [vmem:[#allocation3 + $0x98] sm:$0x1] 0.0
        %845 = vst [vmem:[#allocation3 + $0x99] sm:$0x1] 0.0
        %846 = vst [vmem:[#allocation3 + $0x9a] sm:$0x1] 0.0
        %847 = vst [vmem:[#allocation3 + $0x9b] sm:$0x1] 0.0
        %848 = vst [vmem:[#allocation3 + $0x9c] sm:$0x1] 0.0
        %849 = vst [vmem:[#allocation3 + $0x9d] sm:$0x1] 0.0
        %850 = vst [vmem:[#allocation3 + $0x9e] sm:$0x1] 0.0
        %851 = vst [vmem:[#allocation3 + $0x9f] sm:$0x1] 0.0
        %852 = vst [vmem:[#allocation3 + $0xa0] sm:$0x1] 0.0
        %853 = vst [vmem:[#allocation3 + $0xa1] sm:$0x1] 0.0
        %854 = vst [vmem:[#allocation3 + $0xa2] sm:$0x1] 0.0
        %855 = vst [vmem:[#allocation3 + $0xa3] sm:$0x1] 0.0
        %856 = vst [vmem:[#allocation3 + $0xa4] sm:$0x1] 0.0
        %857 = vst [vmem:[#allocation3 + $0xa5] sm:$0x1] 0.0
        %858 = vst [vmem:[#allocation3 + $0xa6] sm:$0x1] 0.0
        %859 = vst [vmem:[#allocation3 + $0xa7] sm:$0x1] 0.0
        %860 = vst [vmem:[#allocation3 + $0xa8] sm:$0x1] 0.0
        %861 = vst [vmem:[#allocation3 + $0xa9] sm:$0x1] 0.0
        %862 = vst [vmem:[#allocation3 + $0xaa] sm:$0x1] 0.0
        %863 = vst [vmem:[#allocation3 + $0xab] sm:$0x1] 0.0
        %864 = vst [vmem:[#allocation3 + $0xac] sm:$0x1] 0.0
        %865 = vst [vmem:[#allocation3 + $0xad] sm:$0x1] 0.0
        %866 = vst [vmem:[#allocation3 + $0xae] sm:$0x1] 0.0
        %867 = vst [vmem:[#allocation3 + $0xaf] sm:$0x1] 0.0
        %868 = vst [vmem:[#allocation3 + $0xb0] sm:$0x1] 0.0
        %869 = vst [vmem:[#allocation3 + $0xb1] sm:$0x1] 0.0
        %870 = vst [vmem:[#allocation3 + $0xb2] sm:$0x1] 0.0
        %871 = vst [vmem:[#allocation3 + $0xb3] sm:$0x1] 0.0
        %872 = vst [vmem:[#allocation3 + $0xb4] sm:$0x1] 0.0
        %873 = vst [vmem:[#allocation3 + $0xb5] sm:$0x1] 0.0
        %874 = vst [vmem:[#allocation3 + $0xb6] sm:$0x1] 0.0
        %875 = vst [vmem:[#allocation3 + $0xb7] sm:$0x1] 0.0
        %876 = vst [vmem:[#allocation3 + $0xb8] sm:$0x1] 0.0
        %877 = vst [vmem:[#allocation3 + $0xb9] sm:$0x1] 0.0
        %878 = vst [vmem:[#allocation3 + $0xba] sm:$0x1] 0.0
        %879 = vst [vmem:[#allocation3 + $0xbb] sm:$0x1] 0.0
        %880 = vst [vmem:[#allocation3 + $0xbc] sm:$0x1] 0.0
        %881 = vst [vmem:[#allocation3 + $0xbd] sm:$0x1] 0.0
        %882 = vst [vmem:[#allocation3 + $0xbe] sm:$0x1] 0.0
        %883 = vst [vmem:[#allocation3 + $0xbf] sm:$0x1] 0.0
        %884 = vst [vmem:[#allocation3 + $0xc0] sm:$0x1] 0.0
        %885 = vst [vmem:[#allocation3 + $0xc1] sm:$0x1] 0.0
        %886 = vst [vmem:[#allocation3 + $0xc2] sm:$0x1] 0.0
        %887 = vst [vmem:[#allocation3 + $0xc3] sm:$0x1] 0.0
        %888 = vst [vmem:[#allocation3 + $0xc4] sm:$0x1] 0.0
        %889 = vst [vmem:[#allocation3 + $0xc5] sm:$0x1] 0.0
        %890 = vst [vmem:[#allocation3 + $0xc6] sm:$0x1] 0.0
        %891 = vst [vmem:[#allocation3 + $0xc7] sm:$0x1] 0.0
        %892 = vst [vmem:[#allocation3 + $0xc8] sm:$0x1] 0.0
        %893 = vst [vmem:[#allocation3 + $0xc9] sm:$0x1] 0.0
        %894 = vst [vmem:[#allocation3 + $0xca] sm:$0x1] 0.0
        %895 = vst [vmem:[#allocation3 + $0xcb] sm:$0x1] 0.0
        %896 = vst [vmem:[#allocation3 + $0xcc] sm:$0x1] 0.0
        %897 = vst [vmem:[#allocation3 + $0xcd] sm:$0x1] 0.0
        %898 = vst [vmem:[#allocation3 + $0xce] sm:$0x1] 0.0
        %899 = vst [vmem:[#allocation3 + $0xcf] sm:$0x1] 0.0
        %900 = vst [vmem:[#allocation3 + $0xd0] sm:$0x1] 0.0
        %901 = vst [vmem:[#allocation3 + $0xd1] sm:$0x1] 0.0
        %902 = vst [vmem:[#allocation3 + $0xd2] sm:$0x1] 0.0
        %903 = vst [vmem:[#allocation3 + $0xd3] sm:$0x1] 0.0
        %904 = vst [vmem:[#allocation3 + $0xd4] sm:$0x1] 0.0
        %905 = vst [vmem:[#allocation3 + $0xd5] sm:$0x1] 0.0
        %906 = vst [vmem:[#allocation3 + $0xd6] sm:$0x1] 0.0
        %907 = vst [vmem:[#allocation3 + $0xd7] sm:$0x1] 0.0
        %908 = vst [vmem:[#allocation3 + $0xd8] sm:$0x1] 0.0
        %909 = vst [vmem:[#allocation3 + $0xd9] sm:$0x1] 0.0
        %910 = vst [vmem:[#allocation3 + $0xda] sm:$0x1] 0.0
        %911 = vst [vmem:[#allocation3 + $0xdb] sm:$0x1] 0.0
        %912 = vst [vmem:[#allocation3 + $0xdc] sm:$0x1] 0.0
        %913 = vst [vmem:[#allocation3 + $0xdd] sm:$0x1] 0.0
        %914 = vst [vmem:[#allocation3 + $0xde] sm:$0x1] 0.0
        %915 = vst [vmem:[#allocation3 + $0xdf] sm:$0x1] 0.0
        %916 = vst [vmem:[#allocation3 + $0xe0] sm:$0x1] 0.0
        %917 = vst [vmem:[#allocation3 + $0xe1] sm:$0x1] 0.0
        %918 = vst [vmem:[#allocation3 + $0xe2] sm:$0x1] 0.0
        %919 = vst [vmem:[#allocation3 + $0xe3] sm:$0x1] 0.0
        %920 = vst [vmem:[#allocation3 + $0xe4] sm:$0x1] 0.0
        %921 = vst [vmem:[#allocation3 + $0xe5] sm:$0x1] 0.0
        %922 = vst [vmem:[#allocation3 + $0xe6] sm:$0x1] 0.0
        %923 = vst [vmem:[#allocation3 + $0xe7] sm:$0x1] 0.0
        %924 = vst [vmem:[#allocation3 + $0xe8] sm:$0x1] 0.0
        %925 = vst [vmem:[#allocation3 + $0xe9] sm:$0x1] 0.0
        %926 = vst [vmem:[#allocation3 + $0xea] sm:$0x1] 0.0
        %927 = vst [vmem:[#allocation3 + $0xeb] sm:$0x1] 0.0
        %928 = vst [vmem:[#allocation3 + $0xec] sm:$0x1] 0.0
        %929 = vst [vmem:[#allocation3 + $0xed] sm:$0x1] 0.0
        %930 = vst [vmem:[#allocation3 + $0xee] sm:$0x1] 0.0
        %931 = vst [vmem:[#allocation3 + $0xef] sm:$0x1] 0.0
        %932 = vst [vmem:[#allocation3 + $0xf0] sm:$0x1] 0.0
        %933 = vst [vmem:[#allocation3 + $0xf1] sm:$0x1] 0.0
        %934 = vst [vmem:[#allocation3 + $0xf2] sm:$0x1] 0.0
        %935 = vst [vmem:[#allocation3 + $0xf3] sm:$0x1] 0.0
        %936 = vst [vmem:[#allocation3 + $0xf4] sm:$0x1] 0.0
        %937 = vst [vmem:[#allocation3 + $0xf5] sm:$0x1] 0.0
        %938 = vst [vmem:[#allocation3 + $0xf6] sm:$0x1] 0.0
        %939 = vst [vmem:[#allocation3 + $0xf7] sm:$0x1] 0.0
        %940 = vst [vmem:[#allocation3 + $0xf8] sm:$0x1] 0.0
        %941 = vst [vmem:[#allocation3 + $0xf9] sm:$0x1] 0.0
        %942 = vst [vmem:[#allocation3 + $0xfa] sm:$0x1] 0.0
        %943 = vst [vmem:[#allocation3 + $0xfb] sm:$0x1] 0.0
        %944 = vst [vmem:[#allocation3 + $0xfc] sm:$0x1] 0.0
        %945 = vst [vmem:[#allocation3 + $0xfd] sm:$0x1] 0.0
        %946 = vst [vmem:[#allocation3 + $0xfe] sm:$0x1] 0.0
        %947 = vst [vmem:[#allocation3 + $0xff] sm:$0x1] 0.0
        %948 = vst [vmem:[#allocation3 + $0x100] sm:$0x1] 0.0
        %949 = vst [vmem:[#allocation3 + $0x101] sm:$0x1] 0.0
        %950 = vst [vmem:[#allocation3 + $0x102] sm:$0x1] 0.0
        %951 = vst [vmem:[#allocation3 + $0x103] sm:$0x1] 0.0
        %952 = vst [vmem:[#allocation3 + $0x104] sm:$0x1] 0.0
        %953 = vst [vmem:[#allocation3 + $0x105] sm:$0x1] 0.0
        %954 = vst [vmem:[#allocation3 + $0x106] sm:$0x1] 0.0
        %955 = vst [vmem:[#allocation3 + $0x107] sm:$0x1] 0.0
        %956 = vst [vmem:[#allocation3 + $0x108] sm:$0x1] 0.0
        %957 = vst [vmem:[#allocation3 + $0x109] sm:$0x1] 0.0
        %958 = vst [vmem:[#allocation3 + $0x10a] sm:$0x1] 0.0
        %959 = vst [vmem:[#allocation3 + $0x10b] sm:$0x1] 0.0
        %960 = vst [vmem:[#allocation3 + $0x10c] sm:$0x1] 0.0
        %961 = vst [vmem:[#allocation3 + $0x10d] sm:$0x1] 0.0
        %962 = vst [vmem:[#allocation3 + $0x10e] sm:$0x1] 0.0
        %963 = vst [vmem:[#allocation3 + $0x10f] sm:$0x1] 0.0
        %964 = vst [vmem:[#allocation3 + $0x110] sm:$0x1] 0.0
        %965 = vst [vmem:[#allocation3 + $0x111] sm:$0x1] 0.0
        %966 = vst [vmem:[#allocation3 + $0x112] sm:$0x1] 0.0
        %967 = vst [vmem:[#allocation3 + $0x113] sm:$0x1] 0.0
        %968 = vst [vmem:[#allocation3 + $0x114] sm:$0x1] 0.0
        %969 = vst [vmem:[#allocation3 + $0x115] sm:$0x1] 0.0
        %970 = vst [vmem:[#allocation3 + $0x116] sm:$0x1] 0.0
        %971 = vst [vmem:[#allocation3 + $0x117] sm:$0x1] 0.0
        %972 = vst [vmem:[#allocation3 + $0x118] sm:$0x1] 0.0
        %973 = vst [vmem:[#allocation3 + $0x119] sm:$0x1] 0.0
        %974 = vst [vmem:[#allocation3 + $0x11a] sm:$0x1] 0.0
        %975 = vst [vmem:[#allocation3 + $0x11b] sm:$0x1] 0.0
        %976 = vst [vmem:[#allocation3 + $0x11c] sm:$0x1] 0.0
        %977 = vst [vmem:[#allocation3 + $0x11d] sm:$0x1] 0.0
        %978 = vst [vmem:[#allocation3 + $0x11e] sm:$0x1] 0.0
        %979 = vst [vmem:[#allocation3 + $0x11f] sm:$0x1] 0.0
        %980 = vst [vmem:[#allocation3 + $0x120] sm:$0x1] 0.0
        %981 = vst [vmem:[#allocation3 + $0x121] sm:$0x1] 0.0
        %982 = vst [vmem:[#allocation3 + $0x122] sm:$0x1] 0.0
        %983 = vst [vmem:[#allocation3 + $0x123] sm:$0x1] 0.0
        %984 = vst [vmem:[#allocation3 + $0x124] sm:$0x1] 0.0
        %985 = vst [vmem:[#allocation3 + $0x125] sm:$0x1] 0.0
        %986 = vst [vmem:[#allocation3 + $0x126] sm:$0x1] 0.0
        %987 = vst [vmem:[#allocation3 + $0x127] sm:$0x1] 0.0
        %988 = vst [vmem:[#allocation3 + $0x128] sm:$0x1] 0.0
        %989 = vst [vmem:[#allocation3 + $0x129] sm:$0x1] 0.0
        %990 = vst [vmem:[#allocation3 + $0x12a] sm:$0x1] 0.0
        %991 = vst [vmem:[#allocation3 + $0x12b] sm:$0x1] 0.0
        %992 = vst [vmem:[#allocation3 + $0x12c] sm:$0x1] 0.0
        %993 = vst [vmem:[#allocation3 + $0x12d] sm:$0x1] 0.0
        %994 = vst [vmem:[#allocation3 + $0x12e] sm:$0x1] 0.0
        %995 = vst [vmem:[#allocation3 + $0x12f] sm:$0x1] 0.0
        %996 = vst [vmem:[#allocation3 + $0x130] sm:$0x1] 0.0
        %997 = vst [vmem:[#allocation3 + $0x131] sm:$0x1] 0.0
        %998 = vst [vmem:[#allocation3 + $0x132] sm:$0x1] 0.0
        %999 = vst [vmem:[#allocation3 + $0x133] sm:$0x1] 0.0
        %1000 = vst [vmem:[#allocation3 + $0x134] sm:$0x1] 0.0
        %1001 = vst [vmem:[#allocation3 + $0x135] sm:$0x1] 0.0
        %1002 = vst [vmem:[#allocation3 + $0x136] sm:$0x1] 0.0
        %1003 = vst [vmem:[#allocation3 + $0x137] sm:$0x1] 0.0
        %1004 = vst [vmem:[#allocation3 + $0x138] sm:$0x1] 0.0
        %1005 = vst [vmem:[#allocation3 + $0x139] sm:$0x1] 0.0
        %1006 = vst [vmem:[#allocation3 + $0x13a] sm:$0x1] 0.0
        %1007 = vst [vmem:[#allocation3 + $0x13b] sm:$0x1] 0.0
        %1008 = vst [vmem:[#allocation3 + $0x13c] sm:$0x1] 0.0
        %1009 = vst [vmem:[#allocation3 + $0x13d] sm:$0x1] 0.0
        %1010 = vst [vmem:[#allocation3 + $0x13e] sm:$0x1] 0.0
        %1011 = vst [vmem:[#allocation3 + $0x13f] sm:$0x1] 0.0
        %1012 = vst [vmem:[#allocation3 + $0x140] sm:$0x1] 0.0
        %1013 = vst [vmem:[#allocation3 + $0x141] sm:$0x1] 0.0
        %1014 = vst [vmem:[#allocation3 + $0x142] sm:$0x1] 0.0
        %1015 = vst [vmem:[#allocation3 + $0x143] sm:$0x1] 0.0
        %v1016 = vld [vmem:[%s359] sm:$0x1]
        %v1017 = vld [vmem:[%s359 + $0x1] sm:$0x1]
        %v1018 = vld [vmem:[%s359 + $0x2] sm:$0x1]
        %v1019 = vld [vmem:[%s359 + $0x3] sm:$0x1]
        %v1020 = vld [vmem:[%s359 + $0x4] sm:$0x1]
        %v1021 = vld [vmem:[%s359 + $0x5] sm:$0x1]
        %v1022 = vld [vmem:[%s359 + $0x6] sm:$0x1]
        %v1023 = vld [vmem:[%s359 + $0x7] sm:$0x1]
        %v1024 = vld [vmem:[%s359 + $0x8] sm:$0x1]
        %v1025 = vld [vmem:[%s359 + $0x9] sm:$0x1]
        %v1026 = vld [vmem:[%s359 + $0xa] sm:$0x1]
        %v1027 = vld [vmem:[%s359 + $0xb] sm:$0x1]
        %v1028 = vld [vmem:[%s359 + $0xc] sm:$0x1]
        %v1029 = vld [vmem:[%s359 + $0xd] sm:$0x1]
        %v1030 = vld [vmem:[%s359 + $0xe] sm:$0x1]
        %v1031 = vld [vmem:[%s359 + $0xf] sm:$0x1]
        %v1032 = vld [vmem:[%s359 + $0x10] sm:$0x1]
        %v1033 = vld [vmem:[%s359 + $0x11] sm:$0x1]
        %v1034 = vld [vmem:[%s359 + $0x12] sm:$0x1]
        %v1035 = vld [vmem:[%s359 + $0x13] sm:$0x1]
        %v1036 = vld [vmem:[%s359 + $0x14] sm:$0x1]
        %v1037 = vld [vmem:[%s359 + $0x15] sm:$0x1]
        %v1038 = vld [vmem:[%s359 + $0x16] sm:$0x1]
        %v1039 = vld [vmem:[%s359 + $0x17] sm:$0x1]
        %v1040 = vld [vmem:[%s359 + $0x18] sm:$0x1]
        %v1041 = vld [vmem:[%s359 + $0x19] sm:$0x1]
        %v1042 = vld [vmem:[%s359 + $0x1a] sm:$0x1]
        %v1043 = vld [vmem:[%s359 + $0x1b] sm:$0x1]
        %v1044 = vld [vmem:[%s359 + $0x1c] sm:$0x1]
        %v1045 = vld [vmem:[%s359 + $0x1d] sm:$0x1]
        %v1046 = vld [vmem:[%s359 + $0x1e] sm:$0x1]
        %v1047 = vld [vmem:[%s359 + $0x1f] sm:$0x1]
        %v1048 = vld [vmem:[%s359 + $0x20] sm:$0x1]
        %v1049 = vld [vmem:[%s359 + $0x21] sm:$0x1]
        %v1050 = vld [vmem:[%s359 + $0x22] sm:$0x1]
        %v1051 = vld [vmem:[%s359 + $0x23] sm:$0x1]
        %v1052 = vld [vmem:[%s359 + $0x24] sm:$0x1]
        %v1053 = vld [vmem:[%s359 + $0x25] sm:$0x1]
        %v1054 = vld [vmem:[%s359 + $0x26] sm:$0x1]
        %v1055 = vld [vmem:[%s359 + $0x27] sm:$0x1]
        %v1056 = vld [vmem:[%s359 + $0x28] sm:$0x1]
        %v1057 = vld [vmem:[%s359 + $0x29] sm:$0x1]
        %v1058 = vld [vmem:[%s359 + $0x2a] sm:$0x1]
        %v1059 = vld [vmem:[%s359 + $0x2b] sm:$0x1]
        %v1060 = vld [vmem:[%s359 + $0x2c] sm:$0x1]
        %v1061 = vld [vmem:[%s359 + $0x2d] sm:$0x1]
        %v1062 = vld [vmem:[%s359 + $0x2e] sm:$0x1]
        %v1063 = vld [vmem:[%s359 + $0x2f] sm:$0x1]
        %v1064 = vld [vmem:[%s359 + $0x30] sm:$0x1]
        %v1065 = vld [vmem:[%s359 + $0x31] sm:$0x1]
        %v1066 = vld [vmem:[%s359 + $0x32] sm:$0x1]
        %v1067 = vld [vmem:[%s359 + $0x33] sm:$0x1]
        %v1068 = vld [vmem:[%s359 + $0x34] sm:$0x1]
        %v1069 = vld [vmem:[%s359 + $0x35] sm:$0x1]
        %v1070 = vld [vmem:[%s359 + $0x36] sm:$0x1]
        %v1071 = vld [vmem:[%s359 + $0x37] sm:$0x1]
        %v1072 = vld [vmem:[%s359 + $0x38] sm:$0x1]
        %v1073 = vld [vmem:[%s359 + $0x39] sm:$0x1]
        %v1074 = vld [vmem:[%s359 + $0x3a] sm:$0x1]
        %v1075 = vld [vmem:[%s359 + $0x3b] sm:$0x1]
        %v1076 = vld [vmem:[%s359 + $0x3c] sm:$0x1]
        %v1077 = vld [vmem:[%s359 + $0x3d] sm:$0x1]
        %v1078 = vld [vmem:[%s359 + $0x3e] sm:$0x1]
        %v1079 = vld [vmem:[%s359 + $0x3f] sm:$0x1]
        %v1080 = vld [vmem:[%s359 + $0x40] sm:$0x1]
        %v1081 = vld [vmem:[%s359 + $0x41] sm:$0x1]
        %v1082 = vld [vmem:[%s359 + $0x42] sm:$0x1]
        %v1083 = vld [vmem:[%s359 + $0x43] sm:$0x1]
        %v1084 = vld [vmem:[%s359 + $0x44] sm:$0x1]
        %v1085 = vld [vmem:[%s359 + $0x45] sm:$0x1]
        %v1086 = vld [vmem:[%s359 + $0x46] sm:$0x1]
        %v1087 = vld [vmem:[%s359 + $0x47] sm:$0x1]
        %v1088 = vld [vmem:[%s359 + $0x48] sm:$0x1]
        %v1089 = vld [vmem:[%s359 + $0x49] sm:$0x1]
        %v1090 = vld [vmem:[%s359 + $0x4a] sm:$0x1]
        %v1091 = vld [vmem:[%s359 + $0x4b] sm:$0x1]
        %v1092 = vld [vmem:[%s359 + $0x4c] sm:$0x1]
        %v1093 = vld [vmem:[%s359 + $0x4d] sm:$0x1]
        %v1094 = vld [vmem:[%s359 + $0x4e] sm:$0x1]
        %v1095 = vld [vmem:[%s359 + $0x4f] sm:$0x1]
        %v1096 = vld [vmem:[%s359 + $0x50] sm:$0x1]
        %v1097 = vld [vmem:[%s359 + $0x51] sm:$0x1]
        %v1098 = vld [vmem:[%s359 + $0x52] sm:$0x1]
        %v1099 = vld [vmem:[%s359 + $0x53] sm:$0x1]
        %v1100 = vld [vmem:[%s359 + $0x54] sm:$0x1]
        %v1101 = vld [vmem:[%s359 + $0x55] sm:$0x1]
        %v1102 = vld [vmem:[%s359 + $0x56] sm:$0x1]
        %v1103 = vld [vmem:[%s359 + $0x57] sm:$0x1]
        %v1104 = vld [vmem:[%s359 + $0x58] sm:$0x1]
        %v1105 = vld [vmem:[%s359 + $0x59] sm:$0x1]
        %v1106 = vld [vmem:[%s359 + $0x5a] sm:$0x1]
        %v1107 = vld [vmem:[%s359 + $0x5b] sm:$0x1]
        %v1108 = vld [vmem:[%s359 + $0x5c] sm:$0x1]
        %v1109 = vld [vmem:[%s359 + $0x5d] sm:$0x1]
        %v1110 = vld [vmem:[%s359 + $0x5e] sm:$0x1]
        %v1111 = vld [vmem:[%s359 + $0x5f] sm:$0x1]
        %v1112 = vld [vmem:[%s359 + $0x60] sm:$0x1]
        %v1113 = vld [vmem:[%s359 + $0x61] sm:$0x1]
        %v1114 = vld [vmem:[%s359 + $0x62] sm:$0x1]
        %v1115 = vld [vmem:[%s359 + $0x63] sm:$0x1]
        %v1116 = vld [vmem:[%s359 + $0x64] sm:$0x1]
        %v1117 = vld [vmem:[%s359 + $0x65] sm:$0x1]
        %v1118 = vld [vmem:[%s359 + $0x66] sm:$0x1]
        %v1119 = vld [vmem:[%s359 + $0x67] sm:$0x1]
        %v1120 = vld [vmem:[%s359 + $0x68] sm:$0x1]
        %v1121 = vld [vmem:[%s359 + $0x69] sm:$0x1]
        %v1122 = vld [vmem:[%s359 + $0x6a] sm:$0x1]
        %v1123 = vld [vmem:[%s359 + $0x6b] sm:$0x1]
        %v1124 = vld [vmem:[%s359 + $0x6c] sm:$0x1]
        %v1125 = vld [vmem:[%s359 + $0x6d] sm:$0x1]
        %v1126 = vld [vmem:[%s359 + $0x6e] sm:$0x1]
        %v1127 = vld [vmem:[%s359 + $0x6f] sm:$0x1]
        %v1128 = vld [vmem:[%s359 + $0x70] sm:$0x1]
        %v1129 = vld [vmem:[%s359 + $0x71] sm:$0x1]
        %v1130 = vld [vmem:[%s359 + $0x72] sm:$0x1]
        %v1131 = vld [vmem:[%s359 + $0x73] sm:$0x1]
        %v1132 = vld [vmem:[%s359 + $0x74] sm:$0x1]
        %v1133 = vld [vmem:[%s359 + $0x75] sm:$0x1]
        %v1134 = vld [vmem:[%s359 + $0x76] sm:$0x1]
        %v1135 = vld [vmem:[%s359 + $0x77] sm:$0x1]
        %v1136 = vld [vmem:[%s359 + $0x78] sm:$0x1]
        %v1137 = vld [vmem:[%s359 + $0x79] sm:$0x1]
        %v1138 = vld [vmem:[%s359 + $0x7a] sm:$0x1]
        %v1139 = vld [vmem:[%s359 + $0x7b] sm:$0x1]
        %v1140 = vld [vmem:[%s359 + $0x7c] sm:$0x1]
        %v1141 = vld [vmem:[%s359 + $0x7d] sm:$0x1]
        %v1142 = vld [vmem:[%s359 + $0x7e] sm:$0x1]
        %v1143 = vld [vmem:[%s359 + $0x7f] sm:$0x1]
        %v1144 = vld [vmem:[%s359 + $0x80] sm:$0x1]
        %v1145 = vld [vmem:[%s359 + $0x81] sm:$0x1]
        %v1146 = vld [vmem:[%s359 + $0x82] sm:$0x1]
        %v1147 = vld [vmem:[%s359 + $0x83] sm:$0x1]
        %v1148 = vld [vmem:[%s359 + $0x84] sm:$0x1]
        %v1149 = vld [vmem:[%s359 + $0x85] sm:$0x1]
        %v1150 = vld [vmem:[%s359 + $0x86] sm:$0x1]
        %v1151 = vld [vmem:[%s359 + $0x87] sm:$0x1]
        %v1152 = vld [vmem:[%s359 + $0x88] sm:$0x1]
        %v1153 = vld [vmem:[%s359 + $0x89] sm:$0x1]
        %v1154 = vld [vmem:[%s359 + $0x8a] sm:$0x1]
        %v1155 = vld [vmem:[%s359 + $0x8b] sm:$0x1]
        %v1156 = vld [vmem:[%s359 + $0x8c] sm:$0x1]
        %v1157 = vld [vmem:[%s359 + $0x8d] sm:$0x1]
        %v1158 = vld [vmem:[%s359 + $0x8e] sm:$0x1]
        %v1159 = vld [vmem:[%s359 + $0x8f] sm:$0x1]
        %v1160 = vld [vmem:[%s359 + $0x90] sm:$0x1]
        %v1161 = vld [vmem:[%s359 + $0x91] sm:$0x1]
        %v1162 = vld [vmem:[%s359 + $0x92] sm:$0x1]
        %v1163 = vld [vmem:[%s359 + $0x93] sm:$0x1]
        %v1164 = vld [vmem:[%s359 + $0x94] sm:$0x1]
        %v1165 = vld [vmem:[%s359 + $0x95] sm:$0x1]
        %v1166 = vld [vmem:[%s359 + $0x96] sm:$0x1]
        %v1167 = vld [vmem:[%s359 + $0x97] sm:$0x1]
        %v1168 = vld [vmem:[%s359 + $0x98] sm:$0x1]
        %v1169 = vld [vmem:[%s359 + $0x99] sm:$0x1]
        %v1170 = vld [vmem:[%s359 + $0x9a] sm:$0x1]
        %v1171 = vld [vmem:[%s359 + $0x9b] sm:$0x1]
        %v1172 = vld [vmem:[%s359 + $0x9c] sm:$0x1]
        %v1173 = vld [vmem:[%s359 + $0x9d] sm:$0x1]
        %v1174 = vld [vmem:[%s359 + $0x9e] sm:$0x1]
        %v1175 = vld [vmem:[%s359 + $0x9f] sm:$0x1]
        %v1176 = vld [vmem:[%s359 + $0xa0] sm:$0x1]
        %v1177 = vld [vmem:[%s359 + $0xa1] sm:$0x1]
        %v1178 = vld [vmem:[%s359 + $0xa2] sm:$0x1]
        %v1179 = vld [vmem:[%s359 + $0xa3] sm:$0x1]
        %v1180 = vld [vmem:[%s359 + $0xa4] sm:$0x1]
        %v1181 = vld [vmem:[%s359 + $0xa5] sm:$0x1]
        %v1182 = vld [vmem:[%s359 + $0xa6] sm:$0x1]
        %v1183 = vld [vmem:[%s359 + $0xa7] sm:$0x1]
        %v1184 = vld [vmem:[%s359 + $0xa8] sm:$0x1]
        %v1185 = vld [vmem:[%s359 + $0xa9] sm:$0x1]
        %v1186 = vld [vmem:[%s359 + $0xaa] sm:$0x1]
        %v1187 = vld [vmem:[%s359 + $0xab] sm:$0x1]
        %v1188 = vld [vmem:[%s359 + $0xac] sm:$0x1]
        %v1189 = vld [vmem:[%s359 + $0xad] sm:$0x1]
        %v1190 = vld [vmem:[%s359 + $0xae] sm:$0x1]
        %v1191 = vld [vmem:[%s359 + $0xaf] sm:$0x1]
        %v1192 = vld [vmem:[%s359 + $0xb0] sm:$0x1]
        %v1193 = vld [vmem:[%s359 + $0xb1] sm:$0x1]
        %v1194 = vld [vmem:[%s359 + $0xb2] sm:$0x1]
        %v1195 = vld [vmem:[%s359 + $0xb3] sm:$0x1]
        %v1196 = vld [vmem:[%s359 + $0xb4] sm:$0x1]
        %v1197 = vld [vmem:[%s359 + $0xb5] sm:$0x1]
        %v1198 = vld [vmem:[%s359 + $0xb6] sm:$0x1]
        %v1199 = vld [vmem:[%s359 + $0xb7] sm:$0x1]
        %v1200 = vld [vmem:[%s359 + $0xb8] sm:$0x1]
        %v1201 = vld [vmem:[%s359 + $0xb9] sm:$0x1]
        %v1202 = vld [vmem:[%s359 + $0xba] sm:$0x1]
        %v1203 = vld [vmem:[%s359 + $0xbb] sm:$0x1]
        %v1204 = vld [vmem:[%s359 + $0xbc] sm:$0x1]
        %v1205 = vld [vmem:[%s359 + $0xbd] sm:$0x1]
        %v1206 = vld [vmem:[%s359 + $0xbe] sm:$0x1]
        %v1207 = vld [vmem:[%s359 + $0xbf] sm:$0x1]
        %v1208 = vld [vmem:[%s359 + $0xc0] sm:$0x1]
        %v1209 = vld [vmem:[%s359 + $0xc1] sm:$0x1]
        %v1210 = vld [vmem:[%s359 + $0xc2] sm:$0x1]
        %v1211 = vld [vmem:[%s359 + $0xc3] sm:$0x1]
        %v1212 = vld [vmem:[%s359 + $0xc4] sm:$0x1]
        %v1213 = vld [vmem:[%s359 + $0xc5] sm:$0x1]
        %v1214 = vld [vmem:[%s359 + $0xc6] sm:$0x1]
        %v1215 = vld [vmem:[%s359 + $0xc7] sm:$0x1]
        %v1216 = vld [vmem:[%s359 + $0xc8] sm:$0x1]
        %v1217 = vld [vmem:[%s359 + $0xc9] sm:$0x1]
        %v1218 = vld [vmem:[%s359 + $0xca] sm:$0x1]
        %v1219 = vld [vmem:[%s359 + $0xcb] sm:$0x1]
        %v1220 = vld [vmem:[%s359 + $0xcc] sm:$0x1]
        %v1221 = vld [vmem:[%s359 + $0xcd] sm:$0x1]
        %v1222 = vld [vmem:[%s359 + $0xce] sm:$0x1]
        %v1223 = vld [vmem:[%s359 + $0xcf] sm:$0x1]
        %v1224 = vld [vmem:[%s359 + $0xd0] sm:$0x1]
        %v1225 = vld [vmem:[%s359 + $0xd1] sm:$0x1]
        %v1226 = vld [vmem:[%s359 + $0xd2] sm:$0x1]
        %v1227 = vld [vmem:[%s359 + $0xd3] sm:$0x1]
        %v1228 = vld [vmem:[%s359 + $0xd4] sm:$0x1]
        %v1229 = vld [vmem:[%s359 + $0xd5] sm:$0x1]
        %v1230 = vld [vmem:[%s359 + $0xd6] sm:$0x1]
        %v1231 = vld [vmem:[%s359 + $0xd7] sm:$0x1]
        %v1232 = vld [vmem:[%s359 + $0xd8] sm:$0x1]
        %v1233 = vld [vmem:[%s359 + $0xd9] sm:$0x1]
        %v1234 = vld [vmem:[%s359 + $0xda] sm:$0x1]
        %v1235 = vld [vmem:[%s359 + $0xdb] sm:$0x1]
        %v1236 = vld [vmem:[%s359 + $0xdc] sm:$0x1]
        %v1237 = vld [vmem:[%s359 + $0xdd] sm:$0x1]
        %v1238 = vld [vmem:[%s359 + $0xde] sm:$0x1]
        %v1239 = vld [vmem:[%s359 + $0xdf] sm:$0x1]
        %v1240 = vld [vmem:[%s359 + $0xe0] sm:$0x1]
        %v1241 = vld [vmem:[%s359 + $0xe1] sm:$0x1]
        %v1242 = vld [vmem:[%s359 + $0xe2] sm:$0x1]
        %v1243 = vld [vmem:[%s359 + $0xe3] sm:$0x1]
        %v1244 = vld [vmem:[%s359 + $0xe4] sm:$0x1]
        %v1245 = vld [vmem:[%s359 + $0xe5] sm:$0x1]
        %v1246 = vld [vmem:[%s359 + $0xe6] sm:$0x1]
        %v1247 = vld [vmem:[%s359 + $0xe7] sm:$0x1]
        %v1248 = vld [vmem:[%s359 + $0xe8] sm:$0x1]
        %v1249 = vld [vmem:[%s359 + $0xe9] sm:$0x1]
        %v1250 = vld [vmem:[%s359 + $0xea] sm:$0x1]
        %v1251 = vld [vmem:[%s359 + $0xeb] sm:$0x1]
        %v1252 = vld [vmem:[%s359 + $0xec] sm:$0x1]
        %v1253 = vld [vmem:[%s359 + $0xed] sm:$0x1]
        %v1254 = vld [vmem:[%s359 + $0xee] sm:$0x1]
        %v1255 = vld [vmem:[%s359 + $0xef] sm:$0x1]
        %v1256 = vld [vmem:[%s359 + $0xf0] sm:$0x1]
        %v1257 = vld [vmem:[%s359 + $0xf1] sm:$0x1]
        %v1258 = vld [vmem:[%s359 + $0xf2] sm:$0x1]
        %v1259 = vld [vmem:[%s359 + $0xf3] sm:$0x1]
        %v1260 = vld [vmem:[%s359 + $0xf4] sm:$0x1]
        %v1261 = vld [vmem:[%s359 + $0xf5] sm:$0x1]
        %v1262 = vld [vmem:[%s359 + $0xf6] sm:$0x1]
        %v1263 = vld [vmem:[%s359 + $0xf7] sm:$0x1]
        %v1264 = vld [vmem:[%s359 + $0xf8] sm:$0x1]
        %v1265 = vld [vmem:[%s359 + $0xf9] sm:$0x1]
        %v1266 = vld [vmem:[%s359 + $0xfa] sm:$0x1]
        %v1267 = vld [vmem:[%s359 + $0xfb] sm:$0x1]
        %v1268 = vld [vmem:[%s359 + $0xfc] sm:$0x1]
        %v1269 = vld [vmem:[%s359 + $0xfd] sm:$0x1]
        %v1270 = vld [vmem:[%s359 + $0xfe] sm:$0x1]
        %v1271 = vld [vmem:[%s359 + $0xff] sm:$0x1]
        %s1272 = scalar_lea.vmem [#allocation2], 19
        %vm1273 = vcmask 16384
        %1274 = vst.msk [vmem:[%s1272] sm:$0x1] %vm1273, %v1016
        %1275 = vst.msk [vmem:[%s1272 + $0x1] sm:$0x1] %vm1273, %v1017
        %1276 = vst.msk [vmem:[%s1272 + $0x2] sm:$0x1] %vm1273, %v1018
        %1277 = vst.msk [vmem:[%s1272 + $0x3] sm:$0x1] %vm1273, %v1019
        %1278 = vst.msk [vmem:[%s1272 + $0x4] sm:$0x1] %vm1273, %v1020
        %1279 = vst.msk [vmem:[%s1272 + $0x5] sm:$0x1] %vm1273, %v1021
        %1280 = vst.msk [vmem:[%s1272 + $0x6] sm:$0x1] %vm1273, %v1022
        %1281 = vst.msk [vmem:[%s1272 + $0x7] sm:$0x1] %vm1273, %v1023
        %1282 = vst.msk [vmem:[%s1272 + $0x8] sm:$0x1] %vm1273, %v1024
        %1283 = vst.msk [vmem:[%s1272 + $0x9] sm:$0x1] %vm1273, %v1025
        %1284 = vst.msk [vmem:[%s1272 + $0xa] sm:$0x1] %vm1273, %v1026
        %1285 = vst.msk [vmem:[%s1272 + $0xb] sm:$0x1] %vm1273, %v1027
        %1286 = vst.msk [vmem:[%s1272 + $0xc] sm:$0x1] %vm1273, %v1028
        %1287 = vst.msk [vmem:[%s1272 + $0xd] sm:$0x1] %vm1273, %v1029
        %1288 = vst.msk [vmem:[%s1272 + $0xe] sm:$0x1] %vm1273, %v1030
        %1289 = vst.msk [vmem:[%s1272 + $0xf] sm:$0x1] %vm1273, %v1031
        %1290 = vst.msk [vmem:[%s1272 + $0x12] sm:$0x1] %vm1273, %v1032
        %1291 = vst.msk [vmem:[%s1272 + $0x13] sm:$0x1] %vm1273, %v1033
        %1292 = vst.msk [vmem:[%s1272 + $0x14] sm:$0x1] %vm1273, %v1034
        %1293 = vst.msk [vmem:[%s1272 + $0x15] sm:$0x1] %vm1273, %v1035
        %1294 = vst.msk [vmem:[%s1272 + $0x16] sm:$0x1] %vm1273, %v1036
        %1295 = vst.msk [vmem:[%s1272 + $0x17] sm:$0x1] %vm1273, %v1037
        %1296 = vst.msk [vmem:[%s1272 + $0x18] sm:$0x1] %vm1273, %v1038
        %1297 = vst.msk [vmem:[%s1272 + $0x19] sm:$0x1] %vm1273, %v1039
        %1298 = vst.msk [vmem:[%s1272 + $0x1a] sm:$0x1] %vm1273, %v1040
        %1299 = vst.msk [vmem:[%s1272 + $0x1b] sm:$0x1] %vm1273, %v1041
        %1300 = vst.msk [vmem:[%s1272 + $0x1c] sm:$0x1] %vm1273, %v1042
        %1301 = vst.msk [vmem:[%s1272 + $0x1d] sm:$0x1] %vm1273, %v1043
        %1302 = vst.msk [vmem:[%s1272 + $0x1e] sm:$0x1] %vm1273, %v1044
        %1303 = vst.msk [vmem:[%s1272 + $0x1f] sm:$0x1] %vm1273, %v1045
        %1304 = vst.msk [vmem:[%s1272 + $0x20] sm:$0x1] %vm1273, %v1046
        %1305 = vst.msk [vmem:[%s1272 + $0x21] sm:$0x1] %vm1273, %v1047
        %1306 = vst.msk [vmem:[%s1272 + $0x24] sm:$0x1] %vm1273, %v1048
        %1307 = vst.msk [vmem:[%s1272 + $0x25] sm:$0x1] %vm1273, %v1049
        %1308 = vst.msk [vmem:[%s1272 + $0x26] sm:$0x1] %vm1273, %v1050
        %1309 = vst.msk [vmem:[%s1272 + $0x27] sm:$0x1] %vm1273, %v1051
        %1310 = vst.msk [vmem:[%s1272 + $0x28] sm:$0x1] %vm1273, %v1052
        %1311 = vst.msk [vmem:[%s1272 + $0x29] sm:$0x1] %vm1273, %v1053
        %1312 = vst.msk [vmem:[%s1272 + $0x2a] sm:$0x1] %vm1273, %v1054
        %1313 = vst.msk [vmem:[%s1272 + $0x2b] sm:$0x1] %vm1273, %v1055
        %1314 = vst.msk [vmem:[%s1272 + $0x2c] sm:$0x1] %vm1273, %v1056
        %1315 = vst.msk [vmem:[%s1272 + $0x2d] sm:$0x1] %vm1273, %v1057
        %1316 = vst.msk [vmem:[%s1272 + $0x2e] sm:$0x1] %vm1273, %v1058
        %1317 = vst.msk [vmem:[%s1272 + $0x2f] sm:$0x1] %vm1273, %v1059
        %1318 = vst.msk [vmem:[%s1272 + $0x30] sm:$0x1] %vm1273, %v1060
        %1319 = vst.msk [vmem:[%s1272 + $0x31] sm:$0x1] %vm1273, %v1061
        %1320 = vst.msk [vmem:[%s1272 + $0x32] sm:$0x1] %vm1273, %v1062
        %1321 = vst.msk [vmem:[%s1272 + $0x33] sm:$0x1] %vm1273, %v1063
        %1322 = vst.msk [vmem:[%s1272 + $0x36] sm:$0x1] %vm1273, %v1064
        %1323 = vst.msk [vmem:[%s1272 + $0x37] sm:$0x1] %vm1273, %v1065
        %1324 = vst.msk [vmem:[%s1272 + $0x38] sm:$0x1] %vm1273, %v1066
        %1325 = vst.msk [vmem:[%s1272 + $0x39] sm:$0x1] %vm1273, %v1067
        %1326 = vst.msk [vmem:[%s1272 + $0x3a] sm:$0x1] %vm1273, %v1068
        %1327 = vst.msk [vmem:[%s1272 + $0x3b] sm:$0x1] %vm1273, %v1069
        %1328 = vst.msk [vmem:[%s1272 + $0x3c] sm:$0x1] %vm1273, %v1070
        %1329 = vst.msk [vmem:[%s1272 + $0x3d] sm:$0x1] %vm1273, %v1071
        %1330 = vst.msk [vmem:[%s1272 + $0x3e] sm:$0x1] %vm1273, %v1072
        %1331 = vst.msk [vmem:[%s1272 + $0x3f] sm:$0x1] %vm1273, %v1073
        %1332 = vst.msk [vmem:[%s1272 + $0x40] sm:$0x1] %vm1273, %v1074
        %1333 = vst.msk [vmem:[%s1272 + $0x41] sm:$0x1] %vm1273, %v1075
        %1334 = vst.msk [vmem:[%s1272 + $0x42] sm:$0x1] %vm1273, %v1076
        %1335 = vst.msk [vmem:[%s1272 + $0x43] sm:$0x1] %vm1273, %v1077
        %1336 = vst.msk [vmem:[%s1272 + $0x44] sm:$0x1] %vm1273, %v1078
        %1337 = vst.msk [vmem:[%s1272 + $0x45] sm:$0x1] %vm1273, %v1079
        %1338 = vst.msk [vmem:[%s1272 + $0x48] sm:$0x1] %vm1273, %v1080
        %1339 = vst.msk [vmem:[%s1272 + $0x49] sm:$0x1] %vm1273, %v1081
        %1340 = vst.msk [vmem:[%s1272 + $0x4a] sm:$0x1] %vm1273, %v1082
        %1341 = vst.msk [vmem:[%s1272 + $0x4b] sm:$0x1] %vm1273, %v1083
        %1342 = vst.msk [vmem:[%s1272 + $0x4c] sm:$0x1] %vm1273, %v1084
        %1343 = vst.msk [vmem:[%s1272 + $0x4d] sm:$0x1] %vm1273, %v1085
        %1344 = vst.msk [vmem:[%s1272 + $0x4e] sm:$0x1] %vm1273, %v1086
        %1345 = vst.msk [vmem:[%s1272 + $0x4f] sm:$0x1] %vm1273, %v1087
        %1346 = vst.msk [vmem:[%s1272 + $0x50] sm:$0x1] %vm1273, %v1088
        %1347 = vst.msk [vmem:[%s1272 + $0x51] sm:$0x1] %vm1273, %v1089
        %1348 = vst.msk [vmem:[%s1272 + $0x52] sm:$0x1] %vm1273, %v1090
        %1349 = vst.msk [vmem:[%s1272 + $0x53] sm:$0x1] %vm1273, %v1091
        %1350 = vst.msk [vmem:[%s1272 + $0x54] sm:$0x1] %vm1273, %v1092
        %1351 = vst.msk [vmem:[%s1272 + $0x55] sm:$0x1] %vm1273, %v1093
        %1352 = vst.msk [vmem:[%s1272 + $0x56] sm:$0x1] %vm1273, %v1094
        %1353 = vst.msk [vmem:[%s1272 + $0x57] sm:$0x1] %vm1273, %v1095
        %1354 = vst.msk [vmem:[%s1272 + $0x5a] sm:$0x1] %vm1273, %v1096
        %1355 = vst.msk [vmem:[%s1272 + $0x5b] sm:$0x1] %vm1273, %v1097
        %1356 = vst.msk [vmem:[%s1272 + $0x5c] sm:$0x1] %vm1273, %v1098
        %1357 = vst.msk [vmem:[%s1272 + $0x5d] sm:$0x1] %vm1273, %v1099
        %1358 = vst.msk [vmem:[%s1272 + $0x5e] sm:$0x1] %vm1273, %v1100
        %1359 = vst.msk [vmem:[%s1272 + $0x5f] sm:$0x1] %vm1273, %v1101
        %1360 = vst.msk [vmem:[%s1272 + $0x60] sm:$0x1] %vm1273, %v1102
        %1361 = vst.msk [vmem:[%s1272 + $0x61] sm:$0x1] %vm1273, %v1103
        %1362 = vst.msk [vmem:[%s1272 + $0x62] sm:$0x1] %vm1273, %v1104
        %1363 = vst.msk [vmem:[%s1272 + $0x63] sm:$0x1] %vm1273, %v1105
        %1364 = vst.msk [vmem:[%s1272 + $0x64] sm:$0x1] %vm1273, %v1106
        %1365 = vst.msk [vmem:[%s1272 + $0x65] sm:$0x1] %vm1273, %v1107
        %1366 = vst.msk [vmem:[%s1272 + $0x66] sm:$0x1] %vm1273, %v1108
        %1367 = vst.msk [vmem:[%s1272 + $0x67] sm:$0x1] %vm1273, %v1109
        %1368 = vst.msk [vmem:[%s1272 + $0x68] sm:$0x1] %vm1273, %v1110
        %1369 = vst.msk [vmem:[%s1272 + $0x69] sm:$0x1] %vm1273, %v1111
        %1370 = vst.msk [vmem:[%s1272 + $0x6c] sm:$0x1] %vm1273, %v1112
        %1371 = vst.msk [vmem:[%s1272 + $0x6d] sm:$0x1] %vm1273, %v1113
        %1372 = vst.msk [vmem:[%s1272 + $0x6e] sm:$0x1] %vm1273, %v1114
        %1373 = vst.msk [vmem:[%s1272 + $0x6f] sm:$0x1] %vm1273, %v1115
        %1374 = vst.msk [vmem:[%s1272 + $0x70] sm:$0x1] %vm1273, %v1116
        %1375 = vst.msk [vmem:[%s1272 + $0x71] sm:$0x1] %vm1273, %v1117
        %1376 = vst.msk [vmem:[%s1272 + $0x72] sm:$0x1] %vm1273, %v1118
        %1377 = vst.msk [vmem:[%s1272 + $0x73] sm:$0x1] %vm1273, %v1119
        %1378 = vst.msk [vmem:[%s1272 + $0x74] sm:$0x1] %vm1273, %v1120
        %1379 = vst.msk [vmem:[%s1272 + $0x75] sm:$0x1] %vm1273, %v1121
        %1380 = vst.msk [vmem:[%s1272 + $0x76] sm:$0x1] %vm1273, %v1122
        %1381 = vst.msk [vmem:[%s1272 + $0x77] sm:$0x1] %vm1273, %v1123
        %1382 = vst.msk [vmem:[%s1272 + $0x78] sm:$0x1] %vm1273, %v1124
        %1383 = vst.msk [vmem:[%s1272 + $0x79] sm:$0x1] %vm1273, %v1125
        %1384 = vst.msk [vmem:[%s1272 + $0x7a] sm:$0x1] %vm1273, %v1126
        %1385 = vst.msk [vmem:[%s1272 + $0x7b] sm:$0x1] %vm1273, %v1127
        %1386 = vst.msk [vmem:[%s1272 + $0x7e] sm:$0x1] %vm1273, %v1128
        %1387 = vst.msk [vmem:[%s1272 + $0x7f] sm:$0x1] %vm1273, %v1129
        %1388 = vst.msk [vmem:[%s1272 + $0x80] sm:$0x1] %vm1273, %v1130
        %1389 = vst.msk [vmem:[%s1272 + $0x81] sm:$0x1] %vm1273, %v1131
        %1390 = vst.msk [vmem:[%s1272 + $0x82] sm:$0x1] %vm1273, %v1132
        %1391 = vst.msk [vmem:[%s1272 + $0x83] sm:$0x1] %vm1273, %v1133
        %1392 = vst.msk [vmem:[%s1272 + $0x84] sm:$0x1] %vm1273, %v1134
        %1393 = vst.msk [vmem:[%s1272 + $0x85] sm:$0x1] %vm1273, %v1135
        %1394 = vst.msk [vmem:[%s1272 + $0x86] sm:$0x1] %vm1273, %v1136
        %1395 = vst.msk [vmem:[%s1272 + $0x87] sm:$0x1] %vm1273, %v1137
        %1396 = vst.msk [vmem:[%s1272 + $0x88] sm:$0x1] %vm1273, %v1138
        %1397 = vst.msk [vmem:[%s1272 + $0x89] sm:$0x1] %vm1273, %v1139
        %1398 = vst.msk [vmem:[%s1272 + $0x8a] sm:$0x1] %vm1273, %v1140
        %1399 = vst.msk [vmem:[%s1272 + $0x8b] sm:$0x1] %vm1273, %v1141
        %1400 = vst.msk [vmem:[%s1272 + $0x8c] sm:$0x1] %vm1273, %v1142
        %1401 = vst.msk [vmem:[%s1272 + $0x8d] sm:$0x1] %vm1273, %v1143
        %1402 = vst.msk [vmem:[%s1272 + $0x90] sm:$0x1] %vm1273, %v1144
        %1403 = vst.msk [vmem:[%s1272 + $0x91] sm:$0x1] %vm1273, %v1145
        %1404 = vst.msk [vmem:[%s1272 + $0x92] sm:$0x1] %vm1273, %v1146
        %1405 = vst.msk [vmem:[%s1272 + $0x93] sm:$0x1] %vm1273, %v1147
        %1406 = vst.msk [vmem:[%s1272 + $0x94] sm:$0x1] %vm1273, %v1148
        %1407 = vst.msk [vmem:[%s1272 + $0x95] sm:$0x1] %vm1273, %v1149
        %1408 = vst.msk [vmem:[%s1272 + $0x96] sm:$0x1] %vm1273, %v1150
        %1409 = vst.msk [vmem:[%s1272 + $0x97] sm:$0x1] %vm1273, %v1151
        %1410 = vst.msk [vmem:[%s1272 + $0x98] sm:$0x1] %vm1273, %v1152
        %1411 = vst.msk [vmem:[%s1272 + $0x99] sm:$0x1] %vm1273, %v1153
        %1412 = vst.msk [vmem:[%s1272 + $0x9a] sm:$0x1] %vm1273, %v1154
        %1413 = vst.msk [vmem:[%s1272 + $0x9b] sm:$0x1] %vm1273, %v1155
        %1414 = vst.msk [vmem:[%s1272 + $0x9c] sm:$0x1] %vm1273, %v1156
        %1415 = vst.msk [vmem:[%s1272 + $0x9d] sm:$0x1] %vm1273, %v1157
        %1416 = vst.msk [vmem:[%s1272 + $0x9e] sm:$0x1] %vm1273, %v1158
        %1417 = vst.msk [vmem:[%s1272 + $0x9f] sm:$0x1] %vm1273, %v1159
        %1418 = vst.msk [vmem:[%s1272 + $0xa2] sm:$0x1] %vm1273, %v1160
        %1419 = vst.msk [vmem:[%s1272 + $0xa3] sm:$0x1] %vm1273, %v1161
        %1420 = vst.msk [vmem:[%s1272 + $0xa4] sm:$0x1] %vm1273, %v1162
        %1421 = vst.msk [vmem:[%s1272 + $0xa5] sm:$0x1] %vm1273, %v1163
        %1422 = vst.msk [vmem:[%s1272 + $0xa6] sm:$0x1] %vm1273, %v1164
        %1423 = vst.msk [vmem:[%s1272 + $0xa7] sm:$0x1] %vm1273, %v1165
        %1424 = vst.msk [vmem:[%s1272 + $0xa8] sm:$0x1] %vm1273, %v1166
        %1425 = vst.msk [vmem:[%s1272 + $0xa9] sm:$0x1] %vm1273, %v1167
        %1426 = vst.msk [vmem:[%s1272 + $0xaa] sm:$0x1] %vm1273, %v1168
        %1427 = vst.msk [vmem:[%s1272 + $0xab] sm:$0x1] %vm1273, %v1169
        %1428 = vst.msk [vmem:[%s1272 + $0xac] sm:$0x1] %vm1273, %v1170
        %1429 = vst.msk [vmem:[%s1272 + $0xad] sm:$0x1] %vm1273, %v1171
        %1430 = vst.msk [vmem:[%s1272 + $0xae] sm:$0x1] %vm1273, %v1172
        %1431 = vst.msk [vmem:[%s1272 + $0xaf] sm:$0x1] %vm1273, %v1173
        %1432 = vst.msk [vmem:[%s1272 + $0xb0] sm:$0x1] %vm1273, %v1174
        %1433 = vst.msk [vmem:[%s1272 + $0xb1] sm:$0x1] %vm1273, %v1175
        %1434 = vst.msk [vmem:[%s1272 + $0xb4] sm:$0x1] %vm1273, %v1176
        %1435 = vst.msk [vmem:[%s1272 + $0xb5] sm:$0x1] %vm1273, %v1177
        %1436 = vst.msk [vmem:[%s1272 + $0xb6] sm:$0x1] %vm1273, %v1178
        %1437 = vst.msk [vmem:[%s1272 + $0xb7] sm:$0x1] %vm1273, %v1179
        %1438 = vst.msk [vmem:[%s1272 + $0xb8] sm:$0x1] %vm1273, %v1180
        %1439 = vst.msk [vmem:[%s1272 + $0xb9] sm:$0x1] %vm1273, %v1181
        %1440 = vst.msk [vmem:[%s1272 + $0xba] sm:$0x1] %vm1273, %v1182
        %1441 = vst.msk [vmem:[%s1272 + $0xbb] sm:$0x1] %vm1273, %v1183
        %1442 = vst.msk [vmem:[%s1272 + $0xbc] sm:$0x1] %vm1273, %v1184
        %1443 = vst.msk [vmem:[%s1272 + $0xbd] sm:$0x1] %vm1273, %v1185
        %1444 = vst.msk [vmem:[%s1272 + $0xbe] sm:$0x1] %vm1273, %v1186
        %1445 = vst.msk [vmem:[%s1272 + $0xbf] sm:$0x1] %vm1273, %v1187
        %1446 = vst.msk [vmem:[%s1272 + $0xc0] sm:$0x1] %vm1273, %v1188
        %1447 = vst.msk [vmem:[%s1272 + $0xc1] sm:$0x1] %vm1273, %v1189
        %1448 = vst.msk [vmem:[%s1272 + $0xc2] sm:$0x1] %vm1273, %v1190
        %1449 = vst.msk [vmem:[%s1272 + $0xc3] sm:$0x1] %vm1273, %v1191
        %1450 = vst.msk [vmem:[%s1272 + $0xc6] sm:$0x1] %vm1273, %v1192
        %1451 = vst.msk [vmem:[%s1272 + $0xc7] sm:$0x1] %vm1273, %v1193
        %1452 = vst.msk [vmem:[%s1272 + $0xc8] sm:$0x1] %vm1273, %v1194
        %1453 = vst.msk [vmem:[%s1272 + $0xc9] sm:$0x1] %vm1273, %v1195
        %1454 = vst.msk [vmem:[%s1272 + $0xca] sm:$0x1] %vm1273, %v1196
        %1455 = vst.msk [vmem:[%s1272 + $0xcb] sm:$0x1] %vm1273, %v1197
        %1456 = vst.msk [vmem:[%s1272 + $0xcc] sm:$0x1] %vm1273, %v1198
        %1457 = vst.msk [vmem:[%s1272 + $0xcd] sm:$0x1] %vm1273, %v1199
        %1458 = vst.msk [vmem:[%s1272 + $0xce] sm:$0x1] %vm1273, %v1200
        %1459 = vst.msk [vmem:[%s1272 + $0xcf] sm:$0x1] %vm1273, %v1201
        %1460 = vst.msk [vmem:[%s1272 + $0xd0] sm:$0x1] %vm1273, %v1202
        %1461 = vst.msk [vmem:[%s1272 + $0xd1] sm:$0x1] %vm1273, %v1203
        %1462 = vst.msk [vmem:[%s1272 + $0xd2] sm:$0x1] %vm1273, %v1204
        %1463 = vst.msk [vmem:[%s1272 + $0xd3] sm:$0x1] %vm1273, %v1205
        %1464 = vst.msk [vmem:[%s1272 + $0xd4] sm:$0x1] %vm1273, %v1206
        %1465 = vst.msk [vmem:[%s1272 + $0xd5] sm:$0x1] %vm1273, %v1207
        %1466 = vst.msk [vmem:[%s1272 + $0xd8] sm:$0x1] %vm1273, %v1208
        %1467 = vst.msk [vmem:[%s1272 + $0xd9] sm:$0x1] %vm1273, %v1209
        %1468 = vst.msk [vmem:[%s1272 + $0xda] sm:$0x1] %vm1273, %v1210
        %1469 = vst.msk [vmem:[%s1272 + $0xdb] sm:$0x1] %vm1273, %v1211
        %1470 = vst.msk [vmem:[%s1272 + $0xdc] sm:$0x1] %vm1273, %v1212
        %1471 = vst.msk [vmem:[%s1272 + $0xdd] sm:$0x1] %vm1273, %v1213
        %1472 = vst.msk [vmem:[%s1272 + $0xde] sm:$0x1] %vm1273, %v1214
        %1473 = vst.msk [vmem:[%s1272 + $0xdf] sm:$0x1] %vm1273, %v1215
        %1474 = vst.msk [vmem:[%s1272 + $0xe0] sm:$0x1] %vm1273, %v1216
        %1475 = vst.msk [vmem:[%s1272 + $0xe1] sm:$0x1] %vm1273, %v1217
        %1476 = vst.msk [vmem:[%s1272 + $0xe2] sm:$0x1] %vm1273, %v1218
        %1477 = vst.msk [vmem:[%s1272 + $0xe3] sm:$0x1] %vm1273, %v1219
        %1478 = vst.msk [vmem:[%s1272 + $0xe4] sm:$0x1] %vm1273, %v1220
        %1479 = vst.msk [vmem:[%s1272 + $0xe5] sm:$0x1] %vm1273, %v1221
        %1480 = vst.msk [vmem:[%s1272 + $0xe6] sm:$0x1] %vm1273, %v1222
        %1481 = vst.msk [vmem:[%s1272 + $0xe7] sm:$0x1] %vm1273, %v1223
        %1482 = vst.msk [vmem:[%s1272 + $0xea] sm:$0x1] %vm1273, %v1224
        %1483 = vst.msk [vmem:[%s1272 + $0xeb] sm:$0x1] %vm1273, %v1225
        %1484 = vst.msk [vmem:[%s1272 + $0xec] sm:$0x1] %vm1273, %v1226
        %1485 = vst.msk [vmem:[%s1272 + $0xed] sm:$0x1] %vm1273, %v1227
        %1486 = vst.msk [vmem:[%s1272 + $0xee] sm:$0x1] %vm1273, %v1228
        %1487 = vst.msk [vmem:[%s1272 + $0xef] sm:$0x1] %vm1273, %v1229
        %1488 = vst.msk [vmem:[%s1272 + $0xf0] sm:$0x1] %vm1273, %v1230
        %1489 = vst.msk [vmem:[%s1272 + $0xf1] sm:$0x1] %vm1273, %v1231
        %1490 = vst.msk [vmem:[%s1272 + $0xf2] sm:$0x1] %vm1273, %v1232
        %1491 = vst.msk [vmem:[%s1272 + $0xf3] sm:$0x1] %vm1273, %v1233
        %1492 = vst.msk [vmem:[%s1272 + $0xf4] sm:$0x1] %vm1273, %v1234
        %1493 = vst.msk [vmem:[%s1272 + $0xf5] sm:$0x1] %vm1273, %v1235
        %1494 = vst.msk [vmem:[%s1272 + $0xf6] sm:$0x1] %vm1273, %v1236
        %1495 = vst.msk [vmem:[%s1272 + $0xf7] sm:$0x1] %vm1273, %v1237
        %1496 = vst.msk [vmem:[%s1272 + $0xf8] sm:$0x1] %vm1273, %v1238
        %1497 = vst.msk [vmem:[%s1272 + $0xf9] sm:$0x1] %vm1273, %v1239
        %1498 = vst.msk [vmem:[%s1272 + $0xfc] sm:$0x1] %vm1273, %v1240
        %1499 = vst.msk [vmem:[%s1272 + $0xfd] sm:$0x1] %vm1273, %v1241
        %1500 = vst.msk [vmem:[%s1272 + $0xfe] sm:$0x1] %vm1273, %v1242
        %1501 = vst.msk [vmem:[%s1272 + $0xff] sm:$0x1] %vm1273, %v1243
        %1502 = vst.msk [vmem:[%s1272 + $0x100] sm:$0x1] %vm1273, %v1244
        %1503 = vst.msk [vmem:[%s1272 + $0x101] sm:$0x1] %vm1273, %v1245
        %1504 = vst.msk [vmem:[%s1272 + $0x102] sm:$0x1] %vm1273, %v1246
        %1505 = vst.msk [vmem:[%s1272 + $0x103] sm:$0x1] %vm1273, %v1247
        %1506 = vst.msk [vmem:[%s1272 + $0x104] sm:$0x1] %vm1273, %v1248
        %1507 = vst.msk [vmem:[%s1272 + $0x105] sm:$0x1] %vm1273, %v1249
        %1508 = vst.msk [vmem:[%s1272 + $0x106] sm:$0x1] %vm1273, %v1250
        %1509 = vst.msk [vmem:[%s1272 + $0x107] sm:$0x1] %vm1273, %v1251
        %1510 = vst.msk [vmem:[%s1272 + $0x108] sm:$0x1] %vm1273, %v1252
        %1511 = vst.msk [vmem:[%s1272 + $0x109] sm:$0x1] %vm1273, %v1253
        %1512 = vst.msk [vmem:[%s1272 + $0x10a] sm:$0x1] %vm1273, %v1254
        %1513 = vst.msk [vmem:[%s1272 + $0x10b] sm:$0x1] %vm1273, %v1255
        %1514 = vst.msk [vmem:[%s1272 + $0x10e] sm:$0x1] %vm1273, %v1256
        %1515 = vst.msk [vmem:[%s1272 + $0x10f] sm:$0x1] %vm1273, %v1257
        %1516 = vst.msk [vmem:[%s1272 + $0x110] sm:$0x1] %vm1273, %v1258
        %1517 = vst.msk [vmem:[%s1272 + $0x111] sm:$0x1] %vm1273, %v1259
        %1518 = vst.msk [vmem:[%s1272 + $0x112] sm:$0x1] %vm1273, %v1260
        %1519 = vst.msk [vmem:[%s1272 + $0x113] sm:$0x1] %vm1273, %v1261
        %1520 = vst.msk [vmem:[%s1272 + $0x114] sm:$0x1] %vm1273, %v1262
        %1521 = vst.msk [vmem:[%s1272 + $0x115] sm:$0x1] %vm1273, %v1263
        %1522 = vst.msk [vmem:[%s1272 + $0x116] sm:$0x1] %vm1273, %v1264
        %1523 = vst.msk [vmem:[%s1272 + $0x117] sm:$0x1] %vm1273, %v1265
        %1524 = vst.msk [vmem:[%s1272 + $0x118] sm:$0x1] %vm1273, %v1266
        %1525 = vst.msk [vmem:[%s1272 + $0x119] sm:$0x1] %vm1273, %v1267
        %1526 = vst.msk [vmem:[%s1272 + $0x11a] sm:$0x1] %vm1273, %v1268
        %1527 = vst.msk [vmem:[%s1272 + $0x11b] sm:$0x1] %vm1273, %v1269
        %1528 = vst.msk [vmem:[%s1272 + $0x11c] sm:$0x1] %vm1273, %v1270
        %1529 = vst.msk [vmem:[%s1272 + $0x11d] sm:$0x1] %vm1273, %v1271
        %v1530 = vld [vmem:[%s363] sm:$0x1]
        %v1531 = vld [vmem:[%s363 + $0x1] sm:$0x1]
        %v1532 = vld [vmem:[%s363 + $0x2] sm:$0x1]
        %v1533 = vld [vmem:[%s363 + $0x3] sm:$0x1]
        %v1534 = vld [vmem:[%s363 + $0x4] sm:$0x1]
        %v1535 = vld [vmem:[%s363 + $0x5] sm:$0x1]
        %v1536 = vld [vmem:[%s363 + $0x6] sm:$0x1]
        %v1537 = vld [vmem:[%s363 + $0x7] sm:$0x1]
        %v1538 = vld [vmem:[%s363 + $0x8] sm:$0x1]
        %v1539 = vld [vmem:[%s363 + $0x9] sm:$0x1]
        %v1540 = vld [vmem:[%s363 + $0xa] sm:$0x1]
        %v1541 = vld [vmem:[%s363 + $0xb] sm:$0x1]
        %v1542 = vld [vmem:[%s363 + $0xc] sm:$0x1]
        %v1543 = vld [vmem:[%s363 + $0xd] sm:$0x1]
        %v1544 = vld [vmem:[%s363 + $0xe] sm:$0x1]
        %v1545 = vld [vmem:[%s363 + $0xf] sm:$0x1]
        %v1546 = vld [vmem:[%s363 + $0x10] sm:$0x1]
        %v1547 = vld [vmem:[%s363 + $0x11] sm:$0x1]
        %v1548 = vld [vmem:[%s363 + $0x12] sm:$0x1]
        %v1549 = vld [vmem:[%s363 + $0x13] sm:$0x1]
        %v1550 = vld [vmem:[%s363 + $0x14] sm:$0x1]
        %v1551 = vld [vmem:[%s363 + $0x15] sm:$0x1]
        %v1552 = vld [vmem:[%s363 + $0x16] sm:$0x1]
        %v1553 = vld [vmem:[%s363 + $0x17] sm:$0x1]
        %v1554 = vld [vmem:[%s363 + $0x18] sm:$0x1]
        %v1555 = vld [vmem:[%s363 + $0x19] sm:$0x1]
        %v1556 = vld [vmem:[%s363 + $0x1a] sm:$0x1]
        %v1557 = vld [vmem:[%s363 + $0x1b] sm:$0x1]
        %v1558 = vld [vmem:[%s363 + $0x1c] sm:$0x1]
        %v1559 = vld [vmem:[%s363 + $0x1d] sm:$0x1]
        %v1560 = vld [vmem:[%s363 + $0x1e] sm:$0x1]
        %v1561 = vld [vmem:[%s363 + $0x1f] sm:$0x1]
        %v1562 = vld [vmem:[%s363 + $0x20] sm:$0x1]
        %v1563 = vld [vmem:[%s363 + $0x21] sm:$0x1]
        %v1564 = vld [vmem:[%s363 + $0x22] sm:$0x1]
        %v1565 = vld [vmem:[%s363 + $0x23] sm:$0x1]
        %v1566 = vld [vmem:[%s363 + $0x24] sm:$0x1]
        %v1567 = vld [vmem:[%s363 + $0x25] sm:$0x1]
        %v1568 = vld [vmem:[%s363 + $0x26] sm:$0x1]
        %v1569 = vld [vmem:[%s363 + $0x27] sm:$0x1]
        %v1570 = vld [vmem:[%s363 + $0x28] sm:$0x1]
        %v1571 = vld [vmem:[%s363 + $0x29] sm:$0x1]
        %v1572 = vld [vmem:[%s363 + $0x2a] sm:$0x1]
        %v1573 = vld [vmem:[%s363 + $0x2b] sm:$0x1]
        %v1574 = vld [vmem:[%s363 + $0x2c] sm:$0x1]
        %v1575 = vld [vmem:[%s363 + $0x2d] sm:$0x1]
        %v1576 = vld [vmem:[%s363 + $0x2e] sm:$0x1]
        %v1577 = vld [vmem:[%s363 + $0x2f] sm:$0x1]
        %v1578 = vld [vmem:[%s363 + $0x30] sm:$0x1]
        %v1579 = vld [vmem:[%s363 + $0x31] sm:$0x1]
        %v1580 = vld [vmem:[%s363 + $0x32] sm:$0x1]
        %v1581 = vld [vmem:[%s363 + $0x33] sm:$0x1]
        %v1582 = vld [vmem:[%s363 + $0x34] sm:$0x1]
        %v1583 = vld [vmem:[%s363 + $0x35] sm:$0x1]
        %v1584 = vld [vmem:[%s363 + $0x36] sm:$0x1]
        %v1585 = vld [vmem:[%s363 + $0x37] sm:$0x1]
        %v1586 = vld [vmem:[%s363 + $0x38] sm:$0x1]
        %v1587 = vld [vmem:[%s363 + $0x39] sm:$0x1]
        %v1588 = vld [vmem:[%s363 + $0x3a] sm:$0x1]
        %v1589 = vld [vmem:[%s363 + $0x3b] sm:$0x1]
        %v1590 = vld [vmem:[%s363 + $0x3c] sm:$0x1]
        %v1591 = vld [vmem:[%s363 + $0x3d] sm:$0x1]
        %v1592 = vld [vmem:[%s363 + $0x3e] sm:$0x1]
        %v1593 = vld [vmem:[%s363 + $0x3f] sm:$0x1]
        %v1594 = vld [vmem:[%s363 + $0x40] sm:$0x1]
        %v1595 = vld [vmem:[%s363 + $0x41] sm:$0x1]
        %v1596 = vld [vmem:[%s363 + $0x42] sm:$0x1]
        %v1597 = vld [vmem:[%s363 + $0x43] sm:$0x1]
        %v1598 = vld [vmem:[%s363 + $0x44] sm:$0x1]
        %v1599 = vld [vmem:[%s363 + $0x45] sm:$0x1]
        %v1600 = vld [vmem:[%s363 + $0x46] sm:$0x1]
        %v1601 = vld [vmem:[%s363 + $0x47] sm:$0x1]
        %v1602 = vld [vmem:[%s363 + $0x48] sm:$0x1]
        %v1603 = vld [vmem:[%s363 + $0x49] sm:$0x1]
        %v1604 = vld [vmem:[%s363 + $0x4a] sm:$0x1]
        %v1605 = vld [vmem:[%s363 + $0x4b] sm:$0x1]
        %v1606 = vld [vmem:[%s363 + $0x4c] sm:$0x1]
        %v1607 = vld [vmem:[%s363 + $0x4d] sm:$0x1]
        %v1608 = vld [vmem:[%s363 + $0x4e] sm:$0x1]
        %v1609 = vld [vmem:[%s363 + $0x4f] sm:$0x1]
        %v1610 = vld [vmem:[%s363 + $0x50] sm:$0x1]
        %v1611 = vld [vmem:[%s363 + $0x51] sm:$0x1]
        %v1612 = vld [vmem:[%s363 + $0x52] sm:$0x1]
        %v1613 = vld [vmem:[%s363 + $0x53] sm:$0x1]
        %v1614 = vld [vmem:[%s363 + $0x54] sm:$0x1]
        %v1615 = vld [vmem:[%s363 + $0x55] sm:$0x1]
        %v1616 = vld [vmem:[%s363 + $0x56] sm:$0x1]
        %v1617 = vld [vmem:[%s363 + $0x57] sm:$0x1]
        %v1618 = vld [vmem:[%s363 + $0x58] sm:$0x1]
        %v1619 = vld [vmem:[%s363 + $0x59] sm:$0x1]
        %v1620 = vld [vmem:[%s363 + $0x5a] sm:$0x1]
        %v1621 = vld [vmem:[%s363 + $0x5b] sm:$0x1]
        %v1622 = vld [vmem:[%s363 + $0x5c] sm:$0x1]
        %v1623 = vld [vmem:[%s363 + $0x5d] sm:$0x1]
        %v1624 = vld [vmem:[%s363 + $0x5e] sm:$0x1]
        %v1625 = vld [vmem:[%s363 + $0x5f] sm:$0x1]
        %v1626 = vld [vmem:[%s363 + $0x60] sm:$0x1]
        %v1627 = vld [vmem:[%s363 + $0x61] sm:$0x1]
        %v1628 = vld [vmem:[%s363 + $0x62] sm:$0x1]
        %v1629 = vld [vmem:[%s363 + $0x63] sm:$0x1]
        %v1630 = vld [vmem:[%s363 + $0x64] sm:$0x1]
        %v1631 = vld [vmem:[%s363 + $0x65] sm:$0x1]
        %v1632 = vld [vmem:[%s363 + $0x66] sm:$0x1]
        %v1633 = vld [vmem:[%s363 + $0x67] sm:$0x1]
        %v1634 = vld [vmem:[%s363 + $0x68] sm:$0x1]
        %v1635 = vld [vmem:[%s363 + $0x69] sm:$0x1]
        %v1636 = vld [vmem:[%s363 + $0x6a] sm:$0x1]
        %v1637 = vld [vmem:[%s363 + $0x6b] sm:$0x1]
        %v1638 = vld [vmem:[%s363 + $0x6c] sm:$0x1]
        %v1639 = vld [vmem:[%s363 + $0x6d] sm:$0x1]
        %v1640 = vld [vmem:[%s363 + $0x6e] sm:$0x1]
        %v1641 = vld [vmem:[%s363 + $0x6f] sm:$0x1]
        %v1642 = vld [vmem:[%s363 + $0x70] sm:$0x1]
        %v1643 = vld [vmem:[%s363 + $0x71] sm:$0x1]
        %v1644 = vld [vmem:[%s363 + $0x72] sm:$0x1]
        %v1645 = vld [vmem:[%s363 + $0x73] sm:$0x1]
        %v1646 = vld [vmem:[%s363 + $0x74] sm:$0x1]
        %v1647 = vld [vmem:[%s363 + $0x75] sm:$0x1]
        %v1648 = vld [vmem:[%s363 + $0x76] sm:$0x1]
        %v1649 = vld [vmem:[%s363 + $0x77] sm:$0x1]
        %v1650 = vld [vmem:[%s363 + $0x78] sm:$0x1]
        %v1651 = vld [vmem:[%s363 + $0x79] sm:$0x1]
        %v1652 = vld [vmem:[%s363 + $0x7a] sm:$0x1]
        %v1653 = vld [vmem:[%s363 + $0x7b] sm:$0x1]
        %v1654 = vld [vmem:[%s363 + $0x7c] sm:$0x1]
        %v1655 = vld [vmem:[%s363 + $0x7d] sm:$0x1]
        %v1656 = vld [vmem:[%s363 + $0x7e] sm:$0x1]
        %v1657 = vld [vmem:[%s363 + $0x7f] sm:$0x1]
        %v1658 = vld [vmem:[%s363 + $0x80] sm:$0x1]
        %v1659 = vld [vmem:[%s363 + $0x81] sm:$0x1]
        %v1660 = vld [vmem:[%s363 + $0x82] sm:$0x1]
        %v1661 = vld [vmem:[%s363 + $0x83] sm:$0x1]
        %v1662 = vld [vmem:[%s363 + $0x84] sm:$0x1]
        %v1663 = vld [vmem:[%s363 + $0x85] sm:$0x1]
        %v1664 = vld [vmem:[%s363 + $0x86] sm:$0x1]
        %v1665 = vld [vmem:[%s363 + $0x87] sm:$0x1]
        %v1666 = vld [vmem:[%s363 + $0x88] sm:$0x1]
        %v1667 = vld [vmem:[%s363 + $0x89] sm:$0x1]
        %v1668 = vld [vmem:[%s363 + $0x8a] sm:$0x1]
        %v1669 = vld [vmem:[%s363 + $0x8b] sm:$0x1]
        %v1670 = vld [vmem:[%s363 + $0x8c] sm:$0x1]
        %v1671 = vld [vmem:[%s363 + $0x8d] sm:$0x1]
        %v1672 = vld [vmem:[%s363 + $0x8e] sm:$0x1]
        %v1673 = vld [vmem:[%s363 + $0x8f] sm:$0x1]
        %v1674 = vld [vmem:[%s363 + $0x90] sm:$0x1]
        %v1675 = vld [vmem:[%s363 + $0x91] sm:$0x1]
        %v1676 = vld [vmem:[%s363 + $0x92] sm:$0x1]
        %v1677 = vld [vmem:[%s363 + $0x93] sm:$0x1]
        %v1678 = vld [vmem:[%s363 + $0x94] sm:$0x1]
        %v1679 = vld [vmem:[%s363 + $0x95] sm:$0x1]
        %v1680 = vld [vmem:[%s363 + $0x96] sm:$0x1]
        %v1681 = vld [vmem:[%s363 + $0x97] sm:$0x1]
        %v1682 = vld [vmem:[%s363 + $0x98] sm:$0x1]
        %v1683 = vld [vmem:[%s363 + $0x99] sm:$0x1]
        %v1684 = vld [vmem:[%s363 + $0x9a] sm:$0x1]
        %v1685 = vld [vmem:[%s363 + $0x9b] sm:$0x1]
        %v1686 = vld [vmem:[%s363 + $0x9c] sm:$0x1]
        %v1687 = vld [vmem:[%s363 + $0x9d] sm:$0x1]
        %v1688 = vld [vmem:[%s363 + $0x9e] sm:$0x1]
        %v1689 = vld [vmem:[%s363 + $0x9f] sm:$0x1]
        %v1690 = vld [vmem:[%s363 + $0xa0] sm:$0x1]
        %v1691 = vld [vmem:[%s363 + $0xa1] sm:$0x1]
        %v1692 = vld [vmem:[%s363 + $0xa2] sm:$0x1]
        %v1693 = vld [vmem:[%s363 + $0xa3] sm:$0x1]
        %v1694 = vld [vmem:[%s363 + $0xa4] sm:$0x1]
        %v1695 = vld [vmem:[%s363 + $0xa5] sm:$0x1]
        %v1696 = vld [vmem:[%s363 + $0xa6] sm:$0x1]
        %v1697 = vld [vmem:[%s363 + $0xa7] sm:$0x1]
        %v1698 = vld [vmem:[%s363 + $0xa8] sm:$0x1]
        %v1699 = vld [vmem:[%s363 + $0xa9] sm:$0x1]
        %v1700 = vld [vmem:[%s363 + $0xaa] sm:$0x1]
        %v1701 = vld [vmem:[%s363 + $0xab] sm:$0x1]
        %v1702 = vld [vmem:[%s363 + $0xac] sm:$0x1]
        %v1703 = vld [vmem:[%s363 + $0xad] sm:$0x1]
        %v1704 = vld [vmem:[%s363 + $0xae] sm:$0x1]
        %v1705 = vld [vmem:[%s363 + $0xaf] sm:$0x1]
        %v1706 = vld [vmem:[%s363 + $0xb0] sm:$0x1]
        %v1707 = vld [vmem:[%s363 + $0xb1] sm:$0x1]
        %v1708 = vld [vmem:[%s363 + $0xb2] sm:$0x1]
        %v1709 = vld [vmem:[%s363 + $0xb3] sm:$0x1]
        %v1710 = vld [vmem:[%s363 + $0xb4] sm:$0x1]
        %v1711 = vld [vmem:[%s363 + $0xb5] sm:$0x1]
        %v1712 = vld [vmem:[%s363 + $0xb6] sm:$0x1]
        %v1713 = vld [vmem:[%s363 + $0xb7] sm:$0x1]
        %v1714 = vld [vmem:[%s363 + $0xb8] sm:$0x1]
        %v1715 = vld [vmem:[%s363 + $0xb9] sm:$0x1]
        %v1716 = vld [vmem:[%s363 + $0xba] sm:$0x1]
        %v1717 = vld [vmem:[%s363 + $0xbb] sm:$0x1]
        %v1718 = vld [vmem:[%s363 + $0xbc] sm:$0x1]
        %v1719 = vld [vmem:[%s363 + $0xbd] sm:$0x1]
        %v1720 = vld [vmem:[%s363 + $0xbe] sm:$0x1]
        %v1721 = vld [vmem:[%s363 + $0xbf] sm:$0x1]
        %v1722 = vld [vmem:[%s363 + $0xc0] sm:$0x1]
        %v1723 = vld [vmem:[%s363 + $0xc1] sm:$0x1]
        %v1724 = vld [vmem:[%s363 + $0xc2] sm:$0x1]
        %v1725 = vld [vmem:[%s363 + $0xc3] sm:$0x1]
        %v1726 = vld [vmem:[%s363 + $0xc4] sm:$0x1]
        %v1727 = vld [vmem:[%s363 + $0xc5] sm:$0x1]
        %v1728 = vld [vmem:[%s363 + $0xc6] sm:$0x1]
        %v1729 = vld [vmem:[%s363 + $0xc7] sm:$0x1]
        %v1730 = vld [vmem:[%s363 + $0xc8] sm:$0x1]
        %v1731 = vld [vmem:[%s363 + $0xc9] sm:$0x1]
        %v1732 = vld [vmem:[%s363 + $0xca] sm:$0x1]
        %v1733 = vld [vmem:[%s363 + $0xcb] sm:$0x1]
        %v1734 = vld [vmem:[%s363 + $0xcc] sm:$0x1]
        %v1735 = vld [vmem:[%s363 + $0xcd] sm:$0x1]
        %v1736 = vld [vmem:[%s363 + $0xce] sm:$0x1]
        %v1737 = vld [vmem:[%s363 + $0xcf] sm:$0x1]
        %v1738 = vld [vmem:[%s363 + $0xd0] sm:$0x1]
        %v1739 = vld [vmem:[%s363 + $0xd1] sm:$0x1]
        %v1740 = vld [vmem:[%s363 + $0xd2] sm:$0x1]
        %v1741 = vld [vmem:[%s363 + $0xd3] sm:$0x1]
        %v1742 = vld [vmem:[%s363 + $0xd4] sm:$0x1]
        %v1743 = vld [vmem:[%s363 + $0xd5] sm:$0x1]
        %v1744 = vld [vmem:[%s363 + $0xd6] sm:$0x1]
        %v1745 = vld [vmem:[%s363 + $0xd7] sm:$0x1]
        %v1746 = vld [vmem:[%s363 + $0xd8] sm:$0x1]
        %v1747 = vld [vmem:[%s363 + $0xd9] sm:$0x1]
        %v1748 = vld [vmem:[%s363 + $0xda] sm:$0x1]
        %v1749 = vld [vmem:[%s363 + $0xdb] sm:$0x1]
        %v1750 = vld [vmem:[%s363 + $0xdc] sm:$0x1]
        %v1751 = vld [vmem:[%s363 + $0xdd] sm:$0x1]
        %v1752 = vld [vmem:[%s363 + $0xde] sm:$0x1]
        %v1753 = vld [vmem:[%s363 + $0xdf] sm:$0x1]
        %v1754 = vld [vmem:[%s363 + $0xe0] sm:$0x1]
        %v1755 = vld [vmem:[%s363 + $0xe1] sm:$0x1]
        %v1756 = vld [vmem:[%s363 + $0xe2] sm:$0x1]
        %v1757 = vld [vmem:[%s363 + $0xe3] sm:$0x1]
        %v1758 = vld [vmem:[%s363 + $0xe4] sm:$0x1]
        %v1759 = vld [vmem:[%s363 + $0xe5] sm:$0x1]
        %v1760 = vld [vmem:[%s363 + $0xe6] sm:$0x1]
        %v1761 = vld [vmem:[%s363 + $0xe7] sm:$0x1]
        %v1762 = vld [vmem:[%s363 + $0xe8] sm:$0x1]
        %v1763 = vld [vmem:[%s363 + $0xe9] sm:$0x1]
        %v1764 = vld [vmem:[%s363 + $0xea] sm:$0x1]
        %v1765 = vld [vmem:[%s363 + $0xeb] sm:$0x1]
        %v1766 = vld [vmem:[%s363 + $0xec] sm:$0x1]
        %v1767 = vld [vmem:[%s363 + $0xed] sm:$0x1]
        %v1768 = vld [vmem:[%s363 + $0xee] sm:$0x1]
        %v1769 = vld [vmem:[%s363 + $0xef] sm:$0x1]
        %v1770 = vld [vmem:[%s363 + $0xf0] sm:$0x1]
        %v1771 = vld [vmem:[%s363 + $0xf1] sm:$0x1]
        %v1772 = vld [vmem:[%s363 + $0xf2] sm:$0x1]
        %v1773 = vld [vmem:[%s363 + $0xf3] sm:$0x1]
        %v1774 = vld [vmem:[%s363 + $0xf4] sm:$0x1]
        %v1775 = vld [vmem:[%s363 + $0xf5] sm:$0x1]
        %v1776 = vld [vmem:[%s363 + $0xf6] sm:$0x1]
        %v1777 = vld [vmem:[%s363 + $0xf7] sm:$0x1]
        %v1778 = vld [vmem:[%s363 + $0xf8] sm:$0x1]
        %v1779 = vld [vmem:[%s363 + $0xf9] sm:$0x1]
        %v1780 = vld [vmem:[%s363 + $0xfa] sm:$0x1]
        %v1781 = vld [vmem:[%s363 + $0xfb] sm:$0x1]
        %v1782 = vld [vmem:[%s363 + $0xfc] sm:$0x1]
        %v1783 = vld [vmem:[%s363 + $0xfd] sm:$0x1]
        %v1784 = vld [vmem:[%s363 + $0xfe] sm:$0x1]
        %v1785 = vld [vmem:[%s363 + $0xff] sm:$0x1]
        %s1786 = scalar_lea.vmem [#allocation3], 19
        %1787 = vst.msk [vmem:[%s1786] sm:$0x1] %vm1273, %v1530
        %1788 = vst.msk [vmem:[%s1786 + $0x1] sm:$0x1] %vm1273, %v1531
        %1789 = vst.msk [vmem:[%s1786 + $0x2] sm:$0x1] %vm1273, %v1532
        %1790 = vst.msk [vmem:[%s1786 + $0x3] sm:$0x1] %vm1273, %v1533
        %1791 = vst.msk [vmem:[%s1786 + $0x4] sm:$0x1] %vm1273, %v1534
        %1792 = vst.msk [vmem:[%s1786 + $0x5] sm:$0x1] %vm1273, %v1535
        %1793 = vst.msk [vmem:[%s1786 + $0x6] sm:$0x1] %vm1273, %v1536
        %1794 = vst.msk [vmem:[%s1786 + $0x7] sm:$0x1] %vm1273, %v1537
        %1795 = vst.msk [vmem:[%s1786 + $0x8] sm:$0x1] %vm1273, %v1538
        %1796 = vst.msk [vmem:[%s1786 + $0x9] sm:$0x1] %vm1273, %v1539
        %1797 = vst.msk [vmem:[%s1786 + $0xa] sm:$0x1] %vm1273, %v1540
        %1798 = vst.msk [vmem:[%s1786 + $0xb] sm:$0x1] %vm1273, %v1541
        %1799 = vst.msk [vmem:[%s1786 + $0xc] sm:$0x1] %vm1273, %v1542
        %1800 = vst.msk [vmem:[%s1786 + $0xd] sm:$0x1] %vm1273, %v1543
        %1801 = vst.msk [vmem:[%s1786 + $0xe] sm:$0x1] %vm1273, %v1544
        %1802 = vst.msk [vmem:[%s1786 + $0xf] sm:$0x1] %vm1273, %v1545
        %1803 = vst.msk [vmem:[%s1786 + $0x12] sm:$0x1] %vm1273, %v1546
        %1804 = vst.msk [vmem:[%s1786 + $0x13] sm:$0x1] %vm1273, %v1547
        %1805 = vst.msk [vmem:[%s1786 + $0x14] sm:$0x1] %vm1273, %v1548
        %1806 = vst.msk [vmem:[%s1786 + $0x15] sm:$0x1] %vm1273, %v1549
        %1807 = vst.msk [vmem:[%s1786 + $0x16] sm:$0x1] %vm1273, %v1550
        %1808 = vst.msk [vmem:[%s1786 + $0x17] sm:$0x1] %vm1273, %v1551
        %1809 = vst.msk [vmem:[%s1786 + $0x18] sm:$0x1] %vm1273, %v1552
        %1810 = vst.msk [vmem:[%s1786 + $0x19] sm:$0x1] %vm1273, %v1553
        %1811 = vst.msk [vmem:[%s1786 + $0x1a] sm:$0x1] %vm1273, %v1554
        %1812 = vst.msk [vmem:[%s1786 + $0x1b] sm:$0x1] %vm1273, %v1555
        %1813 = vst.msk [vmem:[%s1786 + $0x1c] sm:$0x1] %vm1273, %v1556
        %1814 = vst.msk [vmem:[%s1786 + $0x1d] sm:$0x1] %vm1273, %v1557
        %1815 = vst.msk [vmem:[%s1786 + $0x1e] sm:$0x1] %vm1273, %v1558
        %1816 = vst.msk [vmem:[%s1786 + $0x1f] sm:$0x1] %vm1273, %v1559
        %1817 = vst.msk [vmem:[%s1786 + $0x20] sm:$0x1] %vm1273, %v1560
        %1818 = vst.msk [vmem:[%s1786 + $0x21] sm:$0x1] %vm1273, %v1561
        %1819 = vst.msk [vmem:[%s1786 + $0x24] sm:$0x1] %vm1273, %v1562
        %1820 = vst.msk [vmem:[%s1786 + $0x25] sm:$0x1] %vm1273, %v1563
        %1821 = vst.msk [vmem:[%s1786 + $0x26] sm:$0x1] %vm1273, %v1564
        %1822 = vst.msk [vmem:[%s1786 + $0x27] sm:$0x1] %vm1273, %v1565
        %1823 = vst.msk [vmem:[%s1786 + $0x28] sm:$0x1] %vm1273, %v1566
        %1824 = vst.msk [vmem:[%s1786 + $0x29] sm:$0x1] %vm1273, %v1567
        %1825 = vst.msk [vmem:[%s1786 + $0x2a] sm:$0x1] %vm1273, %v1568
        %1826 = vst.msk [vmem:[%s1786 + $0x2b] sm:$0x1] %vm1273, %v1569
        %1827 = vst.msk [vmem:[%s1786 + $0x2c] sm:$0x1] %vm1273, %v1570
        %1828 = vst.msk [vmem:[%s1786 + $0x2d] sm:$0x1] %vm1273, %v1571
        %1829 = vst.msk [vmem:[%s1786 + $0x2e] sm:$0x1] %vm1273, %v1572
        %1830 = vst.msk [vmem:[%s1786 + $0x2f] sm:$0x1] %vm1273, %v1573
        %1831 = vst.msk [vmem:[%s1786 + $0x30] sm:$0x1] %vm1273, %v1574
        %1832 = vst.msk [vmem:[%s1786 + $0x31] sm:$0x1] %vm1273, %v1575
        %1833 = vst.msk [vmem:[%s1786 + $0x32] sm:$0x1] %vm1273, %v1576
        %1834 = vst.msk [vmem:[%s1786 + $0x33] sm:$0x1] %vm1273, %v1577
        %1835 = vst.msk [vmem:[%s1786 + $0x36] sm:$0x1] %vm1273, %v1578
        %1836 = vst.msk [vmem:[%s1786 + $0x37] sm:$0x1] %vm1273, %v1579
        %1837 = vst.msk [vmem:[%s1786 + $0x38] sm:$0x1] %vm1273, %v1580
        %1838 = vst.msk [vmem:[%s1786 + $0x39] sm:$0x1] %vm1273, %v1581
        %1839 = vst.msk [vmem:[%s1786 + $0x3a] sm:$0x1] %vm1273, %v1582
        %1840 = vst.msk [vmem:[%s1786 + $0x3b] sm:$0x1] %vm1273, %v1583
        %1841 = vst.msk [vmem:[%s1786 + $0x3c] sm:$0x1] %vm1273, %v1584
        %1842 = vst.msk [vmem:[%s1786 + $0x3d] sm:$0x1] %vm1273, %v1585
        %1843 = vst.msk [vmem:[%s1786 + $0x3e] sm:$0x1] %vm1273, %v1586
        %1844 = vst.msk [vmem:[%s1786 + $0x3f] sm:$0x1] %vm1273, %v1587
        %1845 = vst.msk [vmem:[%s1786 + $0x40] sm:$0x1] %vm1273, %v1588
        %1846 = vst.msk [vmem:[%s1786 + $0x41] sm:$0x1] %vm1273, %v1589
        %1847 = vst.msk [vmem:[%s1786 + $0x42] sm:$0x1] %vm1273, %v1590
        %1848 = vst.msk [vmem:[%s1786 + $0x43] sm:$0x1] %vm1273, %v1591
        %1849 = vst.msk [vmem:[%s1786 + $0x44] sm:$0x1] %vm1273, %v1592
        %1850 = vst.msk [vmem:[%s1786 + $0x45] sm:$0x1] %vm1273, %v1593
        %1851 = vst.msk [vmem:[%s1786 + $0x48] sm:$0x1] %vm1273, %v1594
        %1852 = vst.msk [vmem:[%s1786 + $0x49] sm:$0x1] %vm1273, %v1595
        %1853 = vst.msk [vmem:[%s1786 + $0x4a] sm:$0x1] %vm1273, %v1596
        %1854 = vst.msk [vmem:[%s1786 + $0x4b] sm:$0x1] %vm1273, %v1597
        %1855 = vst.msk [vmem:[%s1786 + $0x4c] sm:$0x1] %vm1273, %v1598
        %1856 = vst.msk [vmem:[%s1786 + $0x4d] sm:$0x1] %vm1273, %v1599
        %1857 = vst.msk [vmem:[%s1786 + $0x4e] sm:$0x1] %vm1273, %v1600
        %1858 = vst.msk [vmem:[%s1786 + $0x4f] sm:$0x1] %vm1273, %v1601
        %1859 = vst.msk [vmem:[%s1786 + $0x50] sm:$0x1] %vm1273, %v1602
        %1860 = vst.msk [vmem:[%s1786 + $0x51] sm:$0x1] %vm1273, %v1603
        %1861 = vst.msk [vmem:[%s1786 + $0x52] sm:$0x1] %vm1273, %v1604
        %1862 = vst.msk [vmem:[%s1786 + $0x53] sm:$0x1] %vm1273, %v1605
        %1863 = vst.msk [vmem:[%s1786 + $0x54] sm:$0x1] %vm1273, %v1606
        %1864 = vst.msk [vmem:[%s1786 + $0x55] sm:$0x1] %vm1273, %v1607
        %1865 = vst.msk [vmem:[%s1786 + $0x56] sm:$0x1] %vm1273, %v1608
        %1866 = vst.msk [vmem:[%s1786 + $0x57] sm:$0x1] %vm1273, %v1609
        %1867 = vst.msk [vmem:[%s1786 + $0x5a] sm:$0x1] %vm1273, %v1610
        %1868 = vst.msk [vmem:[%s1786 + $0x5b] sm:$0x1] %vm1273, %v1611
        %1869 = vst.msk [vmem:[%s1786 + $0x5c] sm:$0x1] %vm1273, %v1612
        %1870 = vst.msk [vmem:[%s1786 + $0x5d] sm:$0x1] %vm1273, %v1613
        %1871 = vst.msk [vmem:[%s1786 + $0x5e] sm:$0x1] %vm1273, %v1614
        %1872 = vst.msk [vmem:[%s1786 + $0x5f] sm:$0x1] %vm1273, %v1615
        %1873 = vst.msk [vmem:[%s1786 + $0x60] sm:$0x1] %vm1273, %v1616
        %1874 = vst.msk [vmem:[%s1786 + $0x61] sm:$0x1] %vm1273, %v1617
        %1875 = vst.msk [vmem:[%s1786 + $0x62] sm:$0x1] %vm1273, %v1618
        %1876 = vst.msk [vmem:[%s1786 + $0x63] sm:$0x1] %vm1273, %v1619
        %1877 = vst.msk [vmem:[%s1786 + $0x64] sm:$0x1] %vm1273, %v1620
        %1878 = vst.msk [vmem:[%s1786 + $0x65] sm:$0x1] %vm1273, %v1621
        %1879 = vst.msk [vmem:[%s1786 + $0x66] sm:$0x1] %vm1273, %v1622
        %1880 = vst.msk [vmem:[%s1786 + $0x67] sm:$0x1] %vm1273, %v1623
        %1881 = vst.msk [vmem:[%s1786 + $0x68] sm:$0x1] %vm1273, %v1624
        %1882 = vst.msk [vmem:[%s1786 + $0x69] sm:$0x1] %vm1273, %v1625
        %1883 = vst.msk [vmem:[%s1786 + $0x6c] sm:$0x1] %vm1273, %v1626
        %1884 = vst.msk [vmem:[%s1786 + $0x6d] sm:$0x1] %vm1273, %v1627
        %1885 = vst.msk [vmem:[%s1786 + $0x6e] sm:$0x1] %vm1273, %v1628
        %1886 = vst.msk [vmem:[%s1786 + $0x6f] sm:$0x1] %vm1273, %v1629
        %1887 = vst.msk [vmem:[%s1786 + $0x70] sm:$0x1] %vm1273, %v1630
        %1888 = vst.msk [vmem:[%s1786 + $0x71] sm:$0x1] %vm1273, %v1631
        %1889 = vst.msk [vmem:[%s1786 + $0x72] sm:$0x1] %vm1273, %v1632
        %1890 = vst.msk [vmem:[%s1786 + $0x73] sm:$0x1] %vm1273, %v1633
        %1891 = vst.msk [vmem:[%s1786 + $0x74] sm:$0x1] %vm1273, %v1634
        %1892 = vst.msk [vmem:[%s1786 + $0x75] sm:$0x1] %vm1273, %v1635
        %1893 = vst.msk [vmem:[%s1786 + $0x76] sm:$0x1] %vm1273, %v1636
        %1894 = vst.msk [vmem:[%s1786 + $0x77] sm:$0x1] %vm1273, %v1637
        %1895 = vst.msk [vmem:[%s1786 + $0x78] sm:$0x1] %vm1273, %v1638
        %1896 = vst.msk [vmem:[%s1786 + $0x79] sm:$0x1] %vm1273, %v1639
        %1897 = vst.msk [vmem:[%s1786 + $0x7a] sm:$0x1] %vm1273, %v1640
        %1898 = vst.msk [vmem:[%s1786 + $0x7b] sm:$0x1] %vm1273, %v1641
        %1899 = vst.msk [vmem:[%s1786 + $0x7e] sm:$0x1] %vm1273, %v1642
        %1900 = vst.msk [vmem:[%s1786 + $0x7f] sm:$0x1] %vm1273, %v1643
        %1901 = vst.msk [vmem:[%s1786 + $0x80] sm:$0x1] %vm1273, %v1644
        %1902 = vst.msk [vmem:[%s1786 + $0x81] sm:$0x1] %vm1273, %v1645
        %1903 = vst.msk [vmem:[%s1786 + $0x82] sm:$0x1] %vm1273, %v1646
        %1904 = vst.msk [vmem:[%s1786 + $0x83] sm:$0x1] %vm1273, %v1647
        %1905 = vst.msk [vmem:[%s1786 + $0x84] sm:$0x1] %vm1273, %v1648
        %1906 = vst.msk [vmem:[%s1786 + $0x85] sm:$0x1] %vm1273, %v1649
        %1907 = vst.msk [vmem:[%s1786 + $0x86] sm:$0x1] %vm1273, %v1650
        %1908 = vst.msk [vmem:[%s1786 + $0x87] sm:$0x1] %vm1273, %v1651
        %1909 = vst.msk [vmem:[%s1786 + $0x88] sm:$0x1] %vm1273, %v1652
        %1910 = vst.msk [vmem:[%s1786 + $0x89] sm:$0x1] %vm1273, %v1653
        %1911 = vst.msk [vmem:[%s1786 + $0x8a] sm:$0x1] %vm1273, %v1654
        %1912 = vst.msk [vmem:[%s1786 + $0x8b] sm:$0x1] %vm1273, %v1655
        %1913 = vst.msk [vmem:[%s1786 + $0x8c] sm:$0x1] %vm1273, %v1656
        %1914 = vst.msk [vmem:[%s1786 + $0x8d] sm:$0x1] %vm1273, %v1657
        %1915 = vst.msk [vmem:[%s1786 + $0x90] sm:$0x1] %vm1273, %v1658
        %1916 = vst.msk [vmem:[%s1786 + $0x91] sm:$0x1] %vm1273, %v1659
        %1917 = vst.msk [vmem:[%s1786 + $0x92] sm:$0x1] %vm1273, %v1660
        %1918 = vst.msk [vmem:[%s1786 + $0x93] sm:$0x1] %vm1273, %v1661
        %1919 = vst.msk [vmem:[%s1786 + $0x94] sm:$0x1] %vm1273, %v1662
        %1920 = vst.msk [vmem:[%s1786 + $0x95] sm:$0x1] %vm1273, %v1663
        %1921 = vst.msk [vmem:[%s1786 + $0x96] sm:$0x1] %vm1273, %v1664
        %1922 = vst.msk [vmem:[%s1786 + $0x97] sm:$0x1] %vm1273, %v1665
        %1923 = vst.msk [vmem:[%s1786 + $0x98] sm:$0x1] %vm1273, %v1666
        %1924 = vst.msk [vmem:[%s1786 + $0x99] sm:$0x1] %vm1273, %v1667
        %1925 = vst.msk [vmem:[%s1786 + $0x9a] sm:$0x1] %vm1273, %v1668
        %1926 = vst.msk [vmem:[%s1786 + $0x9b] sm:$0x1] %vm1273, %v1669
        %1927 = vst.msk [vmem:[%s1786 + $0x9c] sm:$0x1] %vm1273, %v1670
        %1928 = vst.msk [vmem:[%s1786 + $0x9d] sm:$0x1] %vm1273, %v1671
        %1929 = vst.msk [vmem:[%s1786 + $0x9e] sm:$0x1] %vm1273, %v1672
        %1930 = vst.msk [vmem:[%s1786 + $0x9f] sm:$0x1] %vm1273, %v1673
        %1931 = vst.msk [vmem:[%s1786 + $0xa2] sm:$0x1] %vm1273, %v1674
        %1932 = vst.msk [vmem:[%s1786 + $0xa3] sm:$0x1] %vm1273, %v1675
        %1933 = vst.msk [vmem:[%s1786 + $0xa4] sm:$0x1] %vm1273, %v1676
        %1934 = vst.msk [vmem:[%s1786 + $0xa5] sm:$0x1] %vm1273, %v1677
        %1935 = vst.msk [vmem:[%s1786 + $0xa6] sm:$0x1] %vm1273, %v1678
        %1936 = vst.msk [vmem:[%s1786 + $0xa7] sm:$0x1] %vm1273, %v1679
        %1937 = vst.msk [vmem:[%s1786 + $0xa8] sm:$0x1] %vm1273, %v1680
        %1938 = vst.msk [vmem:[%s1786 + $0xa9] sm:$0x1] %vm1273, %v1681
        %1939 = vst.msk [vmem:[%s1786 + $0xaa] sm:$0x1] %vm1273, %v1682
        %1940 = vst.msk [vmem:[%s1786 + $0xab] sm:$0x1] %vm1273, %v1683
        %1941 = vst.msk [vmem:[%s1786 + $0xac] sm:$0x1] %vm1273, %v1684
        %1942 = vst.msk [vmem:[%s1786 + $0xad] sm:$0x1] %vm1273, %v1685
        %1943 = vst.msk [vmem:[%s1786 + $0xae] sm:$0x1] %vm1273, %v1686
        %1944 = vst.msk [vmem:[%s1786 + $0xaf] sm:$0x1] %vm1273, %v1687
        %1945 = vst.msk [vmem:[%s1786 + $0xb0] sm:$0x1] %vm1273, %v1688
        %1946 = vst.msk [vmem:[%s1786 + $0xb1] sm:$0x1] %vm1273, %v1689
        %1947 = vst.msk [vmem:[%s1786 + $0xb4] sm:$0x1] %vm1273, %v1690
        %1948 = vst.msk [vmem:[%s1786 + $0xb5] sm:$0x1] %vm1273, %v1691
        %1949 = vst.msk [vmem:[%s1786 + $0xb6] sm:$0x1] %vm1273, %v1692
        %1950 = vst.msk [vmem:[%s1786 + $0xb7] sm:$0x1] %vm1273, %v1693
        %1951 = vst.msk [vmem:[%s1786 + $0xb8] sm:$0x1] %vm1273, %v1694
        %1952 = vst.msk [vmem:[%s1786 + $0xb9] sm:$0x1] %vm1273, %v1695
        %1953 = vst.msk [vmem:[%s1786 + $0xba] sm:$0x1] %vm1273, %v1696
        %1954 = vst.msk [vmem:[%s1786 + $0xbb] sm:$0x1] %vm1273, %v1697
        %1955 = vst.msk [vmem:[%s1786 + $0xbc] sm:$0x1] %vm1273, %v1698
        %1956 = vst.msk [vmem:[%s1786 + $0xbd] sm:$0x1] %vm1273, %v1699
        %1957 = vst.msk [vmem:[%s1786 + $0xbe] sm:$0x1] %vm1273, %v1700
        %1958 = vst.msk [vmem:[%s1786 + $0xbf] sm:$0x1] %vm1273, %v1701
        %1959 = vst.msk [vmem:[%s1786 + $0xc0] sm:$0x1] %vm1273, %v1702
        %1960 = vst.msk [vmem:[%s1786 + $0xc1] sm:$0x1] %vm1273, %v1703
        %1961 = vst.msk [vmem:[%s1786 + $0xc2] sm:$0x1] %vm1273, %v1704
        %1962 = vst.msk [vmem:[%s1786 + $0xc3] sm:$0x1] %vm1273, %v1705
        %1963 = vst.msk [vmem:[%s1786 + $0xc6] sm:$0x1] %vm1273, %v1706
        %1964 = vst.msk [vmem:[%s1786 + $0xc7] sm:$0x1] %vm1273, %v1707
        %1965 = vst.msk [vmem:[%s1786 + $0xc8] sm:$0x1] %vm1273, %v1708
        %1966 = vst.msk [vmem:[%s1786 + $0xc9] sm:$0x1] %vm1273, %v1709
        %1967 = vst.msk [vmem:[%s1786 + $0xca] sm:$0x1] %vm1273, %v1710
        %1968 = vst.msk [vmem:[%s1786 + $0xcb] sm:$0x1] %vm1273, %v1711
        %1969 = vst.msk [vmem:[%s1786 + $0xcc] sm:$0x1] %vm1273, %v1712
        %1970 = vst.msk [vmem:[%s1786 + $0xcd] sm:$0x1] %vm1273, %v1713
        %1971 = vst.msk [vmem:[%s1786 + $0xce] sm:$0x1] %vm1273, %v1714
        %1972 = vst.msk [vmem:[%s1786 + $0xcf] sm:$0x1] %vm1273, %v1715
        %1973 = vst.msk [vmem:[%s1786 + $0xd0] sm:$0x1] %vm1273, %v1716
        %1974 = vst.msk [vmem:[%s1786 + $0xd1] sm:$0x1] %vm1273, %v1717
        %1975 = vst.msk [vmem:[%s1786 + $0xd2] sm:$0x1] %vm1273, %v1718
        %1976 = vst.msk [vmem:[%s1786 + $0xd3] sm:$0x1] %vm1273, %v1719
        %1977 = vst.msk [vmem:[%s1786 + $0xd4] sm:$0x1] %vm1273, %v1720
        %1978 = vst.msk [vmem:[%s1786 + $0xd5] sm:$0x1] %vm1273, %v1721
        %1979 = vst.msk [vmem:[%s1786 + $0xd8] sm:$0x1] %vm1273, %v1722
        %1980 = vst.msk [vmem:[%s1786 + $0xd9] sm:$0x1] %vm1273, %v1723
        %1981 = vst.msk [vmem:[%s1786 + $0xda] sm:$0x1] %vm1273, %v1724
        %1982 = vst.msk [vmem:[%s1786 + $0xdb] sm:$0x1] %vm1273, %v1725
        %1983 = vst.msk [vmem:[%s1786 + $0xdc] sm:$0x1] %vm1273, %v1726
        %1984 = vst.msk [vmem:[%s1786 + $0xdd] sm:$0x1] %vm1273, %v1727
        %1985 = vst.msk [vmem:[%s1786 + $0xde] sm:$0x1] %vm1273, %v1728
        %1986 = vst.msk [vmem:[%s1786 + $0xdf] sm:$0x1] %vm1273, %v1729
        %1987 = vst.msk [vmem:[%s1786 + $0xe0] sm:$0x1] %vm1273, %v1730
        %1988 = vst.msk [vmem:[%s1786 + $0xe1] sm:$0x1] %vm1273, %v1731
        %1989 = vst.msk [vmem:[%s1786 + $0xe2] sm:$0x1] %vm1273, %v1732
        %1990 = vst.msk [vmem:[%s1786 + $0xe3] sm:$0x1] %vm1273, %v1733
        %1991 = vst.msk [vmem:[%s1786 + $0xe4] sm:$0x1] %vm1273, %v1734
        %1992 = vst.msk [vmem:[%s1786 + $0xe5] sm:$0x1] %vm1273, %v1735
        %1993 = vst.msk [vmem:[%s1786 + $0xe6] sm:$0x1] %vm1273, %v1736
        %1994 = vst.msk [vmem:[%s1786 + $0xe7] sm:$0x1] %vm1273, %v1737
        %1995 = vst.msk [vmem:[%s1786 + $0xea] sm:$0x1] %vm1273, %v1738
        %1996 = vst.msk [vmem:[%s1786 + $0xeb] sm:$0x1] %vm1273, %v1739
        %1997 = vst.msk [vmem:[%s1786 + $0xec] sm:$0x1] %vm1273, %v1740
        %1998 = vst.msk [vmem:[%s1786 + $0xed] sm:$0x1] %vm1273, %v1741
        %1999 = vst.msk [vmem:[%s1786 + $0xee] sm:$0x1] %vm1273, %v1742
        %2000 = vst.msk [vmem:[%s1786 + $0xef] sm:$0x1] %vm1273, %v1743
        %2001 = vst.msk [vmem:[%s1786 + $0xf0] sm:$0x1] %vm1273, %v1744
        %2002 = vst.msk [vmem:[%s1786 + $0xf1] sm:$0x1] %vm1273, %v1745
        %2003 = vst.msk [vmem:[%s1786 + $0xf2] sm:$0x1] %vm1273, %v1746
        %2004 = vst.msk [vmem:[%s1786 + $0xf3] sm:$0x1] %vm1273, %v1747
        %2005 = vst.msk [vmem:[%s1786 + $0xf4] sm:$0x1] %vm1273, %v1748
        %2006 = vst.msk [vmem:[%s1786 + $0xf5] sm:$0x1] %vm1273, %v1749
        %2007 = vst.msk [vmem:[%s1786 + $0xf6] sm:$0x1] %vm1273, %v1750
        %2008 = vst.msk [vmem:[%s1786 + $0xf7] sm:$0x1] %vm1273, %v1751
        %2009 = vst.msk [vmem:[%s1786 + $0xf8] sm:$0x1] %vm1273, %v1752
        %2010 = vst.msk [vmem:[%s1786 + $0xf9] sm:$0x1] %vm1273, %v1753
        %2011 = vst.msk [vmem:[%s1786 + $0xfc] sm:$0x1] %vm1273, %v1754
        %2012 = vst.msk [vmem:[%s1786 + $0xfd] sm:$0x1] %vm1273, %v1755
        %2013 = vst.msk [vmem:[%s1786 + $0xfe] sm:$0x1] %vm1273, %v1756
        %2014 = vst.msk [vmem:[%s1786 + $0xff] sm:$0x1] %vm1273, %v1757
        %2015 = vst.msk [vmem:[%s1786 + $0x100] sm:$0x1] %vm1273, %v1758
        %2016 = vst.msk [vmem:[%s1786 + $0x101] sm:$0x1] %vm1273, %v1759
        %2017 = vst.msk [vmem:[%s1786 + $0x102] sm:$0x1] %vm1273, %v1760
        %2018 = vst.msk [vmem:[%s1786 + $0x103] sm:$0x1] %vm1273, %v1761
        %2019 = vst.msk [vmem:[%s1786 + $0x104] sm:$0x1] %vm1273, %v1762
        %2020 = vst.msk [vmem:[%s1786 + $0x105] sm:$0x1] %vm1273, %v1763
        %2021 = vst.msk [vmem:[%s1786 + $0x106] sm:$0x1] %vm1273, %v1764
        %2022 = vst.msk [vmem:[%s1786 + $0x107] sm:$0x1] %vm1273, %v1765
        %2023 = vst.msk [vmem:[%s1786 + $0x108] sm:$0x1] %vm1273, %v1766
        %2024 = vst.msk [vmem:[%s1786 + $0x109] sm:$0x1] %vm1273, %v1767
        %2025 = vst.msk [vmem:[%s1786 + $0x10a] sm:$0x1] %vm1273, %v1768
        %2026 = vst.msk [vmem:[%s1786 + $0x10b] sm:$0x1] %vm1273, %v1769
        %2027 = vst.msk [vmem:[%s1786 + $0x10e] sm:$0x1] %vm1273, %v1770
        %2028 = vst.msk [vmem:[%s1786 + $0x10f] sm:$0x1] %vm1273, %v1771
        %2029 = vst.msk [vmem:[%s1786 + $0x110] sm:$0x1] %vm1273, %v1772
        %2030 = vst.msk [vmem:[%s1786 + $0x111] sm:$0x1] %vm1273, %v1773
        %2031 = vst.msk [vmem:[%s1786 + $0x112] sm:$0x1] %vm1273, %v1774
        %2032 = vst.msk [vmem:[%s1786 + $0x113] sm:$0x1] %vm1273, %v1775
        %2033 = vst.msk [vmem:[%s1786 + $0x114] sm:$0x1] %vm1273, %v1776
        %2034 = vst.msk [vmem:[%s1786 + $0x115] sm:$0x1] %vm1273, %v1777
        %2035 = vst.msk [vmem:[%s1786 + $0x116] sm:$0x1] %vm1273, %v1778
        %2036 = vst.msk [vmem:[%s1786 + $0x117] sm:$0x1] %vm1273, %v1779
        %2037 = vst.msk [vmem:[%s1786 + $0x118] sm:$0x1] %vm1273, %v1780
        %2038 = vst.msk [vmem:[%s1786 + $0x119] sm:$0x1] %vm1273, %v1781
        %2039 = vst.msk [vmem:[%s1786 + $0x11a] sm:$0x1] %vm1273, %v1782
        %2040 = vst.msk [vmem:[%s1786 + $0x11b] sm:$0x1] %vm1273, %v1783
        %2041 = vst.msk [vmem:[%s1786 + $0x11c] sm:$0x1] %vm1273, %v1784
        %2042 = vst.msk [vmem:[%s1786 + $0x11d] sm:$0x1] %vm1273, %v1785
        %v2043 = vld [vmem:[#allocation2] sm:$0x1]
        %v2044 = vld [vmem:[#allocation2 + $0x1] sm:$0x1]
        %v2045 = vld [vmem:[#allocation2 + $0x2] sm:$0x1]
        %v2046 = vld [vmem:[#allocation2 + $0x3] sm:$0x1]
        %v2047 = vld [vmem:[#allocation2 + $0x4] sm:$0x1]
        %v2048 = vld [vmem:[#allocation2 + $0x5] sm:$0x1]
        %v2049 = vld [vmem:[#allocation2 + $0x6] sm:$0x1]
        %v2050 = vld [vmem:[#allocation2 + $0x7] sm:$0x1]
        %v2051 = vld [vmem:[#allocation2 + $0x8] sm:$0x1]
        %v2052 = vld [vmem:[#allocation2 + $0x9] sm:$0x1]
        %v2053 = vld [vmem:[#allocation2 + $0xa] sm:$0x1]
        %v2054 = vld [vmem:[#allocation2 + $0xb] sm:$0x1]
        %v2055 = vld [vmem:[#allocation2 + $0xc] sm:$0x1]
        %v2056 = vld [vmem:[#allocation2 + $0xd] sm:$0x1]
        %v2057 = vld [vmem:[#allocation2 + $0xe] sm:$0x1]
        %v2058 = vld [vmem:[#allocation2 + $0xf] sm:$0x1]
        %v2059 = vld [vmem:[#allocation2 + $0x10] sm:$0x1]
        %v2060 = vld [vmem:[#allocation2 + $0x12] sm:$0x1]
        %v2061 = vld [vmem:[#allocation2 + $0x13] sm:$0x1]
        %v2062 = vld [vmem:[#allocation2 + $0x14] sm:$0x1]
        %v2063 = vld [vmem:[#allocation2 + $0x15] sm:$0x1]
        %v2064 = vld [vmem:[#allocation2 + $0x16] sm:$0x1]
        %v2065 = vld [vmem:[#allocation2 + $0x17] sm:$0x1]
        %v2066 = vld [vmem:[#allocation2 + $0x18] sm:$0x1]
        %v2067 = vld [vmem:[#allocation2 + $0x19] sm:$0x1]
        %v2068 = vld [vmem:[#allocation2 + $0x1a] sm:$0x1]
        %v2069 = vld [vmem:[#allocation2 + $0x1b] sm:$0x1]
        %v2070 = vld [vmem:[#allocation2 + $0x1c] sm:$0x1]
        %v2071 = vld [vmem:[#allocation2 + $0x1d] sm:$0x1]
        %v2072 = vld [vmem:[#allocation2 + $0x1e] sm:$0x1]
        %v2073 = vld [vmem:[#allocation2 + $0x1f] sm:$0x1]
        %v2074 = vld [vmem:[#allocation2 + $0x20] sm:$0x1]
        %v2075 = vld [vmem:[#allocation2 + $0x21] sm:$0x1]
        %v2076 = vld [vmem:[#allocation2 + $0x22] sm:$0x1]
        %v2077 = vld [vmem:[#allocation2 + $0x24] sm:$0x1]
        %v2078 = vld [vmem:[#allocation2 + $0x25] sm:$0x1]
        %v2079 = vld [vmem:[#allocation2 + $0x26] sm:$0x1]
        %v2080 = vld [vmem:[#allocation2 + $0x27] sm:$0x1]
        %v2081 = vld [vmem:[#allocation2 + $0x28] sm:$0x1]
        %v2082 = vld [vmem:[#allocation2 + $0x29] sm:$0x1]
        %v2083 = vld [vmem:[#allocation2 + $0x2a] sm:$0x1]
        %v2084 = vld [vmem:[#allocation2 + $0x2b] sm:$0x1]
        %v2085 = vld [vmem:[#allocation2 + $0x2c] sm:$0x1]
        %v2086 = vld [vmem:[#allocation2 + $0x2d] sm:$0x1]
        %v2087 = vld [vmem:[#allocation2 + $0x2e] sm:$0x1]
        %v2088 = vld [vmem:[#allocation2 + $0x2f] sm:$0x1]
        %v2089 = vld [vmem:[#allocation2 + $0x30] sm:$0x1]
        %v2090 = vld [vmem:[#allocation2 + $0x31] sm:$0x1]
        %v2091 = vld [vmem:[#allocation2 + $0x32] sm:$0x1]
        %v2092 = vld [vmem:[#allocation2 + $0x33] sm:$0x1]
        %v2093 = vld [vmem:[#allocation2 + $0x34] sm:$0x1]
        %v2094 = vld [vmem:[#allocation2 + $0x36] sm:$0x1]
        %v2095 = vld [vmem:[#allocation2 + $0x37] sm:$0x1]
        %v2096 = vld [vmem:[#allocation2 + $0x38] sm:$0x1]
        %v2097 = vld [vmem:[#allocation2 + $0x39] sm:$0x1]
        %v2098 = vld [vmem:[#allocation2 + $0x3a] sm:$0x1]
        %v2099 = vld [vmem:[#allocation2 + $0x3b] sm:$0x1]
        %v2100 = vld [vmem:[#allocation2 + $0x3c] sm:$0x1]
        %v2101 = vld [vmem:[#allocation2 + $0x3d] sm:$0x1]
        %v2102 = vld [vmem:[#allocation2 + $0x3e] sm:$0x1]
        %v2103 = vld [vmem:[#allocation2 + $0x3f] sm:$0x1]
        %v2104 = vld [vmem:[#allocation2 + $0x40] sm:$0x1]
        %v2105 = vld [vmem:[#allocation2 + $0x41] sm:$0x1]
        %v2106 = vld [vmem:[#allocation2 + $0x42] sm:$0x1]
        %v2107 = vld [vmem:[#allocation2 + $0x43] sm:$0x1]
        %v2108 = vld [vmem:[#allocation2 + $0x44] sm:$0x1]
        %v2109 = vld [vmem:[#allocation2 + $0x45] sm:$0x1]
        %v2110 = vld [vmem:[#allocation2 + $0x46] sm:$0x1]
        %v2111 = vld [vmem:[#allocation2 + $0x48] sm:$0x1]
        %v2112 = vld [vmem:[#allocation2 + $0x49] sm:$0x1]
        %v2113 = vld [vmem:[#allocation2 + $0x4a] sm:$0x1]
        %v2114 = vld [vmem:[#allocation2 + $0x4b] sm:$0x1]
        %v2115 = vld [vmem:[#allocation2 + $0x4c] sm:$0x1]
        %v2116 = vld [vmem:[#allocation2 + $0x4d] sm:$0x1]
        %v2117 = vld [vmem:[#allocation2 + $0x4e] sm:$0x1]
        %v2118 = vld [vmem:[#allocation2 + $0x4f] sm:$0x1]
        %v2119 = vld [vmem:[#allocation2 + $0x50] sm:$0x1]
        %v2120 = vld [vmem:[#allocation2 + $0x51] sm:$0x1]
        %v2121 = vld [vmem:[#allocation2 + $0x52] sm:$0x1]
        %v2122 = vld [vmem:[#allocation2 + $0x53] sm:$0x1]
        %v2123 = vld [vmem:[#allocation2 + $0x54] sm:$0x1]
        %v2124 = vld [vmem:[#allocation2 + $0x55] sm:$0x1]
        %v2125 = vld [vmem:[#allocation2 + $0x56] sm:$0x1]
        %v2126 = vld [vmem:[#allocation2 + $0x57] sm:$0x1]
        %v2127 = vld [vmem:[#allocation2 + $0x58] sm:$0x1]
        %v2128 = vld [vmem:[#allocation2 + $0x5a] sm:$0x1]
        %v2129 = vld [vmem:[#allocation2 + $0x5b] sm:$0x1]
        %v2130 = vld [vmem:[#allocation2 + $0x5c] sm:$0x1]
        %v2131 = vld [vmem:[#allocation2 + $0x5d] sm:$0x1]
        %v2132 = vld [vmem:[#allocation2 + $0x5e] sm:$0x1]
        %v2133 = vld [vmem:[#allocation2 + $0x5f] sm:$0x1]
        %v2134 = vld [vmem:[#allocation2 + $0x60] sm:$0x1]
        %v2135 = vld [vmem:[#allocation2 + $0x61] sm:$0x1]
        %v2136 = vld [vmem:[#allocation2 + $0x62] sm:$0x1]
        %v2137 = vld [vmem:[#allocation2 + $0x63] sm:$0x1]
        %v2138 = vld [vmem:[#allocation2 + $0x64] sm:$0x1]
        %v2139 = vld [vmem:[#allocation2 + $0x65] sm:$0x1]
        %v2140 = vld [vmem:[#allocation2 + $0x66] sm:$0x1]
        %v2141 = vld [vmem:[#allocation2 + $0x67] sm:$0x1]
        %v2142 = vld [vmem:[#allocation2 + $0x68] sm:$0x1]
        %v2143 = vld [vmem:[#allocation2 + $0x69] sm:$0x1]
        %v2144 = vld [vmem:[#allocation2 + $0x6a] sm:$0x1]
        %v2145 = vld [vmem:[#allocation2 + $0x6c] sm:$0x1]
        %v2146 = vld [vmem:[#allocation2 + $0x6d] sm:$0x1]
        %v2147 = vld [vmem:[#allocation2 + $0x6e] sm:$0x1]
        %v2148 = vld [vmem:[#allocation2 + $0x6f] sm:$0x1]
        %v2149 = vld [vmem:[#allocation2 + $0x70] sm:$0x1]
        %v2150 = vld [vmem:[#allocation2 + $0x71] sm:$0x1]
        %v2151 = vld [vmem:[#allocation2 + $0x72] sm:$0x1]
        %v2152 = vld [vmem:[#allocation2 + $0x73] sm:$0x1]
        %v2153 = vld [vmem:[#allocation2 + $0x74] sm:$0x1]
        %v2154 = vld [vmem:[#allocation2 + $0x75] sm:$0x1]
        %v2155 = vld [vmem:[#allocation2 + $0x76] sm:$0x1]
        %v2156 = vld [vmem:[#allocation2 + $0x77] sm:$0x1]
        %v2157 = vld [vmem:[#allocation2 + $0x78] sm:$0x1]
        %v2158 = vld [vmem:[#allocation2 + $0x79] sm:$0x1]
        %v2159 = vld [vmem:[#allocation2 + $0x7a] sm:$0x1]
        %v2160 = vld [vmem:[#allocation2 + $0x7b] sm:$0x1]
        %v2161 = vld [vmem:[#allocation2 + $0x7c] sm:$0x1]
        %v2162 = vld [vmem:[#allocation2 + $0x7e] sm:$0x1]
        %v2163 = vld [vmem:[#allocation2 + $0x7f] sm:$0x1]
        %v2164 = vld [vmem:[#allocation2 + $0x80] sm:$0x1]
        %v2165 = vld [vmem:[#allocation2 + $0x81] sm:$0x1]
        %v2166 = vld [vmem:[#allocation2 + $0x82] sm:$0x1]
        %v2167 = vld [vmem:[#allocation2 + $0x83] sm:$0x1]
        %v2168 = vld [vmem:[#allocation2 + $0x84] sm:$0x1]
        %v2169 = vld [vmem:[#allocation2 + $0x85] sm:$0x1]
        %v2170 = vld [vmem:[#allocation2 + $0x86] sm:$0x1]
        %v2171 = vld [vmem:[#allocation2 + $0x87] sm:$0x1]
        %v2172 = vld [vmem:[#allocation2 + $0x88] sm:$0x1]
        %v2173 = vld [vmem:[#allocation2 + $0x89] sm:$0x1]
        %v2174 = vld [vmem:[#allocation2 + $0x8a] sm:$0x1]
        %v2175 = vld [vmem:[#allocation2 + $0x8b] sm:$0x1]
        %v2176 = vld [vmem:[#allocation2 + $0x8c] sm:$0x1]
        %v2177 = vld [vmem:[#allocation2 + $0x8d] sm:$0x1]
        %v2178 = vld [vmem:[#allocation2 + $0x8e] sm:$0x1]
        %v2179 = vld [vmem:[#allocation2 + $0x90] sm:$0x1]
        %v2180 = vld [vmem:[#allocation2 + $0x91] sm:$0x1]
        %v2181 = vld [vmem:[#allocation2 + $0x92] sm:$0x1]
        %v2182 = vld [vmem:[#allocation2 + $0x93] sm:$0x1]
        %v2183 = vld [vmem:[#allocation2 + $0x94] sm:$0x1]
        %v2184 = vld [vmem:[#allocation2 + $0x95] sm:$0x1]
        %v2185 = vld [vmem:[#allocation2 + $0x96] sm:$0x1]
        %v2186 = vld [vmem:[#allocation2 + $0x97] sm:$0x1]
        %v2187 = vld [vmem:[#allocation2 + $0x98] sm:$0x1]
        %v2188 = vld [vmem:[#allocation2 + $0x99] sm:$0x1]
        %v2189 = vld [vmem:[#allocation2 + $0x9a] sm:$0x1]
        %v2190 = vld [vmem:[#allocation2 + $0x9b] sm:$0x1]
        %v2191 = vld [vmem:[#allocation2 + $0x9c] sm:$0x1]
        %v2192 = vld [vmem:[#allocation2 + $0x9d] sm:$0x1]
        %v2193 = vld [vmem:[#allocation2 + $0x9e] sm:$0x1]
        %v2194 = vld [vmem:[#allocation2 + $0x9f] sm:$0x1]
        %v2195 = vld [vmem:[#allocation2 + $0xa0] sm:$0x1]
        %v2196 = vld [vmem:[#allocation2 + $0xa2] sm:$0x1]
        %v2197 = vld [vmem:[#allocation2 + $0xa3] sm:$0x1]
        %v2198 = vld [vmem:[#allocation2 + $0xa4] sm:$0x1]
        %v2199 = vld [vmem:[#allocation2 + $0xa5] sm:$0x1]
        %v2200 = vld [vmem:[#allocation2 + $0xa6] sm:$0x1]
        %v2201 = vld [vmem:[#allocation2 + $0xa7] sm:$0x1]
        %v2202 = vld [vmem:[#allocation2 + $0xa8] sm:$0x1]
        %v2203 = vld [vmem:[#allocation2 + $0xa9] sm:$0x1]
        %v2204 = vld [vmem:[#allocation2 + $0xaa] sm:$0x1]
        %v2205 = vld [vmem:[#allocation2 + $0xab] sm:$0x1]
        %v2206 = vld [vmem:[#allocation2 + $0xac] sm:$0x1]
        %v2207 = vld [vmem:[#allocation2 + $0xad] sm:$0x1]
        %v2208 = vld [vmem:[#allocation2 + $0xae] sm:$0x1]
        %v2209 = vld [vmem:[#allocation2 + $0xaf] sm:$0x1]
        %v2210 = vld [vmem:[#allocation2 + $0xb0] sm:$0x1]
        %v2211 = vld [vmem:[#allocation2 + $0xb1] sm:$0x1]
        %v2212 = vld [vmem:[#allocation2 + $0xb2] sm:$0x1]
        %v2213 = vld [vmem:[#allocation2 + $0xb4] sm:$0x1]
        %v2214 = vld [vmem:[#allocation2 + $0xb5] sm:$0x1]
        %v2215 = vld [vmem:[#allocation2 + $0xb6] sm:$0x1]
        %v2216 = vld [vmem:[#allocation2 + $0xb7] sm:$0x1]
        %v2217 = vld [vmem:[#allocation2 + $0xb8] sm:$0x1]
        %v2218 = vld [vmem:[#allocation2 + $0xb9] sm:$0x1]
        %v2219 = vld [vmem:[#allocation2 + $0xba] sm:$0x1]
        %v2220 = vld [vmem:[#allocation2 + $0xbb] sm:$0x1]
        %v2221 = vld [vmem:[#allocation2 + $0xbc] sm:$0x1]
        %v2222 = vld [vmem:[#allocation2 + $0xbd] sm:$0x1]
        %v2223 = vld [vmem:[#allocation2 + $0xbe] sm:$0x1]
        %v2224 = vld [vmem:[#allocation2 + $0xbf] sm:$0x1]
        %v2225 = vld [vmem:[#allocation2 + $0xc0] sm:$0x1]
        %v2226 = vld [vmem:[#allocation2 + $0xc1] sm:$0x1]
        %v2227 = vld [vmem:[#allocation2 + $0xc2] sm:$0x1]
        %v2228 = vld [vmem:[#allocation2 + $0xc3] sm:$0x1]
        %v2229 = vld [vmem:[#allocation2 + $0xc4] sm:$0x1]
        %v2230 = vld [vmem:[#allocation2 + $0xc6] sm:$0x1]
        %v2231 = vld [vmem:[#allocation2 + $0xc7] sm:$0x1]
        %v2232 = vld [vmem:[#allocation2 + $0xc8] sm:$0x1]
        %v2233 = vld [vmem:[#allocation2 + $0xc9] sm:$0x1]
        %v2234 = vld [vmem:[#allocation2 + $0xca] sm:$0x1]
        %v2235 = vld [vmem:[#allocation2 + $0xcb] sm:$0x1]
        %v2236 = vld [vmem:[#allocation2 + $0xcc] sm:$0x1]
        %v2237 = vld [vmem:[#allocation2 + $0xcd] sm:$0x1]
        %v2238 = vld [vmem:[#allocation2 + $0xce] sm:$0x1]
        %v2239 = vld [vmem:[#allocation2 + $0xcf] sm:$0x1]
        %v2240 = vld [vmem:[#allocation2 + $0xd0] sm:$0x1]
        %v2241 = vld [vmem:[#allocation2 + $0xd1] sm:$0x1]
        %v2242 = vld [vmem:[#allocation2 + $0xd2] sm:$0x1]
        %v2243 = vld [vmem:[#allocation2 + $0xd3] sm:$0x1]
        %v2244 = vld [vmem:[#allocation2 + $0xd4] sm:$0x1]
        %v2245 = vld [vmem:[#allocation2 + $0xd5] sm:$0x1]
        %v2246 = vld [vmem:[#allocation2 + $0xd6] sm:$0x1]
        %v2247 = vld [vmem:[#allocation2 + $0xd8] sm:$0x1]
        %v2248 = vld [vmem:[#allocation2 + $0xd9] sm:$0x1]
        %v2249 = vld [vmem:[#allocation2 + $0xda] sm:$0x1]
        %v2250 = vld [vmem:[#allocation2 + $0xdb] sm:$0x1]
        %v2251 = vld [vmem:[#allocation2 + $0xdc] sm:$0x1]
        %v2252 = vld [vmem:[#allocation2 + $0xdd] sm:$0x1]
        %v2253 = vld [vmem:[#allocation2 + $0xde] sm:$0x1]
        %v2254 = vld [vmem:[#allocation2 + $0xdf] sm:$0x1]
        %v2255 = vld [vmem:[#allocation2 + $0xe0] sm:$0x1]
        %v2256 = vld [vmem:[#allocation2 + $0xe1] sm:$0x1]
        %v2257 = vld [vmem:[#allocation2 + $0xe2] sm:$0x1]
        %v2258 = vld [vmem:[#allocation2 + $0xe3] sm:$0x1]
        %v2259 = vld [vmem:[#allocation2 + $0xe4] sm:$0x1]
        %v2260 = vld [vmem:[#allocation2 + $0xe5] sm:$0x1]
        %v2261 = vld [vmem:[#allocation2 + $0xe6] sm:$0x1]
        %v2262 = vld [vmem:[#allocation2 + $0xe7] sm:$0x1]
        %v2263 = vld [vmem:[#allocation2 + $0xe8] sm:$0x1]
        %v2264 = vld [vmem:[#allocation2 + $0xea] sm:$0x1]
        %v2265 = vld [vmem:[#allocation2 + $0xeb] sm:$0x1]
        %v2266 = vld [vmem:[#allocation2 + $0xec] sm:$0x1]
        %v2267 = vld [vmem:[#allocation2 + $0xed] sm:$0x1]
        %v2268 = vld [vmem:[#allocation2 + $0xee] sm:$0x1]
        %v2269 = vld [vmem:[#allocation2 + $0xef] sm:$0x1]
        %v2270 = vld [vmem:[#allocation2 + $0xf0] sm:$0x1]
        %v2271 = vld [vmem:[#allocation2 + $0xf1] sm:$0x1]
        %v2272 = vld [vmem:[#allocation2 + $0xf2] sm:$0x1]
        %v2273 = vld [vmem:[#allocation2 + $0xf3] sm:$0x1]
        %v2274 = vld [vmem:[#allocation2 + $0xf4] sm:$0x1]
        %v2275 = vld [vmem:[#allocation2 + $0xf5] sm:$0x1]
        %v2276 = vld [vmem:[#allocation2 + $0xf6] sm:$0x1]
        %v2277 = vld [vmem:[#allocation2 + $0xf7] sm:$0x1]
        %v2278 = vld [vmem:[#allocation2 + $0xf8] sm:$0x1]
        %v2279 = vld [vmem:[#allocation2 + $0xf9] sm:$0x1]
        %v2280 = vld [vmem:[#allocation2 + $0xfa] sm:$0x1]
        %v2281 = vld [vmem:[#allocation2 + $0xfc] sm:$0x1]
        %v2282 = vld [vmem:[#allocation2 + $0xfd] sm:$0x1]
        %v2283 = vld [vmem:[#allocation2 + $0xfe] sm:$0x1]
        %v2284 = vld [vmem:[#allocation2 + $0xff] sm:$0x1]
        %v2285 = vld [vmem:[#allocation2 + $0x100] sm:$0x1]
        %v2286 = vld [vmem:[#allocation2 + $0x101] sm:$0x1]
        %v2287 = vld [vmem:[#allocation2 + $0x102] sm:$0x1]
        %v2288 = vld [vmem:[#allocation2 + $0x103] sm:$0x1]
        %v2289 = vld [vmem:[#allocation2 + $0x104] sm:$0x1]
        %v2290 = vld [vmem:[#allocation2 + $0x105] sm:$0x1]
        %v2291 = vld [vmem:[#allocation2 + $0x106] sm:$0x1]
        %v2292 = vld [vmem:[#allocation2 + $0x107] sm:$0x1]
        %v2293 = vld [vmem:[#allocation2 + $0x108] sm:$0x1]
        %v2294 = vld [vmem:[#allocation2 + $0x109] sm:$0x1]
        %v2295 = vld [vmem:[#allocation2 + $0x10a] sm:$0x1]
        %v2296 = vld [vmem:[#allocation2 + $0x10b] sm:$0x1]
        %v2297 = vld [vmem:[#allocation2 + $0x10c] sm:$0x1]
        %v2298 = vld [vmem:[#allocation2 + $0x10e] sm:$0x1]
        %v2299 = vld [vmem:[#allocation2 + $0x10f] sm:$0x1]
        %v2300 = vld [vmem:[#allocation2 + $0x110] sm:$0x1]
        %v2301 = vld [vmem:[#allocation2 + $0x111] sm:$0x1]
        %v2302 = vld [vmem:[#allocation2 + $0x112] sm:$0x1]
        %v2303 = vld [vmem:[#allocation2 + $0x113] sm:$0x1]
        %v2304 = vld [vmem:[#allocation2 + $0x114] sm:$0x1]
        %v2305 = vld [vmem:[#allocation2 + $0x115] sm:$0x1]
        %v2306 = vld [vmem:[#allocation2 + $0x116] sm:$0x1]
        %v2307 = vld [vmem:[#allocation2 + $0x117] sm:$0x1]
        %v2308 = vld [vmem:[#allocation2 + $0x118] sm:$0x1]
        %v2309 = vld [vmem:[#allocation2 + $0x119] sm:$0x1]
        %v2310 = vld [vmem:[#allocation2 + $0x11a] sm:$0x1]
        %v2311 = vld [vmem:[#allocation2 + $0x11b] sm:$0x1]
        %v2312 = vld [vmem:[#allocation2 + $0x11c] sm:$0x1]
        %v2313 = vld [vmem:[#allocation2 + $0x11d] sm:$0x1]
        %v2314 = vld [vmem:[#allocation2 + $0x11e] sm:$0x1]
        %v2315 = vld [vmem:[#allocation2 + $0x120] sm:$0x1]
        %v2316 = vld [vmem:[#allocation2 + $0x121] sm:$0x1]
        %v2317 = vld [vmem:[#allocation2 + $0x122] sm:$0x1]
        %v2318 = vld [vmem:[#allocation2 + $0x123] sm:$0x1]
        %v2319 = vld [vmem:[#allocation2 + $0x124] sm:$0x1]
        %v2320 = vld [vmem:[#allocation2 + $0x125] sm:$0x1]
        %v2321 = vld [vmem:[#allocation2 + $0x126] sm:$0x1]
        %v2322 = vld [vmem:[#allocation2 + $0x127] sm:$0x1]
        %v2323 = vld [vmem:[#allocation2 + $0x128] sm:$0x1]
        %v2324 = vld [vmem:[#allocation2 + $0x129] sm:$0x1]
        %v2325 = vld [vmem:[#allocation2 + $0x12a] sm:$0x1]
        %v2326 = vld [vmem:[#allocation2 + $0x12b] sm:$0x1]
        %v2327 = vld [vmem:[#allocation2 + $0x12c] sm:$0x1]
        %v2328 = vld [vmem:[#allocation2 + $0x12d] sm:$0x1]
        %v2329 = vld [vmem:[#allocation2 + $0x12e] sm:$0x1]
        %v2330 = vld [vmem:[#allocation2 + $0x12f] sm:$0x1]
        %v2331 = vld [vmem:[#allocation2 + $0x130] sm:$0x1]
        %v2332 = vld [vmem:[#allocation3] sm:$0x1]
        %v2333 = vld [vmem:[#allocation3 + $0x1] sm:$0x1]
        %v2334 = vld [vmem:[#allocation3 + $0x2] sm:$0x1]
        %v2335 = vld [vmem:[#allocation3 + $0x3] sm:$0x1]
        %v2336 = vld [vmem:[#allocation3 + $0x4] sm:$0x1]
        %v2337 = vld [vmem:[#allocation3 + $0x5] sm:$0x1]
        %v2338 = vld [vmem:[#allocation3 + $0x6] sm:$0x1]
        %v2339 = vld [vmem:[#allocation3 + $0x7] sm:$0x1]
        %v2340 = vld [vmem:[#allocation3 + $0x8] sm:$0x1]
        %v2341 = vld [vmem:[#allocation3 + $0x9] sm:$0x1]
        %v2342 = vld [vmem:[#allocation3 + $0xa] sm:$0x1]
        %v2343 = vld [vmem:[#allocation3 + $0xb] sm:$0x1]
        %v2344 = vld [vmem:[#allocation3 + $0xc] sm:$0x1]
        %v2345 = vld [vmem:[#allocation3 + $0xd] sm:$0x1]
        %v2346 = vld [vmem:[#allocation3 + $0xe] sm:$0x1]
        %v2347 = vld [vmem:[#allocation3 + $0xf] sm:$0x1]
        %v2348 = vld [vmem:[#allocation3 + $0x10] sm:$0x1]
        %v2349 = vld [vmem:[#allocation3 + $0x12] sm:$0x1]
        %v2350 = vld [vmem:[#allocation3 + $0x13] sm:$0x1]
        %v2351 = vld [vmem:[#allocation3 + $0x14] sm:$0x1]
        %v2352 = vld [vmem:[#allocation3 + $0x15] sm:$0x1]
        %v2353 = vld [vmem:[#allocation3 + $0x16] sm:$0x1]
        %v2354 = vld [vmem:[#allocation3 + $0x17] sm:$0x1]
        %v2355 = vld [vmem:[#allocation3 + $0x18] sm:$0x1]
        %v2356 = vld [vmem:[#allocation3 + $0x19] sm:$0x1]
        %v2357 = vld [vmem:[#allocation3 + $0x1a] sm:$0x1]
        %v2358 = vld [vmem:[#allocation3 + $0x1b] sm:$0x1]
        %v2359 = vld [vmem:[#allocation3 + $0x1c] sm:$0x1]
        %v2360 = vld [vmem:[#allocation3 + $0x1d] sm:$0x1]
        %v2361 = vld [vmem:[#allocation3 + $0x1e] sm:$0x1]
        %v2362 = vld [vmem:[#allocation3 + $0x1f] sm:$0x1]
        %v2363 = vld [vmem:[#allocation3 + $0x20] sm:$0x1]
        %v2364 = vld [vmem:[#allocation3 + $0x21] sm:$0x1]
        %v2365 = vld [vmem:[#allocation3 + $0x22] sm:$0x1]
        %v2366 = vld [vmem:[#allocation3 + $0x24] sm:$0x1]
        %v2367 = vld [vmem:[#allocation3 + $0x25] sm:$0x1]
        %v2368 = vld [vmem:[#allocation3 + $0x26] sm:$0x1]
        %v2369 = vld [vmem:[#allocation3 + $0x27] sm:$0x1]
        %v2370 = vld [vmem:[#allocation3 + $0x28] sm:$0x1]
        %v2371 = vld [vmem:[#allocation3 + $0x29] sm:$0x1]
        %v2372 = vld [vmem:[#allocation3 + $0x2a] sm:$0x1]
        %v2373 = vld [vmem:[#allocation3 + $0x2b] sm:$0x1]
        %v2374 = vld [vmem:[#allocation3 + $0x2c] sm:$0x1]
        %v2375 = vld [vmem:[#allocation3 + $0x2d] sm:$0x1]
        %v2376 = vld [vmem:[#allocation3 + $0x2e] sm:$0x1]
        %v2377 = vld [vmem:[#allocation3 + $0x2f] sm:$0x1]
        %v2378 = vld [vmem:[#allocation3 + $0x30] sm:$0x1]
        %v2379 = vld [vmem:[#allocation3 + $0x31] sm:$0x1]
        %v2380 = vld [vmem:[#allocation3 + $0x32] sm:$0x1]
        %v2381 = vld [vmem:[#allocation3 + $0x33] sm:$0x1]
        %v2382 = vld [vmem:[#allocation3 + $0x34] sm:$0x1]
        %v2383 = vld [vmem:[#allocation3 + $0x36] sm:$0x1]
        %v2384 = vld [vmem:[#allocation3 + $0x37] sm:$0x1]
        %v2385 = vld [vmem:[#allocation3 + $0x38] sm:$0x1]
        %v2386 = vld [vmem:[#allocation3 + $0x39] sm:$0x1]
        %v2387 = vld [vmem:[#allocation3 + $0x3a] sm:$0x1]
        %v2388 = vld [vmem:[#allocation3 + $0x3b] sm:$0x1]
        %v2389 = vld [vmem:[#allocation3 + $0x3c] sm:$0x1]
        %v2390 = vld [vmem:[#allocation3 + $0x3d] sm:$0x1]
        %v2391 = vld [vmem:[#allocation3 + $0x3e] sm:$0x1]
        %v2392 = vld [vmem:[#allocation3 + $0x3f] sm:$0x1]
        %v2393 = vld [vmem:[#allocation3 + $0x40] sm:$0x1]
        %v2394 = vld [vmem:[#allocation3 + $0x41] sm:$0x1]
        %v2395 = vld [vmem:[#allocation3 + $0x42] sm:$0x1]
        %v2396 = vld [vmem:[#allocation3 + $0x43] sm:$0x1]
        %v2397 = vld [vmem:[#allocation3 + $0x44] sm:$0x1]
        %v2398 = vld [vmem:[#allocation3 + $0x45] sm:$0x1]
        %v2399 = vld [vmem:[#allocation3 + $0x46] sm:$0x1]
        %v2400 = vld [vmem:[#allocation3 + $0x48] sm:$0x1]
        %v2401 = vld [vmem:[#allocation3 + $0x49] sm:$0x1]
        %v2402 = vld [vmem:[#allocation3 + $0x4a] sm:$0x1]
        %v2403 = vld [vmem:[#allocation3 + $0x4b] sm:$0x1]
        %v2404 = vld [vmem:[#allocation3 + $0x4c] sm:$0x1]
        %v2405 = vld [vmem:[#allocation3 + $0x4d] sm:$0x1]
        %v2406 = vld [vmem:[#allocation3 + $0x4e] sm:$0x1]
        %v2407 = vld [vmem:[#allocation3 + $0x4f] sm:$0x1]
        %v2408 = vld [vmem:[#allocation3 + $0x50] sm:$0x1]
        %v2409 = vld [vmem:[#allocation3 + $0x51] sm:$0x1]
        %v2410 = vld [vmem:[#allocation3 + $0x52] sm:$0x1]
        %v2411 = vld [vmem:[#allocation3 + $0x53] sm:$0x1]
        %v2412 = vld [vmem:[#allocation3 + $0x54] sm:$0x1]
        %v2413 = vld [vmem:[#allocation3 + $0x55] sm:$0x1]
        %v2414 = vld [vmem:[#allocation3 + $0x56] sm:$0x1]
        %v2415 = vld [vmem:[#allocation3 + $0x57] sm:$0x1]
        %v2416 = vld [vmem:[#allocation3 + $0x58] sm:$0x1]
        %v2417 = vld [vmem:[#allocation3 + $0x5a] sm:$0x1]
        %v2418 = vld [vmem:[#allocation3 + $0x5b] sm:$0x1]
        %v2419 = vld [vmem:[#allocation3 + $0x5c] sm:$0x1]
        %v2420 = vld [vmem:[#allocation3 + $0x5d] sm:$0x1]
        %v2421 = vld [vmem:[#allocation3 + $0x5e] sm:$0x1]
        %v2422 = vld [vmem:[#allocation3 + $0x5f] sm:$0x1]
        %v2423 = vld [vmem:[#allocation3 + $0x60] sm:$0x1]
        %v2424 = vld [vmem:[#allocation3 + $0x61] sm:$0x1]
        %v2425 = vld [vmem:[#allocation3 + $0x62] sm:$0x1]
        %v2426 = vld [vmem:[#allocation3 + $0x63] sm:$0x1]
        %v2427 = vld [vmem:[#allocation3 + $0x64] sm:$0x1]
        %v2428 = vld [vmem:[#allocation3 + $0x65] sm:$0x1]
        %v2429 = vld [vmem:[#allocation3 + $0x66] sm:$0x1]
        %v2430 = vld [vmem:[#allocation3 + $0x67] sm:$0x1]
        %v2431 = vld [vmem:[#allocation3 + $0x68] sm:$0x1]
        %v2432 = vld [vmem:[#allocation3 + $0x69] sm:$0x1]
        %v2433 = vld [vmem:[#allocation3 + $0x6a] sm:$0x1]
        %v2434 = vld [vmem:[#allocation3 + $0x6c] sm:$0x1]
        %v2435 = vld [vmem:[#allocation3 + $0x6d] sm:$0x1]
        %v2436 = vld [vmem:[#allocation3 + $0x6e] sm:$0x1]
        %v2437 = vld [vmem:[#allocation3 + $0x6f] sm:$0x1]
        %v2438 = vld [vmem:[#allocation3 + $0x70] sm:$0x1]
        %v2439 = vld [vmem:[#allocation3 + $0x71] sm:$0x1]
        %v2440 = vld [vmem:[#allocation3 + $0x72] sm:$0x1]
        %v2441 = vld [vmem:[#allocation3 + $0x73] sm:$0x1]
        %v2442 = vld [vmem:[#allocation3 + $0x74] sm:$0x1]
        %v2443 = vld [vmem:[#allocation3 + $0x75] sm:$0x1]
        %v2444 = vld [vmem:[#allocation3 + $0x76] sm:$0x1]
        %v2445 = vld [vmem:[#allocation3 + $0x77] sm:$0x1]
        %v2446 = vld [vmem:[#allocation3 + $0x78] sm:$0x1]
        %v2447 = vld [vmem:[#allocation3 + $0x79] sm:$0x1]
        %v2448 = vld [vmem:[#allocation3 + $0x7a] sm:$0x1]
        %v2449 = vld [vmem:[#allocation3 + $0x7b] sm:$0x1]
        %v2450 = vld [vmem:[#allocation3 + $0x7c] sm:$0x1]
        %v2451 = vld [vmem:[#allocation3 + $0x7e] sm:$0x1]
        %v2452 = vld [vmem:[#allocation3 + $0x7f] sm:$0x1]
        %v2453 = vld [vmem:[#allocation3 + $0x80] sm:$0x1]
        %v2454 = vld [vmem:[#allocation3 + $0x81] sm:$0x1]
        %v2455 = vld [vmem:[#allocation3 + $0x82] sm:$0x1]
        %v2456 = vld [vmem:[#allocation3 + $0x83] sm:$0x1]
        %v2457 = vld [vmem:[#allocation3 + $0x84] sm:$0x1]
        %v2458 = vld [vmem:[#allocation3 + $0x85] sm:$0x1]
        %v2459 = vld [vmem:[#allocation3 + $0x86] sm:$0x1]
        %v2460 = vld [vmem:[#allocation3 + $0x87] sm:$0x1]
        %v2461 = vld [vmem:[#allocation3 + $0x88] sm:$0x1]
        %v2462 = vld [vmem:[#allocation3 + $0x89] sm:$0x1]
        %v2463 = vld [vmem:[#allocation3 + $0x8a] sm:$0x1]
        %v2464 = vld [vmem:[#allocation3 + $0x8b] sm:$0x1]
        %v2465 = vld [vmem:[#allocation3 + $0x8c] sm:$0x1]
        %v2466 = vld [vmem:[#allocation3 + $0x8d] sm:$0x1]
        %v2467 = vld [vmem:[#allocation3 + $0x8e] sm:$0x1]
        %v2468 = vld [vmem:[#allocation3 + $0x90] sm:$0x1]
        %v2469 = vld [vmem:[#allocation3 + $0x91] sm:$0x1]
        %v2470 = vld [vmem:[#allocation3 + $0x92] sm:$0x1]
        %v2471 = vld [vmem:[#allocation3 + $0x93] sm:$0x1]
        %v2472 = vld [vmem:[#allocation3 + $0x94] sm:$0x1]
        %v2473 = vld [vmem:[#allocation3 + $0x95] sm:$0x1]
        %v2474 = vld [vmem:[#allocation3 + $0x96] sm:$0x1]
        %v2475 = vld [vmem:[#allocation3 + $0x97] sm:$0x1]
        %v2476 = vld [vmem:[#allocation3 + $0x98] sm:$0x1]
        %v2477 = vld [vmem:[#allocation3 + $0x99] sm:$0x1]
        %v2478 = vld [vmem:[#allocation3 + $0x9a] sm:$0x1]
        %v2479 = vld [vmem:[#allocation3 + $0x9b] sm:$0x1]
        %v2480 = vld [vmem:[#allocation3 + $0x9c] sm:$0x1]
        %v2481 = vld [vmem:[#allocation3 + $0x9d] sm:$0x1]
        %v2482 = vld [vmem:[#allocation3 + $0x9e] sm:$0x1]
        %v2483 = vld [vmem:[#allocation3 + $0x9f] sm:$0x1]
        %v2484 = vld [vmem:[#allocation3 + $0xa0] sm:$0x1]
        %v2485 = vld [vmem:[#allocation3 + $0xa2] sm:$0x1]
        %v2486 = vld [vmem:[#allocation3 + $0xa3] sm:$0x1]
        %v2487 = vld [vmem:[#allocation3 + $0xa4] sm:$0x1]
        %v2488 = vld [vmem:[#allocation3 + $0xa5] sm:$0x1]
        %v2489 = vld [vmem:[#allocation3 + $0xa6] sm:$0x1]
        %v2490 = vld [vmem:[#allocation3 + $0xa7] sm:$0x1]
        %v2491 = vld [vmem:[#allocation3 + $0xa8] sm:$0x1]
        %v2492 = vld [vmem:[#allocation3 + $0xa9] sm:$0x1]
        %v2493 = vld [vmem:[#allocation3 + $0xaa] sm:$0x1]
        %v2494 = vld [vmem:[#allocation3 + $0xab] sm:$0x1]
        %v2495 = vld [vmem:[#allocation3 + $0xac] sm:$0x1]
        %v2496 = vld [vmem:[#allocation3 + $0xad] sm:$0x1]
        %v2497 = vld [vmem:[#allocation3 + $0xae] sm:$0x1]
        %v2498 = vld [vmem:[#allocation3 + $0xaf] sm:$0x1]
        %v2499 = vld [vmem:[#allocation3 + $0xb0] sm:$0x1]
        %v2500 = vld [vmem:[#allocation3 + $0xb1] sm:$0x1]
        %v2501 = vld [vmem:[#allocation3 + $0xb2] sm:$0x1]
        %v2502 = vld [vmem:[#allocation3 + $0xb4] sm:$0x1]
        %v2503 = vld [vmem:[#allocation3 + $0xb5] sm:$0x1]
        %v2504 = vld [vmem:[#allocation3 + $0xb6] sm:$0x1]
        %v2505 = vld [vmem:[#allocation3 + $0xb7] sm:$0x1]
        %v2506 = vld [vmem:[#allocation3 + $0xb8] sm:$0x1]
        %v2507 = vld [vmem:[#allocation3 + $0xb9] sm:$0x1]
        %v2508 = vld [vmem:[#allocation3 + $0xba] sm:$0x1]
        %v2509 = vld [vmem:[#allocation3 + $0xbb] sm:$0x1]
        %v2510 = vld [vmem:[#allocation3 + $0xbc] sm:$0x1]
        %v2511 = vld [vmem:[#allocation3 + $0xbd] sm:$0x1]
        %v2512 = vld [vmem:[#allocation3 + $0xbe] sm:$0x1]
        %v2513 = vld [vmem:[#allocation3 + $0xbf] sm:$0x1]
        %v2514 = vld [vmem:[#allocation3 + $0xc0] sm:$0x1]
        %v2515 = vld [vmem:[#allocation3 + $0xc1] sm:$0x1]
        %v2516 = vld [vmem:[#allocation3 + $0xc2] sm:$0x1]
        %v2517 = vld [vmem:[#allocation3 + $0xc3] sm:$0x1]
        %v2518 = vld [vmem:[#allocation3 + $0xc4] sm:$0x1]
        %v2519 = vld [vmem:[#allocation3 + $0xc6] sm:$0x1]
        %v2520 = vld [vmem:[#allocation3 + $0xc7] sm:$0x1]
        %v2521 = vld [vmem:[#allocation3 + $0xc8] sm:$0x1]
        %v2522 = vld [vmem:[#allocation3 + $0xc9] sm:$0x1]
        %v2523 = vld [vmem:[#allocation3 + $0xca] sm:$0x1]
        %v2524 = vld [vmem:[#allocation3 + $0xcb] sm:$0x1]
        %v2525 = vld [vmem:[#allocation3 + $0xcc] sm:$0x1]
        %v2526 = vld [vmem:[#allocation3 + $0xcd] sm:$0x1]
        %v2527 = vld [vmem:[#allocation3 + $0xce] sm:$0x1]
        %v2528 = vld [vmem:[#allocation3 + $0xcf] sm:$0x1]
        %v2529 = vld [vmem:[#allocation3 + $0xd0] sm:$0x1]
        %v2530 = vld [vmem:[#allocation3 + $0xd1] sm:$0x1]
        %v2531 = vld [vmem:[#allocation3 + $0xd2] sm:$0x1]
        %v2532 = vld [vmem:[#allocation3 + $0xd3] sm:$0x1]
        %v2533 = vld [vmem:[#allocation3 + $0xd4] sm:$0x1]
        %v2534 = vld [vmem:[#allocation3 + $0xd5] sm:$0x1]
        %v2535 = vld [vmem:[#allocation3 + $0xd6] sm:$0x1]
        %v2536 = vld [vmem:[#allocation3 + $0xd8] sm:$0x1]
        %v2537 = vld [vmem:[#allocation3 + $0xd9] sm:$0x1]
        %v2538 = vld [vmem:[#allocation3 + $0xda] sm:$0x1]
        %v2539 = vld [vmem:[#allocation3 + $0xdb] sm:$0x1]
        %v2540 = vld [vmem:[#allocation3 + $0xdc] sm:$0x1]
        %v2541 = vld [vmem:[#allocation3 + $0xdd] sm:$0x1]
        %v2542 = vld [vmem:[#allocation3 + $0xde] sm:$0x1]
        %v2543 = vld [vmem:[#allocation3 + $0xdf] sm:$0x1]
        %v2544 = vld [vmem:[#allocation3 + $0xe0] sm:$0x1]
        %v2545 = vld [vmem:[#allocation3 + $0xe1] sm:$0x1]
        %v2546 = vld [vmem:[#allocation3 + $0xe2] sm:$0x1]
        %v2547 = vld [vmem:[#allocation3 + $0xe3] sm:$0x1]
        %v2548 = vld [vmem:[#allocation3 + $0xe4] sm:$0x1]
        %v2549 = vld [vmem:[#allocation3 + $0xe5] sm:$0x1]
        %v2550 = vld [vmem:[#allocation3 + $0xe6] sm:$0x1]
        %v2551 = vld [vmem:[#allocation3 + $0xe7] sm:$0x1]
        %v2552 = vld [vmem:[#allocation3 + $0xe8] sm:$0x1]
        %v2553 = vld [vmem:[#allocation3 + $0xea] sm:$0x1]
        %v2554 = vld [vmem:[#allocation3 + $0xeb] sm:$0x1]
        %v2555 = vld [vmem:[#allocation3 + $0xec] sm:$0x1]
        %v2556 = vld [vmem:[#allocation3 + $0xed] sm:$0x1]
        %v2557 = vld [vmem:[#allocation3 + $0xee] sm:$0x1]
        %v2558 = vld [vmem:[#allocation3 + $0xef] sm:$0x1]
        %v2559 = vld [vmem:[#allocation3 + $0xf0] sm:$0x1]
        %v2560 = vld [vmem:[#allocation3 + $0xf1] sm:$0x1]
        %v2561 = vld [vmem:[#allocation3 + $0xf2] sm:$0x1]
        %v2562 = vld [vmem:[#allocation3 + $0xf3] sm:$0x1]
        %v2563 = vld [vmem:[#allocation3 + $0xf4] sm:$0x1]
        %v2564 = vld [vmem:[#allocation3 + $0xf5] sm:$0x1]
        %v2565 = vld [vmem:[#allocation3 + $0xf6] sm:$0x1]
        %v2566 = vld [vmem:[#allocation3 + $0xf7] sm:$0x1]
        %v2567 = vld [vmem:[#allocation3 + $0xf8] sm:$0x1]
        %v2568 = vld [vmem:[#allocation3 + $0xf9] sm:$0x1]
        %v2569 = vld [vmem:[#allocation3 + $0xfa] sm:$0x1]
        %v2570 = vld [vmem:[#allocation3 + $0xfc] sm:$0x1]
        %v2571 = vld [vmem:[#allocation3 + $0xfd] sm:$0x1]
        %v2572 = vld [vmem:[#allocation3 + $0xfe] sm:$0x1]
        %v2573 = vld [vmem:[#allocation3 + $0xff] sm:$0x1]
        %v2574 = vld [vmem:[#allocation3 + $0x100] sm:$0x1]
        %v2575 = vld [vmem:[#allocation3 + $0x101] sm:$0x1]
        %v2576 = vld [vmem:[#allocation3 + $0x102] sm:$0x1]
        %v2577 = vld [vmem:[#allocation3 + $0x103] sm:$0x1]
        %v2578 = vld [vmem:[#allocation3 + $0x104] sm:$0x1]
        %v2579 = vld [vmem:[#allocation3 + $0x105] sm:$0x1]
        %v2580 = vld [vmem:[#allocation3 + $0x106] sm:$0x1]
        %v2581 = vld [vmem:[#allocation3 + $0x107] sm:$0x1]
        %v2582 = vld [vmem:[#allocation3 + $0x108] sm:$0x1]
        %v2583 = vld [vmem:[#allocation3 + $0x109] sm:$0x1]
        %v2584 = vld [vmem:[#allocation3 + $0x10a] sm:$0x1]
        %v2585 = vld [vmem:[#allocation3 + $0x10b] sm:$0x1]
        %v2586 = vld [vmem:[#allocation3 + $0x10c] sm:$0x1]
        %v2587 = vld [vmem:[#allocation3 + $0x10e] sm:$0x1]
        %v2588 = vld [vmem:[#allocation3 + $0x10f] sm:$0x1]
        %v2589 = vld [vmem:[#allocation3 + $0x110] sm:$0x1]
        %v2590 = vld [vmem:[#allocation3 + $0x111] sm:$0x1]
        %v2591 = vld [vmem:[#allocation3 + $0x112] sm:$0x1]
        %v2592 = vld [vmem:[#allocation3 + $0x113] sm:$0x1]
        %v2593 = vld [vmem:[#allocation3 + $0x114] sm:$0x1]
        %v2594 = vld [vmem:[#allocation3 + $0x115] sm:$0x1]
        %v2595 = vld [vmem:[#allocation3 + $0x116] sm:$0x1]
        %v2596 = vld [vmem:[#allocation3 + $0x117] sm:$0x1]
        %v2597 = vld [vmem:[#allocation3 + $0x118] sm:$0x1]
        %v2598 = vld [vmem:[#allocation3 + $0x119] sm:$0x1]
        %v2599 = vld [vmem:[#allocation3 + $0x11a] sm:$0x1]
        %v2600 = vld [vmem:[#allocation3 + $0x11b] sm:$0x1]
        %v2601 = vld [vmem:[#allocation3 + $0x11c] sm:$0x1]
        %v2602 = vld [vmem:[#allocation3 + $0x11d] sm:$0x1]
        %v2603 = vld [vmem:[#allocation3 + $0x11e] sm:$0x1]
        %v2604 = vld [vmem:[#allocation3 + $0x120] sm:$0x1]
        %v2605 = vld [vmem:[#allocation3 + $0x121] sm:$0x1]
        %v2606 = vld [vmem:[#allocation3 + $0x122] sm:$0x1]
        %v2607 = vld [vmem:[#allocation3 + $0x123] sm:$0x1]
        %v2608 = vld [vmem:[#allocation3 + $0x124] sm:$0x1]
        %v2609 = vld [vmem:[#allocation3 + $0x125] sm:$0x1]
        %v2610 = vld [vmem:[#allocation3 + $0x126] sm:$0x1]
        %v2611 = vld [vmem:[#allocation3 + $0x127] sm:$0x1]
        %v2612 = vld [vmem:[#allocation3 + $0x128] sm:$0x1]
        %v2613 = vld [vmem:[#allocation3 + $0x129] sm:$0x1]
        %v2614 = vld [vmem:[#allocation3 + $0x12a] sm:$0x1]
        %v2615 = vld [vmem:[#allocation3 + $0x12b] sm:$0x1]
        %v2616 = vld [vmem:[#allocation3 + $0x12c] sm:$0x1]
        %v2617 = vld [vmem:[#allocation3 + $0x12d] sm:$0x1]
        %v2618 = vld [vmem:[#allocation3 + $0x12e] sm:$0x1]
        %v2619 = vld [vmem:[#allocation3 + $0x12f] sm:$0x1]
        %v2620 = vld [vmem:[#allocation3 + $0x130] sm:$0x1]
        %v2621 = vld [vmem:[#allocation4] sm:$0xff]
        %v2622 = vld [vmem:[#allocation4 + $0x8] sm:$0xff]
        %v2623 = vld [vmem:[#allocation4 + $0x10] sm:$0xff]
        %v2624 = vld [vmem:[#allocation4 + $0x18] sm:$0xff]
        %v2625 = vld [vmem:[#allocation4 + $0x20] sm:$0xff]
        %v2626 = vld [vmem:[#allocation4 + $0x28] sm:$0xff]
        %v2627 = vld [vmem:[#allocation4 + $0x30] sm:$0xff]
        %v2628 = vld [vmem:[#allocation4 + $0x38] sm:$0xff]
        %v2629 = vld [vmem:[#allocation4 + $0x40] sm:$0xff]
        %v2630 = vld [vmem:[#allocation4 + $0x48] sm:$0xff]
        %v2631 = vld [vmem:[#allocation4 + $0x50] sm:$0xff]
        %v2632 = vld [vmem:[#allocation4 + $0x58] sm:$0xff]
        %v2633 = vld [vmem:[#allocation4 + $0x60] sm:$0xff]
        %v2634 = vld [vmem:[#allocation4 + $0x68] sm:$0xff]
        %v2635 = vld [vmem:[#allocation4 + $0x70] sm:$0xff]
        %v2636 = vld [vmem:[#allocation4 + $0x78] sm:$0xff]
        %v2637 = vld [vmem:[#allocation4 + $0x80] sm:$0xff]
        %v2638 = vld [vmem:[#allocation4 + $0x88] sm:$0xff]
        %v2639 = vld [vmem:[#allocation4 + $0x90] sm:$0xff]
        %v2640 = vld [vmem:[#allocation4 + $0x98] sm:$0xff]
        %v2641 = vld [vmem:[#allocation4 + $0xa0] sm:$0xff]
        %v2642 = vld [vmem:[#allocation4 + $0xa8] sm:$0xff]
        %v2643 = vld [vmem:[#allocation4 + $0xb0] sm:$0xff]
        %v2644 = vld [vmem:[#allocation4 + $0xb8] sm:$0xff]
        %v2645 = vld [vmem:[#allocation4 + $0xc0] sm:$0xff]
        %v2646 = vld [vmem:[#allocation4 + $0xc8] sm:$0xff]
        %v2647 = vld [vmem:[#allocation4 + $0xd0] sm:$0xff]
        %v2648 = vld [vmem:[#allocation4 + $0xd8] sm:$0xff]
        %v2649 = vld [vmem:[#allocation4 + $0xe0] sm:$0xff]
        %v2650 = vld [vmem:[#allocation4 + $0xe8] sm:$0xff]
        %v2651 = vld [vmem:[#allocation4 + $0xf0] sm:$0xff]
        %v2652 = vld [vmem:[#allocation4 + $0xf8] sm:$0xff]
        %v2653 = vld [vmem:[#allocation4 + $0x100] sm:$0xff]
        %v2654 = vld [vmem:[#allocation4 + $0x108] sm:$0xff]
        %v2655 = vld [vmem:[#allocation4 + $0x110] sm:$0xff]
        %v2656 = vld [vmem:[#allocation4 + $0x118] sm:$0xff]
        %v2657 = vld [vmem:[#allocation4 + $0x120] sm:$0xff]
        %v2658 = vld [vmem:[#allocation4 + $0x128] sm:$0xff]
        %v2659 = vld [vmem:[#allocation4 + $0x130] sm:$0xff]
        %v2660 = vld [vmem:[#allocation4 + $0x138] sm:$0xff]
        %v2661 = vld [vmem:[#allocation4 + $0x140] sm:$0xff]
        %v2662 = vld [vmem:[#allocation4 + $0x148] sm:$0xff]
        %v2663 = vld [vmem:[#allocation4 + $0x150] sm:$0xff]
        %v2664 = vld [vmem:[#allocation4 + $0x158] sm:$0xff]
        %v2665 = vld [vmem:[#allocation4 + $0x160] sm:$0xff]
        %v2666 = vld [vmem:[#allocation4 + $0x168] sm:$0xff]
        %v2667 = vld [vmem:[#allocation4 + $0x170] sm:$0xff]
        %v2668 = vld [vmem:[#allocation4 + $0x178] sm:$0xff]
        %v2669 = vld [vmem:[#allocation4 + $0x180] sm:$0xff]
        %v2670 = vld [vmem:[#allocation4 + $0x188] sm:$0xff]
        %v2671 = vld [vmem:[#allocation4 + $0x190] sm:$0xff]
        %v2672 = vld [vmem:[#allocation4 + $0x198] sm:$0xff]
        %v2673 = vld [vmem:[#allocation4 + $0x1a0] sm:$0xff]
        %v2674 = vld [vmem:[#allocation4 + $0x1a8] sm:$0xff]
        %v2675 = vld [vmem:[#allocation4 + $0x1b0] sm:$0xff]
        %v2676 = vld [vmem:[#allocation4 + $0x1b8] sm:$0xff]
        %v2677 = vld [vmem:[#allocation4 + $0x1c0] sm:$0xff]
        %v2678 = vld [vmem:[#allocation4 + $0x1c8] sm:$0xff]
        %v2679 = vld [vmem:[#allocation4 + $0x1d0] sm:$0xff]
        %v2680 = vld [vmem:[#allocation4 + $0x1d8] sm:$0xff]
        %v2681 = vld [vmem:[#allocation4 + $0x1e0] sm:$0xff]
        %v2682 = vld [vmem:[#allocation4 + $0x1e8] sm:$0xff]
        %v2683 = vld [vmem:[#allocation4 + $0x1f0] sm:$0xff]
        %v2684 = vld [vmem:[#allocation4 + $0x1f8] sm:$0xff]
        %v2685 = vld [vmem:[#allocation4 + $0x200] sm:$0xff]
        %v2686 = vld [vmem:[#allocation4 + $0x208] sm:$0xff]
        %v2687 = vld [vmem:[#allocation4 + $0x210] sm:$0xff]
        %v2688 = vld [vmem:[#allocation4 + $0x218] sm:$0xff]
        %v2689 = vld [vmem:[#allocation4 + $0x220] sm:$0xff]
        %v2690 = vld [vmem:[#allocation4 + $0x228] sm:$0xff]
        %v2691 = vld [vmem:[#allocation4 + $0x230] sm:$0xff]
        %v2692 = vld [vmem:[#allocation4 + $0x238] sm:$0xff]
        %v2693 = vld [vmem:[#allocation4 + $0x240] sm:$0xff]
        %v2694 = vld [vmem:[#allocation4 + $0x248] sm:$0xff]
        %v2695 = vld [vmem:[#allocation4 + $0x250] sm:$0xff]
        %v2696 = vld [vmem:[#allocation4 + $0x258] sm:$0xff]
        %v2697 = vld [vmem:[#allocation4 + $0x260] sm:$0xff]
        %v2698 = vld [vmem:[#allocation4 + $0x268] sm:$0xff]
        %v2699 = vld [vmem:[#allocation4 + $0x270] sm:$0xff]
        %v2700 = vld [vmem:[#allocation4 + $0x278] sm:$0xff]
        %v2701 = vld [vmem:[#allocation4 + $0x280] sm:$0xff]
        %v2702 = vld [vmem:[#allocation4 + $0x288] sm:$0xff]
        %v2703 = vld [vmem:[#allocation4 + $0x290] sm:$0xff]
        %v2704 = vld [vmem:[#allocation4 + $0x298] sm:$0xff]
        %v2705 = vld [vmem:[#allocation4 + $0x2a0] sm:$0xff]
        %v2706 = vld [vmem:[#allocation4 + $0x2a8] sm:$0xff]
        %v2707 = vld [vmem:[#allocation4 + $0x2b0] sm:$0xff]
        %v2708 = vld [vmem:[#allocation4 + $0x2b8] sm:$0xff]
        %v2709 = vld [vmem:[#allocation4 + $0x2c0] sm:$0xff]
        %v2710 = vld [vmem:[#allocation4 + $0x2c8] sm:$0xff]
        %v2711 = vld [vmem:[#allocation4 + $0x2d0] sm:$0xff]
        %v2712 = vld [vmem:[#allocation4 + $0x2d8] sm:$0xff]
        %v2713 = vld [vmem:[#allocation4 + $0x2e0] sm:$0xff]
        %v2714 = vld [vmem:[#allocation4 + $0x2e8] sm:$0xff]
        %v2715 = vld [vmem:[#allocation4 + $0x2f0] sm:$0xff]
        %v2716 = vld [vmem:[#allocation4 + $0x2f8] sm:$0xff]
        %v2717 = vld [vmem:[#allocation4 + $0x300] sm:$0xff]
        %v2718 = vld [vmem:[#allocation4 + $0x308] sm:$0xff]
        %v2719 = vld [vmem:[#allocation4 + $0x310] sm:$0xff]
        %v2720 = vld [vmem:[#allocation4 + $0x318] sm:$0xff]
        %v2721 = vld [vmem:[#allocation4 + $0x320] sm:$0xff]
        %v2722 = vld [vmem:[#allocation4 + $0x328] sm:$0xff]
        %v2723 = vld [vmem:[#allocation4 + $0x330] sm:$0xff]
        %v2724 = vld [vmem:[#allocation4 + $0x338] sm:$0xff]
        %v2725 = vld [vmem:[#allocation4 + $0x340] sm:$0xff]
        %v2726 = vld [vmem:[#allocation4 + $0x348] sm:$0xff]
        %v2727 = vld [vmem:[#allocation4 + $0x350] sm:$0xff]
        %v2728 = vld [vmem:[#allocation4 + $0x358] sm:$0xff]
        %v2729 = vld [vmem:[#allocation4 + $0x360] sm:$0xff]
        %v2730 = vld [vmem:[#allocation4 + $0x368] sm:$0xff]
        %v2731 = vld [vmem:[#allocation4 + $0x370] sm:$0xff]
        %v2732 = vld [vmem:[#allocation4 + $0x378] sm:$0xff]
        %v2733 = vld [vmem:[#allocation4 + $0x380] sm:$0xff]
        %v2734 = vld [vmem:[#allocation4 + $0x388] sm:$0xff]
        %v2735 = vld [vmem:[#allocation4 + $0x390] sm:$0xff]
        %v2736 = vld [vmem:[#allocation4 + $0x398] sm:$0xff]
        %v2737 = vld [vmem:[#allocation4 + $0x3a0] sm:$0xff]
        %v2738 = vld [vmem:[#allocation4 + $0x3a8] sm:$0xff]
        %v2739 = vld [vmem:[#allocation4 + $0x3b0] sm:$0xff]
        %v2740 = vld [vmem:[#allocation4 + $0x3b8] sm:$0xff]
        %v2741 = vld [vmem:[#allocation4 + $0x3c0] sm:$0xff]
        %v2742 = vld [vmem:[#allocation4 + $0x3c8] sm:$0xff]
        %v2743 = vld [vmem:[#allocation4 + $0x3d0] sm:$0xff]
        %v2744 = vld [vmem:[#allocation4 + $0x3d8] sm:$0xff]
        %v2745 = vld [vmem:[#allocation4 + $0x3e0] sm:$0xff]
        %v2746 = vld [vmem:[#allocation4 + $0x3e8] sm:$0xff]
        %v2747 = vld [vmem:[#allocation4 + $0x3f0] sm:$0xff]
        %v2748 = vld [vmem:[#allocation4 + $0x3f8] sm:$0xff]
        %v2749 = vld [vmem:[#allocation4 + $0x400] sm:$0xff]
        %v2750 = vld [vmem:[#allocation4 + $0x408] sm:$0xff]
        %v2751 = vld [vmem:[#allocation4 + $0x410] sm:$0xff]
        %v2752 = vld [vmem:[#allocation4 + $0x418] sm:$0xff]
        %v2753 = vld [vmem:[#allocation4 + $0x420] sm:$0xff]
        %v2754 = vld [vmem:[#allocation4 + $0x428] sm:$0xff]
        %v2755 = vld [vmem:[#allocation4 + $0x430] sm:$0xff]
        %v2756 = vld [vmem:[#allocation4 + $0x438] sm:$0xff]
        %v2757 = vld [vmem:[#allocation4 + $0x440] sm:$0xff]
        %v2758 = vld [vmem:[#allocation4 + $0x448] sm:$0xff]
        %v2759 = vld [vmem:[#allocation4 + $0x450] sm:$0xff]
        %v2760 = vld [vmem:[#allocation4 + $0x458] sm:$0xff]
        %v2761 = vld [vmem:[#allocation4 + $0x460] sm:$0xff]
        %v2762 = vld [vmem:[#allocation4 + $0x468] sm:$0xff]
        %v2763 = vld [vmem:[#allocation4 + $0x470] sm:$0xff]
        %v2764 = vld [vmem:[#allocation4 + $0x478] sm:$0xff]
        %v2765 = vld [vmem:[%s3] sm:$0x1]
        %v2767 = vperm.slane %v2765, 0
        %v3058 = vrot.slane %v2045, 7
        %vm3059 = vcmask 1041409
        %v3060 = vsel %vm3059, %v3058, %v2043
        %v3061 = vrot.slane %v2047, 6
        %vm3062 = vcmask 1042434
        %v3063 = vsel %vm3062, %v3061, %v3060
        %v3064 = vrot.slane %v2049, 5
        %vm3065 = vcmask 1043459
        %v3066 = vsel %vm3065, %v3064, %v3063
        %v3067 = vrot.slane %v2051, 4
        %vm3068 = vcmask 1044484
        %v3069 = vsel %vm3068, %v3067, %v3066
        %v3070 = vrot.slane %v2053, 3
        %vm3071 = vcmask 1045509
        %v3072 = vsel %vm3071, %v3070, %v3069
        %v3073 = vrot.slane %v2055, 2
        %vm3074 = vcmask 1046534
        %v3075 = vsel %vm3074, %v3073, %v3072
        %v3076 = vrot.slane %v2057, 1
        %vm3077 = vcmask 1047559
        %v3078 = vsel %vm3077, %v3076, %v3075
        %v3079 = vrot.slane %v2046, 7
        %v3080 = vsel %vm3059, %v3079, %v2044
        %v3081 = vrot.slane %v2048, 6
        %v3082 = vsel %vm3062, %v3081, %v3080
        %v3083 = vrot.slane %v2050, 5
        %v3084 = vsel %vm3065, %v3083, %v3082
        %v3085 = vrot.slane %v2052, 4
        %v3086 = vsel %vm3068, %v3085, %v3084
        %v3087 = vrot.slane %v2054, 3
        %v3088 = vsel %vm3071, %v3087, %v3086
        %v3089 = vrot.slane %v2056, 2
        %v3090 = vsel %vm3074, %v3089, %v3088
        %v3091 = vrot.slane %v2058, 1
        %v3092 = vsel %vm3077, %v3091, %v3090
        %v3093 = vrot.slane %v2047, 7
        %v3094 = vsel %vm3059, %v3093, %v2045
        %v3095 = vrot.slane %v2049, 6
        %v3096 = vsel %vm3062, %v3095, %v3094
        %v3097 = vrot.slane %v2051, 5
        %v3098 = vsel %vm3065, %v3097, %v3096
        %v3099 = vrot.slane %v2053, 4
        %v3100 = vsel %vm3068, %v3099, %v3098
        %v3101 = vrot.slane %v2055, 3
        %v3102 = vsel %vm3071, %v3101, %v3100
        %v3103 = vrot.slane %v2057, 2
        %v3104 = vsel %vm3074, %v3103, %v3102
        %v3105 = vrot.slane %v2059, 1
        %v3106 = vsel %vm3077, %v3105, %v3104
        %v3107 = vrot.slane %v2062, 7
        %v3108 = vsel %vm3059, %v3107, %v2060
        %v3109 = vrot.slane %v2064, 6
        %v3110 = vsel %vm3062, %v3109, %v3108
        %v3111 = vrot.slane %v2066, 5
        %v3112 = vsel %vm3065, %v3111, %v3110
        %v3113 = vrot.slane %v2068, 4
        %v3114 = vsel %vm3068, %v3113, %v3112
        %v3115 = vrot.slane %v2070, 3
        %v3116 = vsel %vm3071, %v3115, %v3114
        %v3117 = vrot.slane %v2072, 2
        %v3118 = vsel %vm3074, %v3117, %v3116
        %v3119 = vrot.slane %v2074, 1
        %v3120 = vsel %vm3077, %v3119, %v3118
        %v3121 = vrot.slane %v2063, 7
        %v3122 = vsel %vm3059, %v3121, %v2061
        %v3123 = vrot.slane %v2065, 6
        %v3124 = vsel %vm3062, %v3123, %v3122
        %v3125 = vrot.slane %v2067, 5
        %v3126 = vsel %vm3065, %v3125, %v3124
        %v3127 = vrot.slane %v2069, 4
        %v3128 = vsel %vm3068, %v3127, %v3126
        %v3129 = vrot.slane %v2071, 3
        %v3130 = vsel %vm3071, %v3129, %v3128
        %v3131 = vrot.slane %v2073, 2
        %v3132 = vsel %vm3074, %v3131, %v3130
        %v3133 = vrot.slane %v2075, 1
        %v3134 = vsel %vm3077, %v3133, %v3132
        %v3135 = vrot.slane %v2064, 7
        %v3136 = vsel %vm3059, %v3135, %v2062
        %v3137 = vrot.slane %v2066, 6
        %v3138 = vsel %vm3062, %v3137, %v3136
        %v3139 = vrot.slane %v2068, 5
        %v3140 = vsel %vm3065, %v3139, %v3138
        %v3141 = vrot.slane %v2070, 4
        %v3142 = vsel %vm3068, %v3141, %v3140
        %v3143 = vrot.slane %v2072, 3
        %v3144 = vsel %vm3071, %v3143, %v3142
        %v3145 = vrot.slane %v2074, 2
        %v3146 = vsel %vm3074, %v3145, %v3144
        %v3147 = vrot.slane %v2076, 1
        %v3148 = vsel %vm3077, %v3147, %v3146
        %v3149 = vrot.slane %v2079, 7
        %v3150 = vsel %vm3059, %v3149, %v2077
        %v3151 = vrot.slane %v2081, 6
        %v3152 = vsel %vm3062, %v3151, %v3150
        %v3153 = vrot.slane %v2083, 5
        %v3154 = vsel %vm3065, %v3153, %v3152
        %v3155 = vrot.slane %v2085, 4
        %v3156 = vsel %vm3068, %v3155, %v3154
        %v3157 = vrot.slane %v2087, 3
        %v3158 = vsel %vm3071, %v3157, %v3156
        %v3159 = vrot.slane %v2089, 2
        %v3160 = vsel %vm3074, %v3159, %v3158
        %v3161 = vrot.slane %v2091, 1
        %v3162 = vsel %vm3077, %v3161, %v3160
        %v3163 = vrot.slane %v2080, 7
        %v3164 = vsel %vm3059, %v3163, %v2078
        %v3165 = vrot.slane %v2082, 6
        %v3166 = vsel %vm3062, %v3165, %v3164
        %v3167 = vrot.slane %v2084, 5
        %v3168 = vsel %vm3065, %v3167, %v3166
        %v3169 = vrot.slane %v2086, 4
        %v3170 = vsel %vm3068, %v3169, %v3168
        %v3171 = vrot.slane %v2088, 3
        %v3172 = vsel %vm3071, %v3171, %v3170
        %v3173 = vrot.slane %v2090, 2
        %v3174 = vsel %vm3074, %v3173, %v3172
        %v3175 = vrot.slane %v2092, 1
        %v3176 = vsel %vm3077, %v3175, %v3174
        %v3177 = vrot.slane %v2081, 7
        %v3178 = vsel %vm3059, %v3177, %v2079
        %v3179 = vrot.slane %v2083, 6
        %v3180 = vsel %vm3062, %v3179, %v3178
        %v3181 = vrot.slane %v2085, 5
        %v3182 = vsel %vm3065, %v3181, %v3180
        %v3183 = vrot.slane %v2087, 4
        %v3184 = vsel %vm3068, %v3183, %v3182
        %v3185 = vrot.slane %v2089, 3
        %v3186 = vsel %vm3071, %v3185, %v3184
        %v3187 = vrot.slane %v2091, 2
        %v3188 = vsel %vm3074, %v3187, %v3186
        %v3189 = vrot.slane %v2093, 1
        %v3190 = vsel %vm3077, %v3189, %v3188
        %v3191 = vrot.slane %v2096, 7
        %v3192 = vsel %vm3059, %v3191, %v2094
        %v3193 = vrot.slane %v2098, 6
        %v3194 = vsel %vm3062, %v3193, %v3192
        %v3195 = vrot.slane %v2100, 5
        %v3196 = vsel %vm3065, %v3195, %v3194
        %v3197 = vrot.slane %v2102, 4
        %v3198 = vsel %vm3068, %v3197, %v3196
        %v3199 = vrot.slane %v2104, 3
        %v3200 = vsel %vm3071, %v3199, %v3198
        %v3201 = vrot.slane %v2106, 2
        %v3202 = vsel %vm3074, %v3201, %v3200
        %v3203 = vrot.slane %v2108, 1
        %v3204 = vsel %vm3077, %v3203, %v3202
        %v3205 = vrot.slane %v2097, 7
        %v3206 = vsel %vm3059, %v3205, %v2095
        %v3207 = vrot.slane %v2099, 6
        %v3208 = vsel %vm3062, %v3207, %v3206
        %v3209 = vrot.slane %v2101, 5
        %v3210 = vsel %vm3065, %v3209, %v3208
        %v3211 = vrot.slane %v2103, 4
        %v3212 = vsel %vm3068, %v3211, %v3210
        %v3213 = vrot.slane %v2105, 3
        %v3214 = vsel %vm3071, %v3213, %v3212
        %v3215 = vrot.slane %v2107, 2
        %v3216 = vsel %vm3074, %v3215, %v3214
        %v3217 = vrot.slane %v2109, 1
        %v3218 = vsel %vm3077, %v3217, %v3216
        %v3219 = vrot.slane %v2098, 7
        %v3220 = vsel %vm3059, %v3219, %v2096
        %v3221 = vrot.slane %v2100, 6
        %v3222 = vsel %vm3062, %v3221, %v3220
        %v3223 = vrot.slane %v2102, 5
        %v3224 = vsel %vm3065, %v3223, %v3222
        %v3225 = vrot.slane %v2104, 4
        %v3226 = vsel %vm3068, %v3225, %v3224
        %v3227 = vrot.slane %v2106, 3
        %v3228 = vsel %vm3071, %v3227, %v3226
        %v3229 = vrot.slane %v2108, 2
        %v3230 = vsel %vm3074, %v3229, %v3228
        %v3231 = vrot.slane %v2110, 1
        %v3232 = vsel %vm3077, %v3231, %v3230
        %v3233 = vrot.slane %v2113, 7
        %v3234 = vsel %vm3059, %v3233, %v2111
        %v3235 = vrot.slane %v2115, 6
        %v3236 = vsel %vm3062, %v3235, %v3234
        %v3237 = vrot.slane %v2117, 5
        %v3238 = vsel %vm3065, %v3237, %v3236
        %v3239 = vrot.slane %v2119, 4
        %v3240 = vsel %vm3068, %v3239, %v3238
        %v3241 = vrot.slane %v2121, 3
        %v3242 = vsel %vm3071, %v3241, %v3240
        %v3243 = vrot.slane %v2123, 2
        %v3244 = vsel %vm3074, %v3243, %v3242
        %v3245 = vrot.slane %v2125, 1
        %v3246 = vsel %vm3077, %v3245, %v3244
        %v3247 = vrot.slane %v2114, 7
        %v3248 = vsel %vm3059, %v3247, %v2112
        %v3249 = vrot.slane %v2116, 6
        %v3250 = vsel %vm3062, %v3249, %v3248
        %v3251 = vrot.slane %v2118, 5
        %v3252 = vsel %vm3065, %v3251, %v3250
        %v3253 = vrot.slane %v2120, 4
        %v3254 = vsel %vm3068, %v3253, %v3252
        %v3255 = vrot.slane %v2122, 3
        %v3256 = vsel %vm3071, %v3255, %v3254
        %v3257 = vrot.slane %v2124, 2
        %v3258 = vsel %vm3074, %v3257, %v3256
        %v3259 = vrot.slane %v2126, 1
        %v3260 = vsel %vm3077, %v3259, %v3258
        %v3261 = vrot.slane %v2115, 7
        %v3262 = vsel %vm3059, %v3261, %v2113
        %v3263 = vrot.slane %v2117, 6
        %v3264 = vsel %vm3062, %v3263, %v3262
        %v3265 = vrot.slane %v2119, 5
        %v3266 = vsel %vm3065, %v3265, %v3264
        %v3267 = vrot.slane %v2121, 4
        %v3268 = vsel %vm3068, %v3267, %v3266
        %v3269 = vrot.slane %v2123, 3
        %v3270 = vsel %vm3071, %v3269, %v3268
        %v3271 = vrot.slane %v2125, 2
        %v3272 = vsel %vm3074, %v3271, %v3270
        %v3273 = vrot.slane %v2127, 1
        %v3274 = vsel %vm3077, %v3273, %v3272
        %v3275 = vrot.slane %v2130, 7
        %v3276 = vsel %vm3059, %v3275, %v2128
        %v3277 = vrot.slane %v2132, 6
        %v3278 = vsel %vm3062, %v3277, %v3276
        %v3279 = vrot.slane %v2134, 5
        %v3280 = vsel %vm3065, %v3279, %v3278
        %v3281 = vrot.slane %v2136, 4
        %v3282 = vsel %vm3068, %v3281, %v3280
        %v3283 = vrot.slane %v2138, 3
        %v3284 = vsel %vm3071, %v3283, %v3282
        %v3285 = vrot.slane %v2140, 2
        %v3286 = vsel %vm3074, %v3285, %v3284
        %v3287 = vrot.slane %v2142, 1
        %v3288 = vsel %vm3077, %v3287, %v3286
        %v3289 = vrot.slane %v2131, 7
        %v3290 = vsel %vm3059, %v3289, %v2129
        %v3291 = vrot.slane %v2133, 6
        %v3292 = vsel %vm3062, %v3291, %v3290
        %v3293 = vrot.slane %v2135, 5
        %v3294 = vsel %vm3065, %v3293, %v3292
        %v3295 = vrot.slane %v2137, 4
        %v3296 = vsel %vm3068, %v3295, %v3294
        %v3297 = vrot.slane %v2139, 3
        %v3298 = vsel %vm3071, %v3297, %v3296
        %v3299 = vrot.slane %v2141, 2
        %v3300 = vsel %vm3074, %v3299, %v3298
        %v3301 = vrot.slane %v2143, 1
        %v3302 = vsel %vm3077, %v3301, %v3300
        %v3303 = vrot.slane %v2132, 7
        %v3304 = vsel %vm3059, %v3303, %v2130
        %v3305 = vrot.slane %v2134, 6
        %v3306 = vsel %vm3062, %v3305, %v3304
        %v3307 = vrot.slane %v2136, 5
        %v3308 = vsel %vm3065, %v3307, %v3306
        %v3309 = vrot.slane %v2138, 4
        %v3310 = vsel %vm3068, %v3309, %v3308
        %v3311 = vrot.slane %v2140, 3
        %v3312 = vsel %vm3071, %v3311, %v3310
        %v3313 = vrot.slane %v2142, 2
        %v3314 = vsel %vm3074, %v3313, %v3312
        %v3315 = vrot.slane %v2144, 1
        %v3316 = vsel %vm3077, %v3315, %v3314
        %v3317 = vrot.slane %v2147, 7
        %v3318 = vsel %vm3059, %v3317, %v2145
        %v3319 = vrot.slane %v2149, 6
        %v3320 = vsel %vm3062, %v3319, %v3318
        %v3321 = vrot.slane %v2151, 5
        %v3322 = vsel %vm3065, %v3321, %v3320
        %v3323 = vrot.slane %v2153, 4
        %v3324 = vsel %vm3068, %v3323, %v3322
        %v3325 = vrot.slane %v2155, 3
        %v3326 = vsel %vm3071, %v3325, %v3324
        %v3327 = vrot.slane %v2157, 2
        %v3328 = vsel %vm3074, %v3327, %v3326
        %v3329 = vrot.slane %v2159, 1
        %v3330 = vsel %vm3077, %v3329, %v3328
        %v3331 = vrot.slane %v2148, 7
        %v3332 = vsel %vm3059, %v3331, %v2146
        %v3333 = vrot.slane %v2150, 6
        %v3334 = vsel %vm3062, %v3333, %v3332
        %v3335 = vrot.slane %v2152, 5
        %v3336 = vsel %vm3065, %v3335, %v3334
        %v3337 = vrot.slane %v2154, 4
        %v3338 = vsel %vm3068, %v3337, %v3336
        %v3339 = vrot.slane %v2156, 3
        %v3340 = vsel %vm3071, %v3339, %v3338
        %v3341 = vrot.slane %v2158, 2
        %v3342 = vsel %vm3074, %v3341, %v3340
        %v3343 = vrot.slane %v2160, 1
        %v3344 = vsel %vm3077, %v3343, %v3342
        %v3345 = vrot.slane %v2149, 7
        %v3346 = vsel %vm3059, %v3345, %v2147
        %v3347 = vrot.slane %v2151, 6
        %v3348 = vsel %vm3062, %v3347, %v3346
        %v3349 = vrot.slane %v2153, 5
        %v3350 = vsel %vm3065, %v3349, %v3348
        %v3351 = vrot.slane %v2155, 4
        %v3352 = vsel %vm3068, %v3351, %v3350
        %v3353 = vrot.slane %v2157, 3
        %v3354 = vsel %vm3071, %v3353, %v3352
        %v3355 = vrot.slane %v2159, 2
        %v3356 = vsel %vm3074, %v3355, %v3354
        %v3357 = vrot.slane %v2161, 1
        %v3358 = vsel %vm3077, %v3357, %v3356
        %v3359 = vrot.slane %v2164, 7
        %v3360 = vsel %vm3059, %v3359, %v2162
        %v3361 = vrot.slane %v2166, 6
        %v3362 = vsel %vm3062, %v3361, %v3360
        %v3363 = vrot.slane %v2168, 5
        %v3364 = vsel %vm3065, %v3363, %v3362
        %v3365 = vrot.slane %v2170, 4
        %v3366 = vsel %vm3068, %v3365, %v3364
        %v3367 = vrot.slane %v2172, 3
        %v3368 = vsel %vm3071, %v3367, %v3366
        %v3369 = vrot.slane %v2174, 2
        %v3370 = vsel %vm3074, %v3369, %v3368
        %v3371 = vrot.slane %v2176, 1
        %v3372 = vsel %vm3077, %v3371, %v3370
        %v3373 = vrot.slane %v2165, 7
        %v3374 = vsel %vm3059, %v3373, %v2163
        %v3375 = vrot.slane %v2167, 6
        %v3376 = vsel %vm3062, %v3375, %v3374
        %v3377 = vrot.slane %v2169, 5
        %v3378 = vsel %vm3065, %v3377, %v3376
        %v3379 = vrot.slane %v2171, 4
        %v3380 = vsel %vm3068, %v3379, %v3378
        %v3381 = vrot.slane %v2173, 3
        %v3382 = vsel %vm3071, %v3381, %v3380
        %v3383 = vrot.slane %v2175, 2
        %v3384 = vsel %vm3074, %v3383, %v3382
        %v3385 = vrot.slane %v2177, 1
        %v3386 = vsel %vm3077, %v3385, %v3384
        %v3387 = vrot.slane %v2166, 7
        %v3388 = vsel %vm3059, %v3387, %v2164
        %v3389 = vrot.slane %v2168, 6
        %v3390 = vsel %vm3062, %v3389, %v3388
        %v3391 = vrot.slane %v2170, 5
        %v3392 = vsel %vm3065, %v3391, %v3390
        %v3393 = vrot.slane %v2172, 4
        %v3394 = vsel %vm3068, %v3393, %v3392
        %v3395 = vrot.slane %v2174, 3
        %v3396 = vsel %vm3071, %v3395, %v3394
        %v3397 = vrot.slane %v2176, 2
        %v3398 = vsel %vm3074, %v3397, %v3396
        %v3399 = vrot.slane %v2178, 1
        %v3400 = vsel %vm3077, %v3399, %v3398
        %v3401 = vrot.slane %v2181, 7
        %v3402 = vsel %vm3059, %v3401, %v2179
        %v3403 = vrot.slane %v2183, 6
        %v3404 = vsel %vm3062, %v3403, %v3402
        %v3405 = vrot.slane %v2185, 5
        %v3406 = vsel %vm3065, %v3405, %v3404
        %v3407 = vrot.slane %v2187, 4
        %v3408 = vsel %vm3068, %v3407, %v3406
        %v3409 = vrot.slane %v2189, 3
        %v3410 = vsel %vm3071, %v3409, %v3408
        %v3411 = vrot.slane %v2191, 2
        %v3412 = vsel %vm3074, %v3411, %v3410
        %v3413 = vrot.slane %v2193, 1
        %v3414 = vsel %vm3077, %v3413, %v3412
        %v3415 = vrot.slane %v2182, 7
        %v3416 = vsel %vm3059, %v3415, %v2180
        %v3417 = vrot.slane %v2184, 6
        %v3418 = vsel %vm3062, %v3417, %v3416
        %v3419 = vrot.slane %v2186, 5
        %v3420 = vsel %vm3065, %v3419, %v3418
        %v3421 = vrot.slane %v2188, 4
        %v3422 = vsel %vm3068, %v3421, %v3420
        %v3423 = vrot.slane %v2190, 3
        %v3424 = vsel %vm3071, %v3423, %v3422
        %v3425 = vrot.slane %v2192, 2
        %v3426 = vsel %vm3074, %v3425, %v3424
        %v3427 = vrot.slane %v2194, 1
        %v3428 = vsel %vm3077, %v3427, %v3426
        %v3429 = vrot.slane %v2183, 7
        %v3430 = vsel %vm3059, %v3429, %v2181
        %v3431 = vrot.slane %v2185, 6
        %v3432 = vsel %vm3062, %v3431, %v3430
        %v3433 = vrot.slane %v2187, 5
        %v3434 = vsel %vm3065, %v3433, %v3432
        %v3435 = vrot.slane %v2189, 4
        %v3436 = vsel %vm3068, %v3435, %v3434
        %v3437 = vrot.slane %v2191, 3
        %v3438 = vsel %vm3071, %v3437, %v3436
        %v3439 = vrot.slane %v2193, 2
        %v3440 = vsel %vm3074, %v3439, %v3438
        %v3441 = vrot.slane %v2195, 1
        %v3442 = vsel %vm3077, %v3441, %v3440
        %v3443 = vrot.slane %v2198, 7
        %v3444 = vsel %vm3059, %v3443, %v2196
        %v3445 = vrot.slane %v2200, 6
        %v3446 = vsel %vm3062, %v3445, %v3444
        %v3447 = vrot.slane %v2202, 5
        %v3448 = vsel %vm3065, %v3447, %v3446
        %v3449 = vrot.slane %v2204, 4
        %v3450 = vsel %vm3068, %v3449, %v3448
        %v3451 = vrot.slane %v2206, 3
        %v3452 = vsel %vm3071, %v3451, %v3450
        %v3453 = vrot.slane %v2208, 2
        %v3454 = vsel %vm3074, %v3453, %v3452
        %v3455 = vrot.slane %v2210, 1
        %v3456 = vsel %vm3077, %v3455, %v3454
        %v3457 = vrot.slane %v2199, 7
        %v3458 = vsel %vm3059, %v3457, %v2197
        %v3459 = vrot.slane %v2201, 6
        %v3460 = vsel %vm3062, %v3459, %v3458
        %v3461 = vrot.slane %v2203, 5
        %v3462 = vsel %vm3065, %v3461, %v3460
        %v3463 = vrot.slane %v2205, 4
        %v3464 = vsel %vm3068, %v3463, %v3462
        %v3465 = vrot.slane %v2207, 3
        %v3466 = vsel %vm3071, %v3465, %v3464
        %v3467 = vrot.slane %v2209, 2
        %v3468 = vsel %vm3074, %v3467, %v3466
        %v3469 = vrot.slane %v2211, 1
        %v3470 = vsel %vm3077, %v3469, %v3468
        %v3471 = vrot.slane %v2200, 7
        %v3472 = vsel %vm3059, %v3471, %v2198
        %v3473 = vrot.slane %v2202, 6
        %v3474 = vsel %vm3062, %v3473, %v3472
        %v3475 = vrot.slane %v2204, 5
        %v3476 = vsel %vm3065, %v3475, %v3474
        %v3477 = vrot.slane %v2206, 4
        %v3478 = vsel %vm3068, %v3477, %v3476
        %v3479 = vrot.slane %v2208, 3
        %v3480 = vsel %vm3071, %v3479, %v3478
        %v3481 = vrot.slane %v2210, 2
        %v3482 = vsel %vm3074, %v3481, %v3480
        %v3483 = vrot.slane %v2212, 1
        %v3484 = vsel %vm3077, %v3483, %v3482
        %v3485 = vrot.slane %v2215, 7
        %v3486 = vsel %vm3059, %v3485, %v2213
        %v3487 = vrot.slane %v2217, 6
        %v3488 = vsel %vm3062, %v3487, %v3486
        %v3489 = vrot.slane %v2219, 5
        %v3490 = vsel %vm3065, %v3489, %v3488
        %v3491 = vrot.slane %v2221, 4
        %v3492 = vsel %vm3068, %v3491, %v3490
        %v3493 = vrot.slane %v2223, 3
        %v3494 = vsel %vm3071, %v3493, %v3492
        %v3495 = vrot.slane %v2225, 2
        %v3496 = vsel %vm3074, %v3495, %v3494
        %v3497 = vrot.slane %v2227, 1
        %v3498 = vsel %vm3077, %v3497, %v3496
        %v3499 = vrot.slane %v2216, 7
        %v3500 = vsel %vm3059, %v3499, %v2214
        %v3501 = vrot.slane %v2218, 6
        %v3502 = vsel %vm3062, %v3501, %v3500
        %v3503 = vrot.slane %v2220, 5
        %v3504 = vsel %vm3065, %v3503, %v3502
        %v3505 = vrot.slane %v2222, 4
        %v3506 = vsel %vm3068, %v3505, %v3504
        %v3507 = vrot.slane %v2224, 3
        %v3508 = vsel %vm3071, %v3507, %v3506
        %v3509 = vrot.slane %v2226, 2
        %v3510 = vsel %vm3074, %v3509, %v3508
        %v3511 = vrot.slane %v2228, 1
        %v3512 = vsel %vm3077, %v3511, %v3510
        %v3513 = vrot.slane %v2217, 7
        %v3514 = vsel %vm3059, %v3513, %v2215
        %v3515 = vrot.slane %v2219, 6
        %v3516 = vsel %vm3062, %v3515, %v3514
        %v3517 = vrot.slane %v2221, 5
        %v3518 = vsel %vm3065, %v3517, %v3516
        %v3519 = vrot.slane %v2223, 4
        %v3520 = vsel %vm3068, %v3519, %v3518
        %v3521 = vrot.slane %v2225, 3
        %v3522 = vsel %vm3071, %v3521, %v3520
        %v3523 = vrot.slane %v2227, 2
        %v3524 = vsel %vm3074, %v3523, %v3522
        %v3525 = vrot.slane %v2229, 1
        %v3526 = vsel %vm3077, %v3525, %v3524
        %v3527 = vrot.slane %v2232, 7
        %v3528 = vsel %vm3059, %v3527, %v2230
        %v3529 = vrot.slane %v2234, 6
        %v3530 = vsel %vm3062, %v3529, %v3528
        %v3531 = vrot.slane %v2236, 5
        %v3532 = vsel %vm3065, %v3531, %v3530
        %v3533 = vrot.slane %v2238, 4
        %v3534 = vsel %vm3068, %v3533, %v3532
        %v3535 = vrot.slane %v2240, 3
        %v3536 = vsel %vm3071, %v3535, %v3534
        %v3537 = vrot.slane %v2242, 2
        %v3538 = vsel %vm3074, %v3537, %v3536
        %v3539 = vrot.slane %v2244, 1
        %v3540 = vsel %vm3077, %v3539, %v3538
        %v3541 = vrot.slane %v2233, 7
        %v3542 = vsel %vm3059, %v3541, %v2231
        %v3543 = vrot.slane %v2235, 6
        %v3544 = vsel %vm3062, %v3543, %v3542
        %v3545 = vrot.slane %v2237, 5
        %v3546 = vsel %vm3065, %v3545, %v3544
        %v3547 = vrot.slane %v2239, 4
        %v3548 = vsel %vm3068, %v3547, %v3546
        %v3549 = vrot.slane %v2241, 3
        %v3550 = vsel %vm3071, %v3549, %v3548
        %v3551 = vrot.slane %v2243, 2
        %v3552 = vsel %vm3074, %v3551, %v3550
        %v3553 = vrot.slane %v2245, 1
        %v3554 = vsel %vm3077, %v3553, %v3552
        %v3555 = vrot.slane %v2234, 7
        %v3556 = vsel %vm3059, %v3555, %v2232
        %v3557 = vrot.slane %v2236, 6
        %v3558 = vsel %vm3062, %v3557, %v3556
        %v3559 = vrot.slane %v2238, 5
        %v3560 = vsel %vm3065, %v3559, %v3558
        %v3561 = vrot.slane %v2240, 4
        %v3562 = vsel %vm3068, %v3561, %v3560
        %v3563 = vrot.slane %v2242, 3
        %v3564 = vsel %vm3071, %v3563, %v3562
        %v3565 = vrot.slane %v2244, 2
        %v3566 = vsel %vm3074, %v3565, %v3564
        %v3567 = vrot.slane %v2246, 1
        %v3568 = vsel %vm3077, %v3567, %v3566
        %v3569 = vrot.slane %v2249, 7
        %v3570 = vsel %vm3059, %v3569, %v2247
        %v3571 = vrot.slane %v2251, 6
        %v3572 = vsel %vm3062, %v3571, %v3570
        %v3573 = vrot.slane %v2253, 5
        %v3574 = vsel %vm3065, %v3573, %v3572
        %v3575 = vrot.slane %v2255, 4
        %v3576 = vsel %vm3068, %v3575, %v3574
        %v3577 = vrot.slane %v2257, 3
        %v3578 = vsel %vm3071, %v3577, %v3576
        %v3579 = vrot.slane %v2259, 2
        %v3580 = vsel %vm3074, %v3579, %v3578
        %v3581 = vrot.slane %v2261, 1
        %v3582 = vsel %vm3077, %v3581, %v3580
        %v3583 = vrot.slane %v2250, 7
        %v3584 = vsel %vm3059, %v3583, %v2248
        %v3585 = vrot.slane %v2252, 6
        %v3586 = vsel %vm3062, %v3585, %v3584
        %v3587 = vrot.slane %v2254, 5
        %v3588 = vsel %vm3065, %v3587, %v3586
        %v3589 = vrot.slane %v2256, 4
        %v3590 = vsel %vm3068, %v3589, %v3588
        %v3591 = vrot.slane %v2258, 3
        %v3592 = vsel %vm3071, %v3591, %v3590
        %v3593 = vrot.slane %v2260, 2
        %v3594 = vsel %vm3074, %v3593, %v3592
        %v3595 = vrot.slane %v2262, 1
        %v3596 = vsel %vm3077, %v3595, %v3594
        %v3597 = vrot.slane %v2251, 7
        %v3598 = vsel %vm3059, %v3597, %v2249
        %v3599 = vrot.slane %v2253, 6
        %v3600 = vsel %vm3062, %v3599, %v3598
        %v3601 = vrot.slane %v2255, 5
        %v3602 = vsel %vm3065, %v3601, %v3600
        %v3603 = vrot.slane %v2257, 4
        %v3604 = vsel %vm3068, %v3603, %v3602
        %v3605 = vrot.slane %v2259, 3
        %v3606 = vsel %vm3071, %v3605, %v3604
        %v3607 = vrot.slane %v2261, 2
        %v3608 = vsel %vm3074, %v3607, %v3606
        %v3609 = vrot.slane %v2263, 1
        %v3610 = vsel %vm3077, %v3609, %v3608
        %v3611 = vrot.slane %v2266, 7
        %v3612 = vsel %vm3059, %v3611, %v2264
        %v3613 = vrot.slane %v2268, 6
        %v3614 = vsel %vm3062, %v3613, %v3612
        %v3615 = vrot.slane %v2270, 5
        %v3616 = vsel %vm3065, %v3615, %v3614
        %v3617 = vrot.slane %v2272, 4
        %v3618 = vsel %vm3068, %v3617, %v3616
        %v3619 = vrot.slane %v2274, 3
        %v3620 = vsel %vm3071, %v3619, %v3618
        %v3621 = vrot.slane %v2276, 2
        %v3622 = vsel %vm3074, %v3621, %v3620
        %v3623 = vrot.slane %v2278, 1
        %v3624 = vsel %vm3077, %v3623, %v3622
        %v3625 = vrot.slane %v2267, 7
        %v3626 = vsel %vm3059, %v3625, %v2265
        %v3627 = vrot.slane %v2269, 6
        %v3628 = vsel %vm3062, %v3627, %v3626
        %v3629 = vrot.slane %v2271, 5
        %v3630 = vsel %vm3065, %v3629, %v3628
        %v3631 = vrot.slane %v2273, 4
        %v3632 = vsel %vm3068, %v3631, %v3630
        %v3633 = vrot.slane %v2275, 3
        %v3634 = vsel %vm3071, %v3633, %v3632
        %v3635 = vrot.slane %v2277, 2
        %v3636 = vsel %vm3074, %v3635, %v3634
        %v3637 = vrot.slane %v2279, 1
        %v3638 = vsel %vm3077, %v3637, %v3636
        %v3639 = vrot.slane %v2268, 7
        %v3640 = vsel %vm3059, %v3639, %v2266
        %v3641 = vrot.slane %v2270, 6
        %v3642 = vsel %vm3062, %v3641, %v3640
        %v3643 = vrot.slane %v2272, 5
        %v3644 = vsel %vm3065, %v3643, %v3642
        %v3645 = vrot.slane %v2274, 4
        %v3646 = vsel %vm3068, %v3645, %v3644
        %v3647 = vrot.slane %v2276, 3
        %v3648 = vsel %vm3071, %v3647, %v3646
        %v3649 = vrot.slane %v2278, 2
        %v3650 = vsel %vm3074, %v3649, %v3648
        %v3651 = vrot.slane %v2280, 1
        %v3652 = vsel %vm3077, %v3651, %v3650
        %v3653 = vrot.slane %v2283, 7
        %v3654 = vsel %vm3059, %v3653, %v2281
        %v3655 = vrot.slane %v2285, 6
        %v3656 = vsel %vm3062, %v3655, %v3654
        %v3657 = vrot.slane %v2287, 5
        %v3658 = vsel %vm3065, %v3657, %v3656
        %v3659 = vrot.slane %v2289, 4
        %v3660 = vsel %vm3068, %v3659, %v3658
        %v3661 = vrot.slane %v2291, 3
        %v3662 = vsel %vm3071, %v3661, %v3660
        %v3663 = vrot.slane %v2293, 2
        %v3664 = vsel %vm3074, %v3663, %v3662
        %v3665 = vrot.slane %v2295, 1
        %v3666 = vsel %vm3077, %v3665, %v3664
        %v3667 = vrot.slane %v2284, 7
        %v3668 = vsel %vm3059, %v3667, %v2282
        %v3669 = vrot.slane %v2286, 6
        %v3670 = vsel %vm3062, %v3669, %v3668
        %v3671 = vrot.slane %v2288, 5
        %v3672 = vsel %vm3065, %v3671, %v3670
        %v3673 = vrot.slane %v2290, 4
        %v3674 = vsel %vm3068, %v3673, %v3672
        %v3675 = vrot.slane %v2292, 3
        %v3676 = vsel %vm3071, %v3675, %v3674
        %v3677 = vrot.slane %v2294, 2
        %v3678 = vsel %vm3074, %v3677, %v3676
        %v3679 = vrot.slane %v2296, 1
        %v3680 = vsel %vm3077, %v3679, %v3678
        %v3681 = vrot.slane %v2285, 7
        %v3682 = vsel %vm3059, %v3681, %v2283
        %v3683 = vrot.slane %v2287, 6
        %v3684 = vsel %vm3062, %v3683, %v3682
        %v3685 = vrot.slane %v2289, 5
        %v3686 = vsel %vm3065, %v3685, %v3684
        %v3687 = vrot.slane %v2291, 4
        %v3688 = vsel %vm3068, %v3687, %v3686
        %v3689 = vrot.slane %v2293, 3
        %v3690 = vsel %vm3071, %v3689, %v3688
        %v3691 = vrot.slane %v2295, 2
        %v3692 = vsel %vm3074, %v3691, %v3690
        %v3693 = vrot.slane %v2297, 1
        %v3694 = vsel %vm3077, %v3693, %v3692
        %v3695 = vrot.slane %v2300, 7
        %v3696 = vsel %vm3059, %v3695, %v2298
        %v3697 = vrot.slane %v2302, 6
        %v3698 = vsel %vm3062, %v3697, %v3696
        %v3699 = vrot.slane %v2304, 5
        %v3700 = vsel %vm3065, %v3699, %v3698
        %v3701 = vrot.slane %v2306, 4
        %v3702 = vsel %vm3068, %v3701, %v3700
        %v3703 = vrot.slane %v2308, 3
        %v3704 = vsel %vm3071, %v3703, %v3702
        %v3705 = vrot.slane %v2310, 2
        %v3706 = vsel %vm3074, %v3705, %v3704
        %v3707 = vrot.slane %v2312, 1
        %v3708 = vsel %vm3077, %v3707, %v3706
        %v3709 = vrot.slane %v2301, 7
        %v3710 = vsel %vm3059, %v3709, %v2299
        %v3711 = vrot.slane %v2303, 6
        %v3712 = vsel %vm3062, %v3711, %v3710
        %v3713 = vrot.slane %v2305, 5
        %v3714 = vsel %vm3065, %v3713, %v3712
        %v3715 = vrot.slane %v2307, 4
        %v3716 = vsel %vm3068, %v3715, %v3714
        %v3717 = vrot.slane %v2309, 3
        %v3718 = vsel %vm3071, %v3717, %v3716
        %v3719 = vrot.slane %v2311, 2
        %v3720 = vsel %vm3074, %v3719, %v3718
        %v3721 = vrot.slane %v2313, 1
        %v3722 = vsel %vm3077, %v3721, %v3720
        %v3723 = vrot.slane %v2302, 7
        %v3724 = vsel %vm3059, %v3723, %v2300
        %v3725 = vrot.slane %v2304, 6
        %v3726 = vsel %vm3062, %v3725, %v3724
        %v3727 = vrot.slane %v2306, 5
        %v3728 = vsel %vm3065, %v3727, %v3726
        %v3729 = vrot.slane %v2308, 4
        %v3730 = vsel %vm3068, %v3729, %v3728
        %v3731 = vrot.slane %v2310, 3
        %v3732 = vsel %vm3071, %v3731, %v3730
        %v3733 = vrot.slane %v2312, 2
        %v3734 = vsel %vm3074, %v3733, %v3732
        %v3735 = vrot.slane %v2314, 1
        %v3736 = vsel %vm3077, %v3735, %v3734
        %v3737 = vrot.slane %v2317, 7
        %v3738 = vsel %vm3059, %v3737, %v2315
        %v3739 = vrot.slane %v2319, 6
        %v3740 = vsel %vm3062, %v3739, %v3738
        %v3741 = vrot.slane %v2321, 5
        %v3742 = vsel %vm3065, %v3741, %v3740
        %v3743 = vrot.slane %v2323, 4
        %v3744 = vsel %vm3068, %v3743, %v3742
        %v3745 = vrot.slane %v2325, 3
        %v3746 = vsel %vm3071, %v3745, %v3744
        %v3747 = vrot.slane %v2327, 2
        %v3748 = vsel %vm3074, %v3747, %v3746
        %v3749 = vrot.slane %v2329, 1
        %v3750 = vsel %vm3077, %v3749, %v3748
        %v3751 = vrot.slane %v2318, 7
        %v3752 = vsel %vm3059, %v3751, %v2316
        %v3753 = vrot.slane %v2320, 6
        %v3754 = vsel %vm3062, %v3753, %v3752
        %v3755 = vrot.slane %v2322, 5
        %v3756 = vsel %vm3065, %v3755, %v3754
        %v3757 = vrot.slane %v2324, 4
        %v3758 = vsel %vm3068, %v3757, %v3756
        %v3759 = vrot.slane %v2326, 3
        %v3760 = vsel %vm3071, %v3759, %v3758
        %v3761 = vrot.slane %v2328, 2
        %v3762 = vsel %vm3074, %v3761, %v3760
        %v3763 = vrot.slane %v2330, 1
        %v3764 = vsel %vm3077, %v3763, %v3762
        %v3765 = vrot.slane %v2319, 7
        %v3766 = vsel %vm3059, %v3765, %v2317
        %v3767 = vrot.slane %v2321, 6
        %v3768 = vsel %vm3062, %v3767, %v3766
        %v3769 = vrot.slane %v2323, 5
        %v3770 = vsel %vm3065, %v3769, %v3768
        %v3771 = vrot.slane %v2325, 4
        %v3772 = vsel %vm3068, %v3771, %v3770
        %v3773 = vrot.slane %v2327, 3
        %v3774 = vsel %vm3071, %v3773, %v3772
        %v3775 = vrot.slane %v2329, 2
        %v3776 = vsel %vm3074, %v3775, %v3774
        %v3777 = vrot.slane %v2331, 1
        %v3778 = vsel %vm3077, %v3777, %v3776
        %3830 = vmatpush.msra.mxu0 %v2636
        %3831 = vmatpush.msra.mxu0 %v2635
        %3832 = vmatpush.msra.mxu0 %v2634
        %3833 = vmatpush.msra.mxu0 %v2633
        %3834 = vmatpush.msra.mxu0 %v2632
        %3835 = vmatpush.msra.mxu0 %v2631
        %3836 = vmatpush.msra.mxu0 %v2630
        %3837 = vmatpush.msra.mxu0 %v2629
        %3838 = vmatpush.msra.mxu0 %v2628
        %3839 = vmatpush.msra.mxu0 %v2627
        %3840 = vmatpush.msra.mxu0 %v2626
        %3841 = vmatpush.msra.mxu0 %v2625
        %3842 = vmatpush.msra.mxu0 %v2624
        %3843 = vmatpush.msra.mxu0 %v2623
        %3844 = vmatpush.msra.mxu0 %v2622
        %3845 = vmatpush.msra.mxu0 %v2621
        %3846 = vmatmul.f32.gmra.mxu0 %v3078
        %v3847 = vpop.f32.mrf.mxu0
        %v3848 = vadd.f32 %v2767, %v3847
        %3849 = vmatmul.f32.gmra.mxu0 %v3162
        %v3850 = vpop.f32.mrf.mxu0
        %v3851 = vadd.f32 %v2767, %v3850
        %3852 = vmatmul.f32.gmra.mxu0 %v3246
        %v3853 = vpop.f32.mrf.mxu0
        %v3854 = vadd.f32 %v2767, %v3853
        %3855 = vmatmul.f32.gmra.mxu0 %v3330
        %v3856 = vpop.f32.mrf.mxu0
        %v3857 = vadd.f32 %v2767, %v3856
        %3858 = vmatmul.f32.gmra.mxu0 %v3414
        %v3859 = vpop.f32.mrf.mxu0
        %v3860 = vadd.f32 %v2767, %v3859
        %3861 = vmatmul.f32.gmra.mxu0 %v3498
        %v3862 = vpop.f32.mrf.mxu0
        %v3863 = vadd.f32 %v2767, %v3862
        %3864 = vmatmul.f32.gmra.mxu0 %v3582
        %v3865 = vpop.f32.mrf.mxu0
        %v3866 = vadd.f32 %v2767, %v3865
        %3867 = vmatmul.f32.gmra.mxu0 %v3666
        %v3868 = vpop.f32.mrf.mxu0
        %v3869 = vadd.f32 %v2767, %v3868
        %3870 = vdwg.mxu0
        %3871 = vmatpush.msra.mxu0 %v2652
        %3872 = vmatpush.msra.mxu0 %v2651
        %3873 = vmatpush.msra.mxu0 %v2650
        %3874 = vmatpush.msra.mxu0 %v2649
        %3875 = vmatpush.msra.mxu0 %v2648
        %3876 = vmatpush.msra.mxu0 %v2647
        %3877 = vmatpush.msra.mxu0 %v2646
        %3878 = vmatpush.msra.mxu0 %v2645
        %3879 = vmatpush.msra.mxu0 %v2644
        %3880 = vmatpush.msra.mxu0 %v2643
        %3881 = vmatpush.msra.mxu0 %v2642
        %3882 = vmatpush.msra.mxu0 %v2641
        %3883 = vmatpush.msra.mxu0 %v2640
        %3884 = vmatpush.msra.mxu0 %v2639
        %3885 = vmatpush.msra.mxu0 %v2638
        %3886 = vmatpush.msra.mxu0 %v2637
        %3887 = vmatmul.f32.gmra.mxu0 %v3092
        %v3888 = vpop.f32.mrf.mxu0
        %v3889 = vadd.f32 %v3848, %v3888
        %3890 = vmatmul.f32.gmra.mxu0 %v3176
        %v3891 = vpop.f32.mrf.mxu0
        %v3892 = vadd.f32 %v3851, %v3891
        %3893 = vmatmul.f32.gmra.mxu0 %v3260
        %v3894 = vpop.f32.mrf.mxu0
        %v3895 = vadd.f32 %v3854, %v3894
        %3896 = vmatmul.f32.gmra.mxu0 %v3344
        %v3897 = vpop.f32.mrf.mxu0
        %v3898 = vadd.f32 %v3857, %v3897
        %3899 = vmatmul.f32.gmra.mxu0 %v3428
        %v3900 = vpop.f32.mrf.mxu0
        %v3901 = vadd.f32 %v3860, %v3900
        %3902 = vmatmul.f32.gmra.mxu0 %v3512
        %v3903 = vpop.f32.mrf.mxu0
        %v3904 = vadd.f32 %v3863, %v3903
        %3905 = vmatmul.f32.gmra.mxu0 %v3596
        %v3906 = vpop.f32.mrf.mxu0
        %v3907 = vadd.f32 %v3866, %v3906
        %3908 = vmatmul.f32.gmra.mxu0 %v3680
        %v3909 = vpop.f32.mrf.mxu0
        %v3910 = vadd.f32 %v3869, %v3909
        %3911 = vdwg.mxu0
        %3912 = vmatpush.msra.mxu0 %v2668
        %3913 = vmatpush.msra.mxu0 %v2667
        %3914 = vmatpush.msra.mxu0 %v2666
        %3915 = vmatpush.msra.mxu0 %v2665
        %3916 = vmatpush.msra.mxu0 %v2664
        %3917 = vmatpush.msra.mxu0 %v2663
        %3918 = vmatpush.msra.mxu0 %v2662
        %3919 = vmatpush.msra.mxu0 %v2661
        %3920 = vmatpush.msra.mxu0 %v2660
        %3921 = vmatpush.msra.mxu0 %v2659
        %3922 = vmatpush.msra.mxu0 %v2658
        %3923 = vmatpush.msra.mxu0 %v2657
        %3924 = vmatpush.msra.mxu0 %v2656
        %3925 = vmatpush.msra.mxu0 %v2655
        %3926 = vmatpush.msra.mxu0 %v2654
        %3927 = vmatpush.msra.mxu0 %v2653
        %3928 = vmatmul.f32.gmra.mxu0 %v3106
        %v3929 = vpop.f32.mrf.mxu0
        %v3930 = vadd.f32 %v3889, %v3929
        %3931 = vmatmul.f32.gmra.mxu0 %v3190
        %v3932 = vpop.f32.mrf.mxu0
        %v3933 = vadd.f32 %v3892, %v3932
        %3934 = vmatmul.f32.gmra.mxu0 %v3274
        %v3935 = vpop.f32.mrf.mxu0
        %v3936 = vadd.f32 %v3895, %v3935
        %3937 = vmatmul.f32.gmra.mxu0 %v3358
        %v3938 = vpop.f32.mrf.mxu0
        %v3939 = vadd.f32 %v3898, %v3938
        %3940 = vmatmul.f32.gmra.mxu0 %v3442
        %v3941 = vpop.f32.mrf.mxu0
        %v3942 = vadd.f32 %v3901, %v3941
        %3943 = vmatmul.f32.gmra.mxu0 %v3526
        %v3944 = vpop.f32.mrf.mxu0
        %v3945 = vadd.f32 %v3904, %v3944
        %3946 = vmatmul.f32.gmra.mxu0 %v3610
        %v3947 = vpop.f32.mrf.mxu0
        %v3948 = vadd.f32 %v3907, %v3947
        %3949 = vmatmul.f32.gmra.mxu0 %v3694
        %v3950 = vpop.f32.mrf.mxu0
        %v3951 = vadd.f32 %v3910, %v3950
        %3952 = vdwg.mxu0
        %3953 = vmatpush.msra.mxu0 %v2684
        %3954 = vmatpush.msra.mxu0 %v2683
        %3955 = vmatpush.msra.mxu0 %v2682
        %3956 = vmatpush.msra.mxu0 %v2681
        %3957 = vmatpush.msra.mxu0 %v2680
        %3958 = vmatpush.msra.mxu0 %v2679
        %3959 = vmatpush.msra.mxu0 %v2678
        %3960 = vmatpush.msra.mxu0 %v2677
        %3961 = vmatpush.msra.mxu0 %v2676
        %3962 = vmatpush.msra.mxu0 %v2675
        %3963 = vmatpush.msra.mxu0 %v2674
        %3964 = vmatpush.msra.mxu0 %v2673
        %3965 = vmatpush.msra.mxu0 %v2672
        %3966 = vmatpush.msra.mxu0 %v2671
        %3967 = vmatpush.msra.mxu0 %v2670
        %3968 = vmatpush.msra.mxu0 %v2669
        %3969 = vmatmul.f32.gmra.mxu0 %v3120
        %v3970 = vpop.f32.mrf.mxu0
        %v3971 = vadd.f32 %v3930, %v3970
        %3972 = vmatmul.f32.gmra.mxu0 %v3204
        %v3973 = vpop.f32.mrf.mxu0
        %v3974 = vadd.f32 %v3933, %v3973
        %3975 = vmatmul.f32.gmra.mxu0 %v3288
        %v3976 = vpop.f32.mrf.mxu0
        %v3977 = vadd.f32 %v3936, %v3976
        %3978 = vmatmul.f32.gmra.mxu0 %v3372
        %v3979 = vpop.f32.mrf.mxu0
        %v3980 = vadd.f32 %v3939, %v3979
        %3981 = vmatmul.f32.gmra.mxu0 %v3456
        %v3982 = vpop.f32.mrf.mxu0
        %v3983 = vadd.f32 %v3942, %v3982
        %3984 = vmatmul.f32.gmra.mxu0 %v3540
        %v3985 = vpop.f32.mrf.mxu0
        %v3986 = vadd.f32 %v3945, %v3985
        %3987 = vmatmul.f32.gmra.mxu0 %v3624
        %v3988 = vpop.f32.mrf.mxu0
        %v3989 = vadd.f32 %v3948, %v3988
        %3990 = vmatmul.f32.gmra.mxu0 %v3708
        %v3991 = vpop.f32.mrf.mxu0
        %v3992 = vadd.f32 %v3951, %v3991
        %3993 = vdwg.mxu0
        %3994 = vmatpush.msra.mxu0 %v2700
        %3995 = vmatpush.msra.mxu0 %v2699
        %3996 = vmatpush.msra.mxu0 %v2698
        %3997 = vmatpush.msra.mxu0 %v2697
        %3998 = vmatpush.msra.mxu0 %v2696
        %3999 = vmatpush.msra.mxu0 %v2695
        %4000 = vmatpush.msra.mxu0 %v2694
        %4001 = vmatpush.msra.mxu0 %v2693
        %4002 = vmatpush.msra.mxu0 %v2692
        %4003 = vmatpush.msra.mxu0 %v2691
        %4004 = vmatpush.msra.mxu0 %v2690
        %4005 = vmatpush.msra.mxu0 %v2689
        %4006 = vmatpush.msra.mxu0 %v2688
        %4007 = vmatpush.msra.mxu0 %v2687
        %4008 = vmatpush.msra.mxu0 %v2686
        %4009 = vmatpush.msra.mxu0 %v2685
        %4010 = vmatmul.f32.gmra.mxu0 %v3134
        %v4011 = vpop.f32.mrf.mxu0
        %v4012 = vadd.f32 %v3971, %v4011
        %4013 = vmatmul.f32.gmra.mxu0 %v3218
        %v4014 = vpop.f32.mrf.mxu0
        %v4015 = vadd.f32 %v3974, %v4014
        %4016 = vmatmul.f32.gmra.mxu0 %v3302
        %v4017 = vpop.f32.mrf.mxu0
        %v4018 = vadd.f32 %v3977, %v4017
        %4019 = vmatmul.f32.gmra.mxu0 %v3386
        %v4020 = vpop.f32.mrf.mxu0
        %v4021 = vadd.f32 %v3980, %v4020
        %4022 = vmatmul.f32.gmra.mxu0 %v3470
        %v4023 = vpop.f32.mrf.mxu0
        %v4024 = vadd.f32 %v3983, %v4023
        %4025 = vmatmul.f32.gmra.mxu0 %v3554
        %v4026 = vpop.f32.mrf.mxu0
        %v4027 = vadd.f32 %v3986, %v4026
        %4028 = vmatmul.f32.gmra.mxu0 %v3638
        %v4029 = vpop.f32.mrf.mxu0
        %v4030 = vadd.f32 %v3989, %v4029
        %4031 = vmatmul.f32.gmra.mxu0 %v3722
        %v4032 = vpop.f32.mrf.mxu0
        %v4033 = vadd.f32 %v3992, %v4032
        %4034 = vdwg.mxu0
        %4035 = vmatpush.msra.mxu0 %v2716
        %4036 = vmatpush.msra.mxu0 %v2715
        %4037 = vmatpush.msra.mxu0 %v2714
        %4038 = vmatpush.msra.mxu0 %v2713
        %4039 = vmatpush.msra.mxu0 %v2712
        %4040 = vmatpush.msra.mxu0 %v2711
        %4041 = vmatpush.msra.mxu0 %v2710
        %4042 = vmatpush.msra.mxu0 %v2709
        %4043 = vmatpush.msra.mxu0 %v2708
        %4044 = vmatpush.msra.mxu0 %v2707
        %4045 = vmatpush.msra.mxu0 %v2706
        %4046 = vmatpush.msra.mxu0 %v2705
        %4047 = vmatpush.msra.mxu0 %v2704
        %4048 = vmatpush.msra.mxu0 %v2703
        %4049 = vmatpush.msra.mxu0 %v2702
        %4050 = vmatpush.msra.mxu0 %v2701
        %4051 = vmatmul.f32.gmra.mxu0 %v3148
        %v4052 = vpop.f32.mrf.mxu0
        %v4053 = vadd.f32 %v4012, %v4052
        %4054 = vmatmul.f32.gmra.mxu0 %v3232
        %v4055 = vpop.f32.mrf.mxu0
        %v4056 = vadd.f32 %v4015, %v4055
        %4057 = vmatmul.f32.gmra.mxu0 %v3316
        %v4058 = vpop.f32.mrf.mxu0
        %v4059 = vadd.f32 %v4018, %v4058
        %4060 = vmatmul.f32.gmra.mxu0 %v3400
        %v4061 = vpop.f32.mrf.mxu0
        %v4062 = vadd.f32 %v4021, %v4061
        %4063 = vmatmul.f32.gmra.mxu0 %v3484
        %v4064 = vpop.f32.mrf.mxu0
        %v4065 = vadd.f32 %v4024, %v4064
        %4066 = vmatmul.f32.gmra.mxu0 %v3568
        %v4067 = vpop.f32.mrf.mxu0
        %v4068 = vadd.f32 %v4027, %v4067
        %4069 = vmatmul.f32.gmra.mxu0 %v3652
        %v4070 = vpop.f32.mrf.mxu0
        %v4071 = vadd.f32 %v4030, %v4070
        %4072 = vmatmul.f32.gmra.mxu0 %v3736
        %v4073 = vpop.f32.mrf.mxu0
        %v4074 = vadd.f32 %v4033, %v4073
        %4075 = vdwg.mxu0
        %4076 = vmatpush.msra.mxu0 %v2732
        %4077 = vmatpush.msra.mxu0 %v2731
        %4078 = vmatpush.msra.mxu0 %v2730
        %4079 = vmatpush.msra.mxu0 %v2729
        %4080 = vmatpush.msra.mxu0 %v2728
        %4081 = vmatpush.msra.mxu0 %v2727
        %4082 = vmatpush.msra.mxu0 %v2726
        %4083 = vmatpush.msra.mxu0 %v2725
        %4084 = vmatpush.msra.mxu0 %v2724
        %4085 = vmatpush.msra.mxu0 %v2723
        %4086 = vmatpush.msra.mxu0 %v2722
        %4087 = vmatpush.msra.mxu0 %v2721
        %4088 = vmatpush.msra.mxu0 %v2720
        %4089 = vmatpush.msra.mxu0 %v2719
        %4090 = vmatpush.msra.mxu0 %v2718
        %4091 = vmatpush.msra.mxu0 %v2717
        %4092 = vmatmul.f32.gmra.mxu0 %v3162
        %v4093 = vpop.f32.mrf.mxu0
        %v4094 = vadd.f32 %v4053, %v4093
        %4095 = vmatmul.f32.gmra.mxu0 %v3246
        %v4096 = vpop.f32.mrf.mxu0
        %v4097 = vadd.f32 %v4056, %v4096
        %4098 = vmatmul.f32.gmra.mxu0 %v3330
        %v4099 = vpop.f32.mrf.mxu0
        %v4100 = vadd.f32 %v4059, %v4099
        %4101 = vmatmul.f32.gmra.mxu0 %v3414
        %v4102 = vpop.f32.mrf.mxu0
        %v4103 = vadd.f32 %v4062, %v4102
        %4104 = vmatmul.f32.gmra.mxu0 %v3498
        %v4105 = vpop.f32.mrf.mxu0
        %v4106 = vadd.f32 %v4065, %v4105
        %4107 = vmatmul.f32.gmra.mxu0 %v3582
        %v4108 = vpop.f32.mrf.mxu0
        %v4109 = vadd.f32 %v4068, %v4108
        %4110 = vmatmul.f32.gmra.mxu0 %v3666
        %v4111 = vpop.f32.mrf.mxu0
        %v4112 = vadd.f32 %v4071, %v4111
        %4113 = vmatmul.f32.gmra.mxu0 %v3750
        %v4114 = vpop.f32.mrf.mxu0
        %v4115 = vadd.f32 %v4074, %v4114
        %4116 = vdwg.mxu0
        %4117 = vmatpush.msra.mxu0 %v2748
        %4118 = vmatpush.msra.mxu0 %v2747
        %4119 = vmatpush.msra.mxu0 %v2746
        %4120 = vmatpush.msra.mxu0 %v2745
        %4121 = vmatpush.msra.mxu0 %v2744
        %4122 = vmatpush.msra.mxu0 %v2743
        %4123 = vmatpush.msra.mxu0 %v2742
        %4124 = vmatpush.msra.mxu0 %v2741
        %4125 = vmatpush.msra.mxu0 %v2740
        %4126 = vmatpush.msra.mxu0 %v2739
        %4127 = vmatpush.msra.mxu0 %v2738
        %4128 = vmatpush.msra.mxu0 %v2737
        %4129 = vmatpush.msra.mxu0 %v2736
        %4130 = vmatpush.msra.mxu0 %v2735
        %4131 = vmatpush.msra.mxu0 %v2734
        %4132 = vmatpush.msra.mxu0 %v2733
        %4133 = vmatmul.f32.gmra.mxu0 %v3176
        %v4134 = vpop.f32.mrf.mxu0
        %v4135 = vadd.f32 %v4094, %v4134
        %4136 = vmatmul.f32.gmra.mxu0 %v3260
        %v4137 = vpop.f32.mrf.mxu0
        %v4138 = vadd.f32 %v4097, %v4137
        %4139 = vmatmul.f32.gmra.mxu0 %v3344
        %v4140 = vpop.f32.mrf.mxu0
        %v4141 = vadd.f32 %v4100, %v4140
        %4142 = vmatmul.f32.gmra.mxu0 %v3428
        %v4143 = vpop.f32.mrf.mxu0
        %v4144 = vadd.f32 %v4103, %v4143
        %4145 = vmatmul.f32.gmra.mxu0 %v3512
        %v4146 = vpop.f32.mrf.mxu0
        %v4147 = vadd.f32 %v4106, %v4146
        %4148 = vmatmul.f32.gmra.mxu0 %v3596
        %v4149 = vpop.f32.mrf.mxu0
        %v4150 = vadd.f32 %v4109, %v4149
        %4151 = vmatmul.f32.gmra.mxu0 %v3680
        %v4152 = vpop.f32.mrf.mxu0
        %v4153 = vadd.f32 %v4112, %v4152
        %4154 = vmatmul.f32.gmra.mxu0 %v3764
        %v4155 = vpop.f32.mrf.mxu0
        %v4156 = vadd.f32 %v4115, %v4155
        %4157 = vdwg.mxu0
        %4158 = vmatpush.msra.mxu0 %v2764
        %4159 = vmatpush.msra.mxu0 %v2763
        %4160 = vmatpush.msra.mxu0 %v2762
        %4161 = vmatpush.msra.mxu0 %v2761
        %4162 = vmatpush.msra.mxu0 %v2760
        %4163 = vmatpush.msra.mxu0 %v2759
        %4164 = vmatpush.msra.mxu0 %v2758
        %4165 = vmatpush.msra.mxu0 %v2757
        %4166 = vmatpush.msra.mxu0 %v2756
        %4167 = vmatpush.msra.mxu0 %v2755
        %4168 = vmatpush.msra.mxu0 %v2754
        %4169 = vmatpush.msra.mxu0 %v2753
        %4170 = vmatpush.msra.mxu0 %v2752
        %4171 = vmatpush.msra.mxu0 %v2751
        %4172 = vmatpush.msra.mxu0 %v2750
        %4173 = vmatpush.msra.mxu0 %v2749
        %4174 = vmatmul.f32.gmra.mxu0 %v3190
        %v4175 = vpop.f32.mrf.mxu0
        %v4176 = vadd.f32 %v4135, %v4175
        %4177 = vmatmul.f32.gmra.mxu0 %v3274
        %v4178 = vpop.f32.mrf.mxu0
        %v4179 = vadd.f32 %v4138, %v4178
        %4180 = vmatmul.f32.gmra.mxu0 %v3358
        %v4181 = vpop.f32.mrf.mxu0
        %v4182 = vadd.f32 %v4141, %v4181
        %4183 = vmatmul.f32.gmra.mxu0 %v3442
        %v4184 = vpop.f32.mrf.mxu0
        %v4185 = vadd.f32 %v4144, %v4184
        %4186 = vmatmul.f32.gmra.mxu0 %v3526
        %v4187 = vpop.f32.mrf.mxu0
        %v4188 = vadd.f32 %v4147, %v4187
        %4189 = vmatmul.f32.gmra.mxu0 %v3610
        %v4190 = vpop.f32.mrf.mxu0
        %v4191 = vadd.f32 %v4150, %v4190
        %4192 = vmatmul.f32.gmra.mxu0 %v3694
        %v4193 = vpop.f32.mrf.mxu0
        %v4194 = vadd.f32 %v4153, %v4193
        %4195 = vmatmul.f32.gmra.mxu0 %v3778
        %v4196 = vpop.f32.mrf.mxu0
        %v4197 = vadd.f32 %v4156, %v4196
        %4198 = vdwg.mxu0
        %v4199 = vmax.f32 %v4176, 0.0
        %v4200 = vmax.f32 %v4179, 0.0
        %v4201 = vmax.f32 %v4182, 0.0
        %v4202 = vmax.f32 %v4185, 0.0
        %v4203 = vmax.f32 %v4188, 0.0
        %v4204 = vmax.f32 %v4191, 0.0
        %v4205 = vmax.f32 %v4194, 0.0
        %v4206 = vmax.f32 %v4197, 0.0
        %v4496 = vrot.slane %v2334, 7
        %v4497 = vsel %vm3059, %v4496, %v2332
        %v4498 = vrot.slane %v2336, 6
        %v4499 = vsel %vm3062, %v4498, %v4497
        %v4500 = vrot.slane %v2338, 5
        %v4501 = vsel %vm3065, %v4500, %v4499
        %v4502 = vrot.slane %v2340, 4
        %v4503 = vsel %vm3068, %v4502, %v4501
        %v4504 = vrot.slane %v2342, 3
        %v4505 = vsel %vm3071, %v4504, %v4503
        %v4506 = vrot.slane %v2344, 2
        %v4507 = vsel %vm3074, %v4506, %v4505
        %v4508 = vrot.slane %v2346, 1
        %v4509 = vsel %vm3077, %v4508, %v4507
        %v4510 = vrot.slane %v2335, 7
        %v4511 = vsel %vm3059, %v4510, %v2333
        %v4512 = vrot.slane %v2337, 6
        %v4513 = vsel %vm3062, %v4512, %v4511
        %v4514 = vrot.slane %v2339, 5
        %v4515 = vsel %vm3065, %v4514, %v4513
        %v4516 = vrot.slane %v2341, 4
        %v4517 = vsel %vm3068, %v4516, %v4515
        %v4518 = vrot.slane %v2343, 3
        %v4519 = vsel %vm3071, %v4518, %v4517
        %v4520 = vrot.slane %v2345, 2
        %v4521 = vsel %vm3074, %v4520, %v4519
        %v4522 = vrot.slane %v2347, 1
        %v4523 = vsel %vm3077, %v4522, %v4521
        %v4524 = vrot.slane %v2336, 7
        %v4525 = vsel %vm3059, %v4524, %v2334
        %v4526 = vrot.slane %v2338, 6
        %v4527 = vsel %vm3062, %v4526, %v4525
        %v4528 = vrot.slane %v2340, 5
        %v4529 = vsel %vm3065, %v4528, %v4527
        %v4530 = vrot.slane %v2342, 4
        %v4531 = vsel %vm3068, %v4530, %v4529
        %v4532 = vrot.slane %v2344, 3
        %v4533 = vsel %vm3071, %v4532, %v4531
        %v4534 = vrot.slane %v2346, 2
        %v4535 = vsel %vm3074, %v4534, %v4533
        %v4536 = vrot.slane %v2348, 1
        %v4537 = vsel %vm3077, %v4536, %v4535
        %v4538 = vrot.slane %v2351, 7
        %v4539 = vsel %vm3059, %v4538, %v2349
        %v4540 = vrot.slane %v2353, 6
        %v4541 = vsel %vm3062, %v4540, %v4539
        %v4542 = vrot.slane %v2355, 5
        %v4543 = vsel %vm3065, %v4542, %v4541
        %v4544 = vrot.slane %v2357, 4
        %v4545 = vsel %vm3068, %v4544, %v4543
        %v4546 = vrot.slane %v2359, 3
        %v4547 = vsel %vm3071, %v4546, %v4545
        %v4548 = vrot.slane %v2361, 2
        %v4549 = vsel %vm3074, %v4548, %v4547
        %v4550 = vrot.slane %v2363, 1
        %v4551 = vsel %vm3077, %v4550, %v4549
        %v4552 = vrot.slane %v2352, 7
        %v4553 = vsel %vm3059, %v4552, %v2350
        %v4554 = vrot.slane %v2354, 6
        %v4555 = vsel %vm3062, %v4554, %v4553
        %v4556 = vrot.slane %v2356, 5
        %v4557 = vsel %vm3065, %v4556, %v4555
        %v4558 = vrot.slane %v2358, 4
        %v4559 = vsel %vm3068, %v4558, %v4557
        %v4560 = vrot.slane %v2360, 3
        %v4561 = vsel %vm3071, %v4560, %v4559
        %v4562 = vrot.slane %v2362, 2
        %v4563 = vsel %vm3074, %v4562, %v4561
        %v4564 = vrot.slane %v2364, 1
        %v4565 = vsel %vm3077, %v4564, %v4563
        %v4566 = vrot.slane %v2353, 7
        %v4567 = vsel %vm3059, %v4566, %v2351
        %v4568 = vrot.slane %v2355, 6
        %v4569 = vsel %vm3062, %v4568, %v4567
        %v4570 = vrot.slane %v2357, 5
        %v4571 = vsel %vm3065, %v4570, %v4569
        %v4572 = vrot.slane %v2359, 4
        %v4573 = vsel %vm3068, %v4572, %v4571
        %v4574 = vrot.slane %v2361, 3
        %v4575 = vsel %vm3071, %v4574, %v4573
        %v4576 = vrot.slane %v2363, 2
        %v4577 = vsel %vm3074, %v4576, %v4575
        %v4578 = vrot.slane %v2365, 1
        %v4579 = vsel %vm3077, %v4578, %v4577
        %v4580 = vrot.slane %v2368, 7
        %v4581 = vsel %vm3059, %v4580, %v2366
        %v4582 = vrot.slane %v2370, 6
        %v4583 = vsel %vm3062, %v4582, %v4581
        %v4584 = vrot.slane %v2372, 5
        %v4585 = vsel %vm3065, %v4584, %v4583
        %v4586 = vrot.slane %v2374, 4
        %v4587 = vsel %vm3068, %v4586, %v4585
        %v4588 = vrot.slane %v2376, 3
        %v4589 = vsel %vm3071, %v4588, %v4587
        %v4590 = vrot.slane %v2378, 2
        %v4591 = vsel %vm3074, %v4590, %v4589
        %v4592 = vrot.slane %v2380, 1
        %v4593 = vsel %vm3077, %v4592, %v4591
        %v4594 = vrot.slane %v2369, 7
        %v4595 = vsel %vm3059, %v4594, %v2367
        %v4596 = vrot.slane %v2371, 6
        %v4597 = vsel %vm3062, %v4596, %v4595
        %v4598 = vrot.slane %v2373, 5
        %v4599 = vsel %vm3065, %v4598, %v4597
        %v4600 = vrot.slane %v2375, 4
        %v4601 = vsel %vm3068, %v4600, %v4599
        %v4602 = vrot.slane %v2377, 3
        %v4603 = vsel %vm3071, %v4602, %v4601
        %v4604 = vrot.slane %v2379, 2
        %v4605 = vsel %vm3074, %v4604, %v4603
        %v4606 = vrot.slane %v2381, 1
        %v4607 = vsel %vm3077, %v4606, %v4605
        %v4608 = vrot.slane %v2370, 7
        %v4609 = vsel %vm3059, %v4608, %v2368
        %v4610 = vrot.slane %v2372, 6
        %v4611 = vsel %vm3062, %v4610, %v4609
        %v4612 = vrot.slane %v2374, 5
        %v4613 = vsel %vm3065, %v4612, %v4611
        %v4614 = vrot.slane %v2376, 4
        %v4615 = vsel %vm3068, %v4614, %v4613
        %v4616 = vrot.slane %v2378, 3
        %v4617 = vsel %vm3071, %v4616, %v4615
        %v4618 = vrot.slane %v2380, 2
        %v4619 = vsel %vm3074, %v4618, %v4617
        %v4620 = vrot.slane %v2382, 1
        %v4621 = vsel %vm3077, %v4620, %v4619
        %v4622 = vrot.slane %v2385, 7
        %v4623 = vsel %vm3059, %v4622, %v2383
        %v4624 = vrot.slane %v2387, 6
        %v4625 = vsel %vm3062, %v4624, %v4623
        %v4626 = vrot.slane %v2389, 5
        %v4627 = vsel %vm3065, %v4626, %v4625
        %v4628 = vrot.slane %v2391, 4
        %v4629 = vsel %vm3068, %v4628, %v4627
        %v4630 = vrot.slane %v2393, 3
        %v4631 = vsel %vm3071, %v4630, %v4629
        %v4632 = vrot.slane %v2395, 2
        %v4633 = vsel %vm3074, %v4632, %v4631
        %v4634 = vrot.slane %v2397, 1
        %v4635 = vsel %vm3077, %v4634, %v4633
        %v4636 = vrot.slane %v2386, 7
        %v4637 = vsel %vm3059, %v4636, %v2384
        %v4638 = vrot.slane %v2388, 6
        %v4639 = vsel %vm3062, %v4638, %v4637
        %v4640 = vrot.slane %v2390, 5
        %v4641 = vsel %vm3065, %v4640, %v4639
        %v4642 = vrot.slane %v2392, 4
        %v4643 = vsel %vm3068, %v4642, %v4641
        %v4644 = vrot.slane %v2394, 3
        %v4645 = vsel %vm3071, %v4644, %v4643
        %v4646 = vrot.slane %v2396, 2
        %v4647 = vsel %vm3074, %v4646, %v4645
        %v4648 = vrot.slane %v2398, 1
        %v4649 = vsel %vm3077, %v4648, %v4647
        %v4650 = vrot.slane %v2387, 7
        %v4651 = vsel %vm3059, %v4650, %v2385
        %v4652 = vrot.slane %v2389, 6
        %v4653 = vsel %vm3062, %v4652, %v4651
        %v4654 = vrot.slane %v2391, 5
        %v4655 = vsel %vm3065, %v4654, %v4653
        %v4656 = vrot.slane %v2393, 4
        %v4657 = vsel %vm3068, %v4656, %v4655
        %v4658 = vrot.slane %v2395, 3
        %v4659 = vsel %vm3071, %v4658, %v4657
        %v4660 = vrot.slane %v2397, 2
        %v4661 = vsel %vm3074, %v4660, %v4659
        %v4662 = vrot.slane %v2399, 1
        %v4663 = vsel %vm3077, %v4662, %v4661
        %v4664 = vrot.slane %v2402, 7
        %v4665 = vsel %vm3059, %v4664, %v2400
        %v4666 = vrot.slane %v2404, 6
        %v4667 = vsel %vm3062, %v4666, %v4665
        %v4668 = vrot.slane %v2406, 5
        %v4669 = vsel %vm3065, %v4668, %v4667
        %v4670 = vrot.slane %v2408, 4
        %v4671 = vsel %vm3068, %v4670, %v4669
        %v4672 = vrot.slane %v2410, 3
        %v4673 = vsel %vm3071, %v4672, %v4671
        %v4674 = vrot.slane %v2412, 2
        %v4675 = vsel %vm3074, %v4674, %v4673
        %v4676 = vrot.slane %v2414, 1
        %v4677 = vsel %vm3077, %v4676, %v4675
        %v4678 = vrot.slane %v2403, 7
        %v4679 = vsel %vm3059, %v4678, %v2401
        %v4680 = vrot.slane %v2405, 6
        %v4681 = vsel %vm3062, %v4680, %v4679
        %v4682 = vrot.slane %v2407, 5
        %v4683 = vsel %vm3065, %v4682, %v4681
        %v4684 = vrot.slane %v2409, 4
        %v4685 = vsel %vm3068, %v4684, %v4683
        %v4686 = vrot.slane %v2411, 3
        %v4687 = vsel %vm3071, %v4686, %v4685
        %v4688 = vrot.slane %v2413, 2
        %v4689 = vsel %vm3074, %v4688, %v4687
        %v4690 = vrot.slane %v2415, 1
        %v4691 = vsel %vm3077, %v4690, %v4689
        %v4692 = vrot.slane %v2404, 7
        %v4693 = vsel %vm3059, %v4692, %v2402
        %v4694 = vrot.slane %v2406, 6
        %v4695 = vsel %vm3062, %v4694, %v4693
        %v4696 = vrot.slane %v2408, 5
        %v4697 = vsel %vm3065, %v4696, %v4695
        %v4698 = vrot.slane %v2410, 4
        %v4699 = vsel %vm3068, %v4698, %v4697
        %v4700 = vrot.slane %v2412, 3
        %v4701 = vsel %vm3071, %v4700, %v4699
        %v4702 = vrot.slane %v2414, 2
        %v4703 = vsel %vm3074, %v4702, %v4701
        %v4704 = vrot.slane %v2416, 1
        %v4705 = vsel %vm3077, %v4704, %v4703
        %v4706 = vrot.slane %v2419, 7
        %v4707 = vsel %vm3059, %v4706, %v2417
        %v4708 = vrot.slane %v2421, 6
        %v4709 = vsel %vm3062, %v4708, %v4707
        %v4710 = vrot.slane %v2423, 5
        %v4711 = vsel %vm3065, %v4710, %v4709
        %v4712 = vrot.slane %v2425, 4
        %v4713 = vsel %vm3068, %v4712, %v4711
        %v4714 = vrot.slane %v2427, 3
        %v4715 = vsel %vm3071, %v4714, %v4713
        %v4716 = vrot.slane %v2429, 2
        %v4717 = vsel %vm3074, %v4716, %v4715
        %v4718 = vrot.slane %v2431, 1
        %v4719 = vsel %vm3077, %v4718, %v4717
        %v4720 = vrot.slane %v2420, 7
        %v4721 = vsel %vm3059, %v4720, %v2418
        %v4722 = vrot.slane %v2422, 6
        %v4723 = vsel %vm3062, %v4722, %v4721
        %v4724 = vrot.slane %v2424, 5
        %v4725 = vsel %vm3065, %v4724, %v4723
        %v4726 = vrot.slane %v2426, 4
        %v4727 = vsel %vm3068, %v4726, %v4725
        %v4728 = vrot.slane %v2428, 3
        %v4729 = vsel %vm3071, %v4728, %v4727
        %v4730 = vrot.slane %v2430, 2
        %v4731 = vsel %vm3074, %v4730, %v4729
        %v4732 = vrot.slane %v2432, 1
        %v4733 = vsel %vm3077, %v4732, %v4731
        %v4734 = vrot.slane %v2421, 7
        %v4735 = vsel %vm3059, %v4734, %v2419
        %v4736 = vrot.slane %v2423, 6
        %v4737 = vsel %vm3062, %v4736, %v4735
        %v4738 = vrot.slane %v2425, 5
        %v4739 = vsel %vm3065, %v4738, %v4737
        %v4740 = vrot.slane %v2427, 4
        %v4741 = vsel %vm3068, %v4740, %v4739
        %v4742 = vrot.slane %v2429, 3
        %v4743 = vsel %vm3071, %v4742, %v4741
        %v4744 = vrot.slane %v2431, 2
        %v4745 = vsel %vm3074, %v4744, %v4743
        %v4746 = vrot.slane %v2433, 1
        %v4747 = vsel %vm3077, %v4746, %v4745
        %v4748 = vrot.slane %v2436, 7
        %v4749 = vsel %vm3059, %v4748, %v2434
        %v4750 = vrot.slane %v2438, 6
        %v4751 = vsel %vm3062, %v4750, %v4749
        %v4752 = vrot.slane %v2440, 5
        %v4753 = vsel %vm3065, %v4752, %v4751
        %v4754 = vrot.slane %v2442, 4
        %v4755 = vsel %vm3068, %v4754, %v4753
        %v4756 = vrot.slane %v2444, 3
        %v4757 = vsel %vm3071, %v4756, %v4755
        %v4758 = vrot.slane %v2446, 2
        %v4759 = vsel %vm3074, %v4758, %v4757
        %v4760 = vrot.slane %v2448, 1
        %v4761 = vsel %vm3077, %v4760, %v4759
        %v4762 = vrot.slane %v2437, 7
        %v4763 = vsel %vm3059, %v4762, %v2435
        %v4764 = vrot.slane %v2439, 6
        %v4765 = vsel %vm3062, %v4764, %v4763
        %v4766 = vrot.slane %v2441, 5
        %v4767 = vsel %vm3065, %v4766, %v4765
        %v4768 = vrot.slane %v2443, 4
        %v4769 = vsel %vm3068, %v4768, %v4767
        %v4770 = vrot.slane %v2445, 3
        %v4771 = vsel %vm3071, %v4770, %v4769
        %v4772 = vrot.slane %v2447, 2
        %v4773 = vsel %vm3074, %v4772, %v4771
        %v4774 = vrot.slane %v2449, 1
        %v4775 = vsel %vm3077, %v4774, %v4773
        %v4776 = vrot.slane %v2438, 7
        %v4777 = vsel %vm3059, %v4776, %v2436
        %v4778 = vrot.slane %v2440, 6
        %v4779 = vsel %vm3062, %v4778, %v4777
        %v4780 = vrot.slane %v2442, 5
        %v4781 = vsel %vm3065, %v4780, %v4779
        %v4782 = vrot.slane %v2444, 4
        %v4783 = vsel %vm3068, %v4782, %v4781
        %v4784 = vrot.slane %v2446, 3
        %v4785 = vsel %vm3071, %v4784, %v4783
        %v4786 = vrot.slane %v2448, 2
        %v4787 = vsel %vm3074, %v4786, %v4785
        %v4788 = vrot.slane %v2450, 1
        %v4789 = vsel %vm3077, %v4788, %v4787
        %v4790 = vrot.slane %v2453, 7
        %v4791 = vsel %vm3059, %v4790, %v2451
        %v4792 = vrot.slane %v2455, 6
        %v4793 = vsel %vm3062, %v4792, %v4791
        %v4794 = vrot.slane %v2457, 5
        %v4795 = vsel %vm3065, %v4794, %v4793
        %v4796 = vrot.slane %v2459, 4
        %v4797 = vsel %vm3068, %v4796, %v4795
        %v4798 = vrot.slane %v2461, 3
        %v4799 = vsel %vm3071, %v4798, %v4797
        %v4800 = vrot.slane %v2463, 2
        %v4801 = vsel %vm3074, %v4800, %v4799
        %v4802 = vrot.slane %v2465, 1
        %v4803 = vsel %vm3077, %v4802, %v4801
        %v4804 = vrot.slane %v2454, 7
        %v4805 = vsel %vm3059, %v4804, %v2452
        %v4806 = vrot.slane %v2456, 6
        %v4807 = vsel %vm3062, %v4806, %v4805
        %v4808 = vrot.slane %v2458, 5
        %v4809 = vsel %vm3065, %v4808, %v4807
        %v4810 = vrot.slane %v2460, 4
        %v4811 = vsel %vm3068, %v4810, %v4809
        %v4812 = vrot.slane %v2462, 3
        %v4813 = vsel %vm3071, %v4812, %v4811
        %v4814 = vrot.slane %v2464, 2
        %v4815 = vsel %vm3074, %v4814, %v4813
        %v4816 = vrot.slane %v2466, 1
        %v4817 = vsel %vm3077, %v4816, %v4815
        %v4818 = vrot.slane %v2455, 7
        %v4819 = vsel %vm3059, %v4818, %v2453
        %v4820 = vrot.slane %v2457, 6
        %v4821 = vsel %vm3062, %v4820, %v4819
        %v4822 = vrot.slane %v2459, 5
        %v4823 = vsel %vm3065, %v4822, %v4821
        %v4824 = vrot.slane %v2461, 4
        %v4825 = vsel %vm3068, %v4824, %v4823
        %v4826 = vrot.slane %v2463, 3
        %v4827 = vsel %vm3071, %v4826, %v4825
        %v4828 = vrot.slane %v2465, 2
        %v4829 = vsel %vm3074, %v4828, %v4827
        %v4830 = vrot.slane %v2467, 1
        %v4831 = vsel %vm3077, %v4830, %v4829
        %v4832 = vrot.slane %v2470, 7
        %v4833 = vsel %vm3059, %v4832, %v2468
        %v4834 = vrot.slane %v2472, 6
        %v4835 = vsel %vm3062, %v4834, %v4833
        %v4836 = vrot.slane %v2474, 5
        %v4837 = vsel %vm3065, %v4836, %v4835
        %v4838 = vrot.slane %v2476, 4
        %v4839 = vsel %vm3068, %v4838, %v4837
        %v4840 = vrot.slane %v2478, 3
        %v4841 = vsel %vm3071, %v4840, %v4839
        %v4842 = vrot.slane %v2480, 2
        %v4843 = vsel %vm3074, %v4842, %v4841
        %v4844 = vrot.slane %v2482, 1
        %v4845 = vsel %vm3077, %v4844, %v4843
        %v4846 = vrot.slane %v2471, 7
        %v4847 = vsel %vm3059, %v4846, %v2469
        %v4848 = vrot.slane %v2473, 6
        %v4849 = vsel %vm3062, %v4848, %v4847
        %v4850 = vrot.slane %v2475, 5
        %v4851 = vsel %vm3065, %v4850, %v4849
        %v4852 = vrot.slane %v2477, 4
        %v4853 = vsel %vm3068, %v4852, %v4851
        %v4854 = vrot.slane %v2479, 3
        %v4855 = vsel %vm3071, %v4854, %v4853
        %v4856 = vrot.slane %v2481, 2
        %v4857 = vsel %vm3074, %v4856, %v4855
        %v4858 = vrot.slane %v2483, 1
        %v4859 = vsel %vm3077, %v4858, %v4857
        %v4860 = vrot.slane %v2472, 7
        %v4861 = vsel %vm3059, %v4860, %v2470
        %v4862 = vrot.slane %v2474, 6
        %v4863 = vsel %vm3062, %v4862, %v4861
        %v4864 = vrot.slane %v2476, 5
        %v4865 = vsel %vm3065, %v4864, %v4863
        %v4866 = vrot.slane %v2478, 4
        %v4867 = vsel %vm3068, %v4866, %v4865
        %v4868 = vrot.slane %v2480, 3
        %v4869 = vsel %vm3071, %v4868, %v4867
        %v4870 = vrot.slane %v2482, 2
        %v4871 = vsel %vm3074, %v4870, %v4869
        %v4872 = vrot.slane %v2484, 1
        %v4873 = vsel %vm3077, %v4872, %v4871
        %v4874 = vrot.slane %v2487, 7
        %v4875 = vsel %vm3059, %v4874, %v2485
        %v4876 = vrot.slane %v2489, 6
        %v4877 = vsel %vm3062, %v4876, %v4875
        %v4878 = vrot.slane %v2491, 5
        %v4879 = vsel %vm3065, %v4878, %v4877
        %v4880 = vrot.slane %v2493, 4
        %v4881 = vsel %vm3068, %v4880, %v4879
        %v4882 = vrot.slane %v2495, 3
        %v4883 = vsel %vm3071, %v4882, %v4881
        %v4884 = vrot.slane %v2497, 2
        %v4885 = vsel %vm3074, %v4884, %v4883
        %v4886 = vrot.slane %v2499, 1
        %v4887 = vsel %vm3077, %v4886, %v4885
        %v4888 = vrot.slane %v2488, 7
        %v4889 = vsel %vm3059, %v4888, %v2486
        %v4890 = vrot.slane %v2490, 6
        %v4891 = vsel %vm3062, %v4890, %v4889
        %v4892 = vrot.slane %v2492, 5
        %v4893 = vsel %vm3065, %v4892, %v4891
        %v4894 = vrot.slane %v2494, 4
        %v4895 = vsel %vm3068, %v4894, %v4893
        %v4896 = vrot.slane %v2496, 3
        %v4897 = vsel %vm3071, %v4896, %v4895
        %v4898 = vrot.slane %v2498, 2
        %v4899 = vsel %vm3074, %v4898, %v4897
        %v4900 = vrot.slane %v2500, 1
        %v4901 = vsel %vm3077, %v4900, %v4899
        %v4902 = vrot.slane %v2489, 7
        %v4903 = vsel %vm3059, %v4902, %v2487
        %v4904 = vrot.slane %v2491, 6
        %v4905 = vsel %vm3062, %v4904, %v4903
        %v4906 = vrot.slane %v2493, 5
        %v4907 = vsel %vm3065, %v4906, %v4905
        %v4908 = vrot.slane %v2495, 4
        %v4909 = vsel %vm3068, %v4908, %v4907
        %v4910 = vrot.slane %v2497, 3
        %v4911 = vsel %vm3071, %v4910, %v4909
        %v4912 = vrot.slane %v2499, 2
        %v4913 = vsel %vm3074, %v4912, %v4911
        %v4914 = vrot.slane %v2501, 1
        %v4915 = vsel %vm3077, %v4914, %v4913
        %v4916 = vrot.slane %v2504, 7
        %v4917 = vsel %vm3059, %v4916, %v2502
        %v4918 = vrot.slane %v2506, 6
        %v4919 = vsel %vm3062, %v4918, %v4917
        %v4920 = vrot.slane %v2508, 5
        %v4921 = vsel %vm3065, %v4920, %v4919
        %v4922 = vrot.slane %v2510, 4
        %v4923 = vsel %vm3068, %v4922, %v4921
        %v4924 = vrot.slane %v2512, 3
        %v4925 = vsel %vm3071, %v4924, %v4923
        %v4926 = vrot.slane %v2514, 2
        %v4927 = vsel %vm3074, %v4926, %v4925
        %v4928 = vrot.slane %v2516, 1
        %v4929 = vsel %vm3077, %v4928, %v4927
        %v4930 = vrot.slane %v2505, 7
        %v4931 = vsel %vm3059, %v4930, %v2503
        %v4932 = vrot.slane %v2507, 6
        %v4933 = vsel %vm3062, %v4932, %v4931
        %v4934 = vrot.slane %v2509, 5
        %v4935 = vsel %vm3065, %v4934, %v4933
        %v4936 = vrot.slane %v2511, 4
        %v4937 = vsel %vm3068, %v4936, %v4935
        %v4938 = vrot.slane %v2513, 3
        %v4939 = vsel %vm3071, %v4938, %v4937
        %v4940 = vrot.slane %v2515, 2
        %v4941 = vsel %vm3074, %v4940, %v4939
        %v4942 = vrot.slane %v2517, 1
        %v4943 = vsel %vm3077, %v4942, %v4941
        %v4944 = vrot.slane %v2506, 7
        %v4945 = vsel %vm3059, %v4944, %v2504
        %v4946 = vrot.slane %v2508, 6
        %v4947 = vsel %vm3062, %v4946, %v4945
        %v4948 = vrot.slane %v2510, 5
        %v4949 = vsel %vm3065, %v4948, %v4947
        %v4950 = vrot.slane %v2512, 4
        %v4951 = vsel %vm3068, %v4950, %v4949
        %v4952 = vrot.slane %v2514, 3
        %v4953 = vsel %vm3071, %v4952, %v4951
        %v4954 = vrot.slane %v2516, 2
        %v4955 = vsel %vm3074, %v4954, %v4953
        %v4956 = vrot.slane %v2518, 1
        %v4957 = vsel %vm3077, %v4956, %v4955
        %v4958 = vrot.slane %v2521, 7
        %v4959 = vsel %vm3059, %v4958, %v2519
        %v4960 = vrot.slane %v2523, 6
        %v4961 = vsel %vm3062, %v4960, %v4959
        %v4962 = vrot.slane %v2525, 5
        %v4963 = vsel %vm3065, %v4962, %v4961
        %v4964 = vrot.slane %v2527, 4
        %v4965 = vsel %vm3068, %v4964, %v4963
        %v4966 = vrot.slane %v2529, 3
        %v4967 = vsel %vm3071, %v4966, %v4965
        %v4968 = vrot.slane %v2531, 2
        %v4969 = vsel %vm3074, %v4968, %v4967
        %v4970 = vrot.slane %v2533, 1
        %v4971 = vsel %vm3077, %v4970, %v4969
        %v4972 = vrot.slane %v2522, 7
        %v4973 = vsel %vm3059, %v4972, %v2520
        %v4974 = vrot.slane %v2524, 6
        %v4975 = vsel %vm3062, %v4974, %v4973
        %v4976 = vrot.slane %v2526, 5
        %v4977 = vsel %vm3065, %v4976, %v4975
        %v4978 = vrot.slane %v2528, 4
        %v4979 = vsel %vm3068, %v4978, %v4977
        %v4980 = vrot.slane %v2530, 3
        %v4981 = vsel %vm3071, %v4980, %v4979
        %v4982 = vrot.slane %v2532, 2
        %v4983 = vsel %vm3074, %v4982, %v4981
        %v4984 = vrot.slane %v2534, 1
        %v4985 = vsel %vm3077, %v4984, %v4983
        %v4986 = vrot.slane %v2523, 7
        %v4987 = vsel %vm3059, %v4986, %v2521
        %v4988 = vrot.slane %v2525, 6
        %v4989 = vsel %vm3062, %v4988, %v4987
        %v4990 = vrot.slane %v2527, 5
        %v4991 = vsel %vm3065, %v4990, %v4989
        %v4992 = vrot.slane %v2529, 4
        %v4993 = vsel %vm3068, %v4992, %v4991
        %v4994 = vrot.slane %v2531, 3
        %v4995 = vsel %vm3071, %v4994, %v4993
        %v4996 = vrot.slane %v2533, 2
        %v4997 = vsel %vm3074, %v4996, %v4995
        %v4998 = vrot.slane %v2535, 1
        %v4999 = vsel %vm3077, %v4998, %v4997
        %v5000 = vrot.slane %v2538, 7
        %v5001 = vsel %vm3059, %v5000, %v2536
        %v5002 = vrot.slane %v2540, 6
        %v5003 = vsel %vm3062, %v5002, %v5001
        %v5004 = vrot.slane %v2542, 5
        %v5005 = vsel %vm3065, %v5004, %v5003
        %v5006 = vrot.slane %v2544, 4
        %v5007 = vsel %vm3068, %v5006, %v5005
        %v5008 = vrot.slane %v2546, 3
        %v5009 = vsel %vm3071, %v5008, %v5007
        %v5010 = vrot.slane %v2548, 2
        %v5011 = vsel %vm3074, %v5010, %v5009
        %v5012 = vrot.slane %v2550, 1
        %v5013 = vsel %vm3077, %v5012, %v5011
        %v5014 = vrot.slane %v2539, 7
        %v5015 = vsel %vm3059, %v5014, %v2537
        %v5016 = vrot.slane %v2541, 6
        %v5017 = vsel %vm3062, %v5016, %v5015
        %v5018 = vrot.slane %v2543, 5
        %v5019 = vsel %vm3065, %v5018, %v5017
        %v5020 = vrot.slane %v2545, 4
        %v5021 = vsel %vm3068, %v5020, %v5019
        %v5022 = vrot.slane %v2547, 3
        %v5023 = vsel %vm3071, %v5022, %v5021
        %v5024 = vrot.slane %v2549, 2
        %v5025 = vsel %vm3074, %v5024, %v5023
        %v5026 = vrot.slane %v2551, 1
        %v5027 = vsel %vm3077, %v5026, %v5025
        %v5028 = vrot.slane %v2540, 7
        %v5029 = vsel %vm3059, %v5028, %v2538
        %v5030 = vrot.slane %v2542, 6
        %v5031 = vsel %vm3062, %v5030, %v5029
        %v5032 = vrot.slane %v2544, 5
        %v5033 = vsel %vm3065, %v5032, %v5031
        %v5034 = vrot.slane %v2546, 4
        %v5035 = vsel %vm3068, %v5034, %v5033
        %v5036 = vrot.slane %v2548, 3
        %v5037 = vsel %vm3071, %v5036, %v5035
        %v5038 = vrot.slane %v2550, 2
        %v5039 = vsel %vm3074, %v5038, %v5037
        %v5040 = vrot.slane %v2552, 1
        %v5041 = vsel %vm3077, %v5040, %v5039
        %v5042 = vrot.slane %v2555, 7
        %v5043 = vsel %vm3059, %v5042, %v2553
        %v5044 = vrot.slane %v2557, 6
        %v5045 = vsel %vm3062, %v5044, %v5043
        %v5046 = vrot.slane %v2559, 5
        %v5047 = vsel %vm3065, %v5046, %v5045
        %v5048 = vrot.slane %v2561, 4
        %v5049 = vsel %vm3068, %v5048, %v5047
        %v5050 = vrot.slane %v2563, 3
        %v5051 = vsel %vm3071, %v5050, %v5049
        %v5052 = vrot.slane %v2565, 2
        %v5053 = vsel %vm3074, %v5052, %v5051
        %v5054 = vrot.slane %v2567, 1
        %v5055 = vsel %vm3077, %v5054, %v5053
        %v5056 = vrot.slane %v2556, 7
        %v5057 = vsel %vm3059, %v5056, %v2554
        %v5058 = vrot.slane %v2558, 6
        %v5059 = vsel %vm3062, %v5058, %v5057
        %v5060 = vrot.slane %v2560, 5
        %v5061 = vsel %vm3065, %v5060, %v5059
        %v5062 = vrot.slane %v2562, 4
        %v5063 = vsel %vm3068, %v5062, %v5061
        %v5064 = vrot.slane %v2564, 3
        %v5065 = vsel %vm3071, %v5064, %v5063
        %v5066 = vrot.slane %v2566, 2
        %v5067 = vsel %vm3074, %v5066, %v5065
        %v5068 = vrot.slane %v2568, 1
        %v5069 = vsel %vm3077, %v5068, %v5067
        %v5070 = vrot.slane %v2557, 7
        %v5071 = vsel %vm3059, %v5070, %v2555
        %v5072 = vrot.slane %v2559, 6
        %v5073 = vsel %vm3062, %v5072, %v5071
        %v5074 = vrot.slane %v2561, 5
        %v5075 = vsel %vm3065, %v5074, %v5073
        %v5076 = vrot.slane %v2563, 4
        %v5077 = vsel %vm3068, %v5076, %v5075
        %v5078 = vrot.slane %v2565, 3
        %v5079 = vsel %vm3071, %v5078, %v5077
        %v5080 = vrot.slane %v2567, 2
        %v5081 = vsel %vm3074, %v5080, %v5079
        %v5082 = vrot.slane %v2569, 1
        %v5083 = vsel %vm3077, %v5082, %v5081
        %v5084 = vrot.slane %v2572, 7
        %v5085 = vsel %vm3059, %v5084, %v2570
        %v5086 = vrot.slane %v2574, 6
        %v5087 = vsel %vm3062, %v5086, %v5085
        %v5088 = vrot.slane %v2576, 5
        %v5089 = vsel %vm3065, %v5088, %v5087
        %v5090 = vrot.slane %v2578, 4
        %v5091 = vsel %vm3068, %v5090, %v5089
        %v5092 = vrot.slane %v2580, 3
        %v5093 = vsel %vm3071, %v5092, %v5091
        %v5094 = vrot.slane %v2582, 2
        %v5095 = vsel %vm3074, %v5094, %v5093
        %v5096 = vrot.slane %v2584, 1
        %v5097 = vsel %vm3077, %v5096, %v5095
        %v5098 = vrot.slane %v2573, 7
        %v5099 = vsel %vm3059, %v5098, %v2571
        %v5100 = vrot.slane %v2575, 6
        %v5101 = vsel %vm3062, %v5100, %v5099
        %v5102 = vrot.slane %v2577, 5
        %v5103 = vsel %vm3065, %v5102, %v5101
        %v5104 = vrot.slane %v2579, 4
        %v5105 = vsel %vm3068, %v5104, %v5103
        %v5106 = vrot.slane %v2581, 3
        %v5107 = vsel %vm3071, %v5106, %v5105
        %v5108 = vrot.slane %v2583, 2
        %v5109 = vsel %vm3074, %v5108, %v5107
        %v5110 = vrot.slane %v2585, 1
        %v5111 = vsel %vm3077, %v5110, %v5109
        %v5112 = vrot.slane %v2574, 7
        %v5113 = vsel %vm3059, %v5112, %v2572
        %v5114 = vrot.slane %v2576, 6
        %v5115 = vsel %vm3062, %v5114, %v5113
        %v5116 = vrot.slane %v2578, 5
        %v5117 = vsel %vm3065, %v5116, %v5115
        %v5118 = vrot.slane %v2580, 4
        %v5119 = vsel %vm3068, %v5118, %v5117
        %v5120 = vrot.slane %v2582, 3
        %v5121 = vsel %vm3071, %v5120, %v5119
        %v5122 = vrot.slane %v2584, 2
        %v5123 = vsel %vm3074, %v5122, %v5121
        %v5124 = vrot.slane %v2586, 1
        %v5125 = vsel %vm3077, %v5124, %v5123
        %v5126 = vrot.slane %v2589, 7
        %v5127 = vsel %vm3059, %v5126, %v2587
        %v5128 = vrot.slane %v2591, 6
        %v5129 = vsel %vm3062, %v5128, %v5127
        %v5130 = vrot.slane %v2593, 5
        %v5131 = vsel %vm3065, %v5130, %v5129
        %v5132 = vrot.slane %v2595, 4
        %v5133 = vsel %vm3068, %v5132, %v5131
        %v5134 = vrot.slane %v2597, 3
        %v5135 = vsel %vm3071, %v5134, %v5133
        %v5136 = vrot.slane %v2599, 2
        %v5137 = vsel %vm3074, %v5136, %v5135
        %v5138 = vrot.slane %v2601, 1
        %v5139 = vsel %vm3077, %v5138, %v5137
        %v5140 = vrot.slane %v2590, 7
        %v5141 = vsel %vm3059, %v5140, %v2588
        %v5142 = vrot.slane %v2592, 6
        %v5143 = vsel %vm3062, %v5142, %v5141
        %v5144 = vrot.slane %v2594, 5
        %v5145 = vsel %vm3065, %v5144, %v5143
        %v5146 = vrot.slane %v2596, 4
        %v5147 = vsel %vm3068, %v5146, %v5145
        %v5148 = vrot.slane %v2598, 3
        %v5149 = vsel %vm3071, %v5148, %v5147
        %v5150 = vrot.slane %v2600, 2
        %v5151 = vsel %vm3074, %v5150, %v5149
        %v5152 = vrot.slane %v2602, 1
        %v5153 = vsel %vm3077, %v5152, %v5151
        %v5154 = vrot.slane %v2591, 7
        %v5155 = vsel %vm3059, %v5154, %v2589
        %v5156 = vrot.slane %v2593, 6
        %v5157 = vsel %vm3062, %v5156, %v5155
        %v5158 = vrot.slane %v2595, 5
        %v5159 = vsel %vm3065, %v5158, %v5157
        %v5160 = vrot.slane %v2597, 4
        %v5161 = vsel %vm3068, %v5160, %v5159
        %v5162 = vrot.slane %v2599, 3
        %v5163 = vsel %vm3071, %v5162, %v5161
        %v5164 = vrot.slane %v2601, 2
        %v5165 = vsel %vm3074, %v5164, %v5163
        %v5166 = vrot.slane %v2603, 1
        %v5167 = vsel %vm3077, %v5166, %v5165
        %v5168 = vrot.slane %v2606, 7
        %v5169 = vsel %vm3059, %v5168, %v2604
        %v5170 = vrot.slane %v2608, 6
        %v5171 = vsel %vm3062, %v5170, %v5169
        %v5172 = vrot.slane %v2610, 5
        %v5173 = vsel %vm3065, %v5172, %v5171
        %v5174 = vrot.slane %v2612, 4
        %v5175 = vsel %vm3068, %v5174, %v5173
        %v5176 = vrot.slane %v2614, 3
        %v5177 = vsel %vm3071, %v5176, %v5175
        %v5178 = vrot.slane %v2616, 2
        %v5179 = vsel %vm3074, %v5178, %v5177
        %v5180 = vrot.slane %v2618, 1
        %v5181 = vsel %vm3077, %v5180, %v5179
        %v5182 = vrot.slane %v2607, 7
        %v5183 = vsel %vm3059, %v5182, %v2605
        %v5184 = vrot.slane %v2609, 6
        %v5185 = vsel %vm3062, %v5184, %v5183
        %v5186 = vrot.slane %v2611, 5
        %v5187 = vsel %vm3065, %v5186, %v5185
        %v5188 = vrot.slane %v2613, 4
        %v5189 = vsel %vm3068, %v5188, %v5187
        %v5190 = vrot.slane %v2615, 3
        %v5191 = vsel %vm3071, %v5190, %v5189
        %v5192 = vrot.slane %v2617, 2
        %v5193 = vsel %vm3074, %v5192, %v5191
        %v5194 = vrot.slane %v2619, 1
        %v5195 = vsel %vm3077, %v5194, %v5193
        %v5196 = vrot.slane %v2608, 7
        %v5197 = vsel %vm3059, %v5196, %v2606
        %v5198 = vrot.slane %v2610, 6
        %v5199 = vsel %vm3062, %v5198, %v5197
        %v5200 = vrot.slane %v2612, 5
        %v5201 = vsel %vm3065, %v5200, %v5199
        %v5202 = vrot.slane %v2614, 4
        %v5203 = vsel %vm3068, %v5202, %v5201
        %v5204 = vrot.slane %v2616, 3
        %v5205 = vsel %vm3071, %v5204, %v5203
        %v5206 = vrot.slane %v2618, 2
        %v5207 = vsel %vm3074, %v5206, %v5205
        %v5208 = vrot.slane %v2620, 1
        %v5209 = vsel %vm3077, %v5208, %v5207
        %5261 = vmatpush.msra.mxu0 %v2636
        %5262 = vmatpush.msra.mxu0 %v2635
        %5263 = vmatpush.msra.mxu0 %v2634
        %5264 = vmatpush.msra.mxu0 %v2633
        %5265 = vmatpush.msra.mxu0 %v2632
        %5266 = vmatpush.msra.mxu0 %v2631
        %5267 = vmatpush.msra.mxu0 %v2630
        %5268 = vmatpush.msra.mxu0 %v2629
        %5269 = vmatpush.msra.mxu0 %v2628
        %5270 = vmatpush.msra.mxu0 %v2627
        %5271 = vmatpush.msra.mxu0 %v2626
        %5272 = vmatpush.msra.mxu0 %v2625
        %5273 = vmatpush.msra.mxu0 %v2624
        %5274 = vmatpush.msra.mxu0 %v2623
        %5275 = vmatpush.msra.mxu0 %v2622
        %5276 = vmatpush.msra.mxu0 %v2621
        %5277 = vmatmul.f32.gmra.mxu0 %v4509
        %v5278 = vpop.f32.mrf.mxu0
        %v5279 = vadd.f32 %v2767, %v5278
        %5280 = vmatmul.f32.gmra.mxu0 %v4593
        %v5281 = vpop.f32.mrf.mxu0
        %v5282 = vadd.f32 %v2767, %v5281
        %5283 = vmatmul.f32.gmra.mxu0 %v4677
        %v5284 = vpop.f32.mrf.mxu0
        %v5285 = vadd.f32 %v2767, %v5284
        %5286 = vmatmul.f32.gmra.mxu0 %v4761
        %v5287 = vpop.f32.mrf.mxu0
        %v5288 = vadd.f32 %v2767, %v5287
        %5289 = vmatmul.f32.gmra.mxu0 %v4845
        %v5290 = vpop.f32.mrf.mxu0
        %v5291 = vadd.f32 %v2767, %v5290
        %5292 = vmatmul.f32.gmra.mxu0 %v4929
        %v5293 = vpop.f32.mrf.mxu0
        %v5294 = vadd.f32 %v2767, %v5293
        %5295 = vmatmul.f32.gmra.mxu0 %v5013
        %v5296 = vpop.f32.mrf.mxu0
        %v5297 = vadd.f32 %v2767, %v5296
        %5298 = vmatmul.f32.gmra.mxu0 %v5097
        %v5299 = vpop.f32.mrf.mxu0
        %v5300 = vadd.f32 %v2767, %v5299
        %5301 = vdwg.mxu0
        %5302 = vmatpush.msra.mxu0 %v2652
        %5303 = vmatpush.msra.mxu0 %v2651
        %5304 = vmatpush.msra.mxu0 %v2650
        %5305 = vmatpush.msra.mxu0 %v2649
        %5306 = vmatpush.msra.mxu0 %v2648
        %5307 = vmatpush.msra.mxu0 %v2647
        %5308 = vmatpush.msra.mxu0 %v2646
        %5309 = vmatpush.msra.mxu0 %v2645
        %5310 = vmatpush.msra.mxu0 %v2644
        %5311 = vmatpush.msra.mxu0 %v2643
        %5312 = vmatpush.msra.mxu0 %v2642
        %5313 = vmatpush.msra.mxu0 %v2641
        %5314 = vmatpush.msra.mxu0 %v2640
        %5315 = vmatpush.msra.mxu0 %v2639
        %5316 = vmatpush.msra.mxu0 %v2638
        %5317 = vmatpush.msra.mxu0 %v2637
        %5318 = vmatmul.f32.gmra.mxu0 %v4523
        %v5319 = vpop.f32.mrf.mxu0
        %v5320 = vadd.f32 %v5279, %v5319
        %5321 = vmatmul.f32.gmra.mxu0 %v4607
        %v5322 = vpop.f32.mrf.mxu0
        %v5323 = vadd.f32 %v5282, %v5322
        %5324 = vmatmul.f32.gmra.mxu0 %v4691
        %v5325 = vpop.f32.mrf.mxu0
        %v5326 = vadd.f32 %v5285, %v5325
        %5327 = vmatmul.f32.gmra.mxu0 %v4775
        %v5328 = vpop.f32.mrf.mxu0
        %v5329 = vadd.f32 %v5288, %v5328
        %5330 = vmatmul.f32.gmra.mxu0 %v4859
        %v5331 = vpop.f32.mrf.mxu0
        %v5332 = vadd.f32 %v5291, %v5331
        %5333 = vmatmul.f32.gmra.mxu0 %v4943
        %v5334 = vpop.f32.mrf.mxu0
        %v5335 = vadd.f32 %v5294, %v5334
        %5336 = vmatmul.f32.gmra.mxu0 %v5027
        %v5337 = vpop.f32.mrf.mxu0
        %v5338 = vadd.f32 %v5297, %v5337
        %5339 = vmatmul.f32.gmra.mxu0 %v5111
        %v5340 = vpop.f32.mrf.mxu0
        %v5341 = vadd.f32 %v5300, %v5340
        %5342 = vdwg.mxu0
        %5343 = vmatpush.msra.mxu0 %v2668
        %5344 = vmatpush.msra.mxu0 %v2667
        %5345 = vmatpush.msra.mxu0 %v2666
        %5346 = vmatpush.msra.mxu0 %v2665
        %5347 = vmatpush.msra.mxu0 %v2664
        %5348 = vmatpush.msra.mxu0 %v2663
        %5349 = vmatpush.msra.mxu0 %v2662
        %5350 = vmatpush.msra.mxu0 %v2661
        %5351 = vmatpush.msra.mxu0 %v2660
        %5352 = vmatpush.msra.mxu0 %v2659
        %5353 = vmatpush.msra.mxu0 %v2658
        %5354 = vmatpush.msra.mxu0 %v2657
        %5355 = vmatpush.msra.mxu0 %v2656
        %5356 = vmatpush.msra.mxu0 %v2655
        %5357 = vmatpush.msra.mxu0 %v2654
        %5358 = vmatpush.msra.mxu0 %v2653
        %5359 = vmatmul.f32.gmra.mxu0 %v4537
        %v5360 = vpop.f32.mrf.mxu0
        %v5361 = vadd.f32 %v5320, %v5360
        %5362 = vmatmul.f32.gmra.mxu0 %v4621
        %v5363 = vpop.f32.mrf.mxu0
        %v5364 = vadd.f32 %v5323, %v5363
        %5365 = vmatmul.f32.gmra.mxu0 %v4705
        %v5366 = vpop.f32.mrf.mxu0
        %v5367 = vadd.f32 %v5326, %v5366
        %5368 = vmatmul.f32.gmra.mxu0 %v4789
        %v5369 = vpop.f32.mrf.mxu0
        %v5370 = vadd.f32 %v5329, %v5369
        %5371 = vmatmul.f32.gmra.mxu0 %v4873
        %v5372 = vpop.f32.mrf.mxu0
        %v5373 = vadd.f32 %v5332, %v5372
        %5374 = vmatmul.f32.gmra.mxu0 %v4957
        %v5375 = vpop.f32.mrf.mxu0
        %v5376 = vadd.f32 %v5335, %v5375
        %5377 = vmatmul.f32.gmra.mxu0 %v5041
        %v5378 = vpop.f32.mrf.mxu0
        %v5379 = vadd.f32 %v5338, %v5378
        %5380 = vmatmul.f32.gmra.mxu0 %v5125
        %v5381 = vpop.f32.mrf.mxu0
        %v5382 = vadd.f32 %v5341, %v5381
        %5383 = vdwg.mxu0
        %5384 = vmatpush.msra.mxu0 %v2684
        %5385 = vmatpush.msra.mxu0 %v2683
        %5386 = vmatpush.msra.mxu0 %v2682
        %5387 = vmatpush.msra.mxu0 %v2681
        %5388 = vmatpush.msra.mxu0 %v2680
        %5389 = vmatpush.msra.mxu0 %v2679
        %5390 = vmatpush.msra.mxu0 %v2678
        %5391 = vmatpush.msra.mxu0 %v2677
        %5392 = vmatpush.msra.mxu0 %v2676
        %5393 = vmatpush.msra.mxu0 %v2675
        %5394 = vmatpush.msra.mxu0 %v2674
        %5395 = vmatpush.msra.mxu0 %v2673
        %5396 = vmatpush.msra.mxu0 %v2672
        %5397 = vmatpush.msra.mxu0 %v2671
        %5398 = vmatpush.msra.mxu0 %v2670
        %5399 = vmatpush.msra.mxu0 %v2669
        %5400 = vmatmul.f32.gmra.mxu0 %v4551
        %v5401 = vpop.f32.mrf.mxu0
        %v5402 = vadd.f32 %v5361, %v5401
        %5403 = vmatmul.f32.gmra.mxu0 %v4635
        %v5404 = vpop.f32.mrf.mxu0
        %v5405 = vadd.f32 %v5364, %v5404
        %5406 = vmatmul.f32.gmra.mxu0 %v4719
        %v5407 = vpop.f32.mrf.mxu0
        %v5408 = vadd.f32 %v5367, %v5407
        %5409 = vmatmul.f32.gmra.mxu0 %v4803
        %v5410 = vpop.f32.mrf.mxu0
        %v5411 = vadd.f32 %v5370, %v5410
        %5412 = vmatmul.f32.gmra.mxu0 %v4887
        %v5413 = vpop.f32.mrf.mxu0
        %v5414 = vadd.f32 %v5373, %v5413
        %5415 = vmatmul.f32.gmra.mxu0 %v4971
        %v5416 = vpop.f32.mrf.mxu0
        %v5417 = vadd.f32 %v5376, %v5416
        %5418 = vmatmul.f32.gmra.mxu0 %v5055
        %v5419 = vpop.f32.mrf.mxu0
        %v5420 = vadd.f32 %v5379, %v5419
        %5421 = vmatmul.f32.gmra.mxu0 %v5139
        %v5422 = vpop.f32.mrf.mxu0
        %v5423 = vadd.f32 %v5382, %v5422
        %5424 = vdwg.mxu0
        %5425 = vmatpush.msra.mxu0 %v2700
        %5426 = vmatpush.msra.mxu0 %v2699
        %5427 = vmatpush.msra.mxu0 %v2698
        %5428 = vmatpush.msra.mxu0 %v2697
        %5429 = vmatpush.msra.mxu0 %v2696
        %5430 = vmatpush.msra.mxu0 %v2695
        %5431 = vmatpush.msra.mxu0 %v2694
        %5432 = vmatpush.msra.mxu0 %v2693
        %5433 = vmatpush.msra.mxu0 %v2692
        %5434 = vmatpush.msra.mxu0 %v2691
        %5435 = vmatpush.msra.mxu0 %v2690
        %5436 = vmatpush.msra.mxu0 %v2689
        %5437 = vmatpush.msra.mxu0 %v2688
        %5438 = vmatpush.msra.mxu0 %v2687
        %5439 = vmatpush.msra.mxu0 %v2686
        %5440 = vmatpush.msra.mxu0 %v2685
        %5441 = vmatmul.f32.gmra.mxu0 %v4565
        %v5442 = vpop.f32.mrf.mxu0
        %v5443 = vadd.f32 %v5402, %v5442
        %5444 = vmatmul.f32.gmra.mxu0 %v4649
        %v5445 = vpop.f32.mrf.mxu0
        %v5446 = vadd.f32 %v5405, %v5445
        %5447 = vmatmul.f32.gmra.mxu0 %v4733
        %v5448 = vpop.f32.mrf.mxu0
        %v5449 = vadd.f32 %v5408, %v5448
        %5450 = vmatmul.f32.gmra.mxu0 %v4817
        %v5451 = vpop.f32.mrf.mxu0
        %v5452 = vadd.f32 %v5411, %v5451
        %5453 = vmatmul.f32.gmra.mxu0 %v4901
        %v5454 = vpop.f32.mrf.mxu0
        %v5455 = vadd.f32 %v5414, %v5454
        %5456 = vmatmul.f32.gmra.mxu0 %v4985
        %v5457 = vpop.f32.mrf.mxu0
        %v5458 = vadd.f32 %v5417, %v5457
        %5459 = vmatmul.f32.gmra.mxu0 %v5069
        %v5460 = vpop.f32.mrf.mxu0
        %v5461 = vadd.f32 %v5420, %v5460
        %5462 = vmatmul.f32.gmra.mxu0 %v5153
        %v5463 = vpop.f32.mrf.mxu0
        %v5464 = vadd.f32 %v5423, %v5463
        %5465 = vdwg.mxu0
        %5466 = vmatpush.msra.mxu0 %v2716
        %5467 = vmatpush.msra.mxu0 %v2715
        %5468 = vmatpush.msra.mxu0 %v2714
        %5469 = vmatpush.msra.mxu0 %v2713
        %5470 = vmatpush.msra.mxu0 %v2712
        %5471 = vmatpush.msra.mxu0 %v2711
        %5472 = vmatpush.msra.mxu0 %v2710
        %5473 = vmatpush.msra.mxu0 %v2709
        %5474 = vmatpush.msra.mxu0 %v2708
        %5475 = vmatpush.msra.mxu0 %v2707
        %5476 = vmatpush.msra.mxu0 %v2706
        %5477 = vmatpush.msra.mxu0 %v2705
        %5478 = vmatpush.msra.mxu0 %v2704
        %5479 = vmatpush.msra.mxu0 %v2703
        %5480 = vmatpush.msra.mxu0 %v2702
        %5481 = vmatpush.msra.mxu0 %v2701
        %5482 = vmatmul.f32.gmra.mxu0 %v4579
        %v5483 = vpop.f32.mrf.mxu0
        %v5484 = vadd.f32 %v5443, %v5483
        %5485 = vmatmul.f32.gmra.mxu0 %v4663
        %v5486 = vpop.f32.mrf.mxu0
        %v5487 = vadd.f32 %v5446, %v5486
        %5488 = vmatmul.f32.gmra.mxu0 %v4747
        %v5489 = vpop.f32.mrf.mxu0
        %v5490 = vadd.f32 %v5449, %v5489
        %5491 = vmatmul.f32.gmra.mxu0 %v4831
        %v5492 = vpop.f32.mrf.mxu0
        %v5493 = vadd.f32 %v5452, %v5492
        %5494 = vmatmul.f32.gmra.mxu0 %v4915
        %v5495 = vpop.f32.mrf.mxu0
        %v5496 = vadd.f32 %v5455, %v5495
        %5497 = vmatmul.f32.gmra.mxu0 %v4999
        %v5498 = vpop.f32.mrf.mxu0
        %v5499 = vadd.f32 %v5458, %v5498
        %5500 = vmatmul.f32.gmra.mxu0 %v5083
        %v5501 = vpop.f32.mrf.mxu0
        %v5502 = vadd.f32 %v5461, %v5501
        %5503 = vmatmul.f32.gmra.mxu0 %v5167
        %v5504 = vpop.f32.mrf.mxu0
        %v5505 = vadd.f32 %v5464, %v5504
        %5506 = vdwg.mxu0
        %5507 = vmatpush.msra.mxu0 %v2732
        %5508 = vmatpush.msra.mxu0 %v2731
        %5509 = vmatpush.msra.mxu0 %v2730
        %5510 = vmatpush.msra.mxu0 %v2729
        %5511 = vmatpush.msra.mxu0 %v2728
        %5512 = vmatpush.msra.mxu0 %v2727
        %5513 = vmatpush.msra.mxu0 %v2726
        %5514 = vmatpush.msra.mxu0 %v2725
        %5515 = vmatpush.msra.mxu0 %v2724
        %5516 = vmatpush.msra.mxu0 %v2723
        %5517 = vmatpush.msra.mxu0 %v2722
        %5518 = vmatpush.msra.mxu0 %v2721
        %5519 = vmatpush.msra.mxu0 %v2720
        %5520 = vmatpush.msra.mxu0 %v2719
        %5521 = vmatpush.msra.mxu0 %v2718
        %5522 = vmatpush.msra.mxu0 %v2717
        %5523 = vmatmul.f32.gmra.mxu0 %v4593
        %v5524 = vpop.f32.mrf.mxu0
        %v5525 = vadd.f32 %v5484, %v5524
        %5526 = vmatmul.f32.gmra.mxu0 %v4677
        %v5527 = vpop.f32.mrf.mxu0
        %v5528 = vadd.f32 %v5487, %v5527
        %5529 = vmatmul.f32.gmra.mxu0 %v4761
        %v5530 = vpop.f32.mrf.mxu0
        %v5531 = vadd.f32 %v5490, %v5530
        %5532 = vmatmul.f32.gmra.mxu0 %v4845
        %v5533 = vpop.f32.mrf.mxu0
        %v5534 = vadd.f32 %v5493, %v5533
        %5535 = vmatmul.f32.gmra.mxu0 %v4929
        %v5536 = vpop.f32.mrf.mxu0
        %v5537 = vadd.f32 %v5496, %v5536
        %5538 = vmatmul.f32.gmra.mxu0 %v5013
        %v5539 = vpop.f32.mrf.mxu0
        %v5540 = vadd.f32 %v5499, %v5539
        %5541 = vmatmul.f32.gmra.mxu0 %v5097
        %v5542 = vpop.f32.mrf.mxu0
        %v5543 = vadd.f32 %v5502, %v5542
        %5544 = vmatmul.f32.gmra.mxu0 %v5181
        %v5545 = vpop.f32.mrf.mxu0
        %v5546 = vadd.f32 %v5505, %v5545
        %5547 = vdwg.mxu0
        %5548 = vmatpush.msra.mxu0 %v2748
        %5549 = vmatpush.msra.mxu0 %v2747
        %5550 = vmatpush.msra.mxu0 %v2746
        %5551 = vmatpush.msra.mxu0 %v2745
        %5552 = vmatpush.msra.mxu0 %v2744
        %5553 = vmatpush.msra.mxu0 %v2743
        %5554 = vmatpush.msra.mxu0 %v2742
        %5555 = vmatpush.msra.mxu0 %v2741
        %5556 = vmatpush.msra.mxu0 %v2740
        %5557 = vmatpush.msra.mxu0 %v2739
        %5558 = vmatpush.msra.mxu0 %v2738
        %5559 = vmatpush.msra.mxu0 %v2737
        %5560 = vmatpush.msra.mxu0 %v2736
        %5561 = vmatpush.msra.mxu0 %v2735
        %5562 = vmatpush.msra.mxu0 %v2734
        %5563 = vmatpush.msra.mxu0 %v2733
        %5564 = vmatmul.f32.gmra.mxu0 %v4607
        %v5565 = vpop.f32.mrf.mxu0
        %v5566 = vadd.f32 %v5525, %v5565
        %5567 = vmatmul.f32.gmra.mxu0 %v4691
        %v5568 = vpop.f32.mrf.mxu0
        %v5569 = vadd.f32 %v5528, %v5568
        %5570 = vmatmul.f32.gmra.mxu0 %v4775
        %v5571 = vpop.f32.mrf.mxu0
        %v5572 = vadd.f32 %v5531, %v5571
        %5573 = vmatmul.f32.gmra.mxu0 %v4859
        %v5574 = vpop.f32.mrf.mxu0
        %v5575 = vadd.f32 %v5534, %v5574
        %5576 = vmatmul.f32.gmra.mxu0 %v4943
        %v5577 = vpop.f32.mrf.mxu0
        %v5578 = vadd.f32 %v5537, %v5577
        %5579 = vmatmul.f32.gmra.mxu0 %v5027
        %v5580 = vpop.f32.mrf.mxu0
        %v5581 = vadd.f32 %v5540, %v5580
        %5582 = vmatmul.f32.gmra.mxu0 %v5111
        %v5583 = vpop.f32.mrf.mxu0
        %v5584 = vadd.f32 %v5543, %v5583
        %5585 = vmatmul.f32.gmra.mxu0 %v5195
        %v5586 = vpop.f32.mrf.mxu0
        %v5587 = vadd.f32 %v5546, %v5586
        %5588 = vdwg.mxu0
        %5589 = vmatpush.msra.mxu0 %v2764
        %5590 = vmatpush.msra.mxu0 %v2763
        %5591 = vmatpush.msra.mxu0 %v2762
        %5592 = vmatpush.msra.mxu0 %v2761
        %5593 = vmatpush.msra.mxu0 %v2760
        %5594 = vmatpush.msra.mxu0 %v2759
        %5595 = vmatpush.msra.mxu0 %v2758
        %5596 = vmatpush.msra.mxu0 %v2757
        %5597 = vmatpush.msra.mxu0 %v2756
        %5598 = vmatpush.msra.mxu0 %v2755
        %5599 = vmatpush.msra.mxu0 %v2754
        %5600 = vmatpush.msra.mxu0 %v2753
        %5601 = vmatpush.msra.mxu0 %v2752
        %5602 = vmatpush.msra.mxu0 %v2751
        %5603 = vmatpush.msra.mxu0 %v2750
        %5604 = vmatpush.msra.mxu0 %v2749
        %5605 = vmatmul.f32.gmra.mxu0 %v4621
        %v5606 = vpop.f32.mrf.mxu0
        %v5607 = vadd.f32 %v5566, %v5606
        %5608 = vmatmul.f32.gmra.mxu0 %v4705
        %v5609 = vpop.f32.mrf.mxu0
        %v5610 = vadd.f32 %v5569, %v5609
        %5611 = vmatmul.f32.gmra.mxu0 %v4789
        %v5612 = vpop.f32.mrf.mxu0
        %v5613 = vadd.f32 %v5572, %v5612
        %5614 = vmatmul.f32.gmra.mxu0 %v4873
        %v5615 = vpop.f32.mrf.mxu0
        %v5616 = vadd.f32 %v5575, %v5615
        %5617 = vmatmul.f32.gmra.mxu0 %v4957
        %v5618 = vpop.f32.mrf.mxu0
        %v5619 = vadd.f32 %v5578, %v5618
        %5620 = vmatmul.f32.gmra.mxu0 %v5041
        %v5621 = vpop.f32.mrf.mxu0
        %v5622 = vadd.f32 %v5581, %v5621
        %5623 = vmatmul.f32.gmra.mxu0 %v5125
        %v5624 = vpop.f32.mrf.mxu0
        %v5625 = vadd.f32 %v5584, %v5624
        %5626 = vmatmul.f32.gmra.mxu0 %v5209
        %v5627 = vpop.f32.mrf.mxu0
        %v5628 = vadd.f32 %v5587, %v5627
        %5629 = vdwg.mxu0
        %v5630 = vmax.f32 %v5607, 0.0
        %v5631 = vmax.f32 %v5610, 0.0
        %v5632 = vmax.f32 %v5613, 0.0
        %v5633 = vmax.f32 %v5616, 0.0
        %v5634 = vmax.f32 %v5619, 0.0
        %v5635 = vmax.f32 %v5622, 0.0
        %v5636 = vmax.f32 %v5625, 0.0
        %v5637 = vmax.f32 %v5628, 0.0
        %v5638 = vsub.f32 %v4199, %v5630
        %v5639 = vsub.f32 %v4200, %v5631
        %v5640 = vsub.f32 %v4201, %v5632
        %v5641 = vsub.f32 %v4202, %v5633
        %v5642 = vsub.f32 %v4203, %v5634
        %v5643 = vsub.f32 %v4204, %v5635
        %v5644 = vsub.f32 %v4205, %v5636
        %v5645 = vsub.f32 %v4206, %v5637
        %v5646 = vand.u32 2147483647, %v5638
        %v5647 = vand.u32 2147483647, %v5639
        %v5648 = vand.u32 2147483647, %v5640
        %v5649 = vand.u32 2147483647, %v5641
        %v5650 = vand.u32 2147483647, %v5642
        %v5651 = vand.u32 2147483647, %v5643
        %v5652 = vand.u32 2147483647, %v5644
        %v5653 = vand.u32 2147483647, %v5645
        %v5654 = vadd.f32 %v5646, %v5647
        %v5655 = vadd.f32 %v5654, %v5648
        %v5656 = vadd.f32 %v5655, %v5649
        %v5657 = vadd.f32 %v5656, %v5650
        %v5658 = vadd.f32 %v5657, %v5651
        %v5659 = vadd.f32 %v5658, %v5652
        %v5660 = vadd.f32 %v5659, %v5653
        %v5661 = vrot.slane %v5660, 4
        %v5662 = vadd.f32 %v5660, %v5661
        %v5663 = vrot.slane %v5662, 2
        %v5664 = vadd.f32 %v5662, %v5663
        %v5665 = vrot.slane %v5664, 1
        %v5666 = vadd.f32 %v5664, %v5665
        %v5667 = vrcp.pop 1024.0
        %v5668 = vmul.f32 1024.0, %v5667
        %v5669 = vsub.f32 1.0, %v5668
        %v5670 = vmul.f32 %v5667, %v5669
        %v5671 = vadd.f32 %v5667, %v5670
        %vm5672 = vweird.f32 %v5667
        %v5673 = vsel %vm5672, %v5667, %v5671
        %v5674 = vmul.f32 %v5666, %v5673
        %v5675 = vadd.f32 %v5674, 0.0
        %v5684 = vrot.slane %v4199, 1
        %v5685 = vrot.slane %v4199, 2
        %v5686 = vrot.slane %v4199, 3
        %v5687 = vrot.slane %v4199, 4
        %v5688 = vrot.slane %v4199, 5
        %v5689 = vrot.slane %v4199, 6
        %v5690 = vrot.slane %v4199, 7
        %v5691 = vrot.slane %v4200, 1
        %v5692 = vrot.slane %v4200, 2
        %v5693 = vrot.slane %v4200, 3
        %v5694 = vrot.slane %v4200, 4
        %v5695 = vrot.slane %v4200, 5
        %v5696 = vrot.slane %v4200, 6
        %v5697 = vrot.slane %v4200, 7
        %v5698 = vrot.slane %v4201, 1
        %v5699 = vrot.slane %v4201, 2
        %v5700 = vrot.slane %v4201, 3
        %v5701 = vrot.slane %v4201, 4
        %v5702 = vrot.slane %v4201, 5
        %v5703 = vrot.slane %v4201, 6
        %v5704 = vrot.slane %v4201, 7
        %v5705 = vrot.slane %v4202, 1
        %v5706 = vrot.slane %v4202, 2
        %v5707 = vrot.slane %v4202, 3
        %v5708 = vrot.slane %v4202, 4
        %v5709 = vrot.slane %v4202, 5
        %v5710 = vrot.slane %v4202, 6
        %v5711 = vrot.slane %v4202, 7
        %v5712 = vrot.slane %v4203, 1
        %v5713 = vrot.slane %v4203, 2
        %v5714 = vrot.slane %v4203, 3
        %v5715 = vrot.slane %v4203, 4
        %v5716 = vrot.slane %v4203, 5
        %v5717 = vrot.slane %v4203, 6
        %v5718 = vrot.slane %v4203, 7
        %v5719 = vrot.slane %v4204, 1
        %v5720 = vrot.slane %v4204, 2
        %v5721 = vrot.slane %v4204, 3
        %v5722 = vrot.slane %v4204, 4
        %v5723 = vrot.slane %v4204, 5
        %v5724 = vrot.slane %v4204, 6
        %v5725 = vrot.slane %v4204, 7
        %v5726 = vrot.slane %v4205, 1
        %v5727 = vrot.slane %v4205, 2
        %v5728 = vrot.slane %v4205, 3
        %v5729 = vrot.slane %v4205, 4
        %v5730 = vrot.slane %v4205, 5
        %v5731 = vrot.slane %v4205, 6
        %v5732 = vrot.slane %v4205, 7
        %v5733 = vrot.slane %v4206, 1
        %v5734 = vrot.slane %v4206, 2
        %v5735 = vrot.slane %v4206, 3
        %v5736 = vrot.slane %v4206, 4
        %v5737 = vrot.slane %v4206, 5
        %v5738 = vrot.slane %v4206, 6
        %v5739 = vrot.slane %v4206, 7
        %v5748 = vrot.slane %v5630, 1
        %v5749 = vrot.slane %v5630, 2
        %v5750 = vrot.slane %v5630, 3
        %v5751 = vrot.slane %v5630, 4
        %v5752 = vrot.slane %v5630, 5
        %v5753 = vrot.slane %v5630, 6
        %v5754 = vrot.slane %v5630, 7
        %v5755 = vrot.slane %v5631, 1
        %v5756 = vrot.slane %v5631, 2
        %v5757 = vrot.slane %v5631, 3
        %v5758 = vrot.slane %v5631, 4
        %v5759 = vrot.slane %v5631, 5
        %v5760 = vrot.slane %v5631, 6
        %v5761 = vrot.slane %v5631, 7
        %v5762 = vrot.slane %v5632, 1
        %v5763 = vrot.slane %v5632, 2
        %v5764 = vrot.slane %v5632, 3
        %v5765 = vrot.slane %v5632, 4
        %v5766 = vrot.slane %v5632, 5
        %v5767 = vrot.slane %v5632, 6
        %v5768 = vrot.slane %v5632, 7
        %v5769 = vrot.slane %v5633, 1
        %v5770 = vrot.slane %v5633, 2
        %v5771 = vrot.slane %v5633, 3
        %v5772 = vrot.slane %v5633, 4
        %v5773 = vrot.slane %v5633, 5
        %v5774 = vrot.slane %v5633, 6
        %v5775 = vrot.slane %v5633, 7
        %v5776 = vrot.slane %v5634, 1
        %v5777 = vrot.slane %v5634, 2
        %v5778 = vrot.slane %v5634, 3
        %v5779 = vrot.slane %v5634, 4
        %v5780 = vrot.slane %v5634, 5
        %v5781 = vrot.slane %v5634, 6
        %v5782 = vrot.slane %v5634, 7
        %v5783 = vrot.slane %v5635, 1
        %v5784 = vrot.slane %v5635, 2
        %v5785 = vrot.slane %v5635, 3
        %v5786 = vrot.slane %v5635, 4
        %v5787 = vrot.slane %v5635, 5
        %v5788 = vrot.slane %v5635, 6
        %v5789 = vrot.slane %v5635, 7
        %v5790 = vrot.slane %v5636, 1
        %v5791 = vrot.slane %v5636, 2
        %v5792 = vrot.slane %v5636, 3
        %v5793 = vrot.slane %v5636, 4
        %v5794 = vrot.slane %v5636, 5
        %v5795 = vrot.slane %v5636, 6
        %v5796 = vrot.slane %v5636, 7
        %v5797 = vrot.slane %v5637, 1
        %v5798 = vrot.slane %v5637, 2
        %v5799 = vrot.slane %v5637, 3
        %v5800 = vrot.slane %v5637, 4
        %v5801 = vrot.slane %v5637, 5
        %v5802 = vrot.slane %v5637, 6
        %v5803 = vrot.slane %v5637, 7
        %v5804 = vld [vmem:[#allocation6] sm:$0xff]
        %v5805 = vld [vmem:[#allocation6 + $0x8] sm:$0xff]
        %v5806 = vld [vmem:[#allocation6 + $0x10] sm:$0xff]
        %v5807 = vld [vmem:[#allocation6 + $0x18] sm:$0xff]
        %v5808 = vld [vmem:[#allocation6 + $0x20] sm:$0xff]
        %v5809 = vld [vmem:[#allocation6 + $0x28] sm:$0xff]
        %v5810 = vld [vmem:[#allocation6 + $0x30] sm:$0xff]
        %v5811 = vld [vmem:[#allocation6 + $0x38] sm:$0xff]
        %v5812 = vld [vmem:[#allocation6 + $0x40] sm:$0xff]
        %v5813 = vld [vmem:[#allocation6 + $0x48] sm:$0xff]
        %v5814 = vld [vmem:[#allocation6 + $0x50] sm:$0xff]
        %v5815 = vld [vmem:[#allocation6 + $0x58] sm:$0xff]
        %v5816 = vld [vmem:[#allocation6 + $0x60] sm:$0xff]
        %v5817 = vld [vmem:[#allocation6 + $0x68] sm:$0xff]
        %v5818 = vld [vmem:[#allocation6 + $0x70] sm:$0xff]
        %v5819 = vld [vmem:[#allocation6 + $0x78] sm:$0xff]
        %v5820 = vld [vmem:[#allocation6 + $0x80] sm:$0xff]
        %v5821 = vld [vmem:[#allocation6 + $0x88] sm:$0xff]
        %v5822 = vld [vmem:[#allocation6 + $0x90] sm:$0xff]
        %v5823 = vld [vmem:[#allocation6 + $0x98] sm:$0xff]
        %v5824 = vld [vmem:[#allocation6 + $0xa0] sm:$0xff]
        %v5825 = vld [vmem:[#allocation6 + $0xa8] sm:$0xff]
        %v5826 = vld [vmem:[#allocation6 + $0xb0] sm:$0xff]
        %v5827 = vld [vmem:[#allocation6 + $0xb8] sm:$0xff]
        %v5828 = vld [vmem:[#allocation6 + $0xc0] sm:$0xff]
        %v5829 = vld [vmem:[#allocation6 + $0xc8] sm:$0xff]
        %v5830 = vld [vmem:[#allocation6 + $0xd0] sm:$0xff]
        %v5831 = vld [vmem:[#allocation6 + $0xd8] sm:$0xff]
        %v5832 = vld [vmem:[#allocation6 + $0xe0] sm:$0xff]
        %v5833 = vld [vmem:[#allocation6 + $0xe8] sm:$0xff]
        %v5834 = vld [vmem:[#allocation6 + $0xf0] sm:$0xff]
        %v5835 = vld [vmem:[#allocation6 + $0xf8] sm:$0xff]
        %v5836 = vld [vmem:[#allocation6 + $0x100] sm:$0xff]
        %v5837 = vld [vmem:[#allocation6 + $0x108] sm:$0xff]
        %v5838 = vld [vmem:[#allocation6 + $0x110] sm:$0xff]
        %v5839 = vld [vmem:[#allocation6 + $0x118] sm:$0xff]
        %v5840 = vld [vmem:[#allocation6 + $0x120] sm:$0xff]
        %v5841 = vld [vmem:[#allocation6 + $0x128] sm:$0xff]
        %v5842 = vld [vmem:[#allocation6 + $0x130] sm:$0xff]
        %v5843 = vld [vmem:[#allocation6 + $0x138] sm:$0xff]
        %v5844 = vld [vmem:[#allocation6 + $0x140] sm:$0xff]
        %v5845 = vld [vmem:[#allocation6 + $0x148] sm:$0xff]
        %v5846 = vld [vmem:[#allocation6 + $0x150] sm:$0xff]
        %v5847 = vld [vmem:[#allocation6 + $0x158] sm:$0xff]
        %v5848 = vld [vmem:[#allocation6 + $0x160] sm:$0xff]
        %v5849 = vld [vmem:[#allocation6 + $0x168] sm:$0xff]
        %v5850 = vld [vmem:[#allocation6 + $0x170] sm:$0xff]
        %v5851 = vld [vmem:[#allocation6 + $0x178] sm:$0xff]
        %v5852 = vld [vmem:[#allocation6 + $0x180] sm:$0xff]
        %v5853 = vld [vmem:[#allocation6 + $0x188] sm:$0xff]
        %v5854 = vld [vmem:[#allocation6 + $0x190] sm:$0xff]
        %v5855 = vld [vmem:[#allocation6 + $0x198] sm:$0xff]
        %v5856 = vld [vmem:[#allocation6 + $0x1a0] sm:$0xff]
        %v5857 = vld [vmem:[#allocation6 + $0x1a8] sm:$0xff]
        %v5858 = vld [vmem:[#allocation6 + $0x1b0] sm:$0xff]
        %v5859 = vld [vmem:[#allocation6 + $0x1b8] sm:$0xff]
        %v5860 = vld [vmem:[#allocation6 + $0x1c0] sm:$0xff]
        %v5861 = vld [vmem:[#allocation6 + $0x1c8] sm:$0xff]
        %v5862 = vld [vmem:[#allocation6 + $0x1d0] sm:$0xff]
        %v5863 = vld [vmem:[#allocation6 + $0x1d8] sm:$0xff]
        %v5864 = vld [vmem:[#allocation6 + $0x1e0] sm:$0xff]
        %v5865 = vld [vmem:[#allocation6 + $0x1e8] sm:$0xff]
        %v5866 = vld [vmem:[#allocation6 + $0x1f0] sm:$0xff]
        %v5867 = vld [vmem:[#allocation6 + $0x1f8] sm:$0xff]
        %v5868 = vld [vmem:[#allocation6 + $0x200] sm:$0xff]
        %v5869 = vld [vmem:[#allocation6 + $0x208] sm:$0xff]
        %v5870 = vld [vmem:[#allocation6 + $0x210] sm:$0xff]
        %v5871 = vld [vmem:[#allocation6 + $0x218] sm:$0xff]
        %v5872 = vld [vmem:[#allocation6 + $0x220] sm:$0xff]
        %v5873 = vld [vmem:[#allocation6 + $0x228] sm:$0xff]
        %v5874 = vld [vmem:[#allocation6 + $0x230] sm:$0xff]
        %v5875 = vld [vmem:[#allocation6 + $0x238] sm:$0xff]
        %v5876 = vld [vmem:[#allocation6 + $0x240] sm:$0xff]
        %v5877 = vld [vmem:[#allocation6 + $0x248] sm:$0xff]
        %v5878 = vld [vmem:[#allocation6 + $0x250] sm:$0xff]
        %v5879 = vld [vmem:[#allocation6 + $0x258] sm:$0xff]
        %v5880 = vld [vmem:[#allocation6 + $0x260] sm:$0xff]
        %v5881 = vld [vmem:[#allocation6 + $0x268] sm:$0xff]
        %v5882 = vld [vmem:[#allocation6 + $0x270] sm:$0xff]
        %v5883 = vld [vmem:[#allocation6 + $0x278] sm:$0xff]
        %v5884 = vld [vmem:[#allocation6 + $0x280] sm:$0xff]
        %v5885 = vld [vmem:[#allocation6 + $0x288] sm:$0xff]
        %v5886 = vld [vmem:[#allocation6 + $0x290] sm:$0xff]
        %v5887 = vld [vmem:[#allocation6 + $0x298] sm:$0xff]
        %v5888 = vld [vmem:[#allocation6 + $0x2a0] sm:$0xff]
        %v5889 = vld [vmem:[#allocation6 + $0x2a8] sm:$0xff]
        %v5890 = vld [vmem:[#allocation6 + $0x2b0] sm:$0xff]
        %v5891 = vld [vmem:[#allocation6 + $0x2b8] sm:$0xff]
        %v5892 = vld [vmem:[#allocation6 + $0x2c0] sm:$0xff]
        %v5893 = vld [vmem:[#allocation6 + $0x2c8] sm:$0xff]
        %v5894 = vld [vmem:[#allocation6 + $0x2d0] sm:$0xff]
        %v5895 = vld [vmem:[#allocation6 + $0x2d8] sm:$0xff]
        %v5896 = vld [vmem:[#allocation6 + $0x2e0] sm:$0xff]
        %v5897 = vld [vmem:[#allocation6 + $0x2e8] sm:$0xff]
        %v5898 = vld [vmem:[#allocation6 + $0x2f0] sm:$0xff]
        %v5899 = vld [vmem:[#allocation6 + $0x2f8] sm:$0xff]
        %v5900 = vld [vmem:[#allocation6 + $0x300] sm:$0xff]
        %v5901 = vld [vmem:[#allocation6 + $0x308] sm:$0xff]
        %v5902 = vld [vmem:[#allocation6 + $0x310] sm:$0xff]
        %v5903 = vld [vmem:[#allocation6 + $0x318] sm:$0xff]
        %v5904 = vld [vmem:[#allocation6 + $0x320] sm:$0xff]
        %v5905 = vld [vmem:[#allocation6 + $0x328] sm:$0xff]
        %v5906 = vld [vmem:[#allocation6 + $0x330] sm:$0xff]
        %v5907 = vld [vmem:[#allocation6 + $0x338] sm:$0xff]
        %v5908 = vld [vmem:[#allocation6 + $0x340] sm:$0xff]
        %v5909 = vld [vmem:[#allocation6 + $0x348] sm:$0xff]
        %v5910 = vld [vmem:[#allocation6 + $0x350] sm:$0xff]
        %v5911 = vld [vmem:[#allocation6 + $0x358] sm:$0xff]
        %v5912 = vld [vmem:[#allocation6 + $0x360] sm:$0xff]
        %v5913 = vld [vmem:[#allocation6 + $0x368] sm:$0xff]
        %v5914 = vld [vmem:[#allocation6 + $0x370] sm:$0xff]
        %v5915 = vld [vmem:[#allocation6 + $0x378] sm:$0xff]
        %v5916 = vld [vmem:[#allocation6 + $0x380] sm:$0xff]
        %v5917 = vld [vmem:[#allocation6 + $0x388] sm:$0xff]
        %v5918 = vld [vmem:[#allocation6 + $0x390] sm:$0xff]
        %v5919 = vld [vmem:[#allocation6 + $0x398] sm:$0xff]
        %v5920 = vld [vmem:[#allocation6 + $0x3a0] sm:$0xff]
        %v5921 = vld [vmem:[#allocation6 + $0x3a8] sm:$0xff]
        %v5922 = vld [vmem:[#allocation6 + $0x3b0] sm:$0xff]
        %v5923 = vld [vmem:[#allocation6 + $0x3b8] sm:$0xff]
        %v5924 = vld [vmem:[#allocation6 + $0x3c0] sm:$0xff]
        %v5925 = vld [vmem:[#allocation6 + $0x3c8] sm:$0xff]
        %v5926 = vld [vmem:[#allocation6 + $0x3d0] sm:$0xff]
        %v5927 = vld [vmem:[#allocation6 + $0x3d8] sm:$0xff]
        %v5928 = vld [vmem:[#allocation6 + $0x3e0] sm:$0xff]
        %v5929 = vld [vmem:[#allocation6 + $0x3e8] sm:$0xff]
        %v5930 = vld [vmem:[#allocation6 + $0x3f0] sm:$0xff]
        %v5931 = vld [vmem:[#allocation6 + $0x3f8] sm:$0xff]
        %v5932 = vld [vmem:[#allocation6 + $0x400] sm:$0xff]
        %v5933 = vld [vmem:[#allocation6 + $0x408] sm:$0xff]
        %v5934 = vld [vmem:[#allocation6 + $0x410] sm:$0xff]
        %v5935 = vld [vmem:[#allocation6 + $0x418] sm:$0xff]
        %v5936 = vld [vmem:[#allocation6 + $0x420] sm:$0xff]
        %v5937 = vld [vmem:[#allocation6 + $0x428] sm:$0xff]
        %v5938 = vld [vmem:[#allocation6 + $0x430] sm:$0xff]
        %v5939 = vld [vmem:[#allocation6 + $0x438] sm:$0xff]
        %v5940 = vld [vmem:[#allocation6 + $0x440] sm:$0xff]
        %v5941 = vld [vmem:[#allocation6 + $0x448] sm:$0xff]
        %v5942 = vld [vmem:[#allocation6 + $0x450] sm:$0xff]
        %v5943 = vld [vmem:[#allocation6 + $0x458] sm:$0xff]
        %v5944 = vld [vmem:[#allocation6 + $0x460] sm:$0xff]
        %v5945 = vld [vmem:[#allocation6 + $0x468] sm:$0xff]
        %v5946 = vld [vmem:[#allocation6 + $0x470] sm:$0xff]
        %v5947 = vld [vmem:[#allocation6 + $0x478] sm:$0xff]
        %v5948 = vld [vmem:[%s5] sm:$0x1]
        %v5950 = vperm.slane %v5948, 0
        %v5953 = vrot.slane 0.0, 7
        %v5954 = vsel %vm3059, %v5953, 0.0
        %v5955 = vrot.slane 0.0, 6
        %v5956 = vsel %vm3062, %v5955, %v5954
        %v5957 = vrot.slane 0.0, 5
        %v5958 = vsel %vm3065, %v5957, %v5956
        %v5959 = vrot.slane 0.0, 4
        %v5960 = vsel %vm3068, %v5959, %v5958
        %v5961 = vrot.slane %v5691, 3
        %v5962 = vsel %vm3071, %v5961, %v5960
        %v5963 = vrot.slane %v5693, 2
        %v5964 = vsel %vm3074, %v5963, %v5962
        %v5965 = vrot.slane %v5695, 1
        %v5966 = vsel %vm3077, %v5965, %v5964
        %v5967 = vsel %vm3068, %v5694, %v5958
        %v5968 = vrot.slane %v5692, 3
        %v5969 = vsel %vm3071, %v5968, %v5967
        %v5970 = vrot.slane %v5694, 2
        %v5971 = vsel %vm3074, %v5970, %v5969
        %v5972 = vrot.slane %v5696, 1
        %v5973 = vsel %vm3077, %v5972, %v5971
        %v5974 = vrot.slane %v5691, 4
        %v5975 = vsel %vm3068, %v5974, %v5958
        %v5976 = vrot.slane %v5693, 3
        %v5977 = vsel %vm3071, %v5976, %v5975
        %v5978 = vrot.slane %v5695, 2
        %v5979 = vsel %vm3074, %v5978, %v5977
        %v5980 = vrot.slane %v5697, 1
        %v5981 = vsel %vm3077, %v5980, %v5979
        %v5982 = vrot.slane %v5684, 7
        %v5983 = vsel %vm3059, %v5982, 0.0
        %v5984 = vrot.slane %v5686, 6
        %v5985 = vsel %vm3062, %v5984, %v5983
        %v5986 = vrot.slane %v5688, 5
        %v5987 = vsel %vm3065, %v5986, %v5985
        %v5988 = vsel %vm3068, %v5959, %v5987
        %v5989 = vrot.slane %v5698, 3
        %v5990 = vsel %vm3071, %v5989, %v5988
        %v5991 = vrot.slane %v5700, 2
        %v5992 = vsel %vm3074, %v5991, %v5990
        %v5993 = vrot.slane %v5702, 1
        %v5994 = vsel %vm3077, %v5993, %v5992
        %v5995 = vrot.slane %v5685, 7
        %v5996 = vsel %vm3059, %v5995, %v4199
        %v5997 = vrot.slane %v5687, 6
        %v5998 = vsel %vm3062, %v5997, %v5996
        %v5999 = vrot.slane %v5689, 5
        %v6000 = vsel %vm3065, %v5999, %v5998
        %v6001 = vsel %vm3068, %v5701, %v6000
        %v6002 = vrot.slane %v5699, 3
        %v6003 = vsel %vm3071, %v6002, %v6001
        %v6004 = vrot.slane %v5701, 2
        %v6005 = vsel %vm3074, %v6004, %v6003
        %v6006 = vrot.slane %v5703, 1
        %v6007 = vsel %vm3077, %v6006, %v6005
        %v6008 = vrot.slane %v5686, 7
        %v6009 = vsel %vm3059, %v6008, %v5684
        %v6010 = vrot.slane %v5688, 6
        %v6011 = vsel %vm3062, %v6010, %v6009
        %v6012 = vrot.slane %v5690, 5
        %v6013 = vsel %vm3065, %v6012, %v6011
        %v6014 = vrot.slane %v5698, 4
        %v6015 = vsel %vm3068, %v6014, %v6013
        %v6016 = vrot.slane %v5700, 3
        %v6017 = vsel %vm3071, %v6016, %v6015
        %v6018 = vrot.slane %v5702, 2
        %v6019 = vsel %vm3074, %v6018, %v6017
        %v6020 = vrot.slane %v5704, 1
        %v6021 = vsel %vm3077, %v6020, %v6019
        %v6022 = vrot.slane %v5691, 7
        %v6023 = vsel %vm3059, %v6022, 0.0
        %v6024 = vrot.slane %v5693, 6
        %v6025 = vsel %vm3062, %v6024, %v6023
        %v6026 = vrot.slane %v5695, 5
        %v6027 = vsel %vm3065, %v6026, %v6025
        %v6028 = vsel %vm3068, %v5959, %v6027
        %v6029 = vrot.slane %v5705, 3
        %v6030 = vsel %vm3071, %v6029, %v6028
        %v6031 = vrot.slane %v5707, 2
        %v6032 = vsel %vm3074, %v6031, %v6030
        %v6033 = vrot.slane %v5709, 1
        %v6034 = vsel %vm3077, %v6033, %v6032
        %v6035 = vrot.slane %v5692, 7
        %v6036 = vsel %vm3059, %v6035, %v4200
        %v6037 = vrot.slane %v5694, 6
        %v6038 = vsel %vm3062, %v6037, %v6036
        %v6039 = vrot.slane %v5696, 5
        %v6040 = vsel %vm3065, %v6039, %v6038
        %v6041 = vsel %vm3068, %v5708, %v6040
        %v6042 = vrot.slane %v5706, 3
        %v6043 = vsel %vm3071, %v6042, %v6041
        %v6044 = vrot.slane %v5708, 2
        %v6045 = vsel %vm3074, %v6044, %v6043
        %v6046 = vrot.slane %v5710, 1
        %v6047 = vsel %vm3077, %v6046, %v6045
        %v6048 = vrot.slane %v5693, 7
        %v6049 = vsel %vm3059, %v6048, %v5691
        %v6050 = vrot.slane %v5695, 6
        %v6051 = vsel %vm3062, %v6050, %v6049
        %v6052 = vrot.slane %v5697, 5
        %v6053 = vsel %vm3065, %v6052, %v6051
        %v6054 = vrot.slane %v5705, 4
        %v6055 = vsel %vm3068, %v6054, %v6053
        %v6056 = vrot.slane %v5707, 3
        %v6057 = vsel %vm3071, %v6056, %v6055
        %v6058 = vrot.slane %v5709, 2
        %v6059 = vsel %vm3074, %v6058, %v6057
        %v6060 = vrot.slane %v5711, 1
        %v6061 = vsel %vm3077, %v6060, %v6059
        %v6062 = vrot.slane %v5705, 7
        %v6063 = vsel %vm3059, %v6062, 0.0
        %v6064 = vrot.slane %v5707, 6
        %v6065 = vsel %vm3062, %v6064, %v6063
        %v6066 = vrot.slane %v5709, 5
        %v6067 = vsel %vm3065, %v6066, %v6065
        %v6068 = vsel %vm3068, %v5959, %v6067
        %v6069 = vrot.slane %v5719, 3
        %v6070 = vsel %vm3071, %v6069, %v6068
        %v6071 = vrot.slane %v5721, 2
        %v6072 = vsel %vm3074, %v6071, %v6070
        %v6073 = vrot.slane %v5723, 1
        %v6074 = vsel %vm3077, %v6073, %v6072
        %v6075 = vrot.slane %v5706, 7
        %v6076 = vsel %vm3059, %v6075, %v4202
        %v6077 = vrot.slane %v5708, 6
        %v6078 = vsel %vm3062, %v6077, %v6076
        %v6079 = vrot.slane %v5710, 5
        %v6080 = vsel %vm3065, %v6079, %v6078
        %v6081 = vsel %vm3068, %v5722, %v6080
        %v6082 = vrot.slane %v5720, 3
        %v6083 = vsel %vm3071, %v6082, %v6081
        %v6084 = vrot.slane %v5722, 2
        %v6085 = vsel %vm3074, %v6084, %v6083
        %v6086 = vrot.slane %v5724, 1
        %v6087 = vsel %vm3077, %v6086, %v6085
        %v6088 = vrot.slane %v5707, 7
        %v6089 = vsel %vm3059, %v6088, %v5705
        %v6090 = vrot.slane %v5709, 6
        %v6091 = vsel %vm3062, %v6090, %v6089
        %v6092 = vrot.slane %v5711, 5
        %v6093 = vsel %vm3065, %v6092, %v6091
        %v6094 = vrot.slane %v5719, 4
        %v6095 = vsel %vm3068, %v6094, %v6093
        %v6096 = vrot.slane %v5721, 3
        %v6097 = vsel %vm3071, %v6096, %v6095
        %v6098 = vrot.slane %v5723, 2
        %v6099 = vsel %vm3074, %v6098, %v6097
        %v6100 = vrot.slane %v5725, 1
        %v6101 = vsel %vm3077, %v6100, %v6099
        %v6102 = vrot.slane %v5712, 7
        %v6103 = vsel %vm3059, %v6102, 0.0
        %v6104 = vrot.slane %v5714, 6
        %v6105 = vsel %vm3062, %v6104, %v6103
        %v6106 = vrot.slane %v5716, 5
        %v6107 = vsel %vm3065, %v6106, %v6105
        %v6108 = vsel %vm3068, %v5959, %v6107
        %v6109 = vrot.slane %v5726, 3
        %v6110 = vsel %vm3071, %v6109, %v6108
        %v6111 = vrot.slane %v5728, 2
        %v6112 = vsel %vm3074, %v6111, %v6110
        %v6113 = vrot.slane %v5730, 1
        %v6114 = vsel %vm3077, %v6113, %v6112
        %v6115 = vrot.slane %v5713, 7
        %v6116 = vsel %vm3059, %v6115, %v4203
        %v6117 = vrot.slane %v5715, 6
        %v6118 = vsel %vm3062, %v6117, %v6116
        %v6119 = vrot.slane %v5717, 5
        %v6120 = vsel %vm3065, %v6119, %v6118
        %v6121 = vsel %vm3068, %v5729, %v6120
        %v6122 = vrot.slane %v5727, 3
        %v6123 = vsel %vm3071, %v6122, %v6121
        %v6124 = vrot.slane %v5729, 2
        %v6125 = vsel %vm3074, %v6124, %v6123
        %v6126 = vrot.slane %v5731, 1
        %v6127 = vsel %vm3077, %v6126, %v6125
        %v6128 = vrot.slane %v5714, 7
        %v6129 = vsel %vm3059, %v6128, %v5712
        %v6130 = vrot.slane %v5716, 6
        %v6131 = vsel %vm3062, %v6130, %v6129
        %v6132 = vrot.slane %v5718, 5
        %v6133 = vsel %vm3065, %v6132, %v6131
        %v6134 = vrot.slane %v5726, 4
        %v6135 = vsel %vm3068, %v6134, %v6133
        %v6136 = vrot.slane %v5728, 3
        %v6137 = vsel %vm3071, %v6136, %v6135
        %v6138 = vrot.slane %v5730, 2
        %v6139 = vsel %vm3074, %v6138, %v6137
        %v6140 = vrot.slane %v5732, 1
        %v6141 = vsel %vm3077, %v6140, %v6139
        %v6142 = vrot.slane %v5719, 7
        %v6143 = vsel %vm3059, %v6142, 0.0
        %v6144 = vrot.slane %v5721, 6
        %v6145 = vsel %vm3062, %v6144, %v6143
        %v6146 = vrot.slane %v5723, 5
        %v6147 = vsel %vm3065, %v6146, %v6145
        %v6148 = vsel %vm3068, %v5959, %v6147
        %v6149 = vrot.slane %v5733, 3
        %v6150 = vsel %vm3071, %v6149, %v6148
        %v6151 = vrot.slane %v5735, 2
        %v6152 = vsel %vm3074, %v6151, %v6150
        %v6153 = vrot.slane %v5737, 1
        %v6154 = vsel %vm3077, %v6153, %v6152
        %v6155 = vrot.slane %v5720, 7
        %v6156 = vsel %vm3059, %v6155, %v4204
        %v6157 = vrot.slane %v5722, 6
        %v6158 = vsel %vm3062, %v6157, %v6156
        %v6159 = vrot.slane %v5724, 5
        %v6160 = vsel %vm3065, %v6159, %v6158
        %v6161 = vsel %vm3068, %v5736, %v6160
        %v6162 = vrot.slane %v5734, 3
        %v6163 = vsel %vm3071, %v6162, %v6161
        %v6164 = vrot.slane %v5736, 2
        %v6165 = vsel %vm3074, %v6164, %v6163
        %v6166 = vrot.slane %v5738, 1
        %v6167 = vsel %vm3077, %v6166, %v6165
        %v6168 = vrot.slane %v5721, 7
        %v6169 = vsel %vm3059, %v6168, %v5719
        %v6170 = vrot.slane %v5723, 6
        %v6171 = vsel %vm3062, %v6170, %v6169
        %v6172 = vrot.slane %v5725, 5
        %v6173 = vsel %vm3065, %v6172, %v6171
        %v6174 = vrot.slane %v5733, 4
        %v6175 = vsel %vm3068, %v6174, %v6173
        %v6176 = vrot.slane %v5735, 3
        %v6177 = vsel %vm3071, %v6176, %v6175
        %v6178 = vrot.slane %v5737, 2
        %v6179 = vsel %vm3074, %v6178, %v6177
        %v6180 = vrot.slane %v5739, 1
        %v6181 = vsel %vm3077, %v6180, %v6179
        %6200 = vmatpush.msra.mxu0 %v5819
        %6201 = vmatpush.msra.mxu0 %v5818
        %6202 = vmatpush.msra.mxu0 %v5817
        %6203 = vmatpush.msra.mxu0 %v5816
        %6204 = vmatpush.msra.mxu0 %v5815
        %6205 = vmatpush.msra.mxu0 %v5814
        %6206 = vmatpush.msra.mxu0 %v5813
        %6207 = vmatpush.msra.mxu0 %v5812
        %6208 = vmatpush.msra.mxu0 %v5811
        %6209 = vmatpush.msra.mxu0 %v5810
        %6210 = vmatpush.msra.mxu0 %v5809
        %6211 = vmatpush.msra.mxu0 %v5808
        %6212 = vmatpush.msra.mxu0 %v5807
        %6213 = vmatpush.msra.mxu0 %v5806
        %6214 = vmatpush.msra.mxu0 %v5805
        %6215 = vmatpush.msra.mxu0 %v5804
        %6216 = vmatmul.f32.gmra.mxu0 %v5966
        %v6217 = vpop.f32.mrf.mxu0
        %v6218 = vadd.f32 %v5950, %v6217
        %6219 = vmatmul.f32.gmra.mxu0 %v6074
        %v6220 = vpop.f32.mrf.mxu0
        %v6221 = vadd.f32 %v5950, %v6220
        %6222 = vdwg.mxu0
        %6223 = vmatpush.msra.mxu0 %v5835
        %6224 = vmatpush.msra.mxu0 %v5834
        %6225 = vmatpush.msra.mxu0 %v5833
        %6226 = vmatpush.msra.mxu0 %v5832
        %6227 = vmatpush.msra.mxu0 %v5831
        %6228 = vmatpush.msra.mxu0 %v5830
        %6229 = vmatpush.msra.mxu0 %v5829
        %6230 = vmatpush.msra.mxu0 %v5828
        %6231 = vmatpush.msra.mxu0 %v5827
        %6232 = vmatpush.msra.mxu0 %v5826
        %6233 = vmatpush.msra.mxu0 %v5825
        %6234 = vmatpush.msra.mxu0 %v5824
        %6235 = vmatpush.msra.mxu0 %v5823
        %6236 = vmatpush.msra.mxu0 %v5822
        %6237 = vmatpush.msra.mxu0 %v5821
        %6238 = vmatpush.msra.mxu0 %v5820
        %6239 = vmatmul.f32.gmra.mxu0 %v5973
        %v6240 = vpop.f32.mrf.mxu0
        %v6241 = vadd.f32 %v6218, %v6240
        %6242 = vmatmul.f32.gmra.mxu0 %v6087
        %v6243 = vpop.f32.mrf.mxu0
        %v6244 = vadd.f32 %v6221, %v6243
        %6245 = vdwg.mxu0
        %6246 = vmatpush.msra.mxu0 %v5851
        %6247 = vmatpush.msra.mxu0 %v5850
        %6248 = vmatpush.msra.mxu0 %v5849
        %6249 = vmatpush.msra.mxu0 %v5848
        %6250 = vmatpush.msra.mxu0 %v5847
        %6251 = vmatpush.msra.mxu0 %v5846
        %6252 = vmatpush.msra.mxu0 %v5845
        %6253 = vmatpush.msra.mxu0 %v5844
        %6254 = vmatpush.msra.mxu0 %v5843
        %6255 = vmatpush.msra.mxu0 %v5842
        %6256 = vmatpush.msra.mxu0 %v5841
        %6257 = vmatpush.msra.mxu0 %v5840
        %6258 = vmatpush.msra.mxu0 %v5839
        %6259 = vmatpush.msra.mxu0 %v5838
        %6260 = vmatpush.msra.mxu0 %v5837
        %6261 = vmatpush.msra.mxu0 %v5836
        %6262 = vmatmul.f32.gmra.mxu0 %v5981
        %v6263 = vpop.f32.mrf.mxu0
        %v6264 = vadd.f32 %v6241, %v6263
        %6265 = vmatmul.f32.gmra.mxu0 %v6101
        %v6266 = vpop.f32.mrf.mxu0
        %v6267 = vadd.f32 %v6244, %v6266
        %6268 = vdwg.mxu0
        %6269 = vmatpush.msra.mxu0 %v5867
        %6270 = vmatpush.msra.mxu0 %v5866
        %6271 = vmatpush.msra.mxu0 %v5865
        %6272 = vmatpush.msra.mxu0 %v5864
        %6273 = vmatpush.msra.mxu0 %v5863
        %6274 = vmatpush.msra.mxu0 %v5862
        %6275 = vmatpush.msra.mxu0 %v5861
        %6276 = vmatpush.msra.mxu0 %v5860
        %6277 = vmatpush.msra.mxu0 %v5859
        %6278 = vmatpush.msra.mxu0 %v5858
        %6279 = vmatpush.msra.mxu0 %v5857
        %6280 = vmatpush.msra.mxu0 %v5856
        %6281 = vmatpush.msra.mxu0 %v5855
        %6282 = vmatpush.msra.mxu0 %v5854
        %6283 = vmatpush.msra.mxu0 %v5853
        %6284 = vmatpush.msra.mxu0 %v5852
        %6285 = vmatmul.f32.gmra.mxu0 %v5994
        %v6286 = vpop.f32.mrf.mxu0
        %v6287 = vadd.f32 %v6264, %v6286
        %6288 = vmatmul.f32.gmra.mxu0 %v6114
        %v6289 = vpop.f32.mrf.mxu0
        %v6290 = vadd.f32 %v6267, %v6289
        %6291 = vdwg.mxu0
        %6292 = vmatpush.msra.mxu0 %v5883
        %6293 = vmatpush.msra.mxu0 %v5882
        %6294 = vmatpush.msra.mxu0 %v5881
        %6295 = vmatpush.msra.mxu0 %v5880
        %6296 = vmatpush.msra.mxu0 %v5879
        %6297 = vmatpush.msra.mxu0 %v5878
        %6298 = vmatpush.msra.mxu0 %v5877
        %6299 = vmatpush.msra.mxu0 %v5876
        %6300 = vmatpush.msra.mxu0 %v5875
        %6301 = vmatpush.msra.mxu0 %v5874
        %6302 = vmatpush.msra.mxu0 %v5873
        %6303 = vmatpush.msra.mxu0 %v5872
        %6304 = vmatpush.msra.mxu0 %v5871
        %6305 = vmatpush.msra.mxu0 %v5870
        %6306 = vmatpush.msra.mxu0 %v5869
        %6307 = vmatpush.msra.mxu0 %v5868
        %6308 = vmatmul.f32.gmra.mxu0 %v6007
        %v6309 = vpop.f32.mrf.mxu0
        %v6310 = vadd.f32 %v6287, %v6309
        %6311 = vmatmul.f32.gmra.mxu0 %v6127
        %v6312 = vpop.f32.mrf.mxu0
        %v6313 = vadd.f32 %v6290, %v6312
        %6314 = vdwg.mxu0
        %6315 = vmatpush.msra.mxu0 %v5899
        %6316 = vmatpush.msra.mxu0 %v5898
        %6317 = vmatpush.msra.mxu0 %v5897
        %6318 = vmatpush.msra.mxu0 %v5896
        %6319 = vmatpush.msra.mxu0 %v5895
        %6320 = vmatpush.msra.mxu0 %v5894
        %6321 = vmatpush.msra.mxu0 %v5893
        %6322 = vmatpush.msra.mxu0 %v5892
        %6323 = vmatpush.msra.mxu0 %v5891
        %6324 = vmatpush.msra.mxu0 %v5890
        %6325 = vmatpush.msra.mxu0 %v5889
        %6326 = vmatpush.msra.mxu0 %v5888
        %6327 = vmatpush.msra.mxu0 %v5887
        %6328 = vmatpush.msra.mxu0 %v5886
        %6329 = vmatpush.msra.mxu0 %v5885
        %6330 = vmatpush.msra.mxu0 %v5884
        %6331 = vmatmul.f32.gmra.mxu0 %v6021
        %v6332 = vpop.f32.mrf.mxu0
        %v6333 = vadd.f32 %v6310, %v6332
        %6334 = vmatmul.f32.gmra.mxu0 %v6141
        %v6335 = vpop.f32.mrf.mxu0
        %v6336 = vadd.f32 %v6313, %v6335
        %6337 = vdwg.mxu0
        %6338 = vmatpush.msra.mxu0 %v5915
        %6339 = vmatpush.msra.mxu0 %v5914
        %6340 = vmatpush.msra.mxu0 %v5913
        %6341 = vmatpush.msra.mxu0 %v5912
        %6342 = vmatpush.msra.mxu0 %v5911
        %6343 = vmatpush.msra.mxu0 %v5910
        %6344 = vmatpush.msra.mxu0 %v5909
        %6345 = vmatpush.msra.mxu0 %v5908
        %6346 = vmatpush.msra.mxu0 %v5907
        %6347 = vmatpush.msra.mxu0 %v5906
        %6348 = vmatpush.msra.mxu0 %v5905
        %6349 = vmatpush.msra.mxu0 %v5904
        %6350 = vmatpush.msra.mxu0 %v5903
        %6351 = vmatpush.msra.mxu0 %v5902
        %6352 = vmatpush.msra.mxu0 %v5901
        %6353 = vmatpush.msra.mxu0 %v5900
        %6354 = vmatmul.f32.gmra.mxu0 %v6034
        %v6355 = vpop.f32.mrf.mxu0
        %v6356 = vadd.f32 %v6333, %v6355
        %6357 = vmatmul.f32.gmra.mxu0 %v6154
        %v6358 = vpop.f32.mrf.mxu0
        %v6359 = vadd.f32 %v6336, %v6358
        %6360 = vdwg.mxu0
        %6361 = vmatpush.msra.mxu0 %v5931
        %6362 = vmatpush.msra.mxu0 %v5930
        %6363 = vmatpush.msra.mxu0 %v5929
        %6364 = vmatpush.msra.mxu0 %v5928
        %6365 = vmatpush.msra.mxu0 %v5927
        %6366 = vmatpush.msra.mxu0 %v5926
        %6367 = vmatpush.msra.mxu0 %v5925
        %6368 = vmatpush.msra.mxu0 %v5924
        %6369 = vmatpush.msra.mxu0 %v5923
        %6370 = vmatpush.msra.mxu0 %v5922
        %6371 = vmatpush.msra.mxu0 %v5921
        %6372 = vmatpush.msra.mxu0 %v5920
        %6373 = vmatpush.msra.mxu0 %v5919
        %6374 = vmatpush.msra.mxu0 %v5918
        %6375 = vmatpush.msra.mxu0 %v5917
        %6376 = vmatpush.msra.mxu0 %v5916
        %6377 = vmatmul.f32.gmra.mxu0 %v6047
        %v6378 = vpop.f32.mrf.mxu0
        %v6379 = vadd.f32 %v6356, %v6378
        %6380 = vmatmul.f32.gmra.mxu0 %v6167
        %v6381 = vpop.f32.mrf.mxu0
        %v6382 = vadd.f32 %v6359, %v6381
        %6383 = vdwg.mxu0
        %6384 = vmatpush.msra.mxu0 %v5947
        %6385 = vmatpush.msra.mxu0 %v5946
        %6386 = vmatpush.msra.mxu0 %v5945
        %6387 = vmatpush.msra.mxu0 %v5944
        %6388 = vmatpush.msra.mxu0 %v5943
        %6389 = vmatpush.msra.mxu0 %v5942
        %6390 = vmatpush.msra.mxu0 %v5941
        %6391 = vmatpush.msra.mxu0 %v5940
        %6392 = vmatpush.msra.mxu0 %v5939
        %6393 = vmatpush.msra.mxu0 %v5938
        %6394 = vmatpush.msra.mxu0 %v5937
        %6395 = vmatpush.msra.mxu0 %v5936
        %6396 = vmatpush.msra.mxu0 %v5935
        %6397 = vmatpush.msra.mxu0 %v5934
        %6398 = vmatpush.msra.mxu0 %v5933
        %6399 = vmatpush.msra.mxu0 %v5932
        %6400 = vmatmul.f32.gmra.mxu0 %v6061
        %v6401 = vpop.f32.mrf.mxu0
        %v6402 = vadd.f32 %v6379, %v6401
        %6403 = vmatmul.f32.gmra.mxu0 %v6181
        %v6404 = vpop.f32.mrf.mxu0
        %v6405 = vadd.f32 %v6382, %v6404
        %6406 = vdwg.mxu0
        %v6407 = vmax.f32 %v6402, 0.0
        %v6408 = vmax.f32 %v6405, 0.0
        %v6409 = vrot.slane %v5755, 3
        %v6410 = vsel %vm3071, %v6409, %v5960
        %v6411 = vrot.slane %v5757, 2
        %v6412 = vsel %vm3074, %v6411, %v6410
        %v6413 = vrot.slane %v5759, 1
        %v6414 = vsel %vm3077, %v6413, %v6412
        %v6415 = vsel %vm3068, %v5758, %v5958
        %v6416 = vrot.slane %v5756, 3
        %v6417 = vsel %vm3071, %v6416, %v6415
        %v6418 = vrot.slane %v5758, 2
        %v6419 = vsel %vm3074, %v6418, %v6417
        %v6420 = vrot.slane %v5760, 1
        %v6421 = vsel %vm3077, %v6420, %v6419
        %v6422 = vrot.slane %v5755, 4
        %v6423 = vsel %vm3068, %v6422, %v5958
        %v6424 = vrot.slane %v5757, 3
        %v6425 = vsel %vm3071, %v6424, %v6423
        %v6426 = vrot.slane %v5759, 2
        %v6427 = vsel %vm3074, %v6426, %v6425
        %v6428 = vrot.slane %v5761, 1
        %v6429 = vsel %vm3077, %v6428, %v6427
        %v6430 = vrot.slane %v5748, 7
        %v6431 = vsel %vm3059, %v6430, 0.0
        %v6432 = vrot.slane %v5750, 6
        %v6433 = vsel %vm3062, %v6432, %v6431
        %v6434 = vrot.slane %v5752, 5
        %v6435 = vsel %vm3065, %v6434, %v6433
        %v6436 = vsel %vm3068, %v5959, %v6435
        %v6437 = vrot.slane %v5762, 3
        %v6438 = vsel %vm3071, %v6437, %v6436
        %v6439 = vrot.slane %v5764, 2
        %v6440 = vsel %vm3074, %v6439, %v6438
        %v6441 = vrot.slane %v5766, 1
        %v6442 = vsel %vm3077, %v6441, %v6440
        %v6443 = vrot.slane %v5749, 7
        %v6444 = vsel %vm3059, %v6443, %v5630
        %v6445 = vrot.slane %v5751, 6
        %v6446 = vsel %vm3062, %v6445, %v6444
        %v6447 = vrot.slane %v5753, 5
        %v6448 = vsel %vm3065, %v6447, %v6446
        %v6449 = vsel %vm3068, %v5765, %v6448
        %v6450 = vrot.slane %v5763, 3
        %v6451 = vsel %vm3071, %v6450, %v6449
        %v6452 = vrot.slane %v5765, 2
        %v6453 = vsel %vm3074, %v6452, %v6451
        %v6454 = vrot.slane %v5767, 1
        %v6455 = vsel %vm3077, %v6454, %v6453
        %v6456 = vrot.slane %v5750, 7
        %v6457 = vsel %vm3059, %v6456, %v5748
        %v6458 = vrot.slane %v5752, 6
        %v6459 = vsel %vm3062, %v6458, %v6457
        %v6460 = vrot.slane %v5754, 5
        %v6461 = vsel %vm3065, %v6460, %v6459
        %v6462 = vrot.slane %v5762, 4
        %v6463 = vsel %vm3068, %v6462, %v6461
        %v6464 = vrot.slane %v5764, 3
        %v6465 = vsel %vm3071, %v6464, %v6463
        %v6466 = vrot.slane %v5766, 2
        %v6467 = vsel %vm3074, %v6466, %v6465
        %v6468 = vrot.slane %v5768, 1
        %v6469 = vsel %vm3077, %v6468, %v6467
        %v6470 = vrot.slane %v5755, 7
        %v6471 = vsel %vm3059, %v6470, 0.0
        %v6472 = vrot.slane %v5757, 6
        %v6473 = vsel %vm3062, %v6472, %v6471
        %v6474 = vrot.slane %v5759, 5
        %v6475 = vsel %vm3065, %v6474, %v6473
        %v6476 = vsel %vm3068, %v5959, %v6475
        %v6477 = vrot.slane %v5769, 3
        %v6478 = vsel %vm3071, %v6477, %v6476
        %v6479 = vrot.slane %v5771, 2
        %v6480 = vsel %vm3074, %v6479, %v6478
        %v6481 = vrot.slane %v5773, 1
        %v6482 = vsel %vm3077, %v6481, %v6480
        %v6483 = vrot.slane %v5756, 7
        %v6484 = vsel %vm3059, %v6483, %v5631
        %v6485 = vrot.slane %v5758, 6
        %v6486 = vsel %vm3062, %v6485, %v6484
        %v6487 = vrot.slane %v5760, 5
        %v6488 = vsel %vm3065, %v6487, %v6486
        %v6489 = vsel %vm3068, %v5772, %v6488
        %v6490 = vrot.slane %v5770, 3
        %v6491 = vsel %vm3071, %v6490, %v6489
        %v6492 = vrot.slane %v5772, 2
        %v6493 = vsel %vm3074, %v6492, %v6491
        %v6494 = vrot.slane %v5774, 1
        %v6495 = vsel %vm3077, %v6494, %v6493
        %v6496 = vrot.slane %v5757, 7
        %v6497 = vsel %vm3059, %v6496, %v5755
        %v6498 = vrot.slane %v5759, 6
        %v6499 = vsel %vm3062, %v6498, %v6497
        %v6500 = vrot.slane %v5761, 5
        %v6501 = vsel %vm3065, %v6500, %v6499
        %v6502 = vrot.slane %v5769, 4
        %v6503 = vsel %vm3068, %v6502, %v6501
        %v6504 = vrot.slane %v5771, 3
        %v6505 = vsel %vm3071, %v6504, %v6503
        %v6506 = vrot.slane %v5773, 2
        %v6507 = vsel %vm3074, %v6506, %v6505
        %v6508 = vrot.slane %v5775, 1
        %v6509 = vsel %vm3077, %v6508, %v6507
        %v6510 = vrot.slane %v5769, 7
        %v6511 = vsel %vm3059, %v6510, 0.0
        %v6512 = vrot.slane %v5771, 6
        %v6513 = vsel %vm3062, %v6512, %v6511
        %v6514 = vrot.slane %v5773, 5
        %v6515 = vsel %vm3065, %v6514, %v6513
        %v6516 = vsel %vm3068, %v5959, %v6515
        %v6517 = vrot.slane %v5783, 3
        %v6518 = vsel %vm3071, %v6517, %v6516
        %v6519 = vrot.slane %v5785, 2
        %v6520 = vsel %vm3074, %v6519, %v6518
        %v6521 = vrot.slane %v5787, 1
        %v6522 = vsel %vm3077, %v6521, %v6520
        %v6523 = vrot.slane %v5770, 7
        %v6524 = vsel %vm3059, %v6523, %v5633
        %v6525 = vrot.slane %v5772, 6
        %v6526 = vsel %vm3062, %v6525, %v6524
        %v6527 = vrot.slane %v5774, 5
        %v6528 = vsel %vm3065, %v6527, %v6526
        %v6529 = vsel %vm3068, %v5786, %v6528
        %v6530 = vrot.slane %v5784, 3
        %v6531 = vsel %vm3071, %v6530, %v6529
        %v6532 = vrot.slane %v5786, 2
        %v6533 = vsel %vm3074, %v6532, %v6531
        %v6534 = vrot.slane %v5788, 1
        %v6535 = vsel %vm3077, %v6534, %v6533
        %v6536 = vrot.slane %v5771, 7
        %v6537 = vsel %vm3059, %v6536, %v5769
        %v6538 = vrot.slane %v5773, 6
        %v6539 = vsel %vm3062, %v6538, %v6537
        %v6540 = vrot.slane %v5775, 5
        %v6541 = vsel %vm3065, %v6540, %v6539
        %v6542 = vrot.slane %v5783, 4
        %v6543 = vsel %vm3068, %v6542, %v6541
        %v6544 = vrot.slane %v5785, 3
        %v6545 = vsel %vm3071, %v6544, %v6543
        %v6546 = vrot.slane %v5787, 2
        %v6547 = vsel %vm3074, %v6546, %v6545
        %v6548 = vrot.slane %v5789, 1
        %v6549 = vsel %vm3077, %v6548, %v6547
        %v6550 = vrot.slane %v5776, 7
        %v6551 = vsel %vm3059, %v6550, 0.0
        %v6552 = vrot.slane %v5778, 6
        %v6553 = vsel %vm3062, %v6552, %v6551
        %v6554 = vrot.slane %v5780, 5
        %v6555 = vsel %vm3065, %v6554, %v6553
        %v6556 = vsel %vm3068, %v5959, %v6555
        %v6557 = vrot.slane %v5790, 3
        %v6558 = vsel %vm3071, %v6557, %v6556
        %v6559 = vrot.slane %v5792, 2
        %v6560 = vsel %vm3074, %v6559, %v6558
        %v6561 = vrot.slane %v5794, 1
        %v6562 = vsel %vm3077, %v6561, %v6560
        %v6563 = vrot.slane %v5777, 7
        %v6564 = vsel %vm3059, %v6563, %v5634
        %v6565 = vrot.slane %v5779, 6
        %v6566 = vsel %vm3062, %v6565, %v6564
        %v6567 = vrot.slane %v5781, 5
        %v6568 = vsel %vm3065, %v6567, %v6566
        %v6569 = vsel %vm3068, %v5793, %v6568
        %v6570 = vrot.slane %v5791, 3
        %v6571 = vsel %vm3071, %v6570, %v6569
        %v6572 = vrot.slane %v5793, 2
        %v6573 = vsel %vm3074, %v6572, %v6571
        %v6574 = vrot.slane %v5795, 1
        %v6575 = vsel %vm3077, %v6574, %v6573
        %v6576 = vrot.slane %v5778, 7
        %v6577 = vsel %vm3059, %v6576, %v5776
        %v6578 = vrot.slane %v5780, 6
        %v6579 = vsel %vm3062, %v6578, %v6577
        %v6580 = vrot.slane %v5782, 5
        %v6581 = vsel %vm3065, %v6580, %v6579
        %v6582 = vrot.slane %v5790, 4
        %v6583 = vsel %vm3068, %v6582, %v6581
        %v6584 = vrot.slane %v5792, 3
        %v6585 = vsel %vm3071, %v6584, %v6583
        %v6586 = vrot.slane %v5794, 2
        %v6587 = vsel %vm3074, %v6586, %v6585
        %v6588 = vrot.slane %v5796, 1
        %v6589 = vsel %vm3077, %v6588, %v6587
        %v6590 = vrot.slane %v5783, 7
        %v6591 = vsel %vm3059, %v6590, 0.0
        %v6592 = vrot.slane %v5785, 6
        %v6593 = vsel %vm3062, %v6592, %v6591
        %v6594 = vrot.slane %v5787, 5
        %v6595 = vsel %vm3065, %v6594, %v6593
        %v6596 = vsel %vm3068, %v5959, %v6595
        %v6597 = vrot.slane %v5797, 3
        %v6598 = vsel %vm3071, %v6597, %v6596
        %v6599 = vrot.slane %v5799, 2
        %v6600 = vsel %vm3074, %v6599, %v6598
        %v6601 = vrot.slane %v5801, 1
        %v6602 = vsel %vm3077, %v6601, %v6600
        %v6603 = vrot.slane %v5784, 7
        %v6604 = vsel %vm3059, %v6603, %v5635
        %v6605 = vrot.slane %v5786, 6
        %v6606 = vsel %vm3062, %v6605, %v6604
        %v6607 = vrot.slane %v5788, 5
        %v6608 = vsel %vm3065, %v6607, %v6606
        %v6609 = vsel %vm3068, %v5800, %v6608
        %v6610 = vrot.slane %v5798, 3
        %v6611 = vsel %vm3071, %v6610, %v6609
        %v6612 = vrot.slane %v5800, 2
        %v6613 = vsel %vm3074, %v6612, %v6611
        %v6614 = vrot.slane %v5802, 1
        %v6615 = vsel %vm3077, %v6614, %v6613
        %v6616 = vrot.slane %v5785, 7
        %v6617 = vsel %vm3059, %v6616, %v5783
        %v6618 = vrot.slane %v5787, 6
        %v6619 = vsel %vm3062, %v6618, %v6617
        %v6620 = vrot.slane %v5789, 5
        %v6621 = vsel %vm3065, %v6620, %v6619
        %v6622 = vrot.slane %v5797, 4
        %v6623 = vsel %vm3068, %v6622, %v6621
        %v6624 = vrot.slane %v5799, 3
        %v6625 = vsel %vm3071, %v6624, %v6623
        %v6626 = vrot.slane %v5801, 2
        %v6627 = vsel %vm3074, %v6626, %v6625
        %v6628 = vrot.slane %v5803, 1
        %v6629 = vsel %vm3077, %v6628, %v6627
        %6648 = vmatpush.msra.mxu0 %v5819
        %6649 = vmatpush.msra.mxu0 %v5818
        %6650 = vmatpush.msra.mxu0 %v5817
        %6651 = vmatpush.msra.mxu0 %v5816
        %6652 = vmatpush.msra.mxu0 %v5815
        %6653 = vmatpush.msra.mxu0 %v5814
        %6654 = vmatpush.msra.mxu0 %v5813
        %6655 = vmatpush.msra.mxu0 %v5812
        %6656 = vmatpush.msra.mxu0 %v5811
        %6657 = vmatpush.msra.mxu0 %v5810
        %6658 = vmatpush.msra.mxu0 %v5809
        %6659 = vmatpush.msra.mxu0 %v5808
        %6660 = vmatpush.msra.mxu0 %v5807
        %6661 = vmatpush.msra.mxu0 %v5806
        %6662 = vmatpush.msra.mxu0 %v5805
        %6663 = vmatpush.msra.mxu0 %v5804
        %6664 = vmatmul.f32.gmra.mxu0 %v6414
        %v6665 = vpop.f32.mrf.mxu0
        %v6666 = vadd.f32 %v5950, %v6665
        %6667 = vmatmul.f32.gmra.mxu0 %v6522
        %v6668 = vpop.f32.mrf.mxu0
        %v6669 = vadd.f32 %v5950, %v6668
        %6670 = vdwg.mxu0
        %6671 = vmatpush.msra.mxu0 %v5835
        %6672 = vmatpush.msra.mxu0 %v5834
        %6673 = vmatpush.msra.mxu0 %v5833
        %6674 = vmatpush.msra.mxu0 %v5832
        %6675 = vmatpush.msra.mxu0 %v5831
        %6676 = vmatpush.msra.mxu0 %v5830
        %6677 = vmatpush.msra.mxu0 %v5829
        %6678 = vmatpush.msra.mxu0 %v5828
        %6679 = vmatpush.msra.mxu0 %v5827
        %6680 = vmatpush.msra.mxu0 %v5826
        %6681 = vmatpush.msra.mxu0 %v5825
        %6682 = vmatpush.msra.mxu0 %v5824
        %6683 = vmatpush.msra.mxu0 %v5823
        %6684 = vmatpush.msra.mxu0 %v5822
        %6685 = vmatpush.msra.mxu0 %v5821
        %6686 = vmatpush.msra.mxu0 %v5820
        %6687 = vmatmul.f32.gmra.mxu0 %v6421
        %v6688 = vpop.f32.mrf.mxu0
        %v6689 = vadd.f32 %v6666, %v6688
        %6690 = vmatmul.f32.gmra.mxu0 %v6535
        %v6691 = vpop.f32.mrf.mxu0
        %v6692 = vadd.f32 %v6669, %v6691
        %6693 = vdwg.mxu0
        %6694 = vmatpush.msra.mxu0 %v5851
        %6695 = vmatpush.msra.mxu0 %v5850
        %6696 = vmatpush.msra.mxu0 %v5849
        %6697 = vmatpush.msra.mxu0 %v5848
        %6698 = vmatpush.msra.mxu0 %v5847
        %6699 = vmatpush.msra.mxu0 %v5846
        %6700 = vmatpush.msra.mxu0 %v5845
        %6701 = vmatpush.msra.mxu0 %v5844
        %6702 = vmatpush.msra.mxu0 %v5843
        %6703 = vmatpush.msra.mxu0 %v5842
        %6704 = vmatpush.msra.mxu0 %v5841
        %6705 = vmatpush.msra.mxu0 %v5840
        %6706 = vmatpush.msra.mxu0 %v5839
        %6707 = vmatpush.msra.mxu0 %v5838
        %6708 = vmatpush.msra.mxu0 %v5837
        %6709 = vmatpush.msra.mxu0 %v5836
        %6710 = vmatmul.f32.gmra.mxu0 %v6429
        %v6711 = vpop.f32.mrf.mxu0
        %v6712 = vadd.f32 %v6689, %v6711
        %6713 = vmatmul.f32.gmra.mxu0 %v6549
        %v6714 = vpop.f32.mrf.mxu0
        %v6715 = vadd.f32 %v6692, %v6714
        %6716 = vdwg.mxu0
        %6717 = vmatpush.msra.mxu0 %v5867
        %6718 = vmatpush.msra.mxu0 %v5866
        %6719 = vmatpush.msra.mxu0 %v5865
        %6720 = vmatpush.msra.mxu0 %v5864
        %6721 = vmatpush.msra.mxu0 %v5863
        %6722 = vmatpush.msra.mxu0 %v5862
        %6723 = vmatpush.msra.mxu0 %v5861
        %6724 = vmatpush.msra.mxu0 %v5860
        %6725 = vmatpush.msra.mxu0 %v5859
        %6726 = vmatpush.msra.mxu0 %v5858
        %6727 = vmatpush.msra.mxu0 %v5857
        %6728 = vmatpush.msra.mxu0 %v5856
        %6729 = vmatpush.msra.mxu0 %v5855
        %6730 = vmatpush.msra.mxu0 %v5854
        %6731 = vmatpush.msra.mxu0 %v5853
        %6732 = vmatpush.msra.mxu0 %v5852
        %6733 = vmatmul.f32.gmra.mxu0 %v6442
        %v6734 = vpop.f32.mrf.mxu0
        %v6735 = vadd.f32 %v6712, %v6734
        %6736 = vmatmul.f32.gmra.mxu0 %v6562
        %v6737 = vpop.f32.mrf.mxu0
        %v6738 = vadd.f32 %v6715, %v6737
        %6739 = vdwg.mxu0
        %6740 = vmatpush.msra.mxu0 %v5883
        %6741 = vmatpush.msra.mxu0 %v5882
        %6742 = vmatpush.msra.mxu0 %v5881
        %6743 = vmatpush.msra.mxu0 %v5880
        %6744 = vmatpush.msra.mxu0 %v5879
        %6745 = vmatpush.msra.mxu0 %v5878
        %6746 = vmatpush.msra.mxu0 %v5877
        %6747 = vmatpush.msra.mxu0 %v5876
        %6748 = vmatpush.msra.mxu0 %v5875
        %6749 = vmatpush.msra.mxu0 %v5874
        %6750 = vmatpush.msra.mxu0 %v5873
        %6751 = vmatpush.msra.mxu0 %v5872
        %6752 = vmatpush.msra.mxu0 %v5871
        %6753 = vmatpush.msra.mxu0 %v5870
        %6754 = vmatpush.msra.mxu0 %v5869
        %6755 = vmatpush.msra.mxu0 %v5868
        %6756 = vmatmul.f32.gmra.mxu0 %v6455
        %v6757 = vpop.f32.mrf.mxu0
        %v6758 = vadd.f32 %v6735, %v6757
        %6759 = vmatmul.f32.gmra.mxu0 %v6575
        %v6760 = vpop.f32.mrf.mxu0
        %v6761 = vadd.f32 %v6738, %v6760
        %6762 = vdwg.mxu0
        %6763 = vmatpush.msra.mxu0 %v5899
        %6764 = vmatpush.msra.mxu0 %v5898
        %6765 = vmatpush.msra.mxu0 %v5897
        %6766 = vmatpush.msra.mxu0 %v5896
        %6767 = vmatpush.msra.mxu0 %v5895
        %6768 = vmatpush.msra.mxu0 %v5894
        %6769 = vmatpush.msra.mxu0 %v5893
        %6770 = vmatpush.msra.mxu0 %v5892
        %6771 = vmatpush.msra.mxu0 %v5891
        %6772 = vmatpush.msra.mxu0 %v5890
        %6773 = vmatpush.msra.mxu0 %v5889
        %6774 = vmatpush.msra.mxu0 %v5888
        %6775 = vmatpush.msra.mxu0 %v5887
        %6776 = vmatpush.msra.mxu0 %v5886
        %6777 = vmatpush.msra.mxu0 %v5885
        %6778 = vmatpush.msra.mxu0 %v5884
        %6779 = vmatmul.f32.gmra.mxu0 %v6469
        %v6780 = vpop.f32.mrf.mxu0
        %v6781 = vadd.f32 %v6758, %v6780
        %6782 = vmatmul.f32.gmra.mxu0 %v6589
        %v6783 = vpop.f32.mrf.mxu0
        %v6784 = vadd.f32 %v6761, %v6783
        %6785 = vdwg.mxu0
        %6786 = vmatpush.msra.mxu0 %v5915
        %6787 = vmatpush.msra.mxu0 %v5914
        %6788 = vmatpush.msra.mxu0 %v5913
        %6789 = vmatpush.msra.mxu0 %v5912
        %6790 = vmatpush.msra.mxu0 %v5911
        %6791 = vmatpush.msra.mxu0 %v5910
        %6792 = vmatpush.msra.mxu0 %v5909
        %6793 = vmatpush.msra.mxu0 %v5908
        %6794 = vmatpush.msra.mxu0 %v5907
        %6795 = vmatpush.msra.mxu0 %v5906
        %6796 = vmatpush.msra.mxu0 %v5905
        %6797 = vmatpush.msra.mxu0 %v5904
        %6798 = vmatpush.msra.mxu0 %v5903
        %6799 = vmatpush.msra.mxu0 %v5902
        %6800 = vmatpush.msra.mxu0 %v5901
        %6801 = vmatpush.msra.mxu0 %v5900
        %6802 = vmatmul.f32.gmra.mxu0 %v6482
        %v6803 = vpop.f32.mrf.mxu0
        %v6804 = vadd.f32 %v6781, %v6803
        %6805 = vmatmul.f32.gmra.mxu0 %v6602
        %v6806 = vpop.f32.mrf.mxu0
        %v6807 = vadd.f32 %v6784, %v6806
        %6808 = vdwg.mxu0
        %6809 = vmatpush.msra.mxu0 %v5931
        %6810 = vmatpush.msra.mxu0 %v5930
        %6811 = vmatpush.msra.mxu0 %v5929
        %6812 = vmatpush.msra.mxu0 %v5928
        %6813 = vmatpush.msra.mxu0 %v5927
        %6814 = vmatpush.msra.mxu0 %v5926
        %6815 = vmatpush.msra.mxu0 %v5925
        %6816 = vmatpush.msra.mxu0 %v5924
        %6817 = vmatpush.msra.mxu0 %v5923
        %6818 = vmatpush.msra.mxu0 %v5922
        %6819 = vmatpush.msra.mxu0 %v5921
        %6820 = vmatpush.msra.mxu0 %v5920
        %6821 = vmatpush.msra.mxu0 %v5919
        %6822 = vmatpush.msra.mxu0 %v5918
        %6823 = vmatpush.msra.mxu0 %v5917
        %6824 = vmatpush.msra.mxu0 %v5916
        %6825 = vmatmul.f32.gmra.mxu0 %v6495
        %v6826 = vpop.f32.mrf.mxu0
        %v6827 = vadd.f32 %v6804, %v6826
        %6828 = vmatmul.f32.gmra.mxu0 %v6615
        %v6829 = vpop.f32.mrf.mxu0
        %v6830 = vadd.f32 %v6807, %v6829
        %6831 = vdwg.mxu0
        %6832 = vmatpush.msra.mxu0 %v5947
        %6833 = vmatpush.msra.mxu0 %v5946
        %6834 = vmatpush.msra.mxu0 %v5945
        %6835 = vmatpush.msra.mxu0 %v5944
        %6836 = vmatpush.msra.mxu0 %v5943
        %6837 = vmatpush.msra.mxu0 %v5942
        %6838 = vmatpush.msra.mxu0 %v5941
        %6839 = vmatpush.msra.mxu0 %v5940
        %6840 = vmatpush.msra.mxu0 %v5939
        %6841 = vmatpush.msra.mxu0 %v5938
        %6842 = vmatpush.msra.mxu0 %v5937
        %6843 = vmatpush.msra.mxu0 %v5936
        %6844 = vmatpush.msra.mxu0 %v5935
        %6845 = vmatpush.msra.mxu0 %v5934
        %6846 = vmatpush.msra.mxu0 %v5933
        %6847 = vmatpush.msra.mxu0 %v5932
        %6848 = vmatmul.f32.gmra.mxu0 %v6509
        %v6849 = vpop.f32.mrf.mxu0
        %v6850 = vadd.f32 %v6827, %v6849
        %6851 = vmatmul.f32.gmra.mxu0 %v6629
        %v6852 = vpop.f32.mrf.mxu0
        %v6853 = vadd.f32 %v6830, %v6852
        %6854 = vdwg.mxu0
        %v6855 = vmax.f32 %v6850, 0.0
        %v6856 = vmax.f32 %v6853, 0.0
        %v6857 = vsub.f32 %v6407, %v6855
        %v6858 = vsub.f32 %v6408, %v6856
        %v6859 = vand.u32 2147483647, %v6857
        %v6860 = vand.u32 2147483647, %v6858
        %v6861 = vadd.f32 %v6859, %v6860
        %v6862 = vrot.slane %v6861, 4
        %v6863 = vadd.f32 %v6861, %v6862
        %v6864 = vrot.slane %v6863, 2
        %v6865 = vadd.f32 %v6863, %v6864
        %v6866 = vrot.slane %v6865, 1
        %v6867 = vadd.f32 %v6865, %v6866
        %v6868 = vrcp.pop 512.0
        %v6869 = vmul.f32 512.0, %v6868
        %v6870 = vsub.f32 1.0, %v6869
        %v6871 = vmul.f32 %v6868, %v6870
        %v6872 = vadd.f32 %v6868, %v6871
        %vm6873 = vweird.f32 %v6868
        %v6874 = vsel %vm6873, %v6868, %v6872
        %v6875 = vmul.f32 %v6867, %v6874
        %v6876 = vadd.f32 %v5675, %v6875
        %v6879 = vrot.slane %v6407, 1
        %v6880 = vrot.slane %v6407, 2
        %v6881 = vrot.slane %v6407, 3
        %v6882 = vrot.slane %v6407, 4
        %v6883 = vrot.slane %v6407, 5
        %v6884 = vrot.slane %v6407, 6
        %v6885 = vrot.slane %v6407, 7
        %v6886 = vrot.slane %v6408, 1
        %v6887 = vrot.slane %v6408, 2
        %v6888 = vrot.slane %v6408, 3
        %v6889 = vrot.slane %v6408, 4
        %v6890 = vrot.slane %v6408, 5
        %v6891 = vrot.slane %v6408, 6
        %v6892 = vrot.slane %v6408, 7
        %v6895 = vrot.slane %v6855, 1
        %v6896 = vrot.slane %v6855, 2
        %v6897 = vrot.slane %v6855, 3
        %v6898 = vrot.slane %v6855, 4
        %v6899 = vrot.slane %v6855, 5
        %v6900 = vrot.slane %v6855, 6
        %v6901 = vrot.slane %v6855, 7
        %v6902 = vrot.slane %v6856, 1
        %v6903 = vrot.slane %v6856, 2
        %v6904 = vrot.slane %v6856, 3
        %v6905 = vrot.slane %v6856, 4
        %v6906 = vrot.slane %v6856, 5
        %v6907 = vrot.slane %v6856, 6
        %v6908 = vrot.slane %v6856, 7
        %v6909 = vld [vmem:[#allocation8] sm:$0xff]
        %v6910 = vld [vmem:[#allocation8 + $0x8] sm:$0xff]
        %v6911 = vld [vmem:[#allocation8 + $0x10] sm:$0xff]
        %v6912 = vld [vmem:[#allocation8 + $0x18] sm:$0xff]
        %v6913 = vld [vmem:[#allocation8 + $0x20] sm:$0xff]
        %v6914 = vld [vmem:[#allocation8 + $0x28] sm:$0xff]
        %v6915 = vld [vmem:[#allocation8 + $0x30] sm:$0xff]
        %v6916 = vld [vmem:[#allocation8 + $0x38] sm:$0xff]
        %v6917 = vld [vmem:[#allocation8 + $0x40] sm:$0xff]
        %v6918 = vld [vmem:[#allocation8 + $0x48] sm:$0xff]
        %v6919 = vld [vmem:[#allocation8 + $0x50] sm:$0xff]
        %v6920 = vld [vmem:[#allocation8 + $0x58] sm:$0xff]
        %v6921 = vld [vmem:[#allocation8 + $0x60] sm:$0xff]
        %v6922 = vld [vmem:[#allocation8 + $0x68] sm:$0xff]
        %v6923 = vld [vmem:[#allocation8 + $0x70] sm:$0xff]
        %v6924 = vld [vmem:[#allocation8 + $0x78] sm:$0xff]
        %v6925 = vld [vmem:[#allocation8 + $0x80] sm:$0xff]
        %v6926 = vld [vmem:[#allocation8 + $0x88] sm:$0xff]
        %v6927 = vld [vmem:[#allocation8 + $0x90] sm:$0xff]
        %v6928 = vld [vmem:[#allocation8 + $0x98] sm:$0xff]
        %v6929 = vld [vmem:[#allocation8 + $0xa0] sm:$0xff]
        %v6930 = vld [vmem:[#allocation8 + $0xa8] sm:$0xff]
        %v6931 = vld [vmem:[#allocation8 + $0xb0] sm:$0xff]
        %v6932 = vld [vmem:[#allocation8 + $0xb8] sm:$0xff]
        %v6933 = vld [vmem:[#allocation8 + $0xc0] sm:$0xff]
        %v6934 = vld [vmem:[#allocation8 + $0xc8] sm:$0xff]
        %v6935 = vld [vmem:[#allocation8 + $0xd0] sm:$0xff]
        %v6936 = vld [vmem:[#allocation8 + $0xd8] sm:$0xff]
        %v6937 = vld [vmem:[#allocation8 + $0xe0] sm:$0xff]
        %v6938 = vld [vmem:[#allocation8 + $0xe8] sm:$0xff]
        %v6939 = vld [vmem:[#allocation8 + $0xf0] sm:$0xff]
        %v6940 = vld [vmem:[#allocation8 + $0xf8] sm:$0xff]
        %v6941 = vld [vmem:[#allocation8 + $0x100] sm:$0xff]
        %v6942 = vld [vmem:[#allocation8 + $0x108] sm:$0xff]
        %v6943 = vld [vmem:[#allocation8 + $0x110] sm:$0xff]
        %v6944 = vld [vmem:[#allocation8 + $0x118] sm:$0xff]
        %v6945 = vld [vmem:[#allocation8 + $0x120] sm:$0xff]
        %v6946 = vld [vmem:[#allocation8 + $0x128] sm:$0xff]
        %v6947 = vld [vmem:[#allocation8 + $0x130] sm:$0xff]
        %v6948 = vld [vmem:[#allocation8 + $0x138] sm:$0xff]
        %v6949 = vld [vmem:[#allocation8 + $0x140] sm:$0xff]
        %v6950 = vld [vmem:[#allocation8 + $0x148] sm:$0xff]
        %v6951 = vld [vmem:[#allocation8 + $0x150] sm:$0xff]
        %v6952 = vld [vmem:[#allocation8 + $0x158] sm:$0xff]
        %v6953 = vld [vmem:[#allocation8 + $0x160] sm:$0xff]
        %v6954 = vld [vmem:[#allocation8 + $0x168] sm:$0xff]
        %v6955 = vld [vmem:[#allocation8 + $0x170] sm:$0xff]
        %v6956 = vld [vmem:[#allocation8 + $0x178] sm:$0xff]
        %v6957 = vld [vmem:[#allocation8 + $0x180] sm:$0xff]
        %v6958 = vld [vmem:[#allocation8 + $0x188] sm:$0xff]
        %v6959 = vld [vmem:[#allocation8 + $0x190] sm:$0xff]
        %v6960 = vld [vmem:[#allocation8 + $0x198] sm:$0xff]
        %v6961 = vld [vmem:[#allocation8 + $0x1a0] sm:$0xff]
        %v6962 = vld [vmem:[#allocation8 + $0x1a8] sm:$0xff]
        %v6963 = vld [vmem:[#allocation8 + $0x1b0] sm:$0xff]
        %v6964 = vld [vmem:[#allocation8 + $0x1b8] sm:$0xff]
        %v6965 = vld [vmem:[#allocation8 + $0x1c0] sm:$0xff]
        %v6966 = vld [vmem:[#allocation8 + $0x1c8] sm:$0xff]
        %v6967 = vld [vmem:[#allocation8 + $0x1d0] sm:$0xff]
        %v6968 = vld [vmem:[#allocation8 + $0x1d8] sm:$0xff]
        %v6969 = vld [vmem:[#allocation8 + $0x1e0] sm:$0xff]
        %v6970 = vld [vmem:[#allocation8 + $0x1e8] sm:$0xff]
        %v6971 = vld [vmem:[#allocation8 + $0x1f0] sm:$0xff]
        %v6972 = vld [vmem:[#allocation8 + $0x1f8] sm:$0xff]
        %v6973 = vld [vmem:[#allocation8 + $0x200] sm:$0xff]
        %v6974 = vld [vmem:[#allocation8 + $0x208] sm:$0xff]
        %v6975 = vld [vmem:[#allocation8 + $0x210] sm:$0xff]
        %v6976 = vld [vmem:[#allocation8 + $0x218] sm:$0xff]
        %v6977 = vld [vmem:[#allocation8 + $0x220] sm:$0xff]
        %v6978 = vld [vmem:[#allocation8 + $0x228] sm:$0xff]
        %v6979 = vld [vmem:[#allocation8 + $0x230] sm:$0xff]
        %v6980 = vld [vmem:[#allocation8 + $0x238] sm:$0xff]
        %v6981 = vld [vmem:[#allocation8 + $0x240] sm:$0xff]
        %v6982 = vld [vmem:[#allocation8 + $0x248] sm:$0xff]
        %v6983 = vld [vmem:[#allocation8 + $0x250] sm:$0xff]
        %v6984 = vld [vmem:[#allocation8 + $0x258] sm:$0xff]
        %v6985 = vld [vmem:[#allocation8 + $0x260] sm:$0xff]
        %v6986 = vld [vmem:[#allocation8 + $0x268] sm:$0xff]
        %v6987 = vld [vmem:[#allocation8 + $0x270] sm:$0xff]
        %v6988 = vld [vmem:[#allocation8 + $0x278] sm:$0xff]
        %v6989 = vld [vmem:[#allocation8 + $0x280] sm:$0xff]
        %v6990 = vld [vmem:[#allocation8 + $0x288] sm:$0xff]
        %v6991 = vld [vmem:[#allocation8 + $0x290] sm:$0xff]
        %v6992 = vld [vmem:[#allocation8 + $0x298] sm:$0xff]
        %v6993 = vld [vmem:[#allocation8 + $0x2a0] sm:$0xff]
        %v6994 = vld [vmem:[#allocation8 + $0x2a8] sm:$0xff]
        %v6995 = vld [vmem:[#allocation8 + $0x2b0] sm:$0xff]
        %v6996 = vld [vmem:[#allocation8 + $0x2b8] sm:$0xff]
        %v6997 = vld [vmem:[#allocation8 + $0x2c0] sm:$0xff]
        %v6998 = vld [vmem:[#allocation8 + $0x2c8] sm:$0xff]
        %v6999 = vld [vmem:[#allocation8 + $0x2d0] sm:$0xff]
        %v7000 = vld [vmem:[#allocation8 + $0x2d8] sm:$0xff]
        %v7001 = vld [vmem:[#allocation8 + $0x2e0] sm:$0xff]
        %v7002 = vld [vmem:[#allocation8 + $0x2e8] sm:$0xff]
        %v7003 = vld [vmem:[#allocation8 + $0x2f0] sm:$0xff]
        %v7004 = vld [vmem:[#allocation8 + $0x2f8] sm:$0xff]
        %v7005 = vld [vmem:[#allocation8 + $0x300] sm:$0xff]
        %v7006 = vld [vmem:[#allocation8 + $0x308] sm:$0xff]
        %v7007 = vld [vmem:[#allocation8 + $0x310] sm:$0xff]
        %v7008 = vld [vmem:[#allocation8 + $0x318] sm:$0xff]
        %v7009 = vld [vmem:[#allocation8 + $0x320] sm:$0xff]
        %v7010 = vld [vmem:[#allocation8 + $0x328] sm:$0xff]
        %v7011 = vld [vmem:[#allocation8 + $0x330] sm:$0xff]
        %v7012 = vld [vmem:[#allocation8 + $0x338] sm:$0xff]
        %v7013 = vld [vmem:[#allocation8 + $0x340] sm:$0xff]
        %v7014 = vld [vmem:[#allocation8 + $0x348] sm:$0xff]
        %v7015 = vld [vmem:[#allocation8 + $0x350] sm:$0xff]
        %v7016 = vld [vmem:[#allocation8 + $0x358] sm:$0xff]
        %v7017 = vld [vmem:[#allocation8 + $0x360] sm:$0xff]
        %v7018 = vld [vmem:[#allocation8 + $0x368] sm:$0xff]
        %v7019 = vld [vmem:[#allocation8 + $0x370] sm:$0xff]
        %v7020 = vld [vmem:[#allocation8 + $0x378] sm:$0xff]
        %v7021 = vld [vmem:[#allocation8 + $0x380] sm:$0xff]
        %v7022 = vld [vmem:[#allocation8 + $0x388] sm:$0xff]
        %v7023 = vld [vmem:[#allocation8 + $0x390] sm:$0xff]
        %v7024 = vld [vmem:[#allocation8 + $0x398] sm:$0xff]
        %v7025 = vld [vmem:[#allocation8 + $0x3a0] sm:$0xff]
        %v7026 = vld [vmem:[#allocation8 + $0x3a8] sm:$0xff]
        %v7027 = vld [vmem:[#allocation8 + $0x3b0] sm:$0xff]
        %v7028 = vld [vmem:[#allocation8 + $0x3b8] sm:$0xff]
        %v7029 = vld [vmem:[#allocation8 + $0x3c0] sm:$0xff]
        %v7030 = vld [vmem:[#allocation8 + $0x3c8] sm:$0xff]
        %v7031 = vld [vmem:[#allocation8 + $0x3d0] sm:$0xff]
        %v7032 = vld [vmem:[#allocation8 + $0x3d8] sm:$0xff]
        %v7033 = vld [vmem:[#allocation8 + $0x3e0] sm:$0xff]
        %v7034 = vld [vmem:[#allocation8 + $0x3e8] sm:$0xff]
        %v7035 = vld [vmem:[#allocation8 + $0x3f0] sm:$0xff]
        %v7036 = vld [vmem:[#allocation8 + $0x3f8] sm:$0xff]
        %v7037 = vld [vmem:[#allocation8 + $0x400] sm:$0xff]
        %v7038 = vld [vmem:[#allocation8 + $0x408] sm:$0xff]
        %v7039 = vld [vmem:[#allocation8 + $0x410] sm:$0xff]
        %v7040 = vld [vmem:[#allocation8 + $0x418] sm:$0xff]
        %v7041 = vld [vmem:[#allocation8 + $0x420] sm:$0xff]
        %v7042 = vld [vmem:[#allocation8 + $0x428] sm:$0xff]
        %v7043 = vld [vmem:[#allocation8 + $0x430] sm:$0xff]
        %v7044 = vld [vmem:[#allocation8 + $0x438] sm:$0xff]
        %v7045 = vld [vmem:[#allocation8 + $0x440] sm:$0xff]
        %v7046 = vld [vmem:[#allocation8 + $0x448] sm:$0xff]
        %v7047 = vld [vmem:[#allocation8 + $0x450] sm:$0xff]
        %v7048 = vld [vmem:[#allocation8 + $0x458] sm:$0xff]
        %v7049 = vld [vmem:[#allocation8 + $0x460] sm:$0xff]
        %v7050 = vld [vmem:[#allocation8 + $0x468] sm:$0xff]
        %v7051 = vld [vmem:[#allocation8 + $0x470] sm:$0xff]
        %v7052 = vld [vmem:[#allocation8 + $0x478] sm:$0xff]
        %v7053 = vld [vmem:[%s7] sm:$0x1]
        %v7055 = vperm.slane %v7053, 0
        %v7057 = vrot.slane %v6883, 5
        %v7058 = vsel %vm3065, %v7057, %v5956
        %v7059 = vrot.slane %v6882, 6
        %v7060 = vsel %vm3062, %v7059, %v5954
        %v7061 = vrot.slane %v6884, 5
        %v7062 = vsel %vm3065, %v7061, %v7060
        %v7063 = vrot.slane %v6883, 6
        %v7064 = vsel %vm3062, %v7063, %v5954
        %v7065 = vrot.slane %v6885, 5
        %v7066 = vsel %vm3065, %v7065, %v7064
        %v7067 = vrot.slane %v6879, 7
        %v7068 = vsel %vm3059, %v7067, 0.0
        %v7069 = vsel %vm3062, %v5955, %v7068
        %v7070 = vrot.slane %v6886, 5
        %v7071 = vsel %vm3065, %v7070, %v7069
        %v7072 = vrot.slane %v6880, 7
        %v7073 = vsel %vm3059, %v7072, %v6407
        %v7074 = vsel %vm3062, %v6891, %v7073
        %v7075 = vrot.slane %v6887, 5
        %v7076 = vsel %vm3065, %v7075, %v7074
        %v7077 = vrot.slane %v6881, 7
        %v7078 = vsel %vm3059, %v7077, %v6879
        %v7079 = vrot.slane %v6886, 6
        %v7080 = vsel %vm3062, %v7079, %v7078
        %v7081 = vrot.slane %v6888, 5
        %v7082 = vsel %vm3065, %v7081, %v7080
        %v7083 = vrot.slane %v6883, 7
        %v7084 = vsel %vm3059, %v7083, 0.0
        %v7085 = vsel %vm3062, %v5955, %v7084
        %v7086 = vrot.slane %v6890, 5
        %v7087 = vsel %vm3065, %v7086, %v7085
        %v7088 = vrot.slane %v6884, 7
        %v7089 = vsel %vm3059, %v7088, %v6882
        %v7090 = vrot.slane %v6889, 6
        %v7091 = vsel %vm3062, %v7090, %v7089
        %v7092 = vrot.slane %v6891, 5
        %v7093 = vsel %vm3065, %v7092, %v7091
        %v7094 = vrot.slane %v6885, 7
        %v7095 = vsel %vm3059, %v7094, %v6883
        %v7096 = vrot.slane %v6890, 6
        %v7097 = vsel %vm3062, %v7096, %v7095
        %v7098 = vrot.slane %v6892, 5
        %v7099 = vsel %vm3065, %v7098, %v7097
        %7109 = vmatpush.msra.mxu0 %v6924
        %7110 = vmatpush.msra.mxu0 %v6923
        %7111 = vmatpush.msra.mxu0 %v6922
        %7112 = vmatpush.msra.mxu0 %v6921
        %7113 = vmatpush.msra.mxu0 %v6920
        %7114 = vmatpush.msra.mxu0 %v6919
        %7115 = vmatpush.msra.mxu0 %v6918
        %7116 = vmatpush.msra.mxu0 %v6917
        %7117 = vmatpush.msra.mxu0 %v6916
        %7118 = vmatpush.msra.mxu0 %v6915
        %7119 = vmatpush.msra.mxu0 %v6914
        %7120 = vmatpush.msra.mxu0 %v6913
        %7121 = vmatpush.msra.mxu0 %v6912
        %7122 = vmatpush.msra.mxu0 %v6911
        %7123 = vmatpush.msra.mxu0 %v6910
        %7124 = vmatpush.msra.mxu0 %v6909
        %7125 = vmatmul.f32.gmra.mxu0 %v7058
        %v7126 = vpop.f32.mrf.mxu0
        %v7127 = vadd.f32 %v7055, %v7126
        %7128 = vdwg.mxu0
        %7129 = vmatpush.msra.mxu0 %v6940
        %7130 = vmatpush.msra.mxu0 %v6939
        %7131 = vmatpush.msra.mxu0 %v6938
        %7132 = vmatpush.msra.mxu0 %v6937
        %7133 = vmatpush.msra.mxu0 %v6936
        %7134 = vmatpush.msra.mxu0 %v6935
        %7135 = vmatpush.msra.mxu0 %v6934
        %7136 = vmatpush.msra.mxu0 %v6933
        %7137 = vmatpush.msra.mxu0 %v6932
        %7138 = vmatpush.msra.mxu0 %v6931
        %7139 = vmatpush.msra.mxu0 %v6930
        %7140 = vmatpush.msra.mxu0 %v6929
        %7141 = vmatpush.msra.mxu0 %v6928
        %7142 = vmatpush.msra.mxu0 %v6927
        %7143 = vmatpush.msra.mxu0 %v6926
        %7144 = vmatpush.msra.mxu0 %v6925
        %7145 = vmatmul.f32.gmra.mxu0 %v7062
        %v7146 = vpop.f32.mrf.mxu0
        %v7147 = vadd.f32 %v7127, %v7146
        %7148 = vdwg.mxu0
        %7149 = vmatpush.msra.mxu0 %v6956
        %7150 = vmatpush.msra.mxu0 %v6955
        %7151 = vmatpush.msra.mxu0 %v6954
        %7152 = vmatpush.msra.mxu0 %v6953
        %7153 = vmatpush.msra.mxu0 %v6952
        %7154 = vmatpush.msra.mxu0 %v6951
        %7155 = vmatpush.msra.mxu0 %v6950
        %7156 = vmatpush.msra.mxu0 %v6949
        %7157 = vmatpush.msra.mxu0 %v6948
        %7158 = vmatpush.msra.mxu0 %v6947
        %7159 = vmatpush.msra.mxu0 %v6946
        %7160 = vmatpush.msra.mxu0 %v6945
        %7161 = vmatpush.msra.mxu0 %v6944
        %7162 = vmatpush.msra.mxu0 %v6943
        %7163 = vmatpush.msra.mxu0 %v6942
        %7164 = vmatpush.msra.mxu0 %v6941
        %7165 = vmatmul.f32.gmra.mxu0 %v7066
        %v7166 = vpop.f32.mrf.mxu0
        %v7167 = vadd.f32 %v7147, %v7166
        %7168 = vdwg.mxu0
        %7169 = vmatpush.msra.mxu0 %v6972
        %7170 = vmatpush.msra.mxu0 %v6971
        %7171 = vmatpush.msra.mxu0 %v6970
        %7172 = vmatpush.msra.mxu0 %v6969
        %7173 = vmatpush.msra.mxu0 %v6968
        %7174 = vmatpush.msra.mxu0 %v6967
        %7175 = vmatpush.msra.mxu0 %v6966
        %7176 = vmatpush.msra.mxu0 %v6965
        %7177 = vmatpush.msra.mxu0 %v6964
        %7178 = vmatpush.msra.mxu0 %v6963
        %7179 = vmatpush.msra.mxu0 %v6962
        %7180 = vmatpush.msra.mxu0 %v6961
        %7181 = vmatpush.msra.mxu0 %v6960
        %7182 = vmatpush.msra.mxu0 %v6959
        %7183 = vmatpush.msra.mxu0 %v6958
        %7184 = vmatpush.msra.mxu0 %v6957
        %7185 = vmatmul.f32.gmra.mxu0 %v7071
        %v7186 = vpop.f32.mrf.mxu0
        %v7187 = vadd.f32 %v7167, %v7186
        %7188 = vdwg.mxu0
        %7189 = vmatpush.msra.mxu0 %v6988
        %7190 = vmatpush.msra.mxu0 %v6987
        %7191 = vmatpush.msra.mxu0 %v6986
        %7192 = vmatpush.msra.mxu0 %v6985
        %7193 = vmatpush.msra.mxu0 %v6984
        %7194 = vmatpush.msra.mxu0 %v6983
        %7195 = vmatpush.msra.mxu0 %v6982
        %7196 = vmatpush.msra.mxu0 %v6981
        %7197 = vmatpush.msra.mxu0 %v6980
        %7198 = vmatpush.msra.mxu0 %v6979
        %7199 = vmatpush.msra.mxu0 %v6978
        %7200 = vmatpush.msra.mxu0 %v6977
        %7201 = vmatpush.msra.mxu0 %v6976
        %7202 = vmatpush.msra.mxu0 %v6975
        %7203 = vmatpush.msra.mxu0 %v6974
        %7204 = vmatpush.msra.mxu0 %v6973
        %7205 = vmatmul.f32.gmra.mxu0 %v7076
        %v7206 = vpop.f32.mrf.mxu0
        %v7207 = vadd.f32 %v7187, %v7206
        %7208 = vdwg.mxu0
        %7209 = vmatpush.msra.mxu0 %v7004
        %7210 = vmatpush.msra.mxu0 %v7003
        %7211 = vmatpush.msra.mxu0 %v7002
        %7212 = vmatpush.msra.mxu0 %v7001
        %7213 = vmatpush.msra.mxu0 %v7000
        %7214 = vmatpush.msra.mxu0 %v6999
        %7215 = vmatpush.msra.mxu0 %v6998
        %7216 = vmatpush.msra.mxu0 %v6997
        %7217 = vmatpush.msra.mxu0 %v6996
        %7218 = vmatpush.msra.mxu0 %v6995
        %7219 = vmatpush.msra.mxu0 %v6994
        %7220 = vmatpush.msra.mxu0 %v6993
        %7221 = vmatpush.msra.mxu0 %v6992
        %7222 = vmatpush.msra.mxu0 %v6991
        %7223 = vmatpush.msra.mxu0 %v6990
        %7224 = vmatpush.msra.mxu0 %v6989
        %7225 = vmatmul.f32.gmra.mxu0 %v7082
        %v7226 = vpop.f32.mrf.mxu0
        %v7227 = vadd.f32 %v7207, %v7226
        %7228 = vdwg.mxu0
        %7229 = vmatpush.msra.mxu0 %v7020
        %7230 = vmatpush.msra.mxu0 %v7019
        %7231 = vmatpush.msra.mxu0 %v7018
        %7232 = vmatpush.msra.mxu0 %v7017
        %7233 = vmatpush.msra.mxu0 %v7016
        %7234 = vmatpush.msra.mxu0 %v7015
        %7235 = vmatpush.msra.mxu0 %v7014
        %7236 = vmatpush.msra.mxu0 %v7013
        %7237 = vmatpush.msra.mxu0 %v7012
        %7238 = vmatpush.msra.mxu0 %v7011
        %7239 = vmatpush.msra.mxu0 %v7010
        %7240 = vmatpush.msra.mxu0 %v7009
        %7241 = vmatpush.msra.mxu0 %v7008
        %7242 = vmatpush.msra.mxu0 %v7007
        %7243 = vmatpush.msra.mxu0 %v7006
        %7244 = vmatpush.msra.mxu0 %v7005
        %7245 = vmatmul.f32.gmra.mxu0 %v7087
        %v7246 = vpop.f32.mrf.mxu0
        %v7247 = vadd.f32 %v7227, %v7246
        %7248 = vdwg.mxu0
        %7249 = vmatpush.msra.mxu0 %v7036
        %7250 = vmatpush.msra.mxu0 %v7035
        %7251 = vmatpush.msra.mxu0 %v7034
        %7252 = vmatpush.msra.mxu0 %v7033
        %7253 = vmatpush.msra.mxu0 %v7032
        %7254 = vmatpush.msra.mxu0 %v7031
        %7255 = vmatpush.msra.mxu0 %v7030
        %7256 = vmatpush.msra.mxu0 %v7029
        %7257 = vmatpush.msra.mxu0 %v7028
        %7258 = vmatpush.msra.mxu0 %v7027
        %7259 = vmatpush.msra.mxu0 %v7026
        %7260 = vmatpush.msra.mxu0 %v7025
        %7261 = vmatpush.msra.mxu0 %v7024
        %7262 = vmatpush.msra.mxu0 %v7023
        %7263 = vmatpush.msra.mxu0 %v7022
        %7264 = vmatpush.msra.mxu0 %v7021
        %7265 = vmatmul.f32.gmra.mxu0 %v7093
        %v7266 = vpop.f32.mrf.mxu0
        %v7267 = vadd.f32 %v7247, %v7266
        %7268 = vdwg.mxu0
        %7269 = vmatpush.msra.mxu0 %v7052
        %7270 = vmatpush.msra.mxu0 %v7051
        %7271 = vmatpush.msra.mxu0 %v7050
        %7272 = vmatpush.msra.mxu0 %v7049
        %7273 = vmatpush.msra.mxu0 %v7048
        %7274 = vmatpush.msra.mxu0 %v7047
        %7275 = vmatpush.msra.mxu0 %v7046
        %7276 = vmatpush.msra.mxu0 %v7045
        %7277 = vmatpush.msra.mxu0 %v7044
        %7278 = vmatpush.msra.mxu0 %v7043
        %7279 = vmatpush.msra.mxu0 %v7042
        %7280 = vmatpush.msra.mxu0 %v7041
        %7281 = vmatpush.msra.mxu0 %v7040
        %7282 = vmatpush.msra.mxu0 %v7039
        %7283 = vmatpush.msra.mxu0 %v7038
        %7284 = vmatpush.msra.mxu0 %v7037
        %7285 = vmatmul.f32.gmra.mxu0 %v7099
        %v7286 = vpop.f32.mrf.mxu0
        %v7287 = vadd.f32 %v7267, %v7286
        %7288 = vdwg.mxu0
        %v7289 = vmax.f32 %v7287, 0.0
        %v7290 = vrot.slane %v6899, 5
        %v7291 = vsel %vm3065, %v7290, %v5956
        %v7292 = vrot.slane %v6898, 6
        %v7293 = vsel %vm3062, %v7292, %v5954
        %v7294 = vrot.slane %v6900, 5
        %v7295 = vsel %vm3065, %v7294, %v7293
        %v7296 = vrot.slane %v6899, 6
        %v7297 = vsel %vm3062, %v7296, %v5954
        %v7298 = vrot.slane %v6901, 5
        %v7299 = vsel %vm3065, %v7298, %v7297
        %v7300 = vrot.slane %v6895, 7
        %v7301 = vsel %vm3059, %v7300, 0.0
        %v7302 = vsel %vm3062, %v5955, %v7301
        %v7303 = vrot.slane %v6902, 5
        %v7304 = vsel %vm3065, %v7303, %v7302
        %v7305 = vrot.slane %v6896, 7
        %v7306 = vsel %vm3059, %v7305, %v6855
        %v7307 = vsel %vm3062, %v6907, %v7306
        %v7308 = vrot.slane %v6903, 5
        %v7309 = vsel %vm3065, %v7308, %v7307
        %v7310 = vrot.slane %v6897, 7
        %v7311 = vsel %vm3059, %v7310, %v6895
        %v7312 = vrot.slane %v6902, 6
        %v7313 = vsel %vm3062, %v7312, %v7311
        %v7314 = vrot.slane %v6904, 5
        %v7315 = vsel %vm3065, %v7314, %v7313
        %v7316 = vrot.slane %v6899, 7
        %v7317 = vsel %vm3059, %v7316, 0.0
        %v7318 = vsel %vm3062, %v5955, %v7317
        %v7319 = vrot.slane %v6906, 5
        %v7320 = vsel %vm3065, %v7319, %v7318
        %v7321 = vrot.slane %v6900, 7
        %v7322 = vsel %vm3059, %v7321, %v6898
        %v7323 = vrot.slane %v6905, 6
        %v7324 = vsel %vm3062, %v7323, %v7322
        %v7325 = vrot.slane %v6907, 5
        %v7326 = vsel %vm3065, %v7325, %v7324
        %v7327 = vrot.slane %v6901, 7
        %v7328 = vsel %vm3059, %v7327, %v6899
        %v7329 = vrot.slane %v6906, 6
        %v7330 = vsel %vm3062, %v7329, %v7328
        %v7331 = vrot.slane %v6908, 5
        %v7332 = vsel %vm3065, %v7331, %v7330
        %7342 = vmatpush.msra.mxu0 %v6924
        %7343 = vmatpush.msra.mxu0 %v6923
        %7344 = vmatpush.msra.mxu0 %v6922
        %7345 = vmatpush.msra.mxu0 %v6921
        %7346 = vmatpush.msra.mxu0 %v6920
        %7347 = vmatpush.msra.mxu0 %v6919
        %7348 = vmatpush.msra.mxu0 %v6918
        %7349 = vmatpush.msra.mxu0 %v6917
        %7350 = vmatpush.msra.mxu0 %v6916
        %7351 = vmatpush.msra.mxu0 %v6915
        %7352 = vmatpush.msra.mxu0 %v6914
        %7353 = vmatpush.msra.mxu0 %v6913
        %7354 = vmatpush.msra.mxu0 %v6912
        %7355 = vmatpush.msra.mxu0 %v6911
        %7356 = vmatpush.msra.mxu0 %v6910
        %7357 = vmatpush.msra.mxu0 %v6909
        %7358 = vmatmul.f32.gmra.mxu0 %v7291
        %v7359 = vpop.f32.mrf.mxu0
        %v7360 = vadd.f32 %v7055, %v7359
        %7361 = vdwg.mxu0
        %7362 = vmatpush.msra.mxu0 %v6940
        %7363 = vmatpush.msra.mxu0 %v6939
        %7364 = vmatpush.msra.mxu0 %v6938
        %7365 = vmatpush.msra.mxu0 %v6937
        %7366 = vmatpush.msra.mxu0 %v6936
        %7367 = vmatpush.msra.mxu0 %v6935
        %7368 = vmatpush.msra.mxu0 %v6934
        %7369 = vmatpush.msra.mxu0 %v6933
        %7370 = vmatpush.msra.mxu0 %v6932
        %7371 = vmatpush.msra.mxu0 %v6931
        %7372 = vmatpush.msra.mxu0 %v6930
        %7373 = vmatpush.msra.mxu0 %v6929
        %7374 = vmatpush.msra.mxu0 %v6928
        %7375 = vmatpush.msra.mxu0 %v6927
        %7376 = vmatpush.msra.mxu0 %v6926
        %7377 = vmatpush.msra.mxu0 %v6925
        %7378 = vmatmul.f32.gmra.mxu0 %v7295
        %v7379 = vpop.f32.mrf.mxu0
        %v7380 = vadd.f32 %v7360, %v7379
        %7381 = vdwg.mxu0
        %7382 = vmatpush.msra.mxu0 %v6956
        %7383 = vmatpush.msra.mxu0 %v6955
        %7384 = vmatpush.msra.mxu0 %v6954
        %7385 = vmatpush.msra.mxu0 %v6953
        %7386 = vmatpush.msra.mxu0 %v6952
        %7387 = vmatpush.msra.mxu0 %v6951
        %7388 = vmatpush.msra.mxu0 %v6950
        %7389 = vmatpush.msra.mxu0 %v6949
        %7390 = vmatpush.msra.mxu0 %v6948
        %7391 = vmatpush.msra.mxu0 %v6947
        %7392 = vmatpush.msra.mxu0 %v6946
        %7393 = vmatpush.msra.mxu0 %v6945
        %7394 = vmatpush.msra.mxu0 %v6944
        %7395 = vmatpush.msra.mxu0 %v6943
        %7396 = vmatpush.msra.mxu0 %v6942
        %7397 = vmatpush.msra.mxu0 %v6941
        %7398 = vmatmul.f32.gmra.mxu0 %v7299
        %v7399 = vpop.f32.mrf.mxu0
        %v7400 = vadd.f32 %v7380, %v7399
        %7401 = vdwg.mxu0
        %7402 = vmatpush.msra.mxu0 %v6972
        %7403 = vmatpush.msra.mxu0 %v6971
        %7404 = vmatpush.msra.mxu0 %v6970
        %7405 = vmatpush.msra.mxu0 %v6969
        %7406 = vmatpush.msra.mxu0 %v6968
        %7407 = vmatpush.msra.mxu0 %v6967
        %7408 = vmatpush.msra.mxu0 %v6966
        %7409 = vmatpush.msra.mxu0 %v6965
        %7410 = vmatpush.msra.mxu0 %v6964
        %7411 = vmatpush.msra.mxu0 %v6963
        %7412 = vmatpush.msra.mxu0 %v6962
        %7413 = vmatpush.msra.mxu0 %v6961
        %7414 = vmatpush.msra.mxu0 %v6960
        %7415 = vmatpush.msra.mxu0 %v6959
        %7416 = vmatpush.msra.mxu0 %v6958
        %7417 = vmatpush.msra.mxu0 %v6957
        %7418 = vmatmul.f32.gmra.mxu0 %v7304
        %v7419 = vpop.f32.mrf.mxu0
        %v7420 = vadd.f32 %v7400, %v7419
        %7421 = vdwg.mxu0
        %7422 = vmatpush.msra.mxu0 %v6988
        %7423 = vmatpush.msra.mxu0 %v6987
        %7424 = vmatpush.msra.mxu0 %v6986
        %7425 = vmatpush.msra.mxu0 %v6985
        %7426 = vmatpush.msra.mxu0 %v6984
        %7427 = vmatpush.msra.mxu0 %v6983
        %7428 = vmatpush.msra.mxu0 %v6982
        %7429 = vmatpush.msra.mxu0 %v6981
        %7430 = vmatpush.msra.mxu0 %v6980
        %7431 = vmatpush.msra.mxu0 %v6979
        %7432 = vmatpush.msra.mxu0 %v6978
        %7433 = vmatpush.msra.mxu0 %v6977
        %7434 = vmatpush.msra.mxu0 %v6976
        %7435 = vmatpush.msra.mxu0 %v6975
        %7436 = vmatpush.msra.mxu0 %v6974
        %7437 = vmatpush.msra.mxu0 %v6973
        %7438 = vmatmul.f32.gmra.mxu0 %v7309
        %v7439 = vpop.f32.mrf.mxu0
        %v7440 = vadd.f32 %v7420, %v7439
        %7441 = vdwg.mxu0
        %7442 = vmatpush.msra.mxu0 %v7004
        %7443 = vmatpush.msra.mxu0 %v7003
        %7444 = vmatpush.msra.mxu0 %v7002
        %7445 = vmatpush.msra.mxu0 %v7001
        %7446 = vmatpush.msra.mxu0 %v7000
        %7447 = vmatpush.msra.mxu0 %v6999
        %7448 = vmatpush.msra.mxu0 %v6998
        %7449 = vmatpush.msra.mxu0 %v6997
        %7450 = vmatpush.msra.mxu0 %v6996
        %7451 = vmatpush.msra.mxu0 %v6995
        %7452 = vmatpush.msra.mxu0 %v6994
        %7453 = vmatpush.msra.mxu0 %v6993
        %7454 = vmatpush.msra.mxu0 %v6992
        %7455 = vmatpush.msra.mxu0 %v6991
        %7456 = vmatpush.msra.mxu0 %v6990
        %7457 = vmatpush.msra.mxu0 %v6989
        %7458 = vmatmul.f32.gmra.mxu0 %v7315
        %v7459 = vpop.f32.mrf.mxu0
        %v7460 = vadd.f32 %v7440, %v7459
        %7461 = vdwg.mxu0
        %7462 = vmatpush.msra.mxu0 %v7020
        %7463 = vmatpush.msra.mxu0 %v7019
        %7464 = vmatpush.msra.mxu0 %v7018
        %7465 = vmatpush.msra.mxu0 %v7017
        %7466 = vmatpush.msra.mxu0 %v7016
        %7467 = vmatpush.msra.mxu0 %v7015
        %7468 = vmatpush.msra.mxu0 %v7014
        %7469 = vmatpush.msra.mxu0 %v7013
        %7470 = vmatpush.msra.mxu0 %v7012
        %7471 = vmatpush.msra.mxu0 %v7011
        %7472 = vmatpush.msra.mxu0 %v7010
        %7473 = vmatpush.msra.mxu0 %v7009
        %7474 = vmatpush.msra.mxu0 %v7008
        %7475 = vmatpush.msra.mxu0 %v7007
        %7476 = vmatpush.msra.mxu0 %v7006
        %7477 = vmatpush.msra.mxu0 %v7005
        %7478 = vmatmul.f32.gmra.mxu0 %v7320
        %v7479 = vpop.f32.mrf.mxu0
        %v7480 = vadd.f32 %v7460, %v7479
        %7481 = vdwg.mxu0
        %7482 = vmatpush.msra.mxu0 %v7036
        %7483 = vmatpush.msra.mxu0 %v7035
        %7484 = vmatpush.msra.mxu0 %v7034
        %7485 = vmatpush.msra.mxu0 %v7033
        %7486 = vmatpush.msra.mxu0 %v7032
        %7487 = vmatpush.msra.mxu0 %v7031
        %7488 = vmatpush.msra.mxu0 %v7030
        %7489 = vmatpush.msra.mxu0 %v7029
        %7490 = vmatpush.msra.mxu0 %v7028
        %7491 = vmatpush.msra.mxu0 %v7027
        %7492 = vmatpush.msra.mxu0 %v7026
        %7493 = vmatpush.msra.mxu0 %v7025
        %7494 = vmatpush.msra.mxu0 %v7024
        %7495 = vmatpush.msra.mxu0 %v7023
        %7496 = vmatpush.msra.mxu0 %v7022
        %7497 = vmatpush.msra.mxu0 %v7021
        %7498 = vmatmul.f32.gmra.mxu0 %v7326
        %v7499 = vpop.f32.mrf.mxu0
        %v7500 = vadd.f32 %v7480, %v7499
        %7501 = vdwg.mxu0
        %7502 = vmatpush.msra.mxu0 %v7052
        %7503 = vmatpush.msra.mxu0 %v7051
        %7504 = vmatpush.msra.mxu0 %v7050
        %7505 = vmatpush.msra.mxu0 %v7049
        %7506 = vmatpush.msra.mxu0 %v7048
        %7507 = vmatpush.msra.mxu0 %v7047
        %7508 = vmatpush.msra.mxu0 %v7046
        %7509 = vmatpush.msra.mxu0 %v7045
        %7510 = vmatpush.msra.mxu0 %v7044
        %7511 = vmatpush.msra.mxu0 %v7043
        %7512 = vmatpush.msra.mxu0 %v7042
        %7513 = vmatpush.msra.mxu0 %v7041
        %7514 = vmatpush.msra.mxu0 %v7040
        %7515 = vmatpush.msra.mxu0 %v7039
        %7516 = vmatpush.msra.mxu0 %v7038
        %7517 = vmatpush.msra.mxu0 %v7037
        %7518 = vmatmul.f32.gmra.mxu0 %v7332
        %v7519 = vpop.f32.mrf.mxu0
        %v7520 = vadd.f32 %v7500, %v7519
        %7521 = vdwg.mxu0
        %v7522 = vmax.f32 %v7520, 0.0
        %v7523 = vsub.f32 %v7289, %v7522
        %v7524 = vand.u32 2147483647, %v7523
        %vm7525 = vcmask 1043456
        %v7526 = vsel %vm7525, %v7524, 0.0
        %v7527 = vrot.slane %v7526, 4
        %v7528 = vadd.f32 %v7526, %v7527
        %v7529 = vrot.slane %v7528, 2
        %v7530 = vadd.f32 %v7528, %v7529
        %v7531 = vrot.slane %v7530, 1
        %v7532 = vadd.f32 %v7530, %v7531
        %v7533 = vrcp.pop 256.0
        %v7534 = vmul.f32 256.0, %v7533
        %v7535 = vsub.f32 1.0, %v7534
        %v7536 = vmul.f32 %v7533, %v7535
        %v7537 = vadd.f32 %v7533, %v7536
        %vm7538 = vweird.f32 %v7533
        %v7539 = vsel %vm7538, %v7533, %v7537
        %v7540 = vmul.f32 %v7532, %v7539
        %v7541 = vadd.f32 %v6876, %v7540
        %7542 = vst [vmem:[%s367] sm:$0xff] %v7541
        %p7543 = scmp.lt.s32.totalorder %s21, 1
        %s7544 = scalar_select %p7543, %s21, 1
        %s7545 = smul.addr %s7544, 8
        %s7546 = scalar_lea.vmem %s8, %s7545
        // Predicated region
        $region65: #{_lambda_.1} parent=51 // pred_check
          %p7547 = pneg %p217
        $region66: #{_lambda_.1} parent=51 // pred_check_branch
          %7549 = sbr.rel (%p7547) target = $region68
        $region67: #{_lambda_.1} parent=51 // pred_region
          _
        $region68: #{_lambda_.1} parent=51 // pred_fallthru
          _
      $region52: #{_lambda_.1} parent=5 // pred_fallthru
        _
      %p7550 = scmp.le.s32.totalorder 2, %s16
      // Predicated region
      $region69: #{_lambda_.1} parent=5 // pred_check
        %p7551 = pneg %p7550
      $region70: #{_lambda_.1} parent=5 // pred_check_branch
        %7553 = sbr.rel (%p7551) target = $region72
      $region71: #{_lambda_.1} parent=5 // pred_region
        %s7554 = ssub.s32 %s16, 2
        // Predicated region
        $region73: #{_lambda_.1} parent=71 // pred_check
          %p7555 = pneg %p223
        $region74: #{_lambda_.1} parent=71 // pred_check_branch
          %7557 = sbr.rel (%p7555) target = $region76
        $region75: #{_lambda_.1} parent=71 // pred_region
          %p7558 = scmp.lt.s32.totalorder %s22, 1
          %s7559 = scalar_select %p7558, %s22, 1
          %s7560 = smul.addr %s7559, 8
          %s7561 = scalar_lea.vmem %s8, %s7560
        $region76: #{_lambda_.1} parent=71 // pred_fallthru
          _
      $region72: #{_lambda_.1} parent=5 // pred_fallthru
        _
    $region6: #{_lambda_.1} parent=1 // loop_footer
      %s20 = sadd.s32 1, %s16
    $region7: #{_lambda_.1} parent=1 // loop_footer_branch
      %15 = sbr.rel target = $region3
    $region8: #{_lambda_.1} parent=1 // loop_exit
      _
    %7562 = vsyncpa [#allocation5], 1
    %s7563 = scalar_lea.sflag [#allocation5], 1
    %7564 = vsyncpa %s7563, 1
    %7565 = vsyncpa [#allocation7], 1

</llo_original>
